<compile_context>
chip_gen: v5e
topology: v5e:2x2
jax: 0.10.0
libtpu: 0.0.40
codegen_flags: <defaults>
</compile_context>

<pallas_src>
import functools

import jax
import jax.numpy as jnp
from jax.experimental import pallas as pl
from jax.experimental.pallas import tpu as pltpu

_NEG_SLOPE = 0.2
_BN_EPS = 1e-5

# conv2 tap kh (or kw) -> (parity of the conv1 output row it reads, shift on
# the quarter-resolution 7-grid):  2*oh - 1 + kh == 2*(oh + shift) + parity
_KPAR = (1, 0, 1, 0)
_KSHIFT = (-1, 0, 0, 1)


def _class_taps():
    """For each conv1 parity class pc=(ph,pw): its 4 conv2 taps (kh,kw,di,dj)."""
    out = []
    for ph in range(2):
        for pw in range(2):
            taps = []
            for kh in range(4):
                if _KPAR[kh] != ph:
                    continue
                for kw in range(4):
                    if _KPAR[kw] != pw:
                        continue
                    taps.append((kh, kw, _KSHIFT[kh], _KSHIFT[kw]))
            out.append(tuple(taps))
    return tuple(out)


_CLASS_TAPS = _class_taps()


def _leaky(x):
    return jnp.where(x >= 0.0, x, _NEG_SLOPE * x)


# ---------------- Pallas kernels ----------------

def _conv_stack_kernel(p1_ref, w1_ref, b1_ref, w2_ref, b2_ref,
                       y2_ref, stats_ref, y1_ref, *, tile_b, batch):
    """Fused Conv1 + LeakyReLU + Conv2(+bias) + partial BN sums for one tile.

    Row layout is position-major: row = (oh*7 + ow)*tile_b + b_local, so conv2
    tap shifts are multiples of tile_b rows (sublane aligned) and out-of-range
    taps become static zero blocks.  One chunk == one conv2 output row oh.
    """
    f32 = jnp.float32
    ch = 7 * tile_b                      # rows per chunk (one conv2 output row)

    w1 = w1_ref[...]                     # (64, 256) bf16, block-diagonal
    b1 = b1_ref[...]                     # (1, 256)  f32 (b1 tiled x4)
    b2 = b2_ref[...]                     # (1, 128)  f32

    # ---- Conv1 + bias + LeakyReLU -> bf16 scratch, chunk by chunk ----
    for c in range(7):
        y = jnp.dot(p1_ref[c * ch:(c + 1) * ch, :], w1,
                    preferred_element_type=f32)
        y1_ref[c * ch:(c + 1) * ch, :] = _leaky(y + b1).astype(jnp.bfloat16)

    # ---- batch-padding validity (depends only on row % tile_b; pow2) ----
    t = pl.program_id(0)
    bl = jax.lax.broadcasted_iota(jnp.int32, (ch, 1), 0) & (tile_b - 1)
    valid = ((t * tile_b + bl) < batch).astype(f32)          # (ch, 1)

    zero_blk = jnp.zeros((tile_b, 64), jnp.bfloat16)
    s1 = jnp.zeros((1, 128), f32)
    s2 = jnp.zeros((1, 128), f32)

    # ---- Conv2 + bias: K=256-packed, one dot per parity class ----
    for c in range(7):                   # conv2 output row oh == c
        slabs = []
        for pc in range(4):
            lo, hi = pc * 64, (pc + 1) * 64
            for (_, _, di, dj) in _CLASS_TAPS[pc]:
                oh_src = c + di
                if oh_src < 0 or oh_src > 6:          # whole chunk masked
                    slabs.append(jnp.zeros((ch, 64), jnp.bfloat16))
                    continue
                base = oh_src * ch                    # aligned (mult. of tile_b)
                if dj == 0:
                    slab = y1_ref[base:base + ch, lo:hi]
                elif dj < 0:                          # target ow==0 is invalid
                    slab = jnp.concatenate(
                        [zero_blk, y1_ref[base:base + 6 * tile_b, lo:hi]],
                        axis=0)
                else:                                 # dj > 0: ow==6 invalid
                    slab = jnp.concatenate(
                        [y1_ref[base + tile_b:base + ch, lo:hi], zero_blk],
                        axis=0)
                slabs.append(slab)

        acc = jnp.zeros((ch, 128), f32)               # register-resident
        for pc in range(4):
            operand = jnp.concatenate(slabs[4 * pc:4 * pc + 4], axis=1)
            acc = acc + jnp.dot(operand, w2_ref[pc],
                                preferred_element_type=f32)

        y2 = acc + b2
        y2_ref[c * ch:(c + 1) * ch, :] = y2.astype(jnp.bfloat16)

        # BatchNorm partial sums, taken from the f32 accumulator
        yv = y2 * valid
        s1 = s1 + jnp.sum(yv, axis=0, keepdims=True)
        s2 = s2 + jnp.sum(yv * y2, axis=0, keepdims=True)

    stats_ref[0] = jnp.concatenate([s1, s2], axis=0)


def _bn_head_kernel(y2_ref, scale_ref, shift_ref, w3_ref, b3_ref, o_ref,
                    *, tile_b):
    """BatchNorm (precomputed scale/shift) + LeakyReLU + Linear + Sigmoid."""
    f32 = jnp.float32
    scale = scale_ref[...]                            # (1, 128)
    shift = shift_ref[...]                            # (1, 128)
    acc = jnp.zeros((tile_b, 128), f32)
    for p in range(49):                               # positions (oh*7+ow)
        y = y2_ref[p * tile_b:(p + 1) * tile_b, :].astype(f32)
        z = _leaky(y * scale + shift)
        acc = acc + z * w3_ref[p:p + 1, :]            # per-position weight row
    logit = jnp.sum(acc, axis=1, keepdims=True) + b3_ref[...]
    o_ref[...] = pl.reciprocal(1.0 + jnp.exp(-logit), approx=True)


# ---------------- wrapper ----------------

def _pick_tile_b(batch):
    # Power-of-two sample tiles (pow2 keeps the in-kernel row%tile_b a bitwise
    # AND).  Keep >= 2 grid tiles when the batch allows (v7x shares the
    # "parallel" axis across its 2 TensorCores) and cap tile_b at 32 so the
    # per-chunk f32 accumulator (7*tile_b, 128) stays register-resident.
    if batch <= 16:
        return 8
    if batch <= 32:
        return 16
    return 32


def init_params(key):
    k1, k2, k3, k4, k5, k6 = jax.random.split(key, 6)
    return {
        "w1": 0.05 * jax.random.normal(k1, (64, 1, 4, 4), jnp.float32),
        "b1": 0.01 * jax.random.normal(k2, (64,), jnp.float32),
        "w2": 0.05 * jax.random.normal(k3, (128, 64, 4, 4), jnp.float32),
        "b2": 0.01 * jax.random.normal(k4, (128,), jnp.float32),
        "gamma": jnp.ones((128,), jnp.float32),   # BatchNorm2d weight init
        "beta": jnp.zeros((128,), jnp.float32),   # BatchNorm2d bias init
        "w3": 0.05 * jax.random.normal(k5, (1, 128 * 7 * 7), jnp.float32),
        "b3": 0.01 * jax.random.normal(k6, (1,), jnp.float32),
    }


def discriminator_forward(x_nchw, params):
    B = x_nchw.shape[0]
    tile_b = _pick_tile_b(B)
    nt = (B + tile_b - 1) // tile_b                   # grid size
    bp = nt * tile_b                                  # padded batch
    tile_r = tile_b * 49                              # rows per tile
    m = bp * 49                                       # total rows

    # ---- one-shot prep (XLA): conv1 im2col, lane-dense + position-major ----
    x = x_nchw.reshape(B, 28, 28)
    x = jnp.pad(x, ((0, bp - B), (1, 1), (1, 1)))     # (bp, 30, 30)
    classes = []
    for ph in range(2):
        for pw in range(2):
            taps = [x[:, 2 * ph + kh:2 * ph + kh + 25:4,
                      2 * pw + kw:2 * pw + kw + 25:4]
                    for kh in range(4) for kw in range(4)]
            classes.append(jnp.stack(taps, axis=-1))  # (bp, 7, 7, 16)
    p1 = jnp.stack(classes, axis=-2).reshape(nt, tile_b, 49, 64)
    p1 = p1.transpose(0, 2, 1, 3).reshape(m, 64).astype(jnp.bfloat16)

    # ---- weights, repacked once ----
    w1r = params["w1"].reshape(64, 16).T                          # (tap, cout)
    w1blk = jnp.kron(jnp.eye(4, dtype=w1r.dtype), w1r)            # (64, 256)
    w1blk = w1blk.astype(jnp.bfloat16)
    b1 = jnp.tile(params["b1"].reshape(1, 64), (1, 4)).astype(jnp.float32)
    w2p = jnp.transpose(params["w2"], (2, 3, 1, 0)).reshape(16, 64, 128)
    w2cat = jnp.stack(
        [jnp.concatenate([w2p[kh * 4 + kw]
                          for (kh, kw, _, _) in _CLASS_TAPS[pc]], axis=0)
         for pc in range(4)], axis=0).astype(jnp.bfloat16)        # (4, 256, 128)
    b2 = params["b2"].reshape(1, 128).astype(jnp.float32)

    mosaic_params = pltpu.CompilerParams(
        dimension_semantics=("parallel",),
        vmem_limit_bytes=32 * 1024 * 1024)

    # ---- pass 1: fused conv1 + conv2 (+ BN partial sums), tiled over batch ----
    conv_kernel = functools.partial(_conv_stack_kernel, tile_b=tile_b, batch=B)
    y2, stats = pl.pallas_call(
        conv_kernel,
        out_shape=(jax.ShapeDtypeStruct((m, 128), jnp.bfloat16),
                   jax.ShapeDtypeStruct((nt, 2, 128), jnp.float32)),
        grid=(nt,),
        in_specs=[
            pl.BlockSpec((tile_r, 64), lambda t: (t, 0)),        # p1
            pl.BlockSpec((64, 256), lambda t: (0, 0)),           # w1 block-diag
            pl.BlockSpec((1, 256), lambda t: (0, 0)),            # b1 x4
            pl.BlockSpec((4, 256, 128), lambda t: (0, 0, 0)),    # w2 K-packed
            pl.BlockSpec((1, 128), lambda t: (0, 0)),            # b2
        ],
        out_specs=(
            pl.BlockSpec((tile_r, 128), lambda t: (t, 0)),       # y2 (bf16)
            pl.BlockSpec((1, 2, 128), lambda t: (t, 0, 0)),      # BN partials
        ),
        scratch_shapes=[pltpu.VMEM((tile_r, 256), jnp.bfloat16)],  # y1
        compiler_params=mosaic_params,
    )(p1, w1blk, b1, w2cat, b2)

    # ---- finalize BatchNorm statistics (256 floats -> trivial in XLA) ----
    cnt = float(B * 49)
    mean = jnp.sum(stats[:, 0, :], axis=0) / cnt
    var = jnp.maximum(jnp.sum(stats[:, 1, :], axis=0) / cnt - mean * mean, 0.0)
    inv = jax.lax.rsqrt(var + _BN_EPS)
    scale = (params["gamma"] * inv).reshape(1, 128).astype(jnp.float32)
    shift = (params["beta"] - mean * params["gamma"] * inv)
    shift = shift.reshape(1, 128).astype(jnp.float32)

    # Linear weight permuted once: PyTorch (c,h,w) flatten order -> (pos, c),
    # so the activations never need an NHWC->NCHW transpose or replication.
    w3p = params["w3"].reshape(128, 7, 7).transpose(1, 2, 0).reshape(49, 128)
    w3p = w3p.astype(jnp.float32)
    b3 = params["b3"].reshape(1, 1).astype(jnp.float32)

    # ---- pass 2: BN + LeakyReLU + Linear + Sigmoid, tiled over batch ----
    head_kernel = functools.partial(_bn_head_kernel, tile_b=tile_b)
    out = pl.pallas_call(
        head_kernel,
        out_shape=jax.ShapeDtypeStruct((bp, 1), jnp.float32),
        grid=(nt,),
        in_specs=[
            pl.BlockSpec((tile_r, 128), lambda t: (t, 0)),       # y2 (bf16)
            pl.BlockSpec((1, 128), lambda t: (0, 0)),            # BN scale
            pl.BlockSpec((1, 128), lambda t: (0, 0)),            # BN shift
            pl.BlockSpec((49, 128), lambda t: (0, 0)),           # w3 (pos, c)
            pl.BlockSpec((1, 1), lambda t: (0, 0)),              # b3
        ],
        out_specs=pl.BlockSpec((tile_b, 1), lambda t: (t, 0)),
        compiler_params=mosaic_params,
    )(y2, scale, shift, w3p, b3)

    return out[:B]                                    # (B, 1) in (0, 1)


# ---------------- pure-JAX reference (for verification only) ----------------

def _reference_forward(x, params):
    dn = ("NCHW", "OIHW", "NCHW")
    hi = jax.lax.Precision.HIGHEST
    y = jax.lax.conv_general_dilated(x, params["w1"], (2, 2), ((1, 1), (1, 1)),
                                     dimension_numbers=dn, precision=hi)
    y = _leaky(y + params["b1"][None, :, None, None])
    y = jax.lax.conv_general_dilated(y, params["w2"], (2, 2), ((1, 1), (1, 1)),
                                     dimension_numbers=dn, precision=hi)
    y = y + params["b2"][None, :, None, None]
    mean = jnp.mean(y, axis=(0, 2, 3), keepdims=True)
    var = jnp.mean((y - mean) ** 2, axis=(0, 2, 3), keepdims=True)
    y = (y - mean) * jax.lax.rsqrt(var + _BN_EPS)
    y = y * params["gamma"][None, :, None, None] + params["beta"][None, :, None, None]
    y = _leaky(y)
    y = y.reshape(y.shape[0], -1)
    logits = jnp.dot(y, params["w3"].T, precision=hi) + params["b3"][None, :]
    return jax.nn.sigmoid(logits)


if __name__ == "__main__":
    key = jax.random.PRNGKey(0)
    pkey, xkey = jax.random.split(key)
    params = init_params(pkey)

    fwd = jax.jit(discriminator_forward)
    ref_fn = jax.jit(_reference_forward)

    # batch=2: single grid tile (padded to 8); batch=20: two tiles + padding.
    for batch in (2, 20):
        x = jax.random.normal(jax.random.fold_in(xkey, batch),
                              (batch, 1, 28, 28), jnp.float32)   # NCHW like PyTorch
        out = jax.block_until_ready(fwd(x, params))
        assert out.shape == (batch, 1)
        assert bool(jnp.all(jnp.isfinite(out)))
        ref = jax.block_until_ready(ref_fn(x, params))
        err = float(jnp.max(jnp.abs(out - ref)))
        assert err < 5e-2, f"mismatch vs reference (batch={batch}): {err}"

    print("KERNEL_OK")
</pallas_src>

<mosaic_0001>
module attributes {stable_mosaic.version = 11 : i64} {
  func.func @_conv_stack_kernel(%arg0: i32, %arg1: memref<392x64xbf16, #tpu.memory_space<vmem>>, %arg2: memref<64x256xbf16, #tpu.memory_space<vmem>>, %arg3: memref<1x256xf32, #tpu.memory_space<vmem>>, %arg4: memref<4x256x128xbf16, #tpu.memory_space<vmem>>, %arg5: memref<1x128xf32, #tpu.memory_space<vmem>>, %arg6: memref<392x128xbf16, #tpu.memory_space<vmem>>, %arg7: memref<1x2x128xf32, #tpu.memory_space<vmem>>, %arg8: memref<392x256xbf16, #tpu.memory_space<vmem>>) attributes {dimension_semantics = [#tpu.dimension_semantics<parallel>], iteration_bounds = array<i64: 1>, scalar_prefetch = 0 : i64, scratch_operands = 1 : i64, tpu.core_type = #tpu.core_type<tc>, window_params = [{transform_indices = @transform_0, window_bounds = array<i64: 392, 64>}, {pipeline_mode = #tpu.pipeline_mode<synchronous>, transform_indices = @transform_1, window_bounds = array<i64: 64, 256>}, {pipeline_mode = #tpu.pipeline_mode<synchronous>, transform_indices = @transform_2, window_bounds = array<i64: 1, 256>}, {pipeline_mode = #tpu.pipeline_mode<synchronous>, transform_indices = @transform_3, window_bounds = array<i64: 4, 256, 128>}, {pipeline_mode = #tpu.pipeline_mode<synchronous>, transform_indices = @transform_4, window_bounds = array<i64: 1, 128>}, {transform_indices = @transform_5, window_bounds = array<i64: 392, 128>}, {transform_indices = @transform_6, window_bounds = array<i64: 1, 2, 128>}]} {
    %c0 = arith.constant 0 : index
    %c0_0 = arith.constant 0 : index
    %0 = vector.load %arg2[%c0, %c0_0] : memref<64x256xbf16, #tpu.memory_space<vmem>>, vector<64x256xbf16>
    %c0_1 = arith.constant 0 : index
    %c0_2 = arith.constant 0 : index
    %1 = vector.load %arg3[%c0_1, %c0_2] : memref<1x256xf32, #tpu.memory_space<vmem>>, vector<1x256xf32>
    %c0_3 = arith.constant 0 : index
    %c0_4 = arith.constant 0 : index
    %2 = vector.load %arg5[%c0_3, %c0_4] : memref<1x128xf32, #tpu.memory_space<vmem>>, vector<1x128xf32>
    %c0_5 = arith.constant 0 : index
    %c0_6 = arith.constant 0 : index
    %3 = vector.load %arg1[%c0_5, %c0_6] : memref<392x64xbf16, #tpu.memory_space<vmem>>, vector<56x64xbf16>
    %cst = arith.constant dense<0.000000e+00> : vector<56x256xf32>
    %4 = tpu.matmul %3, %0, %cst {dimension_numbers = #tpu.dot_dimension_numbers<[1], [0], [0], [1], [0, 0, 1, 1], [], []>} : vector<56x64xbf16>, vector<64x256xbf16>, vector<56x256xf32> -> vector<56x256xf32>
    %5 = vector.broadcast %1 : vector<1x256xf32> to vector<56x256xf32>
    %6 = arith.addf %4, %5 : vector<56x256xf32>
    %cst_7 = arith.constant 0.000000e+00 : f32
    %7 = vector.broadcast %cst_7 : f32 to vector<56x256xf32>
    %8 = arith.cmpf oge, %6, %7 : vector<56x256xf32>
    %cst_8 = arith.constant 2.000000e-01 : f32
    %9 = vector.broadcast %cst_8 : f32 to vector<56x256xf32>
    %10 = arith.mulf %9, %6 : vector<56x256xf32>
    %11 = arith.select %8, %6, %10 : vector<56x256xi1>, vector<56x256xf32>
    %12 = arith.truncf %11 : vector<56x256xf32> to vector<56x256xbf16>
    %c0_9 = arith.constant 0 : index
    %c0_10 = arith.constant 0 : index
    %13 = vector.load %arg8[%c0_9, %c0_10] : memref<392x256xbf16, #tpu.memory_space<vmem>>, vector<56x256xbf16>
    tpu.vector_store %arg8[%c0_9, %c0_10], %12 {strides = array<i32>} : memref<392x256xbf16, #tpu.memory_space<vmem>>, vector<56x256xbf16>,
    %c56 = arith.constant 56 : index
    %c0_11 = arith.constant 0 : index
    %14 = vector.load %arg1[%c56, %c0_11] : memref<392x64xbf16, #tpu.memory_space<vmem>>, vector<56x64xbf16>
    %cst_12 = arith.constant dense<0.000000e+00> : vector<56x256xf32>
    %15 = tpu.matmul %14, %0, %cst_12 {dimension_numbers = #tpu.dot_dimension_numbers<[1], [0], [0], [1], [0, 0, 1, 1], [], []>} : vector<56x64xbf16>, vector<64x256xbf16>, vector<56x256xf32> -> vector<56x256xf32>
    %16 = vector.broadcast %1 : vector<1x256xf32> to vector<56x256xf32>
    %17 = arith.addf %15, %16 : vector<56x256xf32>
    %cst_13 = arith.constant 0.000000e+00 : f32
    %18 = vector.broadcast %cst_13 : f32 to vector<56x256xf32>
    %19 = arith.cmpf oge, %17, %18 : vector<56x256xf32>
    %cst_14 = arith.constant 2.000000e-01 : f32
    %20 = vector.broadcast %cst_14 : f32 to vector<56x256xf32>
    %21 = arith.mulf %20, %17 : vector<56x256xf32>
    %22 = arith.select %19, %17, %21 : vector<56x256xi1>, vector<56x256xf32>
    %23 = arith.truncf %22 : vector<56x256xf32> to vector<56x256xbf16>
    %c56_15 = arith.constant 56 : index
    %c0_16 = arith.constant 0 : index
    %24 = vector.load %arg8[%c56_15, %c0_16] : memref<392x256xbf16, #tpu.memory_space<vmem>>, vector<56x256xbf16>
    tpu.vector_store %arg8[%c56_15, %c0_16], %23 {strides = array<i32>} : memref<392x256xbf16, #tpu.memory_space<vmem>>, vector<56x256xbf16>,
    %c112 = arith.constant 112 : index
    %c0_17 = arith.constant 0 : index
    %25 = vector.load %arg1[%c112, %c0_17] : memref<392x64xbf16, #tpu.memory_space<vmem>>, vector<56x64xbf16>
    %cst_18 = arith.constant dense<0.000000e+00> : vector<56x256xf32>
    %26 = tpu.matmul %25, %0, %cst_18 {dimension_numbers = #tpu.dot_dimension_numbers<[1], [0], [0], [1], [0, 0, 1, 1], [], []>} : vector<56x64xbf16>, vector<64x256xbf16>, vector<56x256xf32> -> vector<56x256xf32>
    %27 = vector.broadcast %1 : vector<1x256xf32> to vector<56x256xf32>
    %28 = arith.addf %26, %27 : vector<56x256xf32>
    %cst_19 = arith.constant 0.000000e+00 : f32
    %29 = vector.broadcast %cst_19 : f32 to vector<56x256xf32>
    %30 = arith.cmpf oge, %28, %29 : vector<56x256xf32>
    %cst_20 = arith.constant 2.000000e-01 : f32
    %31 = vector.broadcast %cst_20 : f32 to vector<56x256xf32>
    %32 = arith.mulf %31, %28 : vector<56x256xf32>
    %33 = arith.select %30, %28, %32 : vector<56x256xi1>, vector<56x256xf32>
    %34 = arith.truncf %33 : vector<56x256xf32> to vector<56x256xbf16>
    %c112_21 = arith.constant 112 : index
    %c0_22 = arith.constant 0 : index
    %35 = vector.load %arg8[%c112_21, %c0_22] : memref<392x256xbf16, #tpu.memory_space<vmem>>, vector<56x256xbf16>
    tpu.vector_store %arg8[%c112_21, %c0_22], %34 {strides = array<i32>} : memref<392x256xbf16, #tpu.memory_space<vmem>>, vector<56x256xbf16>,
    %c168 = arith.constant 168 : index
    %c0_23 = arith.constant 0 : index
    %36 = vector.load %arg1[%c168, %c0_23] : memref<392x64xbf16, #tpu.memory_space<vmem>>, vector<56x64xbf16>
    %cst_24 = arith.constant dense<0.000000e+00> : vector<56x256xf32>
    %37 = tpu.matmul %36, %0, %cst_24 {dimension_numbers = #tpu.dot_dimension_numbers<[1], [0], [0], [1], [0, 0, 1, 1], [], []>} : vector<56x64xbf16>, vector<64x256xbf16>, vector<56x256xf32> -> vector<56x256xf32>
    %38 = vector.broadcast %1 : vector<1x256xf32> to vector<56x256xf32>
    %39 = arith.addf %37, %38 : vector<56x256xf32>
    %cst_25 = arith.constant 0.000000e+00 : f32
    %40 = vector.broadcast %cst_25 : f32 to vector<56x256xf32>
    %41 = arith.cmpf oge, %39, %40 : vector<56x256xf32>
    %cst_26 = arith.constant 2.000000e-01 : f32
    %42 = vector.broadcast %cst_26 : f32 to vector<56x256xf32>
    %43 = arith.mulf %42, %39 : vector<56x256xf32>
    %44 = arith.select %41, %39, %43 : vector<56x256xi1>, vector<56x256xf32>
    %45 = arith.truncf %44 : vector<56x256xf32> to vector<56x256xbf16>
    %c168_27 = arith.constant 168 : index
    %c0_28 = arith.constant 0 : index
    %46 = vector.load %arg8[%c168_27, %c0_28] : memref<392x256xbf16, #tpu.memory_space<vmem>>, vector<56x256xbf16>
    tpu.vector_store %arg8[%c168_27, %c0_28], %45 {strides = array<i32>} : memref<392x256xbf16, #tpu.memory_space<vmem>>, vector<56x256xbf16>,
    %c224 = arith.constant 224 : index
    %c0_29 = arith.constant 0 : index
    %47 = vector.load %arg1[%c224, %c0_29] : memref<392x64xbf16, #tpu.memory_space<vmem>>, vector<56x64xbf16>
    %cst_30 = arith.constant dense<0.000000e+00> : vector<56x256xf32>
    %48 = tpu.matmul %47, %0, %cst_30 {dimension_numbers = #tpu.dot_dimension_numbers<[1], [0], [0], [1], [0, 0, 1, 1], [], []>} : vector<56x64xbf16>, vector<64x256xbf16>, vector<56x256xf32> -> vector<56x256xf32>
    %49 = vector.broadcast %1 : vector<1x256xf32> to vector<56x256xf32>
    %50 = arith.addf %48, %49 : vector<56x256xf32>
    %cst_31 = arith.constant 0.000000e+00 : f32
    %51 = vector.broadcast %cst_31 : f32 to vector<56x256xf32>
    %52 = arith.cmpf oge, %50, %51 : vector<56x256xf32>
    %cst_32 = arith.constant 2.000000e-01 : f32
    %53 = vector.broadcast %cst_32 : f32 to vector<56x256xf32>
    %54 = arith.mulf %53, %50 : vector<56x256xf32>
    %55 = arith.select %52, %50, %54 : vector<56x256xi1>, vector<56x256xf32>
    %56 = arith.truncf %55 : vector<56x256xf32> to vector<56x256xbf16>
    %c224_33 = arith.constant 224 : index
    %c0_34 = arith.constant 0 : index
    %57 = vector.load %arg8[%c224_33, %c0_34] : memref<392x256xbf16, #tpu.memory_space<vmem>>, vector<56x256xbf16>
    tpu.vector_store %arg8[%c224_33, %c0_34], %56 {strides = array<i32>} : memref<392x256xbf16, #tpu.memory_space<vmem>>, vector<56x256xbf16>,
    %c280 = arith.constant 280 : index
    %c0_35 = arith.constant 0 : index
    %58 = vector.load %arg1[%c280, %c0_35] : memref<392x64xbf16, #tpu.memory_space<vmem>>, vector<56x64xbf16>
    %cst_36 = arith.constant dense<0.000000e+00> : vector<56x256xf32>
    %59 = tpu.matmul %58, %0, %cst_36 {dimension_numbers = #tpu.dot_dimension_numbers<[1], [0], [0], [1], [0, 0, 1, 1], [], []>} : vector<56x64xbf16>, vector<64x256xbf16>, vector<56x256xf32> -> vector<56x256xf32>
    %60 = vector.broadcast %1 : vector<1x256xf32> to vector<56x256xf32>
    %61 = arith.addf %59, %60 : vector<56x256xf32>
    %cst_37 = arith.constant 0.000000e+00 : f32
    %62 = vector.broadcast %cst_37 : f32 to vector<56x256xf32>
    %63 = arith.cmpf oge, %61, %62 : vector<56x256xf32>
    %cst_38 = arith.constant 2.000000e-01 : f32
    %64 = vector.broadcast %cst_38 : f32 to vector<56x256xf32>
    %65 = arith.mulf %64, %61 : vector<56x256xf32>
    %66 = arith.select %63, %61, %65 : vector<56x256xi1>, vector<56x256xf32>
    %67 = arith.truncf %66 : vector<56x256xf32> to vector<56x256xbf16>
    %c280_39 = arith.constant 280 : index
    %c0_40 = arith.constant 0 : index
    %68 = vector.load %arg8[%c280_39, %c0_40] : memref<392x256xbf16, #tpu.memory_space<vmem>>, vector<56x256xbf16>
    tpu.vector_store %arg8[%c280_39, %c0_40], %67 {strides = array<i32>} : memref<392x256xbf16, #tpu.memory_space<vmem>>, vector<56x256xbf16>,
    %c336 = arith.constant 336 : index
    %c0_41 = arith.constant 0 : index
    %69 = vector.load %arg1[%c336, %c0_41] : memref<392x64xbf16, #tpu.memory_space<vmem>>, vector<56x64xbf16>
    %cst_42 = arith.constant dense<0.000000e+00> : vector<56x256xf32>
    %70 = tpu.matmul %69, %0, %cst_42 {dimension_numbers = #tpu.dot_dimension_numbers<[1], [0], [0], [1], [0, 0, 1, 1], [], []>} : vector<56x64xbf16>, vector<64x256xbf16>, vector<56x256xf32> -> vector<56x256xf32>
    %71 = vector.broadcast %1 : vector<1x256xf32> to vector<56x256xf32>
    %72 = arith.addf %70, %71 : vector<56x256xf32>
    %cst_43 = arith.constant 0.000000e+00 : f32
    %73 = vector.broadcast %cst_43 : f32 to vector<56x256xf32>
    %74 = arith.cmpf oge, %72, %73 : vector<56x256xf32>
    %cst_44 = arith.constant 2.000000e-01 : f32
    %75 = vector.broadcast %cst_44 : f32 to vector<56x256xf32>
    %76 = arith.mulf %75, %72 : vector<56x256xf32>
    %77 = arith.select %74, %72, %76 : vector<56x256xi1>, vector<56x256xf32>
    %78 = arith.truncf %77 : vector<56x256xf32> to vector<56x256xbf16>
    %c336_45 = arith.constant 336 : index
    %c0_46 = arith.constant 0 : index
    %79 = vector.load %arg8[%c336_45, %c0_46] : memref<392x256xbf16, #tpu.memory_space<vmem>>, vector<56x256xbf16>
    tpu.vector_store %arg8[%c336_45, %c0_46], %78 {strides = array<i32>} : memref<392x256xbf16, #tpu.memory_space<vmem>>, vector<56x256xbf16>,
    %80 = tpu.iota {dimensions = array<i32: 0>} : vector<56x1xi32>
    %c7_i32 = arith.constant 7 : i32
    %81 = vector.broadcast %c7_i32 : i32 to vector<56x1xi32>
    %82 = arith.andi %80, %81 : vector<56x1xi32>
    %c8_i32 = arith.constant 8 : i32
    %83 = arith.muli %arg0, %c8_i32 : i32
    %84 = vector.broadcast %83 : i32 to vector<56x1xi32>
    %85 = arith.addi %84, %82 : vector<56x1xi32>
    %c2_i32 = arith.constant 2 : i32
    %86 = vector.broadcast %c2_i32 : i32 to vector<56x1xi32>
    %87 = arith.cmpi slt, %85, %86 : vector<56x1xi32>
    %88 = arith.extui %87 : vector<56x1xi1> to vector<56x1xi32>
    %89 = arith.sitofp %88 : vector<56x1xi32> to vector<56x1xf32>
    %cst_47 = arith.constant 0.000000e+00 : bf16
    %90 = vector.broadcast %cst_47 : bf16 to vector<8x64xbf16>
    %cst_48 = arith.constant 0.000000e+00 : f32
    %91 = vector.broadcast %cst_48 : f32 to vector<1x128xf32>
    %cst_49 = arith.constant 0.000000e+00 : f32
    %92 = vector.broadcast %cst_49 : f32 to vector<1x128xf32>
    %c0_50 = arith.constant 0 : index
    %c0_51 = arith.constant 0 : index
    %93 = vector.load %arg8[%c0_50, %c0_51] : memref<392x256xbf16, #tpu.memory_space<vmem>>, vector<56x64xbf16>
    %c8 = arith.constant 8 : index
    %c0_52 = arith.constant 0 : index
    %94 = vector.load %arg8[%c8, %c0_52] : memref<392x256xbf16, #tpu.memory_space<vmem>>, vector<48x64xbf16>
    %95 = tpu.concatenate %94, %90 in 0 : vector<48x64xbf16>, vector<8x64xbf16> -> vector<56x64xbf16>
    %c56_53 = arith.constant 56 : index
    %c0_54 = arith.constant 0 : index
    %96 = vector.load %arg8[%c56_53, %c0_54] : memref<392x256xbf16, #tpu.memory_space<vmem>>, vector<56x64xbf16>
    %c64 = arith.constant 64 : index
    %c0_55 = arith.constant 0 : index
    %97 = vector.load %arg8[%c64, %c0_55] : memref<392x256xbf16, #tpu.memory_space<vmem>>, vector<48x64xbf16>
    %98 = tpu.concatenate %97, %90 in 0 : vector<48x64xbf16>, vector<8x64xbf16> -> vector<56x64xbf16>
    %c0_56 = arith.constant 0 : index
    %c64_57 = arith.constant 64 : index
    %99 = vector.load %arg8[%c0_56, %c64_57] : memref<392x256xbf16, #tpu.memory_space<vmem>>, vector<48x64xbf16>
    %100 = tpu.concatenate %90, %99 in 0 : vector<8x64xbf16>, vector<48x64xbf16> -> vector<56x64xbf16>
    %c0_58 = arith.constant 0 : index
    %c64_59 = arith.constant 64 : index
    %101 = vector.load %arg8[%c0_58, %c64_59] : memref<392x256xbf16, #tpu.memory_space<vmem>>, vector<56x64xbf16>
    %c56_60 = arith.constant 56 : index
    %c64_61 = arith.constant 64 : index
    %102 = vector.load %arg8[%c56_60, %c64_61] : memref<392x256xbf16, #tpu.memory_space<vmem>>, vector<48x64xbf16>
    %103 = tpu.concatenate %90, %102 in 0 : vector<8x64xbf16>, vector<48x64xbf16> -> vector<56x64xbf16>
    %c56_62 = arith.constant 56 : index
    %c64_63 = arith.constant 64 : index
    %104 = vector.load %arg8[%c56_62, %c64_63] : memref<392x256xbf16, #tpu.memory_space<vmem>>, vector<56x64xbf16>
    %cst_64 = arith.constant 0.000000e+00 : bf16
    %105 = vector.broadcast %cst_64 : bf16 to vector<56x64xbf16>
    %cst_65 = arith.constant 0.000000e+00 : bf16
    %106 = vector.broadcast %cst_65 : bf16 to vector<56x64xbf16>
    %c0_66 = arith.constant 0 : index
    %c128 = arith.constant 128 : index
    %107 = vector.load %arg8[%c0_66, %c128] : memref<392x256xbf16, #tpu.memory_space<vmem>>, vector<56x64xbf16>
    %c8_67 = arith.constant 8 : index
    %c128_68 = arith.constant 128 : index
    %108 = vector.load %arg8[%c8_67, %c128_68] : memref<392x256xbf16, #tpu.memory_space<vmem>>, vector<48x64xbf16>
    %109 = tpu.concatenate %108, %90 in 0 : vector<48x64xbf16>, vector<8x64xbf16> -> vector<56x64xbf16>
    %cst_69 = arith.constant 0.000000e+00 : bf16
    %110 = vector.broadcast %cst_69 : bf16 to vector<56x64xbf16>
    %cst_70 = arith.constant 0.000000e+00 : bf16
    %111 = vector.broadcast %cst_70 : bf16 to vector<56x64xbf16>
    %c0_71 = arith.constant 0 : index
    %c192 = arith.constant 192 : index
    %112 = vector.load %arg8[%c0_71, %c192] : memref<392x256xbf16, #tpu.memory_space<vmem>>, vector<48x64xbf16>
    %113 = tpu.concatenate %90, %112 in 0 : vector<8x64xbf16>, vector<48x64xbf16> -> vector<56x64xbf16>
    %c0_72 = arith.constant 0 : index
    %c192_73 = arith.constant 192 : index
    %114 = vector.load %arg8[%c0_72, %c192_73] : memref<392x256xbf16, #tpu.memory_space<vmem>>, vector<56x64xbf16>
    %cst_74 = arith.constant 0.000000e+00 : f32
    %115 = vector.broadcast %cst_74 : f32 to vector<56x128xf32>
    %116 = tpu.concatenate %93, %95, %96, %98 in 1 : vector<56x64xbf16>, vector<56x64xbf16>, vector<56x64xbf16>, vector<56x64xbf16> -> vector<56x256xbf16>
    %c0_75 = arith.constant 0 : index
    %c0_76 = arith.constant 0 : index
    %c0_77 = arith.constant 0 : index
    %117 = vector.load %arg4[%c0_75, %c0_76, %c0_77] : memref<4x256x128xbf16, #tpu.memory_space<vmem>>, vector<1x256x128xbf16>
    %118 = vector.shape_cast %117 : vector<1x256x128xbf16> to vector<256x128xbf16>
    %cst_78 = arith.constant dense<0.000000e+00> : vector<56x128xf32>
    %119 = tpu.matmul %116, %118, %cst_78 {dimension_numbers = #tpu.dot_dimension_numbers<[1], [0], [0], [1], [0, 0, 1, 1], [], []>} : vector<56x256xbf16>, vector<256x128xbf16>, vector<56x128xf32> -> vector<56x128xf32>
    %120 = arith.addf %115, %119 : vector<56x128xf32>
    %121 = tpu.concatenate %100, %101, %103, %104 in 1 : vector<56x64xbf16>, vector<56x64xbf16>, vector<56x64xbf16>, vector<56x64xbf16> -> vector<56x256xbf16>
    %c1 = arith.constant 1 : index
    %c0_79 = arith.constant 0 : index
    %c0_80 = arith.constant 0 : index
    %122 = vector.load %arg4[%c1, %c0_79, %c0_80] : memref<4x256x128xbf16, #tpu.memory_space<vmem>>, vector<1x256x128xbf16>
    %123 = vector.shape_cast %122 : vector<1x256x128xbf16> to vector<256x128xbf16>
    %cst_81 = arith.constant dense<0.000000e+00> : vector<56x128xf32>
    %124 = tpu.matmul %121, %123, %cst_81 {dimension_numbers = #tpu.dot_dimension_numbers<[1], [0], [0], [1], [0, 0, 1, 1], [], []>} : vector<56x256xbf16>, vector<256x128xbf16>, vector<56x128xf32> -> vector<56x128xf32>
    %125 = arith.addf %120, %124 : vector<56x128xf32>
    %126 = tpu.concatenate %105, %106, %107, %109 in 1 : vector<56x64xbf16>, vector<56x64xbf16>, vector<56x64xbf16>, vector<56x64xbf16> -> vector<56x256xbf16>
    %c2 = arith.constant 2 : index
    %c0_82 = arith.constant 0 : index
    %c0_83 = arith.constant 0 : index
    %127 = vector.load %arg4[%c2, %c0_82, %c0_83] : memref<4x256x128xbf16, #tpu.memory_space<vmem>>, vector<1x256x128xbf16>
    %128 = vector.shape_cast %127 : vector<1x256x128xbf16> to vector<256x128xbf16>
    %cst_84 = arith.constant dense<0.000000e+00> : vector<56x128xf32>
    %129 = tpu.matmul %126, %128, %cst_84 {dimension_numbers = #tpu.dot_dimension_numbers<[1], [0], [0], [1], [0, 0, 1, 1], [], []>} : vector<56x256xbf16>, vector<256x128xbf16>, vector<56x128xf32> -> vector<56x128xf32>
    %130 = arith.addf %125, %129 : vector<56x128xf32>
    %131 = tpu.concatenate %110, %111, %113, %114 in 1 : vector<56x64xbf16>, vector<56x64xbf16>, vector<56x64xbf16>, vector<56x64xbf16> -> vector<56x256xbf16>
    %c3 = arith.constant 3 : index
    %c0_85 = arith.constant 0 : index
    %c0_86 = arith.constant 0 : index
    %132 = vector.load %arg4[%c3, %c0_85, %c0_86] : memref<4x256x128xbf16, #tpu.memory_space<vmem>>, vector<1x256x128xbf16>
    %133 = vector.shape_cast %132 : vector<1x256x128xbf16> to vector<256x128xbf16>
    %cst_87 = arith.constant dense<0.000000e+00> : vector<56x128xf32>
    %134 = tpu.matmul %131, %133, %cst_87 {dimension_numbers = #tpu.dot_dimension_numbers<[1], [0], [0], [1], [0, 0, 1, 1], [], []>} : vector<56x256xbf16>, vector<256x128xbf16>, vector<56x128xf32> -> vector<56x128xf32>
    %135 = arith.addf %130, %134 : vector<56x128xf32>
    %136 = vector.broadcast %2 : vector<1x128xf32> to vector<56x128xf32>
    %137 = arith.addf %135, %136 : vector<56x128xf32>
    %138 = arith.truncf %137 : vector<56x128xf32> to vector<56x128xbf16>
    %c0_88 = arith.constant 0 : index
    %c0_89 = arith.constant 0 : index
    %139 = vector.load %arg6[%c0_88, %c0_89] : memref<392x128xbf16, #tpu.memory_space<vmem>>, vector<56x128xbf16>
    tpu.vector_store %arg6[%c0_88, %c0_89], %138 {strides = array<i32>} : memref<392x128xbf16, #tpu.memory_space<vmem>>, vector<56x128xbf16>,
    %140 = vector.broadcast %89 : vector<56x1xf32> to vector<56x128xf32>
    %141 = arith.mulf %137, %140 : vector<56x128xf32>
    %cst_90 = arith.constant dense<0.000000e+00> : vector<128xf32>
    %142 = vector.multi_reduction <add>, %141, %cst_90 [0] : vector<56x128xf32> to vector<128xf32>
    %143 = vector.shape_cast %142 : vector<128xf32> to vector<1x128xf32>
    %144 = arith.addf %91, %143 : vector<1x128xf32>
    %145 = arith.mulf %141, %137 : vector<56x128xf32>
    %cst_91 = arith.constant dense<0.000000e+00> : vector<128xf32>
    %146 = vector.multi_reduction <add>, %145, %cst_91 [0] : vector<56x128xf32> to vector<128xf32>
    %147 = vector.shape_cast %146 : vector<128xf32> to vector<1x128xf32>
    %148 = arith.addf %92, %147 : vector<1x128xf32>
    %c56_92 = arith.constant 56 : index
    %c0_93 = arith.constant 0 : index
    %149 = vector.load %arg8[%c56_92, %c0_93] : memref<392x256xbf16, #tpu.memory_space<vmem>>, vector<56x64xbf16>
    %c64_94 = arith.constant 64 : index
    %c0_95 = arith.constant 0 : index
    %150 = vector.load %arg8[%c64_94, %c0_95] : memref<392x256xbf16, #tpu.memory_space<vmem>>, vector<48x64xbf16>
    %151 = tpu.concatenate %150, %90 in 0 : vector<48x64xbf16>, vector<8x64xbf16> -> vector<56x64xbf16>
    %c112_96 = arith.constant 112 : index
    %c0_97 = arith.constant 0 : index
    %152 = vector.load %arg8[%c112_96, %c0_97] : memref<392x256xbf16, #tpu.memory_space<vmem>>, vector<56x64xbf16>
    %c120 = arith.constant 120 : index
    %c0_98 = arith.constant 0 : index
    %153 = vector.load %arg8[%c120, %c0_98] : memref<392x256xbf16, #tpu.memory_space<vmem>>, vector<48x64xbf16>
    %154 = tpu.concatenate %153, %90 in 0 : vector<48x64xbf16>, vector<8x64xbf16> -> vector<56x64xbf16>
    %c56_99 = arith.constant 56 : index
    %c64_100 = arith.constant 64 : index
    %155 = vector.load %arg8[%c56_99, %c64_100] : memref<392x256xbf16, #tpu.memory_space<vmem>>, vector<48x64xbf16>
    %156 = tpu.concatenate %90, %155 in 0 : vector<8x64xbf16>, vector<48x64xbf16> -> vector<56x64xbf16>
    %c56_101 = arith.constant 56 : index
    %c64_102 = arith.constant 64 : index
    %157 = vector.load %arg8[%c56_101, %c64_102] : memref<392x256xbf16, #tpu.memory_space<vmem>>, vector<56x64xbf16>
    %c112_103 = arith.constant 112 : index
    %c64_104 = arith.constant 64 : index
    %158 = vector.load %arg8[%c112_103, %c64_104] : memref<392x256xbf16, #tpu.memory_space<vmem>>, vector<48x64xbf16>
    %159 = tpu.concatenate %90, %158 in 0 : vector<8x64xbf16>, vector<48x64xbf16> -> vector<56x64xbf16>
    %c112_105 = arith.constant 112 : index
    %c64_106 = arith.constant 64 : index
    %160 = vector.load %arg8[%c112_105, %c64_106] : memref<392x256xbf16, #tpu.memory_space<vmem>>, vector<56x64xbf16>
    %c0_107 = arith.constant 0 : index
    %c128_108 = arith.constant 128 : index
    %161 = vector.load %arg8[%c0_107, %c128_108] : memref<392x256xbf16, #tpu.memory_space<vmem>>, vector<56x64xbf16>
    %c8_109 = arith.constant 8 : index
    %c128_110 = arith.constant 128 : index
    %162 = vector.load %arg8[%c8_109, %c128_110] : memref<392x256xbf16, #tpu.memory_space<vmem>>, vector<48x64xbf16>
    %163 = tpu.concatenate %162, %90 in 0 : vector<48x64xbf16>, vector<8x64xbf16> -> vector<56x64xbf16>
    %c56_111 = arith.constant 56 : index
    %c128_112 = arith.constant 128 : index
    %164 = vector.load %arg8[%c56_111, %c128_112] : memref<392x256xbf16, #tpu.memory_space<vmem>>, vector<56x64xbf16>
    %c64_113 = arith.constant 64 : index
    %c128_114 = arith.constant 128 : index
    %165 = vector.load %arg8[%c64_113, %c128_114] : memref<392x256xbf16, #tpu.memory_space<vmem>>, vector<48x64xbf16>
    %166 = tpu.concatenate %165, %90 in 0 : vector<48x64xbf16>, vector<8x64xbf16> -> vector<56x64xbf16>
    %c0_115 = arith.constant 0 : index
    %c192_116 = arith.constant 192 : index
    %167 = vector.load %arg8[%c0_115, %c192_116] : memref<392x256xbf16, #tpu.memory_space<vmem>>, vector<48x64xbf16>
    %168 = tpu.concatenate %90, %167 in 0 : vector<8x64xbf16>, vector<48x64xbf16> -> vector<56x64xbf16>
    %c0_117 = arith.constant 0 : index
    %c192_118 = arith.constant 192 : index
    %169 = vector.load %arg8[%c0_117, %c192_118] : memref<392x256xbf16, #tpu.memory_space<vmem>>, vector<56x64xbf16>
    %c56_119 = arith.constant 56 : index
    %c192_120 = arith.constant 192 : index
    %170 = vector.load %arg8[%c56_119, %c192_120] : memref<392x256xbf16, #tpu.memory_space<vmem>>, vector<48x64xbf16>
    %171 = tpu.concatenate %90, %170 in 0 : vector<8x64xbf16>, vector<48x64xbf16> -> vector<56x64xbf16>
    %c56_121 = arith.constant 56 : index
    %c192_122 = arith.constant 192 : index
    %172 = vector.load %arg8[%c56_121, %c192_122] : memref<392x256xbf16, #tpu.memory_space<vmem>>, vector<56x64xbf16>
    %cst_123 = arith.constant 0.000000e+00 : f32
    %173 = vector.broadcast %cst_123 : f32 to vector<56x128xf32>
    %174 = tpu.concatenate %149, %151, %152, %154 in 1 : vector<56x64xbf16>, vector<56x64xbf16>, vector<56x64xbf16>, vector<56x64xbf16> -> vector<56x256xbf16>
    %c0_124 = arith.constant 0 : index
    %c0_125 = arith.constant 0 : index
    %c0_126 = arith.constant 0 : index
    %175 = vector.load %arg4[%c0_124, %c0_125, %c0_126] : memref<4x256x128xbf16, #tpu.memory_space<vmem>>, vector<1x256x128xbf16>
    %176 = vector.shape_cast %175 : vector<1x256x128xbf16> to vector<256x128xbf16>
    %cst_127 = arith.constant dense<0.000000e+00> : vector<56x128xf32>
    %177 = tpu.matmul %174, %176, %cst_127 {dimension_numbers = #tpu.dot_dimension_numbers<[1], [0], [0], [1], [0, 0, 1, 1], [], []>} : vector<56x256xbf16>, vector<256x128xbf16>, vector<56x128xf32> -> vector<56x128xf32>
    %178 = arith.addf %173, %177 : vector<56x128xf32>
    %179 = tpu.concatenate %156, %157, %159, %160 in 1 : vector<56x64xbf16>, vector<56x64xbf16>, vector<56x64xbf16>, vector<56x64xbf16> -> vector<56x256xbf16>
    %c1_128 = arith.constant 1 : index
    %c0_129 = arith.constant 0 : index
    %c0_130 = arith.constant 0 : index
    %180 = vector.load %arg4[%c1_128, %c0_129, %c0_130] : memref<4x256x128xbf16, #tpu.memory_space<vmem>>, vector<1x256x128xbf16>
    %181 = vector.shape_cast %180 : vector<1x256x128xbf16> to vector<256x128xbf16>
    %cst_131 = arith.constant dense<0.000000e+00> : vector<56x128xf32>
    %182 = tpu.matmul %179, %181, %cst_131 {dimension_numbers = #tpu.dot_dimension_numbers<[1], [0], [0], [1], [0, 0, 1, 1], [], []>} : vector<56x256xbf16>, vector<256x128xbf16>, vector<56x128xf32> -> vector<56x128xf32>
    %183 = arith.addf %178, %182 : vector<56x128xf32>
    %184 = tpu.concatenate %161, %163, %164, %166 in 1 : vector<56x64xbf16>, vector<56x64xbf16>, vector<56x64xbf16>, vector<56x64xbf16> -> vector<56x256xbf16>
    %c2_132 = arith.constant 2 : index
    %c0_133 = arith.constant 0 : index
    %c0_134 = arith.constant 0 : index
    %185 = vector.load %arg4[%c2_132, %c0_133, %c0_134] : memref<4x256x128xbf16, #tpu.memory_space<vmem>>, vector<1x256x128xbf16>
    %186 = vector.shape_cast %185 : vector<1x256x128xbf16> to vector<256x128xbf16>
    %cst_135 = arith.constant dense<0.000000e+00> : vector<56x128xf32>
    %187 = tpu.matmul %184, %186, %cst_135 {dimension_numbers = #tpu.dot_dimension_numbers<[1], [0], [0], [1], [0, 0, 1, 1], [], []>} : vector<56x256xbf16>, vector<256x128xbf16>, vector<56x128xf32> -> vector<56x128xf32>
    %188 = arith.addf %183, %187 : vector<56x128xf32>
    %189 = tpu.concatenate %168, %169, %171, %172 in 1 : vector<56x64xbf16>, vector<56x64xbf16>, vector<56x64xbf16>, vector<56x64xbf16> -> vector<56x256xbf16>
    %c3_136 = arith.constant 3 : index
    %c0_137 = arith.constant 0 : index
    %c0_138 = arith.constant 0 : index
    %190 = vector.load %arg4[%c3_136, %c0_137, %c0_138] : memref<4x256x128xbf16, #tpu.memory_space<vmem>>, vector<1x256x128xbf16>
    %191 = vector.shape_cast %190 : vector<1x256x128xbf16> to vector<256x128xbf16>
    %cst_139 = arith.constant dense<0.000000e+00> : vector<56x128xf32>
    %192 = tpu.matmul %189, %191, %cst_139 {dimension_numbers = #tpu.dot_dimension_numbers<[1], [0], [0], [1], [0, 0, 1, 1], [], []>} : vector<56x256xbf16>, vector<256x128xbf16>, vector<56x128xf32> -> vector<56x128xf32>
    %193 = arith.addf %188, %192 : vector<56x128xf32>
    %194 = vector.broadcast %2 : vector<1x128xf32> to vector<56x128xf32>
    %195 = arith.addf %193, %194 : vector<56x128xf32>
    %196 = arith.truncf %195 : vector<56x128xf32> to vector<56x128xbf16>
    %c56_140 = arith.constant 56 : index
    %c0_141 = arith.constant 0 : index
    %197 = vector.load %arg6[%c56_140, %c0_141] : memref<392x128xbf16, #tpu.memory_space<vmem>>, vector<56x128xbf16>
    tpu.vector_store %arg6[%c56_140, %c0_141], %196 {strides = array<i32>} : memref<392x128xbf16, #tpu.memory_space<vmem>>, vector<56x128xbf16>,
    %198 = vector.broadcast %89 : vector<56x1xf32> to vector<56x128xf32>
    %199 = arith.mulf %195, %198 : vector<56x128xf32>
    %cst_142 = arith.constant dense<0.000000e+00> : vector<128xf32>
    %200 = vector.multi_reduction <add>, %199, %cst_142 [0] : vector<56x128xf32> to vector<128xf32>
    %201 = vector.shape_cast %200 : vector<128xf32> to vector<1x128xf32>
    %202 = arith.addf %144, %201 : vector<1x128xf32>
    %203 = arith.mulf %199, %195 : vector<56x128xf32>
    %cst_143 = arith.constant dense<0.000000e+00> : vector<128xf32>
    %204 = vector.multi_reduction <add>, %203, %cst_143 [0] : vector<56x128xf32> to vector<128xf32>
    %205 = vector.shape_cast %204 : vector<128xf32> to vector<1x128xf32>
    %206 = arith.addf %148, %205 : vector<1x128xf32>
    %c112_144 = arith.constant 112 : index
    %c0_145 = arith.constant 0 : index
    %207 = vector.load %arg8[%c112_144, %c0_145] : memref<392x256xbf16, #tpu.memory_space<vmem>>, vector<56x64xbf16>
    %c120_146 = arith.constant 120 : index
    %c0_147 = arith.constant 0 : index
    %208 = vector.load %arg8[%c120_146, %c0_147] : memref<392x256xbf16, #tpu.memory_space<vmem>>, vector<48x64xbf16>
    %209 = tpu.concatenate %208, %90 in 0 : vector<48x64xbf16>, vector<8x64xbf16> -> vector<56x64xbf16>
    %c168_148 = arith.constant 168 : index
    %c0_149 = arith.constant 0 : index
    %210 = vector.load %arg8[%c168_148, %c0_149] : memref<392x256xbf16, #tpu.memory_space<vmem>>, vector<56x64xbf16>
    %c176 = arith.constant 176 : index
    %c0_150 = arith.constant 0 : index
    %211 = vector.load %arg8[%c176, %c0_150] : memref<392x256xbf16, #tpu.memory_space<vmem>>, vector<48x64xbf16>
    %212 = tpu.concatenate %211, %90 in 0 : vector<48x64xbf16>, vector<8x64xbf16> -> vector<56x64xbf16>
    %c112_151 = arith.constant 112 : index
    %c64_152 = arith.constant 64 : index
    %213 = vector.load %arg8[%c112_151, %c64_152] : memref<392x256xbf16, #tpu.memory_space<vmem>>, vector<48x64xbf16>
    %214 = tpu.concatenate %90, %213 in 0 : vector<8x64xbf16>, vector<48x64xbf16> -> vector<56x64xbf16>
    %c112_153 = arith.constant 112 : index
    %c64_154 = arith.constant 64 : index
    %215 = vector.load %arg8[%c112_153, %c64_154] : memref<392x256xbf16, #tpu.memory_space<vmem>>, vector<56x64xbf16>
    %c168_155 = arith.constant 168 : index
    %c64_156 = arith.constant 64 : index
    %216 = vector.load %arg8[%c168_155, %c64_156] : memref<392x256xbf16, #tpu.memory_space<vmem>>, vector<48x64xbf16>
    %217 = tpu.concatenate %90, %216 in 0 : vector<8x64xbf16>, vector<48x64xbf16> -> vector<56x64xbf16>
    %c168_157 = arith.constant 168 : index
    %c64_158 = arith.constant 64 : index
    %218 = vector.load %arg8[%c168_157, %c64_158] : memref<392x256xbf16, #tpu.memory_space<vmem>>, vector<56x64xbf16>
    %c56_159 = arith.constant 56 : index
    %c128_160 = arith.constant 128 : index
    %219 = vector.load %arg8[%c56_159, %c128_160] : memref<392x256xbf16, #tpu.memory_space<vmem>>, vector<56x64xbf16>
    %c64_161 = arith.constant 64 : index
    %c128_162 = arith.constant 128 : index
    %220 = vector.load %arg8[%c64_161, %c128_162] : memref<392x256xbf16, #tpu.memory_space<vmem>>, vector<48x64xbf16>
    %221 = tpu.concatenate %220, %90 in 0 : vector<48x64xbf16>, vector<8x64xbf16> -> vector<56x64xbf16>
    %c112_163 = arith.constant 112 : index
    %c128_164 = arith.constant 128 : index
    %222 = vector.load %arg8[%c112_163, %c128_164] : memref<392x256xbf16, #tpu.memory_space<vmem>>, vector<56x64xbf16>
    %c120_165 = arith.constant 120 : index
    %c128_166 = arith.constant 128 : index
    %223 = vector.load %arg8[%c120_165, %c128_166] : memref<392x256xbf16, #tpu.memory_space<vmem>>, vector<48x64xbf16>
    %224 = tpu.concatenate %223, %90 in 0 : vector<48x64xbf16>, vector<8x64xbf16> -> vector<56x64xbf16>
    %c56_167 = arith.constant 56 : index
    %c192_168 = arith.constant 192 : index
    %225 = vector.load %arg8[%c56_167, %c192_168] : memref<392x256xbf16, #tpu.memory_space<vmem>>, vector<48x64xbf16>
    %226 = tpu.concatenate %90, %225 in 0 : vector<8x64xbf16>, vector<48x64xbf16> -> vector<56x64xbf16>
    %c56_169 = arith.constant 56 : index
    %c192_170 = arith.constant 192 : index
    %227 = vector.load %arg8[%c56_169, %c192_170] : memref<392x256xbf16, #tpu.memory_space<vmem>>, vector<56x64xbf16>
    %c112_171 = arith.constant 112 : index
    %c192_172 = arith.constant 192 : index
    %228 = vector.load %arg8[%c112_171, %c192_172] : memref<392x256xbf16, #tpu.memory_space<vmem>>, vector<48x64xbf16>
    %229 = tpu.concatenate %90, %228 in 0 : vector<8x64xbf16>, vector<48x64xbf16> -> vector<56x64xbf16>
    %c112_173 = arith.constant 112 : index
    %c192_174 = arith.constant 192 : index
    %230 = vector.load %arg8[%c112_173, %c192_174] : memref<392x256xbf16, #tpu.memory_space<vmem>>, vector<56x64xbf16>
    %cst_175 = arith.constant 0.000000e+00 : f32
    %231 = vector.broadcast %cst_175 : f32 to vector<56x128xf32>
    %232 = tpu.concatenate %207, %209, %210, %212 in 1 : vector<56x64xbf16>, vector<56x64xbf16>, vector<56x64xbf16>, vector<56x64xbf16> -> vector<56x256xbf16>
    %c0_176 = arith.constant 0 : index
    %c0_177 = arith.constant 0 : index
    %c0_178 = arith.constant 0 : index
    %233 = vector.load %arg4[%c0_176, %c0_177, %c0_178] : memref<4x256x128xbf16, #tpu.memory_space<vmem>>, vector<1x256x128xbf16>
    %234 = vector.shape_cast %233 : vector<1x256x128xbf16> to vector<256x128xbf16>
    %cst_179 = arith.constant dense<0.000000e+00> : vector<56x128xf32>
    %235 = tpu.matmul %232, %234, %cst_179 {dimension_numbers = #tpu.dot_dimension_numbers<[1], [0], [0], [1], [0, 0, 1, 1], [], []>} : vector<56x256xbf16>, vector<256x128xbf16>, vector<56x128xf32> -> vector<56x128xf32>
    %236 = arith.addf %231, %235 : vector<56x128xf32>
    %237 = tpu.concatenate %214, %215, %217, %218 in 1 : vector<56x64xbf16>, vector<56x64xbf16>, vector<56x64xbf16>, vector<56x64xbf16> -> vector<56x256xbf16>
    %c1_180 = arith.constant 1 : index
    %c0_181 = arith.constant 0 : index
    %c0_182 = arith.constant 0 : index
    %238 = vector.load %arg4[%c1_180, %c0_181, %c0_182] : memref<4x256x128xbf16, #tpu.memory_space<vmem>>, vector<1x256x128xbf16>
    %239 = vector.shape_cast %238 : vector<1x256x128xbf16> to vector<256x128xbf16>
    %cst_183 = arith.constant dense<0.000000e+00> : vector<56x128xf32>
    %240 = tpu.matmul %237, %239, %cst_183 {dimension_numbers = #tpu.dot_dimension_numbers<[1], [0], [0], [1], [0, 0, 1, 1], [], []>} : vector<56x256xbf16>, vector<256x128xbf16>, vector<56x128xf32> -> vector<56x128xf32>
    %241 = arith.addf %236, %240 : vector<56x128xf32>
    %242 = tpu.concatenate %219, %221, %222, %224 in 1 : vector<56x64xbf16>, vector<56x64xbf16>, vector<56x64xbf16>, vector<56x64xbf16> -> vector<56x256xbf16>
    %c2_184 = arith.constant 2 : index
    %c0_185 = arith.constant 0 : index
    %c0_186 = arith.constant 0 : index
    %243 = vector.load %arg4[%c2_184, %c0_185, %c0_186] : memref<4x256x128xbf16, #tpu.memory_space<vmem>>, vector<1x256x128xbf16>
    %244 = vector.shape_cast %243 : vector<1x256x128xbf16> to vector<256x128xbf16>
    %cst_187 = arith.constant dense<0.000000e+00> : vector<56x128xf32>
    %245 = tpu.matmul %242, %244, %cst_187 {dimension_numbers = #tpu.dot_dimension_numbers<[1], [0], [0], [1], [0, 0, 1, 1], [], []>} : vector<56x256xbf16>, vector<256x128xbf16>, vector<56x128xf32> -> vector<56x128xf32>
    %246 = arith.addf %241, %245 : vector<56x128xf32>
    %247 = tpu.concatenate %226, %227, %229, %230 in 1 : vector<56x64xbf16>, vector<56x64xbf16>, vector<56x64xbf16>, vector<56x64xbf16> -> vector<56x256xbf16>
    %c3_188 = arith.constant 3 : index
    %c0_189 = arith.constant 0 : index
    %c0_190 = arith.constant 0 : index
    %248 = vector.load %arg4[%c3_188, %c0_189, %c0_190] : memref<4x256x128xbf16, #tpu.memory_space<vmem>>, vector<1x256x128xbf16>
    %249 = vector.shape_cast %248 : vector<1x256x128xbf16> to vector<256x128xbf16>
    %cst_191 = arith.constant dense<0.000000e+00> : vector<56x128xf32>
    %250 = tpu.matmul %247, %249, %cst_191 {dimension_numbers = #tpu.dot_dimension_numbers<[1], [0], [0], [1], [0, 0, 1, 1], [], []>} : vector<56x256xbf16>, vector<256x128xbf16>, vector<56x128xf32> -> vector<56x128xf32>
    %251 = arith.addf %246, %250 : vector<56x128xf32>
    %252 = vector.broadcast %2 : vector<1x128xf32> to vector<56x128xf32>
    %253 = arith.addf %251, %252 : vector<56x128xf32>
    %254 = arith.truncf %253 : vector<56x128xf32> to vector<56x128xbf16>
    %c112_192 = arith.constant 112 : index
    %c0_193 = arith.constant 0 : index
    %255 = vector.load %arg6[%c112_192, %c0_193] : memref<392x128xbf16, #tpu.memory_space<vmem>>, vector<56x128xbf16>
    tpu.vector_store %arg6[%c112_192, %c0_193], %254 {strides = array<i32>} : memref<392x128xbf16, #tpu.memory_space<vmem>>, vector<56x128xbf16>,
    %256 = vector.broadcast %89 : vector<56x1xf32> to vector<56x128xf32>
    %257 = arith.mulf %253, %256 : vector<56x128xf32>
    %cst_194 = arith.constant dense<0.000000e+00> : vector<128xf32>
    %258 = vector.multi_reduction <add>, %257, %cst_194 [0] : vector<56x128xf32> to vector<128xf32>
    %259 = vector.shape_cast %258 : vector<128xf32> to vector<1x128xf32>
    %260 = arith.addf %202, %259 : vector<1x128xf32>
    %261 = arith.mulf %257, %253 : vector<56x128xf32>
    %cst_195 = arith.constant dense<0.000000e+00> : vector<128xf32>
    %262 = vector.multi_reduction <add>, %261, %cst_195 [0] : vector<56x128xf32> to vector<128xf32>
    %263 = vector.shape_cast %262 : vector<128xf32> to vector<1x128xf32>
    %264 = arith.addf %206, %263 : vector<1x128xf32>
    %c168_196 = arith.constant 168 : index
    %c0_197 = arith.constant 0 : index
    %265 = vector.load %arg8[%c168_196, %c0_197] : memref<392x256xbf16, #tpu.memory_space<vmem>>, vector<56x64xbf16>
    %c176_198 = arith.constant 176 : index
    %c0_199 = arith.constant 0 : index
    %266 = vector.load %arg8[%c176_198, %c0_199] : memref<392x256xbf16, #tpu.memory_space<vmem>>, vector<48x64xbf16>
    %267 = tpu.concatenate %266, %90 in 0 : vector<48x64xbf16>, vector<8x64xbf16> -> vector<56x64xbf16>
    %c224_200 = arith.constant 224 : index
    %c0_201 = arith.constant 0 : index
    %268 = vector.load %arg8[%c224_200, %c0_201] : memref<392x256xbf16, #tpu.memory_space<vmem>>, vector<56x64xbf16>
    %c232 = arith.constant 232 : index
    %c0_202 = arith.constant 0 : index
    %269 = vector.load %arg8[%c232, %c0_202] : memref<392x256xbf16, #tpu.memory_space<vmem>>, vector<48x64xbf16>
    %270 = tpu.concatenate %269, %90 in 0 : vector<48x64xbf16>, vector<8x64xbf16> -> vector<56x64xbf16>
    %c168_203 = arith.constant 168 : index
    %c64_204 = arith.constant 64 : index
    %271 = vector.load %arg8[%c168_203, %c64_204] : memref<392x256xbf16, #tpu.memory_space<vmem>>, vector<48x64xbf16>
    %272 = tpu.concatenate %90, %271 in 0 : vector<8x64xbf16>, vector<48x64xbf16> -> vector<56x64xbf16>
    %c168_205 = arith.constant 168 : index
    %c64_206 = arith.constant 64 : index
    %273 = vector.load %arg8[%c168_205, %c64_206] : memref<392x256xbf16, #tpu.memory_space<vmem>>, vector<56x64xbf16>
    %c224_207 = arith.constant 224 : index
    %c64_208 = arith.constant 64 : index
    %274 = vector.load %arg8[%c224_207, %c64_208] : memref<392x256xbf16, #tpu.memory_space<vmem>>, vector<48x64xbf16>
    %275 = tpu.concatenate %90, %274 in 0 : vector<8x64xbf16>, vector<48x64xbf16> -> vector<56x64xbf16>
    %c224_209 = arith.constant 224 : index
    %c64_210 = arith.constant 64 : index
    %276 = vector.load %arg8[%c224_209, %c64_210] : memref<392x256xbf16, #tpu.memory_space<vmem>>, vector<56x64xbf16>
    %c112_211 = arith.constant 112 : index
    %c128_212 = arith.constant 128 : index
    %277 = vector.load %arg8[%c112_211, %c128_212] : memref<392x256xbf16, #tpu.memory_space<vmem>>, vector<56x64xbf16>
    %c120_213 = arith.constant 120 : index
    %c128_214 = arith.constant 128 : index
    %278 = vector.load %arg8[%c120_213, %c128_214] : memref<392x256xbf16, #tpu.memory_space<vmem>>, vector<48x64xbf16>
    %279 = tpu.concatenate %278, %90 in 0 : vector<48x64xbf16>, vector<8x64xbf16> -> vector<56x64xbf16>
    %c168_215 = arith.constant 168 : index
    %c128_216 = arith.constant 128 : index
    %280 = vector.load %arg8[%c168_215, %c128_216] : memref<392x256xbf16, #tpu.memory_space<vmem>>, vector<56x64xbf16>
    %c176_217 = arith.constant 176 : index
    %c128_218 = arith.constant 128 : index
    %281 = vector.load %arg8[%c176_217, %c128_218] : memref<392x256xbf16, #tpu.memory_space<vmem>>, vector<48x64xbf16>
    %282 = tpu.concatenate %281, %90 in 0 : vector<48x64xbf16>, vector<8x64xbf16> -> vector<56x64xbf16>
    %c112_219 = arith.constant 112 : index
    %c192_220 = arith.constant 192 : index
    %283 = vector.load %arg8[%c112_219, %c192_220] : memref<392x256xbf16, #tpu.memory_space<vmem>>, vector<48x64xbf16>
    %284 = tpu.concatenate %90, %283 in 0 : vector<8x64xbf16>, vector<48x64xbf16> -> vector<56x64xbf16>
    %c112_221 = arith.constant 112 : index
    %c192_222 = arith.constant 192 : index
    %285 = vector.load %arg8[%c112_221, %c192_222] : memref<392x256xbf16, #tpu.memory_space<vmem>>, vector<56x64xbf16>
    %c168_223 = arith.constant 168 : index
    %c192_224 = arith.constant 192 : index
    %286 = vector.load %arg8[%c168_223, %c192_224] : memref<392x256xbf16, #tpu.memory_space<vmem>>, vector<48x64xbf16>
    %287 = tpu.concatenate %90, %286 in 0 : vector<8x64xbf16>, vector<48x64xbf16> -> vector<56x64xbf16>
    %c168_225 = arith.constant 168 : index
    %c192_226 = arith.constant 192 : index
    %288 = vector.load %arg8[%c168_225, %c192_226] : memref<392x256xbf16, #tpu.memory_space<vmem>>, vector<56x64xbf16>
    %cst_227 = arith.constant 0.000000e+00 : f32
    %289 = vector.broadcast %cst_227 : f32 to vector<56x128xf32>
    %290 = tpu.concatenate %265, %267, %268, %270 in 1 : vector<56x64xbf16>, vector<56x64xbf16>, vector<56x64xbf16>, vector<56x64xbf16> -> vector<56x256xbf16>
    %c0_228 = arith.constant 0 : index
    %c0_229 = arith.constant 0 : index
    %c0_230 = arith.constant 0 : index
    %291 = vector.load %arg4[%c0_228, %c0_229, %c0_230] : memref<4x256x128xbf16, #tpu.memory_space<vmem>>, vector<1x256x128xbf16>
    %292 = vector.shape_cast %291 : vector<1x256x128xbf16> to vector<256x128xbf16>
    %cst_231 = arith.constant dense<0.000000e+00> : vector<56x128xf32>
    %293 = tpu.matmul %290, %292, %cst_231 {dimension_numbers = #tpu.dot_dimension_numbers<[1], [0], [0], [1], [0, 0, 1, 1], [], []>} : vector<56x256xbf16>, vector<256x128xbf16>, vector<56x128xf32> -> vector<56x128xf32>
    %294 = arith.addf %289, %293 : vector<56x128xf32>
    %295 = tpu.concatenate %272, %273, %275, %276 in 1 : vector<56x64xbf16>, vector<56x64xbf16>, vector<56x64xbf16>, vector<56x64xbf16> -> vector<56x256xbf16>
    %c1_232 = arith.constant 1 : index
    %c0_233 = arith.constant 0 : index
    %c0_234 = arith.constant 0 : index
    %296 = vector.load %arg4[%c1_232, %c0_233, %c0_234] : memref<4x256x128xbf16, #tpu.memory_space<vmem>>, vector<1x256x128xbf16>
    %297 = vector.shape_cast %296 : vector<1x256x128xbf16> to vector<256x128xbf16>
    %cst_235 = arith.constant dense<0.000000e+00> : vector<56x128xf32>
    %298 = tpu.matmul %295, %297, %cst_235 {dimension_numbers = #tpu.dot_dimension_numbers<[1], [0], [0], [1], [0, 0, 1, 1], [], []>} : vector<56x256xbf16>, vector<256x128xbf16>, vector<56x128xf32> -> vector<56x128xf32>
    %299 = arith.addf %294, %298 : vector<56x128xf32>
    %300 = tpu.concatenate %277, %279, %280, %282 in 1 : vector<56x64xbf16>, vector<56x64xbf16>, vector<56x64xbf16>, vector<56x64xbf16> -> vector<56x256xbf16>
    %c2_236 = arith.constant 2 : index
    %c0_237 = arith.constant 0 : index
    %c0_238 = arith.constant 0 : index
    %301 = vector.load %arg4[%c2_236, %c0_237, %c0_238] : memref<4x256x128xbf16, #tpu.memory_space<vmem>>, vector<1x256x128xbf16>
    %302 = vector.shape_cast %301 : vector<1x256x128xbf16> to vector<256x128xbf16>
    %cst_239 = arith.constant dense<0.000000e+00> : vector<56x128xf32>
    %303 = tpu.matmul %300, %302, %cst_239 {dimension_numbers = #tpu.dot_dimension_numbers<[1], [0], [0], [1], [0, 0, 1, 1], [], []>} : vector<56x256xbf16>, vector<256x128xbf16>, vector<56x128xf32> -> vector<56x128xf32>
    %304 = arith.addf %299, %303 : vector<56x128xf32>
    %305 = tpu.concatenate %284, %285, %287, %288 in 1 : vector<56x64xbf16>, vector<56x64xbf16>, vector<56x64xbf16>, vector<56x64xbf16> -> vector<56x256xbf16>
    %c3_240 = arith.constant 3 : index
    %c0_241 = arith.constant 0 : index
    %c0_242 = arith.constant 0 : index
    %306 = vector.load %arg4[%c3_240, %c0_241, %c0_242] : memref<4x256x128xbf16, #tpu.memory_space<vmem>>, vector<1x256x128xbf16>
    %307 = vector.shape_cast %306 : vector<1x256x128xbf16> to vector<256x128xbf16>
    %cst_243 = arith.constant dense<0.000000e+00> : vector<56x128xf32>
    %308 = tpu.matmul %305, %307, %cst_243 {dimension_numbers = #tpu.dot_dimension_numbers<[1], [0], [0], [1], [0, 0, 1, 1], [], []>} : vector<56x256xbf16>, vector<256x128xbf16>, vector<56x128xf32> -> vector<56x128xf32>
    %309 = arith.addf %304, %308 : vector<56x128xf32>
    %310 = vector.broadcast %2 : vector<1x128xf32> to vector<56x128xf32>
    %311 = arith.addf %309, %310 : vector<56x128xf32>
    %312 = arith.truncf %311 : vector<56x128xf32> to vector<56x128xbf16>
    %c168_244 = arith.constant 168 : index
    %c0_245 = arith.constant 0 : index
    %313 = vector.load %arg6[%c168_244, %c0_245] : memref<392x128xbf16, #tpu.memory_space<vmem>>, vector<56x128xbf16>
    tpu.vector_store %arg6[%c168_244, %c0_245], %312 {strides = array<i32>} : memref<392x128xbf16, #tpu.memory_space<vmem>>, vector<56x128xbf16>,
    %314 = vector.broadcast %89 : vector<56x1xf32> to vector<56x128xf32>
    %315 = arith.mulf %311, %314 : vector<56x128xf32>
    %cst_246 = arith.constant dense<0.000000e+00> : vector<128xf32>
    %316 = vector.multi_reduction <add>, %315, %cst_246 [0] : vector<56x128xf32> to vector<128xf32>
    %317 = vector.shape_cast %316 : vector<128xf32> to vector<1x128xf32>
    %318 = arith.addf %260, %317 : vector<1x128xf32>
    %319 = arith.mulf %315, %311 : vector<56x128xf32>
    %cst_247 = arith.constant dense<0.000000e+00> : vector<128xf32>
    %320 = vector.multi_reduction <add>, %319, %cst_247 [0] : vector<56x128xf32> to vector<128xf32>
    %321 = vector.shape_cast %320 : vector<128xf32> to vector<1x128xf32>
    %322 = arith.addf %264, %321 : vector<1x128xf32>
    %c224_248 = arith.constant 224 : index
    %c0_249 = arith.constant 0 : index
    %323 = vector.load %arg8[%c224_248, %c0_249] : memref<392x256xbf16, #tpu.memory_space<vmem>>, vector<56x64xbf16>
    %c232_250 = arith.constant 232 : index
    %c0_251 = arith.constant 0 : index
    %324 = vector.load %arg8[%c232_250, %c0_251] : memref<392x256xbf16, #tpu.memory_space<vmem>>, vector<48x64xbf16>
    %325 = tpu.concatenate %324, %90 in 0 : vector<48x64xbf16>, vector<8x64xbf16> -> vector<56x64xbf16>
    %c280_252 = arith.constant 280 : index
    %c0_253 = arith.constant 0 : index
    %326 = vector.load %arg8[%c280_252, %c0_253] : memref<392x256xbf16, #tpu.memory_space<vmem>>, vector<56x64xbf16>
    %c288 = arith.constant 288 : index
    %c0_254 = arith.constant 0 : index
    %327 = vector.load %arg8[%c288, %c0_254] : memref<392x256xbf16, #tpu.memory_space<vmem>>, vector<48x64xbf16>
    %328 = tpu.concatenate %327, %90 in 0 : vector<48x64xbf16>, vector<8x64xbf16> -> vector<56x64xbf16>
    %c224_255 = arith.constant 224 : index
    %c64_256 = arith.constant 64 : index
    %329 = vector.load %arg8[%c224_255, %c64_256] : memref<392x256xbf16, #tpu.memory_space<vmem>>, vector<48x64xbf16>
    %330 = tpu.concatenate %90, %329 in 0 : vector<8x64xbf16>, vector<48x64xbf16> -> vector<56x64xbf16>
    %c224_257 = arith.constant 224 : index
    %c64_258 = arith.constant 64 : index
    %331 = vector.load %arg8[%c224_257, %c64_258] : memref<392x256xbf16, #tpu.memory_space<vmem>>, vector<56x64xbf16>
    %c280_259 = arith.constant 280 : index
    %c64_260 = arith.constant 64 : index
    %332 = vector.load %arg8[%c280_259, %c64_260] : memref<392x256xbf16, #tpu.memory_space<vmem>>, vector<48x64xbf16>
    %333 = tpu.concatenate %90, %332 in 0 : vector<8x64xbf16>, vector<48x64xbf16> -> vector<56x64xbf16>
    %c280_261 = arith.constant 280 : index
    %c64_262 = arith.constant 64 : index
    %334 = vector.load %arg8[%c280_261, %c64_262] : memref<392x256xbf16, #tpu.memory_space<vmem>>, vector<56x64xbf16>
    %c168_263 = arith.constant 168 : index
    %c128_264 = arith.constant 128 : index
    %335 = vector.load %arg8[%c168_263, %c128_264] : memref<392x256xbf16, #tpu.memory_space<vmem>>, vector<56x64xbf16>
    %c176_265 = arith.constant 176 : index
    %c128_266 = arith.constant 128 : index
    %336 = vector.load %arg8[%c176_265, %c128_266] : memref<392x256xbf16, #tpu.memory_space<vmem>>, vector<48x64xbf16>
    %337 = tpu.concatenate %336, %90 in 0 : vector<48x64xbf16>, vector<8x64xbf16> -> vector<56x64xbf16>
    %c224_267 = arith.constant 224 : index
    %c128_268 = arith.constant 128 : index
    %338 = vector.load %arg8[%c224_267, %c128_268] : memref<392x256xbf16, #tpu.memory_space<vmem>>, vector<56x64xbf16>
    %c232_269 = arith.constant 232 : index
    %c128_270 = arith.constant 128 : index
    %339 = vector.load %arg8[%c232_269, %c128_270] : memref<392x256xbf16, #tpu.memory_space<vmem>>, vector<48x64xbf16>
    %340 = tpu.concatenate %339, %90 in 0 : vector<48x64xbf16>, vector<8x64xbf16> -> vector<56x64xbf16>
    %c168_271 = arith.constant 168 : index
    %c192_272 = arith.constant 192 : index
    %341 = vector.load %arg8[%c168_271, %c192_272] : memref<392x256xbf16, #tpu.memory_space<vmem>>, vector<48x64xbf16>
    %342 = tpu.concatenate %90, %341 in 0 : vector<8x64xbf16>, vector<48x64xbf16> -> vector<56x64xbf16>
    %c168_273 = arith.constant 168 : index
    %c192_274 = arith.constant 192 : index
    %343 = vector.load %arg8[%c168_273, %c192_274] : memref<392x256xbf16, #tpu.memory_space<vmem>>, vector<56x64xbf16>
    %c224_275 = arith.constant 224 : index
    %c192_276 = arith.constant 192 : index
    %344 = vector.load %arg8[%c224_275, %c192_276] : memref<392x256xbf16, #tpu.memory_space<vmem>>, vector<48x64xbf16>
    %345 = tpu.concatenate %90, %344 in 0 : vector<8x64xbf16>, vector<48x64xbf16> -> vector<56x64xbf16>
    %c224_277 = arith.constant 224 : index
    %c192_278 = arith.constant 192 : index
    %346 = vector.load %arg8[%c224_277, %c192_278] : memref<392x256xbf16, #tpu.memory_space<vmem>>, vector<56x64xbf16>
    %cst_279 = arith.constant 0.000000e+00 : f32
    %347 = vector.broadcast %cst_279 : f32 to vector<56x128xf32>
    %348 = tpu.concatenate %323, %325, %326, %328 in 1 : vector<56x64xbf16>, vector<56x64xbf16>, vector<56x64xbf16>, vector<56x64xbf16> -> vector<56x256xbf16>
    %c0_280 = arith.constant 0 : index
    %c0_281 = arith.constant 0 : index
    %c0_282 = arith.constant 0 : index
    %349 = vector.load %arg4[%c0_280, %c0_281, %c0_282] : memref<4x256x128xbf16, #tpu.memory_space<vmem>>, vector<1x256x128xbf16>
    %350 = vector.shape_cast %349 : vector<1x256x128xbf16> to vector<256x128xbf16>
    %cst_283 = arith.constant dense<0.000000e+00> : vector<56x128xf32>
    %351 = tpu.matmul %348, %350, %cst_283 {dimension_numbers = #tpu.dot_dimension_numbers<[1], [0], [0], [1], [0, 0, 1, 1], [], []>} : vector<56x256xbf16>, vector<256x128xbf16>, vector<56x128xf32> -> vector<56x128xf32>
    %352 = arith.addf %347, %351 : vector<56x128xf32>
    %353 = tpu.concatenate %330, %331, %333, %334 in 1 : vector<56x64xbf16>, vector<56x64xbf16>, vector<56x64xbf16>, vector<56x64xbf16> -> vector<56x256xbf16>
    %c1_284 = arith.constant 1 : index
    %c0_285 = arith.constant 0 : index
    %c0_286 = arith.constant 0 : index
    %354 = vector.load %arg4[%c1_284, %c0_285, %c0_286] : memref<4x256x128xbf16, #tpu.memory_space<vmem>>, vector<1x256x128xbf16>
    %355 = vector.shape_cast %354 : vector<1x256x128xbf16> to vector<256x128xbf16>
    %cst_287 = arith.constant dense<0.000000e+00> : vector<56x128xf32>
    %356 = tpu.matmul %353, %355, %cst_287 {dimension_numbers = #tpu.dot_dimension_numbers<[1], [0], [0], [1], [0, 0, 1, 1], [], []>} : vector<56x256xbf16>, vector<256x128xbf16>, vector<56x128xf32> -> vector<56x128xf32>
    %357 = arith.addf %352, %356 : vector<56x128xf32>
    %358 = tpu.concatenate %335, %337, %338, %340 in 1 : vector<56x64xbf16>, vector<56x64xbf16>, vector<56x64xbf16>, vector<56x64xbf16> -> vector<56x256xbf16>
    %c2_288 = arith.constant 2 : index
    %c0_289 = arith.constant 0 : index
    %c0_290 = arith.constant 0 : index
    %359 = vector.load %arg4[%c2_288, %c0_289, %c0_290] : memref<4x256x128xbf16, #tpu.memory_space<vmem>>, vector<1x256x128xbf16>
    %360 = vector.shape_cast %359 : vector<1x256x128xbf16> to vector<256x128xbf16>
    %cst_291 = arith.constant dense<0.000000e+00> : vector<56x128xf32>
    %361 = tpu.matmul %358, %360, %cst_291 {dimension_numbers = #tpu.dot_dimension_numbers<[1], [0], [0], [1], [0, 0, 1, 1], [], []>} : vector<56x256xbf16>, vector<256x128xbf16>, vector<56x128xf32> -> vector<56x128xf32>
    %362 = arith.addf %357, %361 : vector<56x128xf32>
    %363 = tpu.concatenate %342, %343, %345, %346 in 1 : vector<56x64xbf16>, vector<56x64xbf16>, vector<56x64xbf16>, vector<56x64xbf16> -> vector<56x256xbf16>
    %c3_292 = arith.constant 3 : index
    %c0_293 = arith.constant 0 : index
    %c0_294 = arith.constant 0 : index
    %364 = vector.load %arg4[%c3_292, %c0_293, %c0_294] : memref<4x256x128xbf16, #tpu.memory_space<vmem>>, vector<1x256x128xbf16>
    %365 = vector.shape_cast %364 : vector<1x256x128xbf16> to vector<256x128xbf16>
    %cst_295 = arith.constant dense<0.000000e+00> : vector<56x128xf32>
    %366 = tpu.matmul %363, %365, %cst_295 {dimension_numbers = #tpu.dot_dimension_numbers<[1], [0], [0], [1], [0, 0, 1, 1], [], []>} : vector<56x256xbf16>, vector<256x128xbf16>, vector<56x128xf32> -> vector<56x128xf32>
    %367 = arith.addf %362, %366 : vector<56x128xf32>
    %368 = vector.broadcast %2 : vector<1x128xf32> to vector<56x128xf32>
    %369 = arith.addf %367, %368 : vector<56x128xf32>
    %370 = arith.truncf %369 : vector<56x128xf32> to vector<56x128xbf16>
    %c224_296 = arith.constant 224 : index
    %c0_297 = arith.constant 0 : index
    %371 = vector.load %arg6[%c224_296, %c0_297] : memref<392x128xbf16, #tpu.memory_space<vmem>>, vector<56x128xbf16>
    tpu.vector_store %arg6[%c224_296, %c0_297], %370 {strides = array<i32>} : memref<392x128xbf16, #tpu.memory_space<vmem>>, vector<56x128xbf16>,
    %372 = vector.broadcast %89 : vector<56x1xf32> to vector<56x128xf32>
    %373 = arith.mulf %369, %372 : vector<56x128xf32>
    %cst_298 = arith.constant dense<0.000000e+00> : vector<128xf32>
    %374 = vector.multi_reduction <add>, %373, %cst_298 [0] : vector<56x128xf32> to vector<128xf32>
    %375 = vector.shape_cast %374 : vector<128xf32> to vector<1x128xf32>
    %376 = arith.addf %318, %375 : vector<1x128xf32>
    %377 = arith.mulf %373, %369 : vector<56x128xf32>
    %cst_299 = arith.constant dense<0.000000e+00> : vector<128xf32>
    %378 = vector.multi_reduction <add>, %377, %cst_299 [0] : vector<56x128xf32> to vector<128xf32>
    %379 = vector.shape_cast %378 : vector<128xf32> to vector<1x128xf32>
    %380 = arith.addf %322, %379 : vector<1x128xf32>
    %c280_300 = arith.constant 280 : index
    %c0_301 = arith.constant 0 : index
    %381 = vector.load %arg8[%c280_300, %c0_301] : memref<392x256xbf16, #tpu.memory_space<vmem>>, vector<56x64xbf16>
    %c288_302 = arith.constant 288 : index
    %c0_303 = arith.constant 0 : index
    %382 = vector.load %arg8[%c288_302, %c0_303] : memref<392x256xbf16, #tpu.memory_space<vmem>>, vector<48x64xbf16>
    %383 = tpu.concatenate %382, %90 in 0 : vector<48x64xbf16>, vector<8x64xbf16> -> vector<56x64xbf16>
    %c336_304 = arith.constant 336 : index
    %c0_305 = arith.constant 0 : index
    %384 = vector.load %arg8[%c336_304, %c0_305] : memref<392x256xbf16, #tpu.memory_space<vmem>>, vector<56x64xbf16>
    %c344 = arith.constant 344 : index
    %c0_306 = arith.constant 0 : index
    %385 = vector.load %arg8[%c344, %c0_306] : memref<392x256xbf16, #tpu.memory_space<vmem>>, vector<48x64xbf16>
    %386 = tpu.concatenate %385, %90 in 0 : vector<48x64xbf16>, vector<8x64xbf16> -> vector<56x64xbf16>
    %c280_307 = arith.constant 280 : index
    %c64_308 = arith.constant 64 : index
    %387 = vector.load %arg8[%c280_307, %c64_308] : memref<392x256xbf16, #tpu.memory_space<vmem>>, vector<48x64xbf16>
    %388 = tpu.concatenate %90, %387 in 0 : vector<8x64xbf16>, vector<48x64xbf16> -> vector<56x64xbf16>
    %c280_309 = arith.constant 280 : index
    %c64_310 = arith.constant 64 : index
    %389 = vector.load %arg8[%c280_309, %c64_310] : memref<392x256xbf16, #tpu.memory_space<vmem>>, vector<56x64xbf16>
    %c336_311 = arith.constant 336 : index
    %c64_312 = arith.constant 64 : index
    %390 = vector.load %arg8[%c336_311, %c64_312] : memref<392x256xbf16, #tpu.memory_space<vmem>>, vector<48x64xbf16>
    %391 = tpu.concatenate %90, %390 in 0 : vector<8x64xbf16>, vector<48x64xbf16> -> vector<56x64xbf16>
    %c336_313 = arith.constant 336 : index
    %c64_314 = arith.constant 64 : index
    %392 = vector.load %arg8[%c336_313, %c64_314] : memref<392x256xbf16, #tpu.memory_space<vmem>>, vector<56x64xbf16>
    %c224_315 = arith.constant 224 : index
    %c128_316 = arith.constant 128 : index
    %393 = vector.load %arg8[%c224_315, %c128_316] : memref<392x256xbf16, #tpu.memory_space<vmem>>, vector<56x64xbf16>
    %c232_317 = arith.constant 232 : index
    %c128_318 = arith.constant 128 : index
    %394 = vector.load %arg8[%c232_317, %c128_318] : memref<392x256xbf16, #tpu.memory_space<vmem>>, vector<48x64xbf16>
    %395 = tpu.concatenate %394, %90 in 0 : vector<48x64xbf16>, vector<8x64xbf16> -> vector<56x64xbf16>
    %c280_319 = arith.constant 280 : index
    %c128_320 = arith.constant 128 : index
    %396 = vector.load %arg8[%c280_319, %c128_320] : memref<392x256xbf16, #tpu.memory_space<vmem>>, vector<56x64xbf16>
    %c288_321 = arith.constant 288 : index
    %c128_322 = arith.constant 128 : index
    %397 = vector.load %arg8[%c288_321, %c128_322] : memref<392x256xbf16, #tpu.memory_space<vmem>>, vector<48x64xbf16>
    %398 = tpu.concatenate %397, %90 in 0 : vector<48x64xbf16>, vector<8x64xbf16> -> vector<56x64xbf16>
    %c224_323 = arith.constant 224 : index
    %c192_324 = arith.constant 192 : index
    %399 = vector.load %arg8[%c224_323, %c192_324] : memref<392x256xbf16, #tpu.memory_space<vmem>>, vector<48x64xbf16>
    %400 = tpu.concatenate %90, %399 in 0 : vector<8x64xbf16>, vector<48x64xbf16> -> vector<56x64xbf16>
    %c224_325 = arith.constant 224 : index
    %c192_326 = arith.constant 192 : index
    %401 = vector.load %arg8[%c224_325, %c192_326] : memref<392x256xbf16, #tpu.memory_space<vmem>>, vector<56x64xbf16>
    %c280_327 = arith.constant 280 : index
    %c192_328 = arith.constant 192 : index
    %402 = vector.load %arg8[%c280_327, %c192_328] : memref<392x256xbf16, #tpu.memory_space<vmem>>, vector<48x64xbf16>
    %403 = tpu.concatenate %90, %402 in 0 : vector<8x64xbf16>, vector<48x64xbf16> -> vector<56x64xbf16>
    %c280_329 = arith.constant 280 : index
    %c192_330 = arith.constant 192 : index
    %404 = vector.load %arg8[%c280_329, %c192_330] : memref<392x256xbf16, #tpu.memory_space<vmem>>, vector<56x64xbf16>
    %cst_331 = arith.constant 0.000000e+00 : f32
    %405 = vector.broadcast %cst_331 : f32 to vector<56x128xf32>
    %406 = tpu.concatenate %381, %383, %384, %386 in 1 : vector<56x64xbf16>, vector<56x64xbf16>, vector<56x64xbf16>, vector<56x64xbf16> -> vector<56x256xbf16>
    %c0_332 = arith.constant 0 : index
    %c0_333 = arith.constant 0 : index
    %c0_334 = arith.constant 0 : index
    %407 = vector.load %arg4[%c0_332, %c0_333, %c0_334] : memref<4x256x128xbf16, #tpu.memory_space<vmem>>, vector<1x256x128xbf16>
    %408 = vector.shape_cast %407 : vector<1x256x128xbf16> to vector<256x128xbf16>
    %cst_335 = arith.constant dense<0.000000e+00> : vector<56x128xf32>
    %409 = tpu.matmul %406, %408, %cst_335 {dimension_numbers = #tpu.dot_dimension_numbers<[1], [0], [0], [1], [0, 0, 1, 1], [], []>} : vector<56x256xbf16>, vector<256x128xbf16>, vector<56x128xf32> -> vector<56x128xf32>
    %410 = arith.addf %405, %409 : vector<56x128xf32>
    %411 = tpu.concatenate %388, %389, %391, %392 in 1 : vector<56x64xbf16>, vector<56x64xbf16>, vector<56x64xbf16>, vector<56x64xbf16> -> vector<56x256xbf16>
    %c1_336 = arith.constant 1 : index
    %c0_337 = arith.constant 0 : index
    %c0_338 = arith.constant 0 : index
    %412 = vector.load %arg4[%c1_336, %c0_337, %c0_338] : memref<4x256x128xbf16, #tpu.memory_space<vmem>>, vector<1x256x128xbf16>
    %413 = vector.shape_cast %412 : vector<1x256x128xbf16> to vector<256x128xbf16>
    %cst_339 = arith.constant dense<0.000000e+00> : vector<56x128xf32>
    %414 = tpu.matmul %411, %413, %cst_339 {dimension_numbers = #tpu.dot_dimension_numbers<[1], [0], [0], [1], [0, 0, 1, 1], [], []>} : vector<56x256xbf16>, vector<256x128xbf16>, vector<56x128xf32> -> vector<56x128xf32>
    %415 = arith.addf %410, %414 : vector<56x128xf32>
    %416 = tpu.concatenate %393, %395, %396, %398 in 1 : vector<56x64xbf16>, vector<56x64xbf16>, vector<56x64xbf16>, vector<56x64xbf16> -> vector<56x256xbf16>
    %c2_340 = arith.constant 2 : index
    %c0_341 = arith.constant 0 : index
    %c0_342 = arith.constant 0 : index
    %417 = vector.load %arg4[%c2_340, %c0_341, %c0_342] : memref<4x256x128xbf16, #tpu.memory_space<vmem>>, vector<1x256x128xbf16>
    %418 = vector.shape_cast %417 : vector<1x256x128xbf16> to vector<256x128xbf16>
    %cst_343 = arith.constant dense<0.000000e+00> : vector<56x128xf32>
    %419 = tpu.matmul %416, %418, %cst_343 {dimension_numbers = #tpu.dot_dimension_numbers<[1], [0], [0], [1], [0, 0, 1, 1], [], []>} : vector<56x256xbf16>, vector<256x128xbf16>, vector<56x128xf32> -> vector<56x128xf32>
    %420 = arith.addf %415, %419 : vector<56x128xf32>
    %421 = tpu.concatenate %400, %401, %403, %404 in 1 : vector<56x64xbf16>, vector<56x64xbf16>, vector<56x64xbf16>, vector<56x64xbf16> -> vector<56x256xbf16>
    %c3_344 = arith.constant 3 : index
    %c0_345 = arith.constant 0 : index
    %c0_346 = arith.constant 0 : index
    %422 = vector.load %arg4[%c3_344, %c0_345, %c0_346] : memref<4x256x128xbf16, #tpu.memory_space<vmem>>, vector<1x256x128xbf16>
    %423 = vector.shape_cast %422 : vector<1x256x128xbf16> to vector<256x128xbf16>
    %cst_347 = arith.constant dense<0.000000e+00> : vector<56x128xf32>
    %424 = tpu.matmul %421, %423, %cst_347 {dimension_numbers = #tpu.dot_dimension_numbers<[1], [0], [0], [1], [0, 0, 1, 1], [], []>} : vector<56x256xbf16>, vector<256x128xbf16>, vector<56x128xf32> -> vector<56x128xf32>
    %425 = arith.addf %420, %424 : vector<56x128xf32>
    %426 = vector.broadcast %2 : vector<1x128xf32> to vector<56x128xf32>
    %427 = arith.addf %425, %426 : vector<56x128xf32>
    %428 = arith.truncf %427 : vector<56x128xf32> to vector<56x128xbf16>
    %c280_348 = arith.constant 280 : index
    %c0_349 = arith.constant 0 : index
    %429 = vector.load %arg6[%c280_348, %c0_349] : memref<392x128xbf16, #tpu.memory_space<vmem>>, vector<56x128xbf16>
    tpu.vector_store %arg6[%c280_348, %c0_349], %428 {strides = array<i32>} : memref<392x128xbf16, #tpu.memory_space<vmem>>, vector<56x128xbf16>,
    %430 = vector.broadcast %89 : vector<56x1xf32> to vector<56x128xf32>
    %431 = arith.mulf %427, %430 : vector<56x128xf32>
    %cst_350 = arith.constant dense<0.000000e+00> : vector<128xf32>
    %432 = vector.multi_reduction <add>, %431, %cst_350 [0] : vector<56x128xf32> to vector<128xf32>
    %433 = vector.shape_cast %432 : vector<128xf32> to vector<1x128xf32>
    %434 = arith.addf %376, %433 : vector<1x128xf32>
    %435 = arith.mulf %431, %427 : vector<56x128xf32>
    %cst_351 = arith.constant dense<0.000000e+00> : vector<128xf32>
    %436 = vector.multi_reduction <add>, %435, %cst_351 [0] : vector<56x128xf32> to vector<128xf32>
    %437 = vector.shape_cast %436 : vector<128xf32> to vector<1x128xf32>
    %438 = arith.addf %380, %437 : vector<1x128xf32>
    %c336_352 = arith.constant 336 : index
    %c0_353 = arith.constant 0 : index
    %439 = vector.load %arg8[%c336_352, %c0_353] : memref<392x256xbf16, #tpu.memory_space<vmem>>, vector<56x64xbf16>
    %c344_354 = arith.constant 344 : index
    %c0_355 = arith.constant 0 : index
    %440 = vector.load %arg8[%c344_354, %c0_355] : memref<392x256xbf16, #tpu.memory_space<vmem>>, vector<48x64xbf16>
    %441 = tpu.concatenate %440, %90 in 0 : vector<48x64xbf16>, vector<8x64xbf16> -> vector<56x64xbf16>
    %cst_356 = arith.constant 0.000000e+00 : bf16
    %442 = vector.broadcast %cst_356 : bf16 to vector<56x64xbf16>
    %cst_357 = arith.constant 0.000000e+00 : bf16
    %443 = vector.broadcast %cst_357 : bf16 to vector<56x64xbf16>
    %c336_358 = arith.constant 336 : index
    %c64_359 = arith.constant 64 : index
    %444 = vector.load %arg8[%c336_358, %c64_359] : memref<392x256xbf16, #tpu.memory_space<vmem>>, vector<48x64xbf16>
    %445 = tpu.concatenate %90, %444 in 0 : vector<8x64xbf16>, vector<48x64xbf16> -> vector<56x64xbf16>
    %c336_360 = arith.constant 336 : index
    %c64_361 = arith.constant 64 : index
    %446 = vector.load %arg8[%c336_360, %c64_361] : memref<392x256xbf16, #tpu.memory_space<vmem>>, vector<56x64xbf16>
    %cst_362 = arith.constant 0.000000e+00 : bf16
    %447 = vector.broadcast %cst_362 : bf16 to vector<56x64xbf16>
    %cst_363 = arith.constant 0.000000e+00 : bf16
    %448 = vector.broadcast %cst_363 : bf16 to vector<56x64xbf16>
    %c280_364 = arith.constant 280 : index
    %c128_365 = arith.constant 128 : index
    %449 = vector.load %arg8[%c280_364, %c128_365] : memref<392x256xbf16, #tpu.memory_space<vmem>>, vector<56x64xbf16>
    %c288_366 = arith.constant 288 : index
    %c128_367 = arith.constant 128 : index
    %450 = vector.load %arg8[%c288_366, %c128_367] : memref<392x256xbf16, #tpu.memory_space<vmem>>, vector<48x64xbf16>
    %451 = tpu.concatenate %450, %90 in 0 : vector<48x64xbf16>, vector<8x64xbf16> -> vector<56x64xbf16>
    %c336_368 = arith.constant 336 : index
    %c128_369 = arith.constant 128 : index
    %452 = vector.load %arg8[%c336_368, %c128_369] : memref<392x256xbf16, #tpu.memory_space<vmem>>, vector<56x64xbf16>
    %c344_370 = arith.constant 344 : index
    %c128_371 = arith.constant 128 : index
    %453 = vector.load %arg8[%c344_370, %c128_371] : memref<392x256xbf16, #tpu.memory_space<vmem>>, vector<48x64xbf16>
    %454 = tpu.concatenate %453, %90 in 0 : vector<48x64xbf16>, vector<8x64xbf16> -> vector<56x64xbf16>
    %c280_372 = arith.constant 280 : index
    %c192_373 = arith.constant 192 : index
    %455 = vector.load %arg8[%c280_372, %c192_373] : memref<392x256xbf16, #tpu.memory_space<vmem>>, vector<48x64xbf16>
    %456 = tpu.concatenate %90, %455 in 0 : vector<8x64xbf16>, vector<48x64xbf16> -> vector<56x64xbf16>
    %c280_374 = arith.constant 280 : index
    %c192_375 = arith.constant 192 : index
    %457 = vector.load %arg8[%c280_374, %c192_375] : memref<392x256xbf16, #tpu.memory_space<vmem>>, vector<56x64xbf16>
    %c336_376 = arith.constant 336 : index
    %c192_377 = arith.constant 192 : index
    %458 = vector.load %arg8[%c336_376, %c192_377] : memref<392x256xbf16, #tpu.memory_space<vmem>>, vector<48x64xbf16>
    %459 = tpu.concatenate %90, %458 in 0 : vector<8x64xbf16>, vector<48x64xbf16> -> vector<56x64xbf16>
    %c336_378 = arith.constant 336 : index
    %c192_379 = arith.constant 192 : index
    %460 = vector.load %arg8[%c336_378, %c192_379] : memref<392x256xbf16, #tpu.memory_space<vmem>>, vector<56x64xbf16>
    %cst_380 = arith.constant 0.000000e+00 : f32
    %461 = vector.broadcast %cst_380 : f32 to vector<56x128xf32>
    %462 = tpu.concatenate %439, %441, %442, %443 in 1 : vector<56x64xbf16>, vector<56x64xbf16>, vector<56x64xbf16>, vector<56x64xbf16> -> vector<56x256xbf16>
    %c0_381 = arith.constant 0 : index
    %c0_382 = arith.constant 0 : index
    %c0_383 = arith.constant 0 : index
    %463 = vector.load %arg4[%c0_381, %c0_382, %c0_383] : memref<4x256x128xbf16, #tpu.memory_space<vmem>>, vector<1x256x128xbf16>
    %464 = vector.shape_cast %463 : vector<1x256x128xbf16> to vector<256x128xbf16>
    %cst_384 = arith.constant dense<0.000000e+00> : vector<56x128xf32>
    %465 = tpu.matmul %462, %464, %cst_384 {dimension_numbers = #tpu.dot_dimension_numbers<[1], [0], [0], [1], [0, 0, 1, 1], [], []>} : vector<56x256xbf16>, vector<256x128xbf16>, vector<56x128xf32> -> vector<56x128xf32>
    %466 = arith.addf %461, %465 : vector<56x128xf32>
    %467 = tpu.concatenate %445, %446, %447, %448 in 1 : vector<56x64xbf16>, vector<56x64xbf16>, vector<56x64xbf16>, vector<56x64xbf16> -> vector<56x256xbf16>
    %c1_385 = arith.constant 1 : index
    %c0_386 = arith.constant 0 : index
    %c0_387 = arith.constant 0 : index
    %468 = vector.load %arg4[%c1_385, %c0_386, %c0_387] : memref<4x256x128xbf16, #tpu.memory_space<vmem>>, vector<1x256x128xbf16>
    %469 = vector.shape_cast %468 : vector<1x256x128xbf16> to vector<256x128xbf16>
    %cst_388 = arith.constant dense<0.000000e+00> : vector<56x128xf32>
    %470 = tpu.matmul %467, %469, %cst_388 {dimension_numbers = #tpu.dot_dimension_numbers<[1], [0], [0], [1], [0, 0, 1, 1], [], []>} : vector<56x256xbf16>, vector<256x128xbf16>, vector<56x128xf32> -> vector<56x128xf32>
    %471 = arith.addf %466, %470 : vector<56x128xf32>
    %472 = tpu.concatenate %449, %451, %452, %454 in 1 : vector<56x64xbf16>, vector<56x64xbf16>, vector<56x64xbf16>, vector<56x64xbf16> -> vector<56x256xbf16>
    %c2_389 = arith.constant 2 : index
    %c0_390 = arith.constant 0 : index
    %c0_391 = arith.constant 0 : index
    %473 = vector.load %arg4[%c2_389, %c0_390, %c0_391] : memref<4x256x128xbf16, #tpu.memory_space<vmem>>, vector<1x256x128xbf16>
    %474 = vector.shape_cast %473 : vector<1x256x128xbf16> to vector<256x128xbf16>
    %cst_392 = arith.constant dense<0.000000e+00> : vector<56x128xf32>
    %475 = tpu.matmul %472, %474, %cst_392 {dimension_numbers = #tpu.dot_dimension_numbers<[1], [0], [0], [1], [0, 0, 1, 1], [], []>} : vector<56x256xbf16>, vector<256x128xbf16>, vector<56x128xf32> -> vector<56x128xf32>
    %476 = arith.addf %471, %475 : vector<56x128xf32>
    %477 = tpu.concatenate %456, %457, %459, %460 in 1 : vector<56x64xbf16>, vector<56x64xbf16>, vector<56x64xbf16>, vector<56x64xbf16> -> vector<56x256xbf16>
    %c3_393 = arith.constant 3 : index
    %c0_394 = arith.constant 0 : index
    %c0_395 = arith.constant 0 : index
    %478 = vector.load %arg4[%c3_393, %c0_394, %c0_395] : memref<4x256x128xbf16, #tpu.memory_space<vmem>>, vector<1x256x128xbf16>
    %479 = vector.shape_cast %478 : vector<1x256x128xbf16> to vector<256x128xbf16>
    %cst_396 = arith.constant dense<0.000000e+00> : vector<56x128xf32>
    %480 = tpu.matmul %477, %479, %cst_396 {dimension_numbers = #tpu.dot_dimension_numbers<[1], [0], [0], [1], [0, 0, 1, 1], [], []>} : vector<56x256xbf16>, vector<256x128xbf16>, vector<56x128xf32> -> vector<56x128xf32>
    %481 = arith.addf %476, %480 : vector<56x128xf32>
    %482 = vector.broadcast %2 : vector<1x128xf32> to vector<56x128xf32>
    %483 = arith.addf %481, %482 : vector<56x128xf32>
    %484 = arith.truncf %483 : vector<56x128xf32> to vector<56x128xbf16>
    %c336_397 = arith.constant 336 : index
    %c0_398 = arith.constant 0 : index
    %485 = vector.load %arg6[%c336_397, %c0_398] : memref<392x128xbf16, #tpu.memory_space<vmem>>, vector<56x128xbf16>
    tpu.vector_store %arg6[%c336_397, %c0_398], %484 {strides = array<i32>} : memref<392x128xbf16, #tpu.memory_space<vmem>>, vector<56x128xbf16>,
    %486 = vector.broadcast %89 : vector<56x1xf32> to vector<56x128xf32>
    %487 = arith.mulf %483, %486 : vector<56x128xf32>
    %cst_399 = arith.constant dense<0.000000e+00> : vector<128xf32>
    %488 = vector.multi_reduction <add>, %487, %cst_399 [0] : vector<56x128xf32> to vector<128xf32>
    %489 = vector.shape_cast %488 : vector<128xf32> to vector<1x128xf32>
    %490 = arith.addf %434, %489 : vector<1x128xf32>
    %491 = arith.mulf %487, %483 : vector<56x128xf32>
    %cst_400 = arith.constant dense<0.000000e+00> : vector<128xf32>
    %492 = vector.multi_reduction <add>, %491, %cst_400 [0] : vector<56x128xf32> to vector<128xf32>
    %493 = vector.shape_cast %492 : vector<128xf32> to vector<1x128xf32>
    %494 = arith.addf %438, %493 : vector<1x128xf32>
    %495 = tpu.concatenate %490, %494 in 0 : vector<1x128xf32>, vector<1x128xf32> -> vector<2x128xf32>
    %c0_401 = arith.constant 0 : index
    %c0_402 = arith.constant 0 : index
    %c0_403 = arith.constant 0 : index
    %496 = vector.load %arg7[%c0_401, %c0_402, %c0_403] : memref<1x2x128xf32, #tpu.memory_space<vmem>>, vector<1x2x128xf32>
    %497 = vector.shape_cast %496 : vector<1x2x128xf32> to vector<2x128xf32>
    %498 = vector.shape_cast %495 : vector<2x128xf32> to vector<1x2x128xf32>
    tpu.vector_store %arg7[%c0_401, %c0_402, %c0_403], %498 {strides = array<i32>} : memref<1x2x128xf32, #tpu.memory_space<vmem>>, vector<1x2x128xf32>,
    return
  }
  func.func @transform_0(%arg0: i32) -> (i32, i32) {
    %c0_i32 = arith.constant 0 : i32
    %c0_i32_0 = arith.constant 0 : i32
    return %arg0, %c0_i32 : i32, i32
  }
  func.func @transform_1(%arg0: i32) -> (i32, i32) {
    %c0_i32 = arith.constant 0 : i32
    %c0_i32_0 = arith.constant 0 : i32
    %c0_i32_1 = arith.constant 0 : i32
    return %c0_i32, %c0_i32_0 : i32, i32
  }
  func.func @transform_2(%arg0: i32) -> (i32, i32) {
    %c0_i32 = arith.constant 0 : i32
    %c0_i32_0 = arith.constant 0 : i32
    %c0_i32_1 = arith.constant 0 : i32
    return %c0_i32, %c0_i32_0 : i32, i32
  }
  func.func @transform_3(%arg0: i32) -> (i32, i32, i32) {
    %c0_i32 = arith.constant 0 : i32
    %c0_i32_0 = arith.constant 0 : i32
    %c0_i32_1 = arith.constant 0 : i32
    %c0_i32_2 = arith.constant 0 : i32
    return %c0_i32, %c0_i32_0, %c0_i32_1 : i32, i32, i32
  }
  func.func @transform_4(%arg0: i32) -> (i32, i32) {
    %c0_i32 = arith.constant 0 : i32
    %c0_i32_0 = arith.constant 0 : i32
    %c0_i32_1 = arith.constant 0 : i32
    return %c0_i32, %c0_i32_0 : i32, i32
  }
  func.func @transform_5(%arg0: i32) -> (i32, i32) {
    %c0_i32 = arith.constant 0 : i32
    %c0_i32_0 = arith.constant 0 : i32
    return %arg0, %c0_i32 : i32, i32
  }
  func.func @transform_6(%arg0: i32) -> (i32, i32, i32) {
    %c0_i32 = arith.constant 0 : i32
    %c0_i32_0 = arith.constant 0 : i32
    %c0_i32_1 = arith.constant 0 : i32
    return %arg0, %c0_i32, %c0_i32_0 : i32, i32, i32
  }
}

module attributes {stable_mosaic.version = 11 : i64} {
  func.func @_bn_head_kernel(%arg0: i32, %arg1: memref<392x128xbf16, #tpu.memory_space<vmem>>, %arg2: memref<1x128xf32, #tpu.memory_space<vmem>>, %arg3: memref<1x128xf32, #tpu.memory_space<vmem>>, %arg4: memref<49x128xf32, #tpu.memory_space<vmem>>, %arg5: memref<1x1xf32, #tpu.memory_space<vmem>>, %arg6: memref<8x1xf32, #tpu.memory_space<vmem>>) attributes {dimension_semantics = [#tpu.dimension_semantics<parallel>], iteration_bounds = array<i64: 1>, scalar_prefetch = 0 : i64, scratch_operands = 0 : i64, tpu.core_type = #tpu.core_type<tc>, window_params = [{transform_indices = @transform_0, window_bounds = array<i64: 392, 128>}, {pipeline_mode = #tpu.pipeline_mode<synchronous>, transform_indices = @transform_1, window_bounds = array<i64: 1, 128>}, {pipeline_mode = #tpu.pipeline_mode<synchronous>, transform_indices = @transform_2, window_bounds = array<i64: 1, 128>}, {pipeline_mode = #tpu.pipeline_mode<synchronous>, transform_indices = @transform_3, window_bounds = array<i64: 49, 128>}, {pipeline_mode = #tpu.pipeline_mode<synchronous>, transform_indices = @transform_4, window_bounds = array<i64: 1, 1>}, {transform_indices = @transform_5, window_bounds = array<i64: 8, 1>}]} {
    %c0 = arith.constant 0 : index
    %c0_0 = arith.constant 0 : index
    %0 = vector.load %arg2[%c0, %c0_0] : memref<1x128xf32, #tpu.memory_space<vmem>>, vector<1x128xf32>
    %c0_1 = arith.constant 0 : index
    %c0_2 = arith.constant 0 : index
    %1 = vector.load %arg3[%c0_1, %c0_2] : memref<1x128xf32, #tpu.memory_space<vmem>>, vector<1x128xf32>
    %cst = arith.constant 0.000000e+00 : f32
    %2 = vector.broadcast %cst : f32 to vector<8x128xf32>
    %c0_3 = arith.constant 0 : index
    %c0_4 = arith.constant 0 : index
    %3 = vector.load %arg1[%c0_3, %c0_4] : memref<392x128xbf16, #tpu.memory_space<vmem>>, vector<8x128xbf16>
    %4 = arith.extf %3 : vector<8x128xbf16> to vector<8x128xf32>
    %5 = vector.broadcast %0 : vector<1x128xf32> to vector<8x128xf32>
    %6 = arith.mulf %4, %5 : vector<8x128xf32>
    %7 = vector.broadcast %1 : vector<1x128xf32> to vector<8x128xf32>
    %8 = arith.addf %6, %7 : vector<8x128xf32>
    %cst_5 = arith.constant 0.000000e+00 : f32
    %9 = vector.broadcast %cst_5 : f32 to vector<8x128xf32>
    %10 = arith.cmpf oge, %8, %9 : vector<8x128xf32>
    %cst_6 = arith.constant 2.000000e-01 : f32
    %11 = vector.broadcast %cst_6 : f32 to vector<8x128xf32>
    %12 = arith.mulf %11, %8 : vector<8x128xf32>
    %13 = arith.select %10, %8, %12 : vector<8x128xi1>, vector<8x128xf32>
    %c0_7 = arith.constant 0 : index
    %c0_8 = arith.constant 0 : index
    %14 = vector.load %arg4[%c0_7, %c0_8] : memref<49x128xf32, #tpu.memory_space<vmem>>, vector<1x128xf32>
    %15 = vector.broadcast %14 : vector<1x128xf32> to vector<8x128xf32>
    %16 = arith.mulf %13, %15 : vector<8x128xf32>
    %17 = arith.addf %2, %16 : vector<8x128xf32>
    %c8 = arith.constant 8 : index
    %c0_9 = arith.constant 0 : index
    %18 = vector.load %arg1[%c8, %c0_9] : memref<392x128xbf16, #tpu.memory_space<vmem>>, vector<8x128xbf16>
    %19 = arith.extf %18 : vector<8x128xbf16> to vector<8x128xf32>
    %20 = vector.broadcast %0 : vector<1x128xf32> to vector<8x128xf32>
    %21 = arith.mulf %19, %20 : vector<8x128xf32>
    %22 = vector.broadcast %1 : vector<1x128xf32> to vector<8x128xf32>
    %23 = arith.addf %21, %22 : vector<8x128xf32>
    %cst_10 = arith.constant 0.000000e+00 : f32
    %24 = vector.broadcast %cst_10 : f32 to vector<8x128xf32>
    %25 = arith.cmpf oge, %23, %24 : vector<8x128xf32>
    %cst_11 = arith.constant 2.000000e-01 : f32
    %26 = vector.broadcast %cst_11 : f32 to vector<8x128xf32>
    %27 = arith.mulf %26, %23 : vector<8x128xf32>
    %28 = arith.select %25, %23, %27 : vector<8x128xi1>, vector<8x128xf32>
    %c1 = arith.constant 1 : index
    %c0_12 = arith.constant 0 : index
    %29 = vector.load %arg4[%c1, %c0_12] : memref<49x128xf32, #tpu.memory_space<vmem>>, vector<1x128xf32>
    %30 = vector.broadcast %29 : vector<1x128xf32> to vector<8x128xf32>
    %31 = arith.mulf %28, %30 : vector<8x128xf32>
    %32 = arith.addf %17, %31 : vector<8x128xf32>
    %c16 = arith.constant 16 : index
    %c0_13 = arith.constant 0 : index
    %33 = vector.load %arg1[%c16, %c0_13] : memref<392x128xbf16, #tpu.memory_space<vmem>>, vector<8x128xbf16>
    %34 = arith.extf %33 : vector<8x128xbf16> to vector<8x128xf32>
    %35 = vector.broadcast %0 : vector<1x128xf32> to vector<8x128xf32>
    %36 = arith.mulf %34, %35 : vector<8x128xf32>
    %37 = vector.broadcast %1 : vector<1x128xf32> to vector<8x128xf32>
    %38 = arith.addf %36, %37 : vector<8x128xf32>
    %cst_14 = arith.constant 0.000000e+00 : f32
    %39 = vector.broadcast %cst_14 : f32 to vector<8x128xf32>
    %40 = arith.cmpf oge, %38, %39 : vector<8x128xf32>
    %cst_15 = arith.constant 2.000000e-01 : f32
    %41 = vector.broadcast %cst_15 : f32 to vector<8x128xf32>
    %42 = arith.mulf %41, %38 : vector<8x128xf32>
    %43 = arith.select %40, %38, %42 : vector<8x128xi1>, vector<8x128xf32>
    %c2 = arith.constant 2 : index
    %c0_16 = arith.constant 0 : index
    %44 = vector.load %arg4[%c2, %c0_16] : memref<49x128xf32, #tpu.memory_space<vmem>>, vector<1x128xf32>
    %45 = vector.broadcast %44 : vector<1x128xf32> to vector<8x128xf32>
    %46 = arith.mulf %43, %45 : vector<8x128xf32>
    %47 = arith.addf %32, %46 : vector<8x128xf32>
    %c24 = arith.constant 24 : index
    %c0_17 = arith.constant 0 : index
    %48 = vector.load %arg1[%c24, %c0_17] : memref<392x128xbf16, #tpu.memory_space<vmem>>, vector<8x128xbf16>
    %49 = arith.extf %48 : vector<8x128xbf16> to vector<8x128xf32>
    %50 = vector.broadcast %0 : vector<1x128xf32> to vector<8x128xf32>
    %51 = arith.mulf %49, %50 : vector<8x128xf32>
    %52 = vector.broadcast %1 : vector<1x128xf32> to vector<8x128xf32>
    %53 = arith.addf %51, %52 : vector<8x128xf32>
    %cst_18 = arith.constant 0.000000e+00 : f32
    %54 = vector.broadcast %cst_18 : f32 to vector<8x128xf32>
    %55 = arith.cmpf oge, %53, %54 : vector<8x128xf32>
    %cst_19 = arith.constant 2.000000e-01 : f32
    %56 = vector.broadcast %cst_19 : f32 to vector<8x128xf32>
    %57 = arith.mulf %56, %53 : vector<8x128xf32>
    %58 = arith.select %55, %53, %57 : vector<8x128xi1>, vector<8x128xf32>
    %c3 = arith.constant 3 : index
    %c0_20 = arith.constant 0 : index
    %59 = vector.load %arg4[%c3, %c0_20] : memref<49x128xf32, #tpu.memory_space<vmem>>, vector<1x128xf32>
    %60 = vector.broadcast %59 : vector<1x128xf32> to vector<8x128xf32>
    %61 = arith.mulf %58, %60 : vector<8x128xf32>
    %62 = arith.addf %47, %61 : vector<8x128xf32>
    %c32 = arith.constant 32 : index
    %c0_21 = arith.constant 0 : index
    %63 = vector.load %arg1[%c32, %c0_21] : memref<392x128xbf16, #tpu.memory_space<vmem>>, vector<8x128xbf16>
    %64 = arith.extf %63 : vector<8x128xbf16> to vector<8x128xf32>
    %65 = vector.broadcast %0 : vector<1x128xf32> to vector<8x128xf32>
    %66 = arith.mulf %64, %65 : vector<8x128xf32>
    %67 = vector.broadcast %1 : vector<1x128xf32> to vector<8x128xf32>
    %68 = arith.addf %66, %67 : vector<8x128xf32>
    %cst_22 = arith.constant 0.000000e+00 : f32
    %69 = vector.broadcast %cst_22 : f32 to vector<8x128xf32>
    %70 = arith.cmpf oge, %68, %69 : vector<8x128xf32>
    %cst_23 = arith.constant 2.000000e-01 : f32
    %71 = vector.broadcast %cst_23 : f32 to vector<8x128xf32>
    %72 = arith.mulf %71, %68 : vector<8x128xf32>
    %73 = arith.select %70, %68, %72 : vector<8x128xi1>, vector<8x128xf32>
    %c4 = arith.constant 4 : index
    %c0_24 = arith.constant 0 : index
    %74 = vector.load %arg4[%c4, %c0_24] : memref<49x128xf32, #tpu.memory_space<vmem>>, vector<1x128xf32>
    %75 = vector.broadcast %74 : vector<1x128xf32> to vector<8x128xf32>
    %76 = arith.mulf %73, %75 : vector<8x128xf32>
    %77 = arith.addf %62, %76 : vector<8x128xf32>
    %c40 = arith.constant 40 : index
    %c0_25 = arith.constant 0 : index
    %78 = vector.load %arg1[%c40, %c0_25] : memref<392x128xbf16, #tpu.memory_space<vmem>>, vector<8x128xbf16>
    %79 = arith.extf %78 : vector<8x128xbf16> to vector<8x128xf32>
    %80 = vector.broadcast %0 : vector<1x128xf32> to vector<8x128xf32>
    %81 = arith.mulf %79, %80 : vector<8x128xf32>
    %82 = vector.broadcast %1 : vector<1x128xf32> to vector<8x128xf32>
    %83 = arith.addf %81, %82 : vector<8x128xf32>
    %cst_26 = arith.constant 0.000000e+00 : f32
    %84 = vector.broadcast %cst_26 : f32 to vector<8x128xf32>
    %85 = arith.cmpf oge, %83, %84 : vector<8x128xf32>
    %cst_27 = arith.constant 2.000000e-01 : f32
    %86 = vector.broadcast %cst_27 : f32 to vector<8x128xf32>
    %87 = arith.mulf %86, %83 : vector<8x128xf32>
    %88 = arith.select %85, %83, %87 : vector<8x128xi1>, vector<8x128xf32>
    %c5 = arith.constant 5 : index
    %c0_28 = arith.constant 0 : index
    %89 = vector.load %arg4[%c5, %c0_28] : memref<49x128xf32, #tpu.memory_space<vmem>>, vector<1x128xf32>
    %90 = vector.broadcast %89 : vector<1x128xf32> to vector<8x128xf32>
    %91 = arith.mulf %88, %90 : vector<8x128xf32>
    %92 = arith.addf %77, %91 : vector<8x128xf32>
    %c48 = arith.constant 48 : index
    %c0_29 = arith.constant 0 : index
    %93 = vector.load %arg1[%c48, %c0_29] : memref<392x128xbf16, #tpu.memory_space<vmem>>, vector<8x128xbf16>
    %94 = arith.extf %93 : vector<8x128xbf16> to vector<8x128xf32>
    %95 = vector.broadcast %0 : vector<1x128xf32> to vector<8x128xf32>
    %96 = arith.mulf %94, %95 : vector<8x128xf32>
    %97 = vector.broadcast %1 : vector<1x128xf32> to vector<8x128xf32>
    %98 = arith.addf %96, %97 : vector<8x128xf32>
    %cst_30 = arith.constant 0.000000e+00 : f32
    %99 = vector.broadcast %cst_30 : f32 to vector<8x128xf32>
    %100 = arith.cmpf oge, %98, %99 : vector<8x128xf32>
    %cst_31 = arith.constant 2.000000e-01 : f32
    %101 = vector.broadcast %cst_31 : f32 to vector<8x128xf32>
    %102 = arith.mulf %101, %98 : vector<8x128xf32>
    %103 = arith.select %100, %98, %102 : vector<8x128xi1>, vector<8x128xf32>
    %c6 = arith.constant 6 : index
    %c0_32 = arith.constant 0 : index
    %104 = vector.load %arg4[%c6, %c0_32] : memref<49x128xf32, #tpu.memory_space<vmem>>, vector<1x128xf32>
    %105 = vector.broadcast %104 : vector<1x128xf32> to vector<8x128xf32>
    %106 = arith.mulf %103, %105 : vector<8x128xf32>
    %107 = arith.addf %92, %106 : vector<8x128xf32>
    %c56 = arith.constant 56 : index
    %c0_33 = arith.constant 0 : index
    %108 = vector.load %arg1[%c56, %c0_33] : memref<392x128xbf16, #tpu.memory_space<vmem>>, vector<8x128xbf16>
    %109 = arith.extf %108 : vector<8x128xbf16> to vector<8x128xf32>
    %110 = vector.broadcast %0 : vector<1x128xf32> to vector<8x128xf32>
    %111 = arith.mulf %109, %110 : vector<8x128xf32>
    %112 = vector.broadcast %1 : vector<1x128xf32> to vector<8x128xf32>
    %113 = arith.addf %111, %112 : vector<8x128xf32>
    %cst_34 = arith.constant 0.000000e+00 : f32
    %114 = vector.broadcast %cst_34 : f32 to vector<8x128xf32>
    %115 = arith.cmpf oge, %113, %114 : vector<8x128xf32>
    %cst_35 = arith.constant 2.000000e-01 : f32
    %116 = vector.broadcast %cst_35 : f32 to vector<8x128xf32>
    %117 = arith.mulf %116, %113 : vector<8x128xf32>
    %118 = arith.select %115, %113, %117 : vector<8x128xi1>, vector<8x128xf32>
    %c7 = arith.constant 7 : index
    %c0_36 = arith.constant 0 : index
    %119 = vector.load %arg4[%c7, %c0_36] : memref<49x128xf32, #tpu.memory_space<vmem>>, vector<1x128xf32>
    %120 = vector.broadcast %119 : vector<1x128xf32> to vector<8x128xf32>
    %121 = arith.mulf %118, %120 : vector<8x128xf32>
    %122 = arith.addf %107, %121 : vector<8x128xf32>
    %c64 = arith.constant 64 : index
    %c0_37 = arith.constant 0 : index
    %123 = vector.load %arg1[%c64, %c0_37] : memref<392x128xbf16, #tpu.memory_space<vmem>>, vector<8x128xbf16>
    %124 = arith.extf %123 : vector<8x128xbf16> to vector<8x128xf32>
    %125 = vector.broadcast %0 : vector<1x128xf32> to vector<8x128xf32>
    %126 = arith.mulf %124, %125 : vector<8x128xf32>
    %127 = vector.broadcast %1 : vector<1x128xf32> to vector<8x128xf32>
    %128 = arith.addf %126, %127 : vector<8x128xf32>
    %cst_38 = arith.constant 0.000000e+00 : f32
    %129 = vector.broadcast %cst_38 : f32 to vector<8x128xf32>
    %130 = arith.cmpf oge, %128, %129 : vector<8x128xf32>
    %cst_39 = arith.constant 2.000000e-01 : f32
    %131 = vector.broadcast %cst_39 : f32 to vector<8x128xf32>
    %132 = arith.mulf %131, %128 : vector<8x128xf32>
    %133 = arith.select %130, %128, %132 : vector<8x128xi1>, vector<8x128xf32>
    %c8_40 = arith.constant 8 : index
    %c0_41 = arith.constant 0 : index
    %134 = vector.load %arg4[%c8_40, %c0_41] : memref<49x128xf32, #tpu.memory_space<vmem>>, vector<1x128xf32>
    %135 = vector.broadcast %134 : vector<1x128xf32> to vector<8x128xf32>
    %136 = arith.mulf %133, %135 : vector<8x128xf32>
    %137 = arith.addf %122, %136 : vector<8x128xf32>
    %c72 = arith.constant 72 : index
    %c0_42 = arith.constant 0 : index
    %138 = vector.load %arg1[%c72, %c0_42] : memref<392x128xbf16, #tpu.memory_space<vmem>>, vector<8x128xbf16>
    %139 = arith.extf %138 : vector<8x128xbf16> to vector<8x128xf32>
    %140 = vector.broadcast %0 : vector<1x128xf32> to vector<8x128xf32>
    %141 = arith.mulf %139, %140 : vector<8x128xf32>
    %142 = vector.broadcast %1 : vector<1x128xf32> to vector<8x128xf32>
    %143 = arith.addf %141, %142 : vector<8x128xf32>
    %cst_43 = arith.constant 0.000000e+00 : f32
    %144 = vector.broadcast %cst_43 : f32 to vector<8x128xf32>
    %145 = arith.cmpf oge, %143, %144 : vector<8x128xf32>
    %cst_44 = arith.constant 2.000000e-01 : f32
    %146 = vector.broadcast %cst_44 : f32 to vector<8x128xf32>
    %147 = arith.mulf %146, %143 : vector<8x128xf32>
    %148 = arith.select %145, %143, %147 : vector<8x128xi1>, vector<8x128xf32>
    %c9 = arith.constant 9 : index
    %c0_45 = arith.constant 0 : index
    %149 = vector.load %arg4[%c9, %c0_45] : memref<49x128xf32, #tpu.memory_space<vmem>>, vector<1x128xf32>
    %150 = vector.broadcast %149 : vector<1x128xf32> to vector<8x128xf32>
    %151 = arith.mulf %148, %150 : vector<8x128xf32>
    %152 = arith.addf %137, %151 : vector<8x128xf32>
    %c80 = arith.constant 80 : index
    %c0_46 = arith.constant 0 : index
    %153 = vector.load %arg1[%c80, %c0_46] : memref<392x128xbf16, #tpu.memory_space<vmem>>, vector<8x128xbf16>
    %154 = arith.extf %153 : vector<8x128xbf16> to vector<8x128xf32>
    %155 = vector.broadcast %0 : vector<1x128xf32> to vector<8x128xf32>
    %156 = arith.mulf %154, %155 : vector<8x128xf32>
    %157 = vector.broadcast %1 : vector<1x128xf32> to vector<8x128xf32>
    %158 = arith.addf %156, %157 : vector<8x128xf32>
    %cst_47 = arith.constant 0.000000e+00 : f32
    %159 = vector.broadcast %cst_47 : f32 to vector<8x128xf32>
    %160 = arith.cmpf oge, %158, %159 : vector<8x128xf32>
    %cst_48 = arith.constant 2.000000e-01 : f32
    %161 = vector.broadcast %cst_48 : f32 to vector<8x128xf32>
    %162 = arith.mulf %161, %158 : vector<8x128xf32>
    %163 = arith.select %160, %158, %162 : vector<8x128xi1>, vector<8x128xf32>
    %c10 = arith.constant 10 : index
    %c0_49 = arith.constant 0 : index
    %164 = vector.load %arg4[%c10, %c0_49] : memref<49x128xf32, #tpu.memory_space<vmem>>, vector<1x128xf32>
    %165 = vector.broadcast %164 : vector<1x128xf32> to vector<8x128xf32>
    %166 = arith.mulf %163, %165 : vector<8x128xf32>
    %167 = arith.addf %152, %166 : vector<8x128xf32>
    %c88 = arith.constant 88 : index
    %c0_50 = arith.constant 0 : index
    %168 = vector.load %arg1[%c88, %c0_50] : memref<392x128xbf16, #tpu.memory_space<vmem>>, vector<8x128xbf16>
    %169 = arith.extf %168 : vector<8x128xbf16> to vector<8x128xf32>
    %170 = vector.broadcast %0 : vector<1x128xf32> to vector<8x128xf32>
    %171 = arith.mulf %169, %170 : vector<8x128xf32>
    %172 = vector.broadcast %1 : vector<1x128xf32> to vector<8x128xf32>
    %173 = arith.addf %171, %172 : vector<8x128xf32>
    %cst_51 = arith.constant 0.000000e+00 : f32
    %174 = vector.broadcast %cst_51 : f32 to vector<8x128xf32>
    %175 = arith.cmpf oge, %173, %174 : vector<8x128xf32>
    %cst_52 = arith.constant 2.000000e-01 : f32
    %176 = vector.broadcast %cst_52 : f32 to vector<8x128xf32>
    %177 = arith.mulf %176, %173 : vector<8x128xf32>
    %178 = arith.select %175, %173, %177 : vector<8x128xi1>, vector<8x128xf32>
    %c11 = arith.constant 11 : index
    %c0_53 = arith.constant 0 : index
    %179 = vector.load %arg4[%c11, %c0_53] : memref<49x128xf32, #tpu.memory_space<vmem>>, vector<1x128xf32>
    %180 = vector.broadcast %179 : vector<1x128xf32> to vector<8x128xf32>
    %181 = arith.mulf %178, %180 : vector<8x128xf32>
    %182 = arith.addf %167, %181 : vector<8x128xf32>
    %c96 = arith.constant 96 : index
    %c0_54 = arith.constant 0 : index
    %183 = vector.load %arg1[%c96, %c0_54] : memref<392x128xbf16, #tpu.memory_space<vmem>>, vector<8x128xbf16>
    %184 = arith.extf %183 : vector<8x128xbf16> to vector<8x128xf32>
    %185 = vector.broadcast %0 : vector<1x128xf32> to vector<8x128xf32>
    %186 = arith.mulf %184, %185 : vector<8x128xf32>
    %187 = vector.broadcast %1 : vector<1x128xf32> to vector<8x128xf32>
    %188 = arith.addf %186, %187 : vector<8x128xf32>
    %cst_55 = arith.constant 0.000000e+00 : f32
    %189 = vector.broadcast %cst_55 : f32 to vector<8x128xf32>
    %190 = arith.cmpf oge, %188, %189 : vector<8x128xf32>
    %cst_56 = arith.constant 2.000000e-01 : f32
    %191 = vector.broadcast %cst_56 : f32 to vector<8x128xf32>
    %192 = arith.mulf %191, %188 : vector<8x128xf32>
    %193 = arith.select %190, %188, %192 : vector<8x128xi1>, vector<8x128xf32>
    %c12 = arith.constant 12 : index
    %c0_57 = arith.constant 0 : index
    %194 = vector.load %arg4[%c12, %c0_57] : memref<49x128xf32, #tpu.memory_space<vmem>>, vector<1x128xf32>
    %195 = vector.broadcast %194 : vector<1x128xf32> to vector<8x128xf32>
    %196 = arith.mulf %193, %195 : vector<8x128xf32>
    %197 = arith.addf %182, %196 : vector<8x128xf32>
    %c104 = arith.constant 104 : index
    %c0_58 = arith.constant 0 : index
    %198 = vector.load %arg1[%c104, %c0_58] : memref<392x128xbf16, #tpu.memory_space<vmem>>, vector<8x128xbf16>
    %199 = arith.extf %198 : vector<8x128xbf16> to vector<8x128xf32>
    %200 = vector.broadcast %0 : vector<1x128xf32> to vector<8x128xf32>
    %201 = arith.mulf %199, %200 : vector<8x128xf32>
    %202 = vector.broadcast %1 : vector<1x128xf32> to vector<8x128xf32>
    %203 = arith.addf %201, %202 : vector<8x128xf32>
    %cst_59 = arith.constant 0.000000e+00 : f32
    %204 = vector.broadcast %cst_59 : f32 to vector<8x128xf32>
    %205 = arith.cmpf oge, %203, %204 : vector<8x128xf32>
    %cst_60 = arith.constant 2.000000e-01 : f32
    %206 = vector.broadcast %cst_60 : f32 to vector<8x128xf32>
    %207 = arith.mulf %206, %203 : vector<8x128xf32>
    %208 = arith.select %205, %203, %207 : vector<8x128xi1>, vector<8x128xf32>
    %c13 = arith.constant 13 : index
    %c0_61 = arith.constant 0 : index
    %209 = vector.load %arg4[%c13, %c0_61] : memref<49x128xf32, #tpu.memory_space<vmem>>, vector<1x128xf32>
    %210 = vector.broadcast %209 : vector<1x128xf32> to vector<8x128xf32>
    %211 = arith.mulf %208, %210 : vector<8x128xf32>
    %212 = arith.addf %197, %211 : vector<8x128xf32>
    %c112 = arith.constant 112 : index
    %c0_62 = arith.constant 0 : index
    %213 = vector.load %arg1[%c112, %c0_62] : memref<392x128xbf16, #tpu.memory_space<vmem>>, vector<8x128xbf16>
    %214 = arith.extf %213 : vector<8x128xbf16> to vector<8x128xf32>
    %215 = vector.broadcast %0 : vector<1x128xf32> to vector<8x128xf32>
    %216 = arith.mulf %214, %215 : vector<8x128xf32>
    %217 = vector.broadcast %1 : vector<1x128xf32> to vector<8x128xf32>
    %218 = arith.addf %216, %217 : vector<8x128xf32>
    %cst_63 = arith.constant 0.000000e+00 : f32
    %219 = vector.broadcast %cst_63 : f32 to vector<8x128xf32>
    %220 = arith.cmpf oge, %218, %219 : vector<8x128xf32>
    %cst_64 = arith.constant 2.000000e-01 : f32
    %221 = vector.broadcast %cst_64 : f32 to vector<8x128xf32>
    %222 = arith.mulf %221, %218 : vector<8x128xf32>
    %223 = arith.select %220, %218, %222 : vector<8x128xi1>, vector<8x128xf32>
    %c14 = arith.constant 14 : index
    %c0_65 = arith.constant 0 : index
    %224 = vector.load %arg4[%c14, %c0_65] : memref<49x128xf32, #tpu.memory_space<vmem>>, vector<1x128xf32>
    %225 = vector.broadcast %224 : vector<1x128xf32> to vector<8x128xf32>
    %226 = arith.mulf %223, %225 : vector<8x128xf32>
    %227 = arith.addf %212, %226 : vector<8x128xf32>
    %c120 = arith.constant 120 : index
    %c0_66 = arith.constant 0 : index
    %228 = vector.load %arg1[%c120, %c0_66] : memref<392x128xbf16, #tpu.memory_space<vmem>>, vector<8x128xbf16>
    %229 = arith.extf %228 : vector<8x128xbf16> to vector<8x128xf32>
    %230 = vector.broadcast %0 : vector<1x128xf32> to vector<8x128xf32>
    %231 = arith.mulf %229, %230 : vector<8x128xf32>
    %232 = vector.broadcast %1 : vector<1x128xf32> to vector<8x128xf32>
    %233 = arith.addf %231, %232 : vector<8x128xf32>
    %cst_67 = arith.constant 0.000000e+00 : f32
    %234 = vector.broadcast %cst_67 : f32 to vector<8x128xf32>
    %235 = arith.cmpf oge, %233, %234 : vector<8x128xf32>
    %cst_68 = arith.constant 2.000000e-01 : f32
    %236 = vector.broadcast %cst_68 : f32 to vector<8x128xf32>
    %237 = arith.mulf %236, %233 : vector<8x128xf32>
    %238 = arith.select %235, %233, %237 : vector<8x128xi1>, vector<8x128xf32>
    %c15 = arith.constant 15 : index
    %c0_69 = arith.constant 0 : index
    %239 = vector.load %arg4[%c15, %c0_69] : memref<49x128xf32, #tpu.memory_space<vmem>>, vector<1x128xf32>
    %240 = vector.broadcast %239 : vector<1x128xf32> to vector<8x128xf32>
    %241 = arith.mulf %238, %240 : vector<8x128xf32>
    %242 = arith.addf %227, %241 : vector<8x128xf32>
    %c128 = arith.constant 128 : index
    %c0_70 = arith.constant 0 : index
    %243 = vector.load %arg1[%c128, %c0_70] : memref<392x128xbf16, #tpu.memory_space<vmem>>, vector<8x128xbf16>
    %244 = arith.extf %243 : vector<8x128xbf16> to vector<8x128xf32>
    %245 = vector.broadcast %0 : vector<1x128xf32> to vector<8x128xf32>
    %246 = arith.mulf %244, %245 : vector<8x128xf32>
    %247 = vector.broadcast %1 : vector<1x128xf32> to vector<8x128xf32>
    %248 = arith.addf %246, %247 : vector<8x128xf32>
    %cst_71 = arith.constant 0.000000e+00 : f32
    %249 = vector.broadcast %cst_71 : f32 to vector<8x128xf32>
    %250 = arith.cmpf oge, %248, %249 : vector<8x128xf32>
    %cst_72 = arith.constant 2.000000e-01 : f32
    %251 = vector.broadcast %cst_72 : f32 to vector<8x128xf32>
    %252 = arith.mulf %251, %248 : vector<8x128xf32>
    %253 = arith.select %250, %248, %252 : vector<8x128xi1>, vector<8x128xf32>
    %c16_73 = arith.constant 16 : index
    %c0_74 = arith.constant 0 : index
    %254 = vector.load %arg4[%c16_73, %c0_74] : memref<49x128xf32, #tpu.memory_space<vmem>>, vector<1x128xf32>
    %255 = vector.broadcast %254 : vector<1x128xf32> to vector<8x128xf32>
    %256 = arith.mulf %253, %255 : vector<8x128xf32>
    %257 = arith.addf %242, %256 : vector<8x128xf32>
    %c136 = arith.constant 136 : index
    %c0_75 = arith.constant 0 : index
    %258 = vector.load %arg1[%c136, %c0_75] : memref<392x128xbf16, #tpu.memory_space<vmem>>, vector<8x128xbf16>
    %259 = arith.extf %258 : vector<8x128xbf16> to vector<8x128xf32>
    %260 = vector.broadcast %0 : vector<1x128xf32> to vector<8x128xf32>
    %261 = arith.mulf %259, %260 : vector<8x128xf32>
    %262 = vector.broadcast %1 : vector<1x128xf32> to vector<8x128xf32>
    %263 = arith.addf %261, %262 : vector<8x128xf32>
    %cst_76 = arith.constant 0.000000e+00 : f32
    %264 = vector.broadcast %cst_76 : f32 to vector<8x128xf32>
    %265 = arith.cmpf oge, %263, %264 : vector<8x128xf32>
    %cst_77 = arith.constant 2.000000e-01 : f32
    %266 = vector.broadcast %cst_77 : f32 to vector<8x128xf32>
    %267 = arith.mulf %266, %263 : vector<8x128xf32>
    %268 = arith.select %265, %263, %267 : vector<8x128xi1>, vector<8x128xf32>
    %c17 = arith.constant 17 : index
    %c0_78 = arith.constant 0 : index
    %269 = vector.load %arg4[%c17, %c0_78] : memref<49x128xf32, #tpu.memory_space<vmem>>, vector<1x128xf32>
    %270 = vector.broadcast %269 : vector<1x128xf32> to vector<8x128xf32>
    %271 = arith.mulf %268, %270 : vector<8x128xf32>
    %272 = arith.addf %257, %271 : vector<8x128xf32>
    %c144 = arith.constant 144 : index
    %c0_79 = arith.constant 0 : index
    %273 = vector.load %arg1[%c144, %c0_79] : memref<392x128xbf16, #tpu.memory_space<vmem>>, vector<8x128xbf16>
    %274 = arith.extf %273 : vector<8x128xbf16> to vector<8x128xf32>
    %275 = vector.broadcast %0 : vector<1x128xf32> to vector<8x128xf32>
    %276 = arith.mulf %274, %275 : vector<8x128xf32>
    %277 = vector.broadcast %1 : vector<1x128xf32> to vector<8x128xf32>
    %278 = arith.addf %276, %277 : vector<8x128xf32>
    %cst_80 = arith.constant 0.000000e+00 : f32
    %279 = vector.broadcast %cst_80 : f32 to vector<8x128xf32>
    %280 = arith.cmpf oge, %278, %279 : vector<8x128xf32>
    %cst_81 = arith.constant 2.000000e-01 : f32
    %281 = vector.broadcast %cst_81 : f32 to vector<8x128xf32>
    %282 = arith.mulf %281, %278 : vector<8x128xf32>
    %283 = arith.select %280, %278, %282 : vector<8x128xi1>, vector<8x128xf32>
    %c18 = arith.constant 18 : index
    %c0_82 = arith.constant 0 : index
    %284 = vector.load %arg4[%c18, %c0_82] : memref<49x128xf32, #tpu.memory_space<vmem>>, vector<1x128xf32>
    %285 = vector.broadcast %284 : vector<1x128xf32> to vector<8x128xf32>
    %286 = arith.mulf %283, %285 : vector<8x128xf32>
    %287 = arith.addf %272, %286 : vector<8x128xf32>
    %c152 = arith.constant 152 : index
    %c0_83 = arith.constant 0 : index
    %288 = vector.load %arg1[%c152, %c0_83] : memref<392x128xbf16, #tpu.memory_space<vmem>>, vector<8x128xbf16>
    %289 = arith.extf %288 : vector<8x128xbf16> to vector<8x128xf32>
    %290 = vector.broadcast %0 : vector<1x128xf32> to vector<8x128xf32>
    %291 = arith.mulf %289, %290 : vector<8x128xf32>
    %292 = vector.broadcast %1 : vector<1x128xf32> to vector<8x128xf32>
    %293 = arith.addf %291, %292 : vector<8x128xf32>
    %cst_84 = arith.constant 0.000000e+00 : f32
    %294 = vector.broadcast %cst_84 : f32 to vector<8x128xf32>
    %295 = arith.cmpf oge, %293, %294 : vector<8x128xf32>
    %cst_85 = arith.constant 2.000000e-01 : f32
    %296 = vector.broadcast %cst_85 : f32 to vector<8x128xf32>
    %297 = arith.mulf %296, %293 : vector<8x128xf32>
    %298 = arith.select %295, %293, %297 : vector<8x128xi1>, vector<8x128xf32>
    %c19 = arith.constant 19 : index
    %c0_86 = arith.constant 0 : index
    %299 = vector.load %arg4[%c19, %c0_86] : memref<49x128xf32, #tpu.memory_space<vmem>>, vector<1x128xf32>
    %300 = vector.broadcast %299 : vector<1x128xf32> to vector<8x128xf32>
    %301 = arith.mulf %298, %300 : vector<8x128xf32>
    %302 = arith.addf %287, %301 : vector<8x128xf32>
    %c160 = arith.constant 160 : index
    %c0_87 = arith.constant 0 : index
    %303 = vector.load %arg1[%c160, %c0_87] : memref<392x128xbf16, #tpu.memory_space<vmem>>, vector<8x128xbf16>
    %304 = arith.extf %303 : vector<8x128xbf16> to vector<8x128xf32>
    %305 = vector.broadcast %0 : vector<1x128xf32> to vector<8x128xf32>
    %306 = arith.mulf %304, %305 : vector<8x128xf32>
    %307 = vector.broadcast %1 : vector<1x128xf32> to vector<8x128xf32>
    %308 = arith.addf %306, %307 : vector<8x128xf32>
    %cst_88 = arith.constant 0.000000e+00 : f32
    %309 = vector.broadcast %cst_88 : f32 to vector<8x128xf32>
    %310 = arith.cmpf oge, %308, %309 : vector<8x128xf32>
    %cst_89 = arith.constant 2.000000e-01 : f32
    %311 = vector.broadcast %cst_89 : f32 to vector<8x128xf32>
    %312 = arith.mulf %311, %308 : vector<8x128xf32>
    %313 = arith.select %310, %308, %312 : vector<8x128xi1>, vector<8x128xf32>
    %c20 = arith.constant 20 : index
    %c0_90 = arith.constant 0 : index
    %314 = vector.load %arg4[%c20, %c0_90] : memref<49x128xf32, #tpu.memory_space<vmem>>, vector<1x128xf32>
    %315 = vector.broadcast %314 : vector<1x128xf32> to vector<8x128xf32>
    %316 = arith.mulf %313, %315 : vector<8x128xf32>
    %317 = arith.addf %302, %316 : vector<8x128xf32>
    %c168 = arith.constant 168 : index
    %c0_91 = arith.constant 0 : index
    %318 = vector.load %arg1[%c168, %c0_91] : memref<392x128xbf16, #tpu.memory_space<vmem>>, vector<8x128xbf16>
    %319 = arith.extf %318 : vector<8x128xbf16> to vector<8x128xf32>
    %320 = vector.broadcast %0 : vector<1x128xf32> to vector<8x128xf32>
    %321 = arith.mulf %319, %320 : vector<8x128xf32>
    %322 = vector.broadcast %1 : vector<1x128xf32> to vector<8x128xf32>
    %323 = arith.addf %321, %322 : vector<8x128xf32>
    %cst_92 = arith.constant 0.000000e+00 : f32
    %324 = vector.broadcast %cst_92 : f32 to vector<8x128xf32>
    %325 = arith.cmpf oge, %323, %324 : vector<8x128xf32>
    %cst_93 = arith.constant 2.000000e-01 : f32
    %326 = vector.broadcast %cst_93 : f32 to vector<8x128xf32>
    %327 = arith.mulf %326, %323 : vector<8x128xf32>
    %328 = arith.select %325, %323, %327 : vector<8x128xi1>, vector<8x128xf32>
    %c21 = arith.constant 21 : index
    %c0_94 = arith.constant 0 : index
    %329 = vector.load %arg4[%c21, %c0_94] : memref<49x128xf32, #tpu.memory_space<vmem>>, vector<1x128xf32>
    %330 = vector.broadcast %329 : vector<1x128xf32> to vector<8x128xf32>
    %331 = arith.mulf %328, %330 : vector<8x128xf32>
    %332 = arith.addf %317, %331 : vector<8x128xf32>
    %c176 = arith.constant 176 : index
    %c0_95 = arith.constant 0 : index
    %333 = vector.load %arg1[%c176, %c0_95] : memref<392x128xbf16, #tpu.memory_space<vmem>>, vector<8x128xbf16>
    %334 = arith.extf %333 : vector<8x128xbf16> to vector<8x128xf32>
    %335 = vector.broadcast %0 : vector<1x128xf32> to vector<8x128xf32>
    %336 = arith.mulf %334, %335 : vector<8x128xf32>
    %337 = vector.broadcast %1 : vector<1x128xf32> to vector<8x128xf32>
    %338 = arith.addf %336, %337 : vector<8x128xf32>
    %cst_96 = arith.constant 0.000000e+00 : f32
    %339 = vector.broadcast %cst_96 : f32 to vector<8x128xf32>
    %340 = arith.cmpf oge, %338, %339 : vector<8x128xf32>
    %cst_97 = arith.constant 2.000000e-01 : f32
    %341 = vector.broadcast %cst_97 : f32 to vector<8x128xf32>
    %342 = arith.mulf %341, %338 : vector<8x128xf32>
    %343 = arith.select %340, %338, %342 : vector<8x128xi1>, vector<8x128xf32>
    %c22 = arith.constant 22 : index
    %c0_98 = arith.constant 0 : index
    %344 = vector.load %arg4[%c22, %c0_98] : memref<49x128xf32, #tpu.memory_space<vmem>>, vector<1x128xf32>
    %345 = vector.broadcast %344 : vector<1x128xf32> to vector<8x128xf32>
    %346 = arith.mulf %343, %345 : vector<8x128xf32>
    %347 = arith.addf %332, %346 : vector<8x128xf32>
    %c184 = arith.constant 184 : index
    %c0_99 = arith.constant 0 : index
    %348 = vector.load %arg1[%c184, %c0_99] : memref<392x128xbf16, #tpu.memory_space<vmem>>, vector<8x128xbf16>
    %349 = arith.extf %348 : vector<8x128xbf16> to vector<8x128xf32>
    %350 = vector.broadcast %0 : vector<1x128xf32> to vector<8x128xf32>
    %351 = arith.mulf %349, %350 : vector<8x128xf32>
    %352 = vector.broadcast %1 : vector<1x128xf32> to vector<8x128xf32>
    %353 = arith.addf %351, %352 : vector<8x128xf32>
    %cst_100 = arith.constant 0.000000e+00 : f32
    %354 = vector.broadcast %cst_100 : f32 to vector<8x128xf32>
    %355 = arith.cmpf oge, %353, %354 : vector<8x128xf32>
    %cst_101 = arith.constant 2.000000e-01 : f32
    %356 = vector.broadcast %cst_101 : f32 to vector<8x128xf32>
    %357 = arith.mulf %356, %353 : vector<8x128xf32>
    %358 = arith.select %355, %353, %357 : vector<8x128xi1>, vector<8x128xf32>
    %c23 = arith.constant 23 : index
    %c0_102 = arith.constant 0 : index
    %359 = vector.load %arg4[%c23, %c0_102] : memref<49x128xf32, #tpu.memory_space<vmem>>, vector<1x128xf32>
    %360 = vector.broadcast %359 : vector<1x128xf32> to vector<8x128xf32>
    %361 = arith.mulf %358, %360 : vector<8x128xf32>
    %362 = arith.addf %347, %361 : vector<8x128xf32>
    %c192 = arith.constant 192 : index
    %c0_103 = arith.constant 0 : index
    %363 = vector.load %arg1[%c192, %c0_103] : memref<392x128xbf16, #tpu.memory_space<vmem>>, vector<8x128xbf16>
    %364 = arith.extf %363 : vector<8x128xbf16> to vector<8x128xf32>
    %365 = vector.broadcast %0 : vector<1x128xf32> to vector<8x128xf32>
    %366 = arith.mulf %364, %365 : vector<8x128xf32>
    %367 = vector.broadcast %1 : vector<1x128xf32> to vector<8x128xf32>
    %368 = arith.addf %366, %367 : vector<8x128xf32>
    %cst_104 = arith.constant 0.000000e+00 : f32
    %369 = vector.broadcast %cst_104 : f32 to vector<8x128xf32>
    %370 = arith.cmpf oge, %368, %369 : vector<8x128xf32>
    %cst_105 = arith.constant 2.000000e-01 : f32
    %371 = vector.broadcast %cst_105 : f32 to vector<8x128xf32>
    %372 = arith.mulf %371, %368 : vector<8x128xf32>
    %373 = arith.select %370, %368, %372 : vector<8x128xi1>, vector<8x128xf32>
    %c24_106 = arith.constant 24 : index
    %c0_107 = arith.constant 0 : index
    %374 = vector.load %arg4[%c24_106, %c0_107] : memref<49x128xf32, #tpu.memory_space<vmem>>, vector<1x128xf32>
    %375 = vector.broadcast %374 : vector<1x128xf32> to vector<8x128xf32>
    %376 = arith.mulf %373, %375 : vector<8x128xf32>
    %377 = arith.addf %362, %376 : vector<8x128xf32>
    %c200 = arith.constant 200 : index
    %c0_108 = arith.constant 0 : index
    %378 = vector.load %arg1[%c200, %c0_108] : memref<392x128xbf16, #tpu.memory_space<vmem>>, vector<8x128xbf16>
    %379 = arith.extf %378 : vector<8x128xbf16> to vector<8x128xf32>
    %380 = vector.broadcast %0 : vector<1x128xf32> to vector<8x128xf32>
    %381 = arith.mulf %379, %380 : vector<8x128xf32>
    %382 = vector.broadcast %1 : vector<1x128xf32> to vector<8x128xf32>
    %383 = arith.addf %381, %382 : vector<8x128xf32>
    %cst_109 = arith.constant 0.000000e+00 : f32
    %384 = vector.broadcast %cst_109 : f32 to vector<8x128xf32>
    %385 = arith.cmpf oge, %383, %384 : vector<8x128xf32>
    %cst_110 = arith.constant 2.000000e-01 : f32
    %386 = vector.broadcast %cst_110 : f32 to vector<8x128xf32>
    %387 = arith.mulf %386, %383 : vector<8x128xf32>
    %388 = arith.select %385, %383, %387 : vector<8x128xi1>, vector<8x128xf32>
    %c25 = arith.constant 25 : index
    %c0_111 = arith.constant 0 : index
    %389 = vector.load %arg4[%c25, %c0_111] : memref<49x128xf32, #tpu.memory_space<vmem>>, vector<1x128xf32>
    %390 = vector.broadcast %389 : vector<1x128xf32> to vector<8x128xf32>
    %391 = arith.mulf %388, %390 : vector<8x128xf32>
    %392 = arith.addf %377, %391 : vector<8x128xf32>
    %c208 = arith.constant 208 : index
    %c0_112 = arith.constant 0 : index
    %393 = vector.load %arg1[%c208, %c0_112] : memref<392x128xbf16, #tpu.memory_space<vmem>>, vector<8x128xbf16>
    %394 = arith.extf %393 : vector<8x128xbf16> to vector<8x128xf32>
    %395 = vector.broadcast %0 : vector<1x128xf32> to vector<8x128xf32>
    %396 = arith.mulf %394, %395 : vector<8x128xf32>
    %397 = vector.broadcast %1 : vector<1x128xf32> to vector<8x128xf32>
    %398 = arith.addf %396, %397 : vector<8x128xf32>
    %cst_113 = arith.constant 0.000000e+00 : f32
    %399 = vector.broadcast %cst_113 : f32 to vector<8x128xf32>
    %400 = arith.cmpf oge, %398, %399 : vector<8x128xf32>
    %cst_114 = arith.constant 2.000000e-01 : f32
    %401 = vector.broadcast %cst_114 : f32 to vector<8x128xf32>
    %402 = arith.mulf %401, %398 : vector<8x128xf32>
    %403 = arith.select %400, %398, %402 : vector<8x128xi1>, vector<8x128xf32>
    %c26 = arith.constant 26 : index
    %c0_115 = arith.constant 0 : index
    %404 = vector.load %arg4[%c26, %c0_115] : memref<49x128xf32, #tpu.memory_space<vmem>>, vector<1x128xf32>
    %405 = vector.broadcast %404 : vector<1x128xf32> to vector<8x128xf32>
    %406 = arith.mulf %403, %405 : vector<8x128xf32>
    %407 = arith.addf %392, %406 : vector<8x128xf32>
    %c216 = arith.constant 216 : index
    %c0_116 = arith.constant 0 : index
    %408 = vector.load %arg1[%c216, %c0_116] : memref<392x128xbf16, #tpu.memory_space<vmem>>, vector<8x128xbf16>
    %409 = arith.extf %408 : vector<8x128xbf16> to vector<8x128xf32>
    %410 = vector.broadcast %0 : vector<1x128xf32> to vector<8x128xf32>
    %411 = arith.mulf %409, %410 : vector<8x128xf32>
    %412 = vector.broadcast %1 : vector<1x128xf32> to vector<8x128xf32>
    %413 = arith.addf %411, %412 : vector<8x128xf32>
    %cst_117 = arith.constant 0.000000e+00 : f32
    %414 = vector.broadcast %cst_117 : f32 to vector<8x128xf32>
    %415 = arith.cmpf oge, %413, %414 : vector<8x128xf32>
    %cst_118 = arith.constant 2.000000e-01 : f32
    %416 = vector.broadcast %cst_118 : f32 to vector<8x128xf32>
    %417 = arith.mulf %416, %413 : vector<8x128xf32>
    %418 = arith.select %415, %413, %417 : vector<8x128xi1>, vector<8x128xf32>
    %c27 = arith.constant 27 : index
    %c0_119 = arith.constant 0 : index
    %419 = vector.load %arg4[%c27, %c0_119] : memref<49x128xf32, #tpu.memory_space<vmem>>, vector<1x128xf32>
    %420 = vector.broadcast %419 : vector<1x128xf32> to vector<8x128xf32>
    %421 = arith.mulf %418, %420 : vector<8x128xf32>
    %422 = arith.addf %407, %421 : vector<8x128xf32>
    %c224 = arith.constant 224 : index
    %c0_120 = arith.constant 0 : index
    %423 = vector.load %arg1[%c224, %c0_120] : memref<392x128xbf16, #tpu.memory_space<vmem>>, vector<8x128xbf16>
    %424 = arith.extf %423 : vector<8x128xbf16> to vector<8x128xf32>
    %425 = vector.broadcast %0 : vector<1x128xf32> to vector<8x128xf32>
    %426 = arith.mulf %424, %425 : vector<8x128xf32>
    %427 = vector.broadcast %1 : vector<1x128xf32> to vector<8x128xf32>
    %428 = arith.addf %426, %427 : vector<8x128xf32>
    %cst_121 = arith.constant 0.000000e+00 : f32
    %429 = vector.broadcast %cst_121 : f32 to vector<8x128xf32>
    %430 = arith.cmpf oge, %428, %429 : vector<8x128xf32>
    %cst_122 = arith.constant 2.000000e-01 : f32
    %431 = vector.broadcast %cst_122 : f32 to vector<8x128xf32>
    %432 = arith.mulf %431, %428 : vector<8x128xf32>
    %433 = arith.select %430, %428, %432 : vector<8x128xi1>, vector<8x128xf32>
    %c28 = arith.constant 28 : index
    %c0_123 = arith.constant 0 : index
    %434 = vector.load %arg4[%c28, %c0_123] : memref<49x128xf32, #tpu.memory_space<vmem>>, vector<1x128xf32>
    %435 = vector.broadcast %434 : vector<1x128xf32> to vector<8x128xf32>
    %436 = arith.mulf %433, %435 : vector<8x128xf32>
    %437 = arith.addf %422, %436 : vector<8x128xf32>
    %c232 = arith.constant 232 : index
    %c0_124 = arith.constant 0 : index
    %438 = vector.load %arg1[%c232, %c0_124] : memref<392x128xbf16, #tpu.memory_space<vmem>>, vector<8x128xbf16>
    %439 = arith.extf %438 : vector<8x128xbf16> to vector<8x128xf32>
    %440 = vector.broadcast %0 : vector<1x128xf32> to vector<8x128xf32>
    %441 = arith.mulf %439, %440 : vector<8x128xf32>
    %442 = vector.broadcast %1 : vector<1x128xf32> to vector<8x128xf32>
    %443 = arith.addf %441, %442 : vector<8x128xf32>
    %cst_125 = arith.constant 0.000000e+00 : f32
    %444 = vector.broadcast %cst_125 : f32 to vector<8x128xf32>
    %445 = arith.cmpf oge, %443, %444 : vector<8x128xf32>
    %cst_126 = arith.constant 2.000000e-01 : f32
    %446 = vector.broadcast %cst_126 : f32 to vector<8x128xf32>
    %447 = arith.mulf %446, %443 : vector<8x128xf32>
    %448 = arith.select %445, %443, %447 : vector<8x128xi1>, vector<8x128xf32>
    %c29 = arith.constant 29 : index
    %c0_127 = arith.constant 0 : index
    %449 = vector.load %arg4[%c29, %c0_127] : memref<49x128xf32, #tpu.memory_space<vmem>>, vector<1x128xf32>
    %450 = vector.broadcast %449 : vector<1x128xf32> to vector<8x128xf32>
    %451 = arith.mulf %448, %450 : vector<8x128xf32>
    %452 = arith.addf %437, %451 : vector<8x128xf32>
    %c240 = arith.constant 240 : index
    %c0_128 = arith.constant 0 : index
    %453 = vector.load %arg1[%c240, %c0_128] : memref<392x128xbf16, #tpu.memory_space<vmem>>, vector<8x128xbf16>
    %454 = arith.extf %453 : vector<8x128xbf16> to vector<8x128xf32>
    %455 = vector.broadcast %0 : vector<1x128xf32> to vector<8x128xf32>
    %456 = arith.mulf %454, %455 : vector<8x128xf32>
    %457 = vector.broadcast %1 : vector<1x128xf32> to vector<8x128xf32>
    %458 = arith.addf %456, %457 : vector<8x128xf32>
    %cst_129 = arith.constant 0.000000e+00 : f32
    %459 = vector.broadcast %cst_129 : f32 to vector<8x128xf32>
    %460 = arith.cmpf oge, %458, %459 : vector<8x128xf32>
    %cst_130 = arith.constant 2.000000e-01 : f32
    %461 = vector.broadcast %cst_130 : f32 to vector<8x128xf32>
    %462 = arith.mulf %461, %458 : vector<8x128xf32>
    %463 = arith.select %460, %458, %462 : vector<8x128xi1>, vector<8x128xf32>
    %c30 = arith.constant 30 : index
    %c0_131 = arith.constant 0 : index
    %464 = vector.load %arg4[%c30, %c0_131] : memref<49x128xf32, #tpu.memory_space<vmem>>, vector<1x128xf32>
    %465 = vector.broadcast %464 : vector<1x128xf32> to vector<8x128xf32>
    %466 = arith.mulf %463, %465 : vector<8x128xf32>
    %467 = arith.addf %452, %466 : vector<8x128xf32>
    %c248 = arith.constant 248 : index
    %c0_132 = arith.constant 0 : index
    %468 = vector.load %arg1[%c248, %c0_132] : memref<392x128xbf16, #tpu.memory_space<vmem>>, vector<8x128xbf16>
    %469 = arith.extf %468 : vector<8x128xbf16> to vector<8x128xf32>
    %470 = vector.broadcast %0 : vector<1x128xf32> to vector<8x128xf32>
    %471 = arith.mulf %469, %470 : vector<8x128xf32>
    %472 = vector.broadcast %1 : vector<1x128xf32> to vector<8x128xf32>
    %473 = arith.addf %471, %472 : vector<8x128xf32>
    %cst_133 = arith.constant 0.000000e+00 : f32
    %474 = vector.broadcast %cst_133 : f32 to vector<8x128xf32>
    %475 = arith.cmpf oge, %473, %474 : vector<8x128xf32>
    %cst_134 = arith.constant 2.000000e-01 : f32
    %476 = vector.broadcast %cst_134 : f32 to vector<8x128xf32>
    %477 = arith.mulf %476, %473 : vector<8x128xf32>
    %478 = arith.select %475, %473, %477 : vector<8x128xi1>, vector<8x128xf32>
    %c31 = arith.constant 31 : index
    %c0_135 = arith.constant 0 : index
    %479 = vector.load %arg4[%c31, %c0_135] : memref<49x128xf32, #tpu.memory_space<vmem>>, vector<1x128xf32>
    %480 = vector.broadcast %479 : vector<1x128xf32> to vector<8x128xf32>
    %481 = arith.mulf %478, %480 : vector<8x128xf32>
    %482 = arith.addf %467, %481 : vector<8x128xf32>
    %c256 = arith.constant 256 : index
    %c0_136 = arith.constant 0 : index
    %483 = vector.load %arg1[%c256, %c0_136] : memref<392x128xbf16, #tpu.memory_space<vmem>>, vector<8x128xbf16>
    %484 = arith.extf %483 : vector<8x128xbf16> to vector<8x128xf32>
    %485 = vector.broadcast %0 : vector<1x128xf32> to vector<8x128xf32>
    %486 = arith.mulf %484, %485 : vector<8x128xf32>
    %487 = vector.broadcast %1 : vector<1x128xf32> to vector<8x128xf32>
    %488 = arith.addf %486, %487 : vector<8x128xf32>
    %cst_137 = arith.constant 0.000000e+00 : f32
    %489 = vector.broadcast %cst_137 : f32 to vector<8x128xf32>
    %490 = arith.cmpf oge, %488, %489 : vector<8x128xf32>
    %cst_138 = arith.constant 2.000000e-01 : f32
    %491 = vector.broadcast %cst_138 : f32 to vector<8x128xf32>
    %492 = arith.mulf %491, %488 : vector<8x128xf32>
    %493 = arith.select %490, %488, %492 : vector<8x128xi1>, vector<8x128xf32>
    %c32_139 = arith.constant 32 : index
    %c0_140 = arith.constant 0 : index
    %494 = vector.load %arg4[%c32_139, %c0_140] : memref<49x128xf32, #tpu.memory_space<vmem>>, vector<1x128xf32>
    %495 = vector.broadcast %494 : vector<1x128xf32> to vector<8x128xf32>
    %496 = arith.mulf %493, %495 : vector<8x128xf32>
    %497 = arith.addf %482, %496 : vector<8x128xf32>
    %c264 = arith.constant 264 : index
    %c0_141 = arith.constant 0 : index
    %498 = vector.load %arg1[%c264, %c0_141] : memref<392x128xbf16, #tpu.memory_space<vmem>>, vector<8x128xbf16>
    %499 = arith.extf %498 : vector<8x128xbf16> to vector<8x128xf32>
    %500 = vector.broadcast %0 : vector<1x128xf32> to vector<8x128xf32>
    %501 = arith.mulf %499, %500 : vector<8x128xf32>
    %502 = vector.broadcast %1 : vector<1x128xf32> to vector<8x128xf32>
    %503 = arith.addf %501, %502 : vector<8x128xf32>
    %cst_142 = arith.constant 0.000000e+00 : f32
    %504 = vector.broadcast %cst_142 : f32 to vector<8x128xf32>
    %505 = arith.cmpf oge, %503, %504 : vector<8x128xf32>
    %cst_143 = arith.constant 2.000000e-01 : f32
    %506 = vector.broadcast %cst_143 : f32 to vector<8x128xf32>
    %507 = arith.mulf %506, %503 : vector<8x128xf32>
    %508 = arith.select %505, %503, %507 : vector<8x128xi1>, vector<8x128xf32>
    %c33 = arith.constant 33 : index
    %c0_144 = arith.constant 0 : index
    %509 = vector.load %arg4[%c33, %c0_144] : memref<49x128xf32, #tpu.memory_space<vmem>>, vector<1x128xf32>
    %510 = vector.broadcast %509 : vector<1x128xf32> to vector<8x128xf32>
    %511 = arith.mulf %508, %510 : vector<8x128xf32>
    %512 = arith.addf %497, %511 : vector<8x128xf32>
    %c272 = arith.constant 272 : index
    %c0_145 = arith.constant 0 : index
    %513 = vector.load %arg1[%c272, %c0_145] : memref<392x128xbf16, #tpu.memory_space<vmem>>, vector<8x128xbf16>
    %514 = arith.extf %513 : vector<8x128xbf16> to vector<8x128xf32>
    %515 = vector.broadcast %0 : vector<1x128xf32> to vector<8x128xf32>
    %516 = arith.mulf %514, %515 : vector<8x128xf32>
    %517 = vector.broadcast %1 : vector<1x128xf32> to vector<8x128xf32>
    %518 = arith.addf %516, %517 : vector<8x128xf32>
    %cst_146 = arith.constant 0.000000e+00 : f32
    %519 = vector.broadcast %cst_146 : f32 to vector<8x128xf32>
    %520 = arith.cmpf oge, %518, %519 : vector<8x128xf32>
    %cst_147 = arith.constant 2.000000e-01 : f32
    %521 = vector.broadcast %cst_147 : f32 to vector<8x128xf32>
    %522 = arith.mulf %521, %518 : vector<8x128xf32>
    %523 = arith.select %520, %518, %522 : vector<8x128xi1>, vector<8x128xf32>
    %c34 = arith.constant 34 : index
    %c0_148 = arith.constant 0 : index
    %524 = vector.load %arg4[%c34, %c0_148] : memref<49x128xf32, #tpu.memory_space<vmem>>, vector<1x128xf32>
    %525 = vector.broadcast %524 : vector<1x128xf32> to vector<8x128xf32>
    %526 = arith.mulf %523, %525 : vector<8x128xf32>
    %527 = arith.addf %512, %526 : vector<8x128xf32>
    %c280 = arith.constant 280 : index
    %c0_149 = arith.constant 0 : index
    %528 = vector.load %arg1[%c280, %c0_149] : memref<392x128xbf16, #tpu.memory_space<vmem>>, vector<8x128xbf16>
    %529 = arith.extf %528 : vector<8x128xbf16> to vector<8x128xf32>
    %530 = vector.broadcast %0 : vector<1x128xf32> to vector<8x128xf32>
    %531 = arith.mulf %529, %530 : vector<8x128xf32>
    %532 = vector.broadcast %1 : vector<1x128xf32> to vector<8x128xf32>
    %533 = arith.addf %531, %532 : vector<8x128xf32>
    %cst_150 = arith.constant 0.000000e+00 : f32
    %534 = vector.broadcast %cst_150 : f32 to vector<8x128xf32>
    %535 = arith.cmpf oge, %533, %534 : vector<8x128xf32>
    %cst_151 = arith.constant 2.000000e-01 : f32
    %536 = vector.broadcast %cst_151 : f32 to vector<8x128xf32>
    %537 = arith.mulf %536, %533 : vector<8x128xf32>
    %538 = arith.select %535, %533, %537 : vector<8x128xi1>, vector<8x128xf32>
    %c35 = arith.constant 35 : index
    %c0_152 = arith.constant 0 : index
    %539 = vector.load %arg4[%c35, %c0_152] : memref<49x128xf32, #tpu.memory_space<vmem>>, vector<1x128xf32>
    %540 = vector.broadcast %539 : vector<1x128xf32> to vector<8x128xf32>
    %541 = arith.mulf %538, %540 : vector<8x128xf32>
    %542 = arith.addf %527, %541 : vector<8x128xf32>
    %c288 = arith.constant 288 : index
    %c0_153 = arith.constant 0 : index
    %543 = vector.load %arg1[%c288, %c0_153] : memref<392x128xbf16, #tpu.memory_space<vmem>>, vector<8x128xbf16>
    %544 = arith.extf %543 : vector<8x128xbf16> to vector<8x128xf32>
    %545 = vector.broadcast %0 : vector<1x128xf32> to vector<8x128xf32>
    %546 = arith.mulf %544, %545 : vector<8x128xf32>
    %547 = vector.broadcast %1 : vector<1x128xf32> to vector<8x128xf32>
    %548 = arith.addf %546, %547 : vector<8x128xf32>
    %cst_154 = arith.constant 0.000000e+00 : f32
    %549 = vector.broadcast %cst_154 : f32 to vector<8x128xf32>
    %550 = arith.cmpf oge, %548, %549 : vector<8x128xf32>
    %cst_155 = arith.constant 2.000000e-01 : f32
    %551 = vector.broadcast %cst_155 : f32 to vector<8x128xf32>
    %552 = arith.mulf %551, %548 : vector<8x128xf32>
    %553 = arith.select %550, %548, %552 : vector<8x128xi1>, vector<8x128xf32>
    %c36 = arith.constant 36 : index
    %c0_156 = arith.constant 0 : index
    %554 = vector.load %arg4[%c36, %c0_156] : memref<49x128xf32, #tpu.memory_space<vmem>>, vector<1x128xf32>
    %555 = vector.broadcast %554 : vector<1x128xf32> to vector<8x128xf32>
    %556 = arith.mulf %553, %555 : vector<8x128xf32>
    %557 = arith.addf %542, %556 : vector<8x128xf32>
    %c296 = arith.constant 296 : index
    %c0_157 = arith.constant 0 : index
    %558 = vector.load %arg1[%c296, %c0_157] : memref<392x128xbf16, #tpu.memory_space<vmem>>, vector<8x128xbf16>
    %559 = arith.extf %558 : vector<8x128xbf16> to vector<8x128xf32>
    %560 = vector.broadcast %0 : vector<1x128xf32> to vector<8x128xf32>
    %561 = arith.mulf %559, %560 : vector<8x128xf32>
    %562 = vector.broadcast %1 : vector<1x128xf32> to vector<8x128xf32>
    %563 = arith.addf %561, %562 : vector<8x128xf32>
    %cst_158 = arith.constant 0.000000e+00 : f32
    %564 = vector.broadcast %cst_158 : f32 to vector<8x128xf32>
    %565 = arith.cmpf oge, %563, %564 : vector<8x128xf32>
    %cst_159 = arith.constant 2.000000e-01 : f32
    %566 = vector.broadcast %cst_159 : f32 to vector<8x128xf32>
    %567 = arith.mulf %566, %563 : vector<8x128xf32>
    %568 = arith.select %565, %563, %567 : vector<8x128xi1>, vector<8x128xf32>
    %c37 = arith.constant 37 : index
    %c0_160 = arith.constant 0 : index
    %569 = vector.load %arg4[%c37, %c0_160] : memref<49x128xf32, #tpu.memory_space<vmem>>, vector<1x128xf32>
    %570 = vector.broadcast %569 : vector<1x128xf32> to vector<8x128xf32>
    %571 = arith.mulf %568, %570 : vector<8x128xf32>
    %572 = arith.addf %557, %571 : vector<8x128xf32>
    %c304 = arith.constant 304 : index
    %c0_161 = arith.constant 0 : index
    %573 = vector.load %arg1[%c304, %c0_161] : memref<392x128xbf16, #tpu.memory_space<vmem>>, vector<8x128xbf16>
    %574 = arith.extf %573 : vector<8x128xbf16> to vector<8x128xf32>
    %575 = vector.broadcast %0 : vector<1x128xf32> to vector<8x128xf32>
    %576 = arith.mulf %574, %575 : vector<8x128xf32>
    %577 = vector.broadcast %1 : vector<1x128xf32> to vector<8x128xf32>
    %578 = arith.addf %576, %577 : vector<8x128xf32>
    %cst_162 = arith.constant 0.000000e+00 : f32
    %579 = vector.broadcast %cst_162 : f32 to vector<8x128xf32>
    %580 = arith.cmpf oge, %578, %579 : vector<8x128xf32>
    %cst_163 = arith.constant 2.000000e-01 : f32
    %581 = vector.broadcast %cst_163 : f32 to vector<8x128xf32>
    %582 = arith.mulf %581, %578 : vector<8x128xf32>
    %583 = arith.select %580, %578, %582 : vector<8x128xi1>, vector<8x128xf32>
    %c38 = arith.constant 38 : index
    %c0_164 = arith.constant 0 : index
    %584 = vector.load %arg4[%c38, %c0_164] : memref<49x128xf32, #tpu.memory_space<vmem>>, vector<1x128xf32>
    %585 = vector.broadcast %584 : vector<1x128xf32> to vector<8x128xf32>
    %586 = arith.mulf %583, %585 : vector<8x128xf32>
    %587 = arith.addf %572, %586 : vector<8x128xf32>
    %c312 = arith.constant 312 : index
    %c0_165 = arith.constant 0 : index
    %588 = vector.load %arg1[%c312, %c0_165] : memref<392x128xbf16, #tpu.memory_space<vmem>>, vector<8x128xbf16>
    %589 = arith.extf %588 : vector<8x128xbf16> to vector<8x128xf32>
    %590 = vector.broadcast %0 : vector<1x128xf32> to vector<8x128xf32>
    %591 = arith.mulf %589, %590 : vector<8x128xf32>
    %592 = vector.broadcast %1 : vector<1x128xf32> to vector<8x128xf32>
    %593 = arith.addf %591, %592 : vector<8x128xf32>
    %cst_166 = arith.constant 0.000000e+00 : f32
    %594 = vector.broadcast %cst_166 : f32 to vector<8x128xf32>
    %595 = arith.cmpf oge, %593, %594 : vector<8x128xf32>
    %cst_167 = arith.constant 2.000000e-01 : f32
    %596 = vector.broadcast %cst_167 : f32 to vector<8x128xf32>
    %597 = arith.mulf %596, %593 : vector<8x128xf32>
    %598 = arith.select %595, %593, %597 : vector<8x128xi1>, vector<8x128xf32>
    %c39 = arith.constant 39 : index
    %c0_168 = arith.constant 0 : index
    %599 = vector.load %arg4[%c39, %c0_168] : memref<49x128xf32, #tpu.memory_space<vmem>>, vector<1x128xf32>
    %600 = vector.broadcast %599 : vector<1x128xf32> to vector<8x128xf32>
    %601 = arith.mulf %598, %600 : vector<8x128xf32>
    %602 = arith.addf %587, %601 : vector<8x128xf32>
    %c320 = arith.constant 320 : index
    %c0_169 = arith.constant 0 : index
    %603 = vector.load %arg1[%c320, %c0_169] : memref<392x128xbf16, #tpu.memory_space<vmem>>, vector<8x128xbf16>
    %604 = arith.extf %603 : vector<8x128xbf16> to vector<8x128xf32>
    %605 = vector.broadcast %0 : vector<1x128xf32> to vector<8x128xf32>
    %606 = arith.mulf %604, %605 : vector<8x128xf32>
    %607 = vector.broadcast %1 : vector<1x128xf32> to vector<8x128xf32>
    %608 = arith.addf %606, %607 : vector<8x128xf32>
    %cst_170 = arith.constant 0.000000e+00 : f32
    %609 = vector.broadcast %cst_170 : f32 to vector<8x128xf32>
    %610 = arith.cmpf oge, %608, %609 : vector<8x128xf32>
    %cst_171 = arith.constant 2.000000e-01 : f32
    %611 = vector.broadcast %cst_171 : f32 to vector<8x128xf32>
    %612 = arith.mulf %611, %608 : vector<8x128xf32>
    %613 = arith.select %610, %608, %612 : vector<8x128xi1>, vector<8x128xf32>
    %c40_172 = arith.constant 40 : index
    %c0_173 = arith.constant 0 : index
    %614 = vector.load %arg4[%c40_172, %c0_173] : memref<49x128xf32, #tpu.memory_space<vmem>>, vector<1x128xf32>
    %615 = vector.broadcast %614 : vector<1x128xf32> to vector<8x128xf32>
    %616 = arith.mulf %613, %615 : vector<8x128xf32>
    %617 = arith.addf %602, %616 : vector<8x128xf32>
    %c328 = arith.constant 328 : index
    %c0_174 = arith.constant 0 : index
    %618 = vector.load %arg1[%c328, %c0_174] : memref<392x128xbf16, #tpu.memory_space<vmem>>, vector<8x128xbf16>
    %619 = arith.extf %618 : vector<8x128xbf16> to vector<8x128xf32>
    %620 = vector.broadcast %0 : vector<1x128xf32> to vector<8x128xf32>
    %621 = arith.mulf %619, %620 : vector<8x128xf32>
    %622 = vector.broadcast %1 : vector<1x128xf32> to vector<8x128xf32>
    %623 = arith.addf %621, %622 : vector<8x128xf32>
    %cst_175 = arith.constant 0.000000e+00 : f32
    %624 = vector.broadcast %cst_175 : f32 to vector<8x128xf32>
    %625 = arith.cmpf oge, %623, %624 : vector<8x128xf32>
    %cst_176 = arith.constant 2.000000e-01 : f32
    %626 = vector.broadcast %cst_176 : f32 to vector<8x128xf32>
    %627 = arith.mulf %626, %623 : vector<8x128xf32>
    %628 = arith.select %625, %623, %627 : vector<8x128xi1>, vector<8x128xf32>
    %c41 = arith.constant 41 : index
    %c0_177 = arith.constant 0 : index
    %629 = vector.load %arg4[%c41, %c0_177] : memref<49x128xf32, #tpu.memory_space<vmem>>, vector<1x128xf32>
    %630 = vector.broadcast %629 : vector<1x128xf32> to vector<8x128xf32>
    %631 = arith.mulf %628, %630 : vector<8x128xf32>
    %632 = arith.addf %617, %631 : vector<8x128xf32>
    %c336 = arith.constant 336 : index
    %c0_178 = arith.constant 0 : index
    %633 = vector.load %arg1[%c336, %c0_178] : memref<392x128xbf16, #tpu.memory_space<vmem>>, vector<8x128xbf16>
    %634 = arith.extf %633 : vector<8x128xbf16> to vector<8x128xf32>
    %635 = vector.broadcast %0 : vector<1x128xf32> to vector<8x128xf32>
    %636 = arith.mulf %634, %635 : vector<8x128xf32>
    %637 = vector.broadcast %1 : vector<1x128xf32> to vector<8x128xf32>
    %638 = arith.addf %636, %637 : vector<8x128xf32>
    %cst_179 = arith.constant 0.000000e+00 : f32
    %639 = vector.broadcast %cst_179 : f32 to vector<8x128xf32>
    %640 = arith.cmpf oge, %638, %639 : vector<8x128xf32>
    %cst_180 = arith.constant 2.000000e-01 : f32
    %641 = vector.broadcast %cst_180 : f32 to vector<8x128xf32>
    %642 = arith.mulf %641, %638 : vector<8x128xf32>
    %643 = arith.select %640, %638, %642 : vector<8x128xi1>, vector<8x128xf32>
    %c42 = arith.constant 42 : index
    %c0_181 = arith.constant 0 : index
    %644 = vector.load %arg4[%c42, %c0_181] : memref<49x128xf32, #tpu.memory_space<vmem>>, vector<1x128xf32>
    %645 = vector.broadcast %644 : vector<1x128xf32> to vector<8x128xf32>
    %646 = arith.mulf %643, %645 : vector<8x128xf32>
    %647 = arith.addf %632, %646 : vector<8x128xf32>
    %c344 = arith.constant 344 : index
    %c0_182 = arith.constant 0 : index
    %648 = vector.load %arg1[%c344, %c0_182] : memref<392x128xbf16, #tpu.memory_space<vmem>>, vector<8x128xbf16>
    %649 = arith.extf %648 : vector<8x128xbf16> to vector<8x128xf32>
    %650 = vector.broadcast %0 : vector<1x128xf32> to vector<8x128xf32>
    %651 = arith.mulf %649, %650 : vector<8x128xf32>
    %652 = vector.broadcast %1 : vector<1x128xf32> to vector<8x128xf32>
    %653 = arith.addf %651, %652 : vector<8x128xf32>
    %cst_183 = arith.constant 0.000000e+00 : f32
    %654 = vector.broadcast %cst_183 : f32 to vector<8x128xf32>
    %655 = arith.cmpf oge, %653, %654 : vector<8x128xf32>
    %cst_184 = arith.constant 2.000000e-01 : f32
    %656 = vector.broadcast %cst_184 : f32 to vector<8x128xf32>
    %657 = arith.mulf %656, %653 : vector<8x128xf32>
    %658 = arith.select %655, %653, %657 : vector<8x128xi1>, vector<8x128xf32>
    %c43 = arith.constant 43 : index
    %c0_185 = arith.constant 0 : index
    %659 = vector.load %arg4[%c43, %c0_185] : memref<49x128xf32, #tpu.memory_space<vmem>>, vector<1x128xf32>
    %660 = vector.broadcast %659 : vector<1x128xf32> to vector<8x128xf32>
    %661 = arith.mulf %658, %660 : vector<8x128xf32>
    %662 = arith.addf %647, %661 : vector<8x128xf32>
    %c352 = arith.constant 352 : index
    %c0_186 = arith.constant 0 : index
    %663 = vector.load %arg1[%c352, %c0_186] : memref<392x128xbf16, #tpu.memory_space<vmem>>, vector<8x128xbf16>
    %664 = arith.extf %663 : vector<8x128xbf16> to vector<8x128xf32>
    %665 = vector.broadcast %0 : vector<1x128xf32> to vector<8x128xf32>
    %666 = arith.mulf %664, %665 : vector<8x128xf32>
    %667 = vector.broadcast %1 : vector<1x128xf32> to vector<8x128xf32>
    %668 = arith.addf %666, %667 : vector<8x128xf32>
    %cst_187 = arith.constant 0.000000e+00 : f32
    %669 = vector.broadcast %cst_187 : f32 to vector<8x128xf32>
    %670 = arith.cmpf oge, %668, %669 : vector<8x128xf32>
    %cst_188 = arith.constant 2.000000e-01 : f32
    %671 = vector.broadcast %cst_188 : f32 to vector<8x128xf32>
    %672 = arith.mulf %671, %668 : vector<8x128xf32>
    %673 = arith.select %670, %668, %672 : vector<8x128xi1>, vector<8x128xf32>
    %c44 = arith.constant 44 : index
    %c0_189 = arith.constant 0 : index
    %674 = vector.load %arg4[%c44, %c0_189] : memref<49x128xf32, #tpu.memory_space<vmem>>, vector<1x128xf32>
    %675 = vector.broadcast %674 : vector<1x128xf32> to vector<8x128xf32>
    %676 = arith.mulf %673, %675 : vector<8x128xf32>
    %677 = arith.addf %662, %676 : vector<8x128xf32>
    %c360 = arith.constant 360 : index
    %c0_190 = arith.constant 0 : index
    %678 = vector.load %arg1[%c360, %c0_190] : memref<392x128xbf16, #tpu.memory_space<vmem>>, vector<8x128xbf16>
    %679 = arith.extf %678 : vector<8x128xbf16> to vector<8x128xf32>
    %680 = vector.broadcast %0 : vector<1x128xf32> to vector<8x128xf32>
    %681 = arith.mulf %679, %680 : vector<8x128xf32>
    %682 = vector.broadcast %1 : vector<1x128xf32> to vector<8x128xf32>
    %683 = arith.addf %681, %682 : vector<8x128xf32>
    %cst_191 = arith.constant 0.000000e+00 : f32
    %684 = vector.broadcast %cst_191 : f32 to vector<8x128xf32>
    %685 = arith.cmpf oge, %683, %684 : vector<8x128xf32>
    %cst_192 = arith.constant 2.000000e-01 : f32
    %686 = vector.broadcast %cst_192 : f32 to vector<8x128xf32>
    %687 = arith.mulf %686, %683 : vector<8x128xf32>
    %688 = arith.select %685, %683, %687 : vector<8x128xi1>, vector<8x128xf32>
    %c45 = arith.constant 45 : index
    %c0_193 = arith.constant 0 : index
    %689 = vector.load %arg4[%c45, %c0_193] : memref<49x128xf32, #tpu.memory_space<vmem>>, vector<1x128xf32>
    %690 = vector.broadcast %689 : vector<1x128xf32> to vector<8x128xf32>
    %691 = arith.mulf %688, %690 : vector<8x128xf32>
    %692 = arith.addf %677, %691 : vector<8x128xf32>
    %c368 = arith.constant 368 : index
    %c0_194 = arith.constant 0 : index
    %693 = vector.load %arg1[%c368, %c0_194] : memref<392x128xbf16, #tpu.memory_space<vmem>>, vector<8x128xbf16>
    %694 = arith.extf %693 : vector<8x128xbf16> to vector<8x128xf32>
    %695 = vector.broadcast %0 : vector<1x128xf32> to vector<8x128xf32>
    %696 = arith.mulf %694, %695 : vector<8x128xf32>
    %697 = vector.broadcast %1 : vector<1x128xf32> to vector<8x128xf32>
    %698 = arith.addf %696, %697 : vector<8x128xf32>
    %cst_195 = arith.constant 0.000000e+00 : f32
    %699 = vector.broadcast %cst_195 : f32 to vector<8x128xf32>
    %700 = arith.cmpf oge, %698, %699 : vector<8x128xf32>
    %cst_196 = arith.constant 2.000000e-01 : f32
    %701 = vector.broadcast %cst_196 : f32 to vector<8x128xf32>
    %702 = arith.mulf %701, %698 : vector<8x128xf32>
    %703 = arith.select %700, %698, %702 : vector<8x128xi1>, vector<8x128xf32>
    %c46 = arith.constant 46 : index
    %c0_197 = arith.constant 0 : index
    %704 = vector.load %arg4[%c46, %c0_197] : memref<49x128xf32, #tpu.memory_space<vmem>>, vector<1x128xf32>
    %705 = vector.broadcast %704 : vector<1x128xf32> to vector<8x128xf32>
    %706 = arith.mulf %703, %705 : vector<8x128xf32>
    %707 = arith.addf %692, %706 : vector<8x128xf32>
    %c376 = arith.constant 376 : index
    %c0_198 = arith.constant 0 : index
    %708 = vector.load %arg1[%c376, %c0_198] : memref<392x128xbf16, #tpu.memory_space<vmem>>, vector<8x128xbf16>
    %709 = arith.extf %708 : vector<8x128xbf16> to vector<8x128xf32>
    %710 = vector.broadcast %0 : vector<1x128xf32> to vector<8x128xf32>
    %711 = arith.mulf %709, %710 : vector<8x128xf32>
    %712 = vector.broadcast %1 : vector<1x128xf32> to vector<8x128xf32>
    %713 = arith.addf %711, %712 : vector<8x128xf32>
    %cst_199 = arith.constant 0.000000e+00 : f32
    %714 = vector.broadcast %cst_199 : f32 to vector<8x128xf32>
    %715 = arith.cmpf oge, %713, %714 : vector<8x128xf32>
    %cst_200 = arith.constant 2.000000e-01 : f32
    %716 = vector.broadcast %cst_200 : f32 to vector<8x128xf32>
    %717 = arith.mulf %716, %713 : vector<8x128xf32>
    %718 = arith.select %715, %713, %717 : vector<8x128xi1>, vector<8x128xf32>
    %c47 = arith.constant 47 : index
    %c0_201 = arith.constant 0 : index
    %719 = vector.load %arg4[%c47, %c0_201] : memref<49x128xf32, #tpu.memory_space<vmem>>, vector<1x128xf32>
    %720 = vector.broadcast %719 : vector<1x128xf32> to vector<8x128xf32>
    %721 = arith.mulf %718, %720 : vector<8x128xf32>
    %722 = arith.addf %707, %721 : vector<8x128xf32>
    %c384 = arith.constant 384 : index
    %c0_202 = arith.constant 0 : index
    %723 = vector.load %arg1[%c384, %c0_202] : memref<392x128xbf16, #tpu.memory_space<vmem>>, vector<8x128xbf16>
    %724 = arith.extf %723 : vector<8x128xbf16> to vector<8x128xf32>
    %725 = vector.broadcast %0 : vector<1x128xf32> to vector<8x128xf32>
    %726 = arith.mulf %724, %725 : vector<8x128xf32>
    %727 = vector.broadcast %1 : vector<1x128xf32> to vector<8x128xf32>
    %728 = arith.addf %726, %727 : vector<8x128xf32>
    %cst_203 = arith.constant 0.000000e+00 : f32
    %729 = vector.broadcast %cst_203 : f32 to vector<8x128xf32>
    %730 = arith.cmpf oge, %728, %729 : vector<8x128xf32>
    %cst_204 = arith.constant 2.000000e-01 : f32
    %731 = vector.broadcast %cst_204 : f32 to vector<8x128xf32>
    %732 = arith.mulf %731, %728 : vector<8x128xf32>
    %733 = arith.select %730, %728, %732 : vector<8x128xi1>, vector<8x128xf32>
    %c48_205 = arith.constant 48 : index
    %c0_206 = arith.constant 0 : index
    %734 = vector.load %arg4[%c48_205, %c0_206] : memref<49x128xf32, #tpu.memory_space<vmem>>, vector<1x128xf32>
    %735 = vector.broadcast %734 : vector<1x128xf32> to vector<8x128xf32>
    %736 = arith.mulf %733, %735 : vector<8x128xf32>
    %737 = arith.addf %722, %736 : vector<8x128xf32>
    %cst_207 = arith.constant dense<0.000000e+00> : vector<8xf32>
    %738 = vector.multi_reduction <add>, %737, %cst_207 [1] : vector<8x128xf32> to vector<8xf32>
    %739 = vector.shape_cast %738 : vector<8xf32> to vector<8x1xf32>
    %c0_208 = arith.constant 0 : index
    %c0_209 = arith.constant 0 : index
    %740 = vector.load %arg5[%c0_208, %c0_209] : memref<1x1xf32, #tpu.memory_space<vmem>>, vector<1x1xf32>
    %741 = vector.broadcast %740 : vector<1x1xf32> to vector<8x1xf32>
    %742 = arith.addf %739, %741 : vector<8x1xf32>
    %cst_210 = arith.constant 0.000000e+00 : f32
    %743 = vector.broadcast %cst_210 : f32 to vector<8x1xf32>
    %744 = arith.subf %743, %742 : vector<8x1xf32>
    %745 = math.exp %744 : vector<8x1xf32>
    %cst_211 = arith.constant 1.000000e+00 : f32
    %746 = vector.broadcast %cst_211 : f32 to vector<8x1xf32>
    %747 = arith.addf %746, %745 : vector<8x1xf32>
    %748 = tpu.reciprocal %747 {approx = true} : vector<8x1xf32> -> vector<8x1xf32>
    %c0_212 = arith.constant 0 : index
    %c0_213 = arith.constant 0 : index
    %749 = vector.load %arg6[%c0_212, %c0_213] : memref<8x1xf32, #tpu.memory_space<vmem>>, vector<8x1xf32>
    tpu.vector_store %arg6[%c0_212, %c0_213], %748 {strides = array<i32>} : memref<8x1xf32, #tpu.memory_space<vmem>>, vector<8x1xf32>,
    return
  }
  func.func @transform_0(%arg0: i32) -> (i32, i32) {
    %c0_i32 = arith.constant 0 : i32
    %c0_i32_0 = arith.constant 0 : i32
    return %arg0, %c0_i32 : i32, i32
  }
  func.func @transform_1(%arg0: i32) -> (i32, i32) {
    %c0_i32 = arith.constant 0 : i32
    %c0_i32_0 = arith.constant 0 : i32
    %c0_i32_1 = arith.constant 0 : i32
    return %c0_i32, %c0_i32_0 : i32, i32
  }
  func.func @transform_2(%arg0: i32) -> (i32, i32) {
    %c0_i32 = arith.constant 0 : i32
    %c0_i32_0 = arith.constant 0 : i32
    %c0_i32_1 = arith.constant 0 : i32
    return %c0_i32, %c0_i32_0 : i32, i32
  }
  func.func @transform_3(%arg0: i32) -> (i32, i32) {
    %c0_i32 = arith.constant 0 : i32
    %c0_i32_0 = arith.constant 0 : i32
    %c0_i32_1 = arith.constant 0 : i32
    return %c0_i32, %c0_i32_0 : i32, i32
  }
  func.func @transform_4(%arg0: i32) -> (i32, i32) {
    %c0_i32 = arith.constant 0 : i32
    %c0_i32_0 = arith.constant 0 : i32
    %c0_i32_1 = arith.constant 0 : i32
    return %c0_i32, %c0_i32_0 : i32, i32
  }
  func.func @transform_5(%arg0: i32) -> (i32, i32) {
    %c0_i32 = arith.constant 0 : i32
    %c0_i32_0 = arith.constant 0 : i32
    return %arg0, %c0_i32 : i32, i32
  }
}

</mosaic_0001>

<llo_original>
// kernel: discriminator_forward.3
$region0: #{discriminator_forward.3}
  #allocation0 [shape = 'u32[]', space=smem, size = 0x4, offset = 0x4, fixed_abs, tag = 'smem constant byte address 0x4 - core index']
  #allocation1 [shape = 'u32[72,128]{1,0:T(1,128)}', space=vmem, size = 0x9000, scoped, tag = 'internal scratch']
  #allocation2 [shape = 'f32[1,1]{1,0:T(1,128)S(1)}', space=vmem, size = 0x200, scoped, tag = 'scoped memory for discriminator_forward.3']
  %s0 = inlined_call_operand.vmem [shape: bf16[392,128], index: 0, kind: input, shape index: {}]
  %s1 = inlined_call_operand.vmem [shape: f32[1,128], index: 1, kind: input, shape index: {}]
  %s2 = inlined_call_operand.vmem [shape: f32[1,128], index: 2, kind: input, shape index: {}]
  %s3 = inlined_call_operand.vmem [shape: f32[49,128], index: 3, kind: input, shape index: {}]
  %s4 = inlined_call_operand.<no memory space> [shape: f32[1,1], index: 4, kind: input, shape index: {}]
  %s5 = inlined_call_operand.vmem [shape: f32[8,1], index: 5, kind: output, shape index: {}]
  %s6 = sld [smem:[#allocation0]]
  $region30: #{discriminator_forward.3} parent=0
    _
  %s8 = ssub.s32 1, %s6
  %s9 = scalar_select 0, %s8, %s6
  %v10 = vstv %s4
  %11 = vst [vmem:[#allocation2] sm:$0x1] %v10
  // Predicated region
  $region2: #{discriminator_forward.3} parent=0 // pred_check
    _
  $region3: #{discriminator_forward.3} parent=0 // pred_check_branch
    %13 = sbr.rel (0) target = $region5
  $region4: #{discriminator_forward.3} parent=0 // pred_region
    _
  $region5: #{discriminator_forward.3} parent=0 // pred_fallthru
    _
  // Predicated region
  $region6: #{discriminator_forward.3} parent=0 // pred_check
    _
  $region7: #{discriminator_forward.3} parent=0 // pred_check_branch
    %15 = sbr.rel (0) target = $region9
  $region8: #{discriminator_forward.3} parent=0 // pred_region
    _
  $region9: #{discriminator_forward.3} parent=0 // pred_fallthru
    _
  // Predicated region
  $region10: #{discriminator_forward.3} parent=0 // pred_check
    _
  $region11: #{discriminator_forward.3} parent=0 // pred_check_branch
    %17 = sbr.rel (0) target = $region13
  $region12: #{discriminator_forward.3} parent=0 // pred_region
    _
  $region13: #{discriminator_forward.3} parent=0 // pred_fallthru
    _
  // Predicated region
  $region14: #{discriminator_forward.3} parent=0 // pred_check
    _
  $region15: #{discriminator_forward.3} parent=0 // pred_check_branch
    %19 = sbr.rel (0) target = $region17
  $region16: #{discriminator_forward.3} parent=0 // pred_region
    _
  $region17: #{discriminator_forward.3} parent=0 // pred_fallthru
    _
  // Predicated region
  $region18: #{discriminator_forward.3} parent=0 // pred_check
    _
  $region19: #{discriminator_forward.3} parent=0 // pred_check_branch
    %21 = sbr.rel (0) target = $region21
  $region20: #{discriminator_forward.3} parent=0 // pred_region
    _
  $region21: #{discriminator_forward.3} parent=0 // pred_fallthru
    _
  %v22 = vld [vmem:[%s1] sm:$0x1]
  %v23 = vld [vmem:[%s2] sm:$0x1]
  %v24 = vld [vmem:[%s0] sm:$0xf]
  %v25 = vunpack.c.l.bf16 %v24
  %v27 = vperm.slane %v22, 0
  %v29 = vmul.f32 %v25, %v27
  %v31 = vperm.slane %v23, 0
  %v33 = vadd.f32 %v29, %v31
  %vm34 = vcmp.ge.f32.partialorder %v33, 0.0
  %v35 = vmul.f32 %v33, 0.2
  %v36 = vsel %vm34, %v33, %v35
  %v37 = vld [vmem:[%s3] sm:$0x1]
  %v38 = vperm.slane %v37, 0
  %v39 = vmul.f32 %v36, %v38
  %v40 = vadd.f32 %v39, 0.0
  %v41 = vld [vmem:[%s0 + $0x4] sm:$0xf]
  %v42 = vunpack.c.l.bf16 %v41
  %v43 = vmul.f32 %v42, %v27
  %v44 = vadd.f32 %v43, %v31
  %vm45 = vcmp.ge.f32.partialorder %v44, 0.0
  %v46 = vmul.f32 %v44, 0.2
  %v47 = vsel %vm45, %v44, %v46
  %v48 = vld [vmem:[%s3 + $0x1] sm:$0x1]
  %v49 = vperm.slane %v48, 0
  %v50 = vmul.f32 %v47, %v49
  %v51 = vadd.f32 %v40, %v50
  %v52 = vld [vmem:[%s0 + $0x8] sm:$0xf]
  %v53 = vunpack.c.l.bf16 %v52
  %v54 = vmul.f32 %v53, %v27
  %v55 = vadd.f32 %v54, %v31
  %vm56 = vcmp.ge.f32.partialorder %v55, 0.0
  %v57 = vmul.f32 %v55, 0.2
  %v58 = vsel %vm56, %v55, %v57
  %v59 = vld [vmem:[%s3 + $0x2] sm:$0x1]
  %v60 = vperm.slane %v59, 0
  %v61 = vmul.f32 %v58, %v60
  %v62 = vadd.f32 %v51, %v61
  %v63 = vld [vmem:[%s0 + $0xc] sm:$0xf]
  %v64 = vunpack.c.l.bf16 %v63
  %v65 = vmul.f32 %v64, %v27
  %v66 = vadd.f32 %v65, %v31
  %vm67 = vcmp.ge.f32.partialorder %v66, 0.0
  %v68 = vmul.f32 %v66, 0.2
  %v69 = vsel %vm67, %v66, %v68
  %v70 = vld [vmem:[%s3 + $0x3] sm:$0x1]
  %v71 = vperm.slane %v70, 0
  %v72 = vmul.f32 %v69, %v71
  %v73 = vadd.f32 %v62, %v72
  %v74 = vld [vmem:[%s0 + $0x10] sm:$0xf]
  %v75 = vunpack.c.l.bf16 %v74
  %v76 = vmul.f32 %v75, %v27
  %v77 = vadd.f32 %v76, %v31
  %vm78 = vcmp.ge.f32.partialorder %v77, 0.0
  %v79 = vmul.f32 %v77, 0.2
  %v80 = vsel %vm78, %v77, %v79
  %v81 = vld [vmem:[%s3 + $0x4] sm:$0x1]
  %v82 = vperm.slane %v81, 0
  %v83 = vmul.f32 %v80, %v82
  %v84 = vadd.f32 %v73, %v83
  %v85 = vld [vmem:[%s0 + $0x14] sm:$0xf]
  %v86 = vunpack.c.l.bf16 %v85
  %v87 = vmul.f32 %v86, %v27
  %v88 = vadd.f32 %v87, %v31
  %vm89 = vcmp.ge.f32.partialorder %v88, 0.0
  %v90 = vmul.f32 %v88, 0.2
  %v91 = vsel %vm89, %v88, %v90
  %v92 = vld [vmem:[%s3 + $0x5] sm:$0x1]
  %v93 = vperm.slane %v92, 0
  %v94 = vmul.f32 %v91, %v93
  %v95 = vadd.f32 %v84, %v94
  %v96 = vld [vmem:[%s0 + $0x18] sm:$0xf]
  %v97 = vunpack.c.l.bf16 %v96
  %v98 = vmul.f32 %v97, %v27
  %v99 = vadd.f32 %v98, %v31
  %vm100 = vcmp.ge.f32.partialorder %v99, 0.0
  %v101 = vmul.f32 %v99, 0.2
  %v102 = vsel %vm100, %v99, %v101
  %v103 = vld [vmem:[%s3 + $0x6] sm:$0x1]
  %v104 = vperm.slane %v103, 0
  %v105 = vmul.f32 %v102, %v104
  %v106 = vadd.f32 %v95, %v105
  %v107 = vld [vmem:[%s0 + $0x1c] sm:$0xf]
  %v108 = vunpack.c.l.bf16 %v107
  %v109 = vmul.f32 %v108, %v27
  %v110 = vadd.f32 %v109, %v31
  %vm111 = vcmp.ge.f32.partialorder %v110, 0.0
  %v112 = vmul.f32 %v110, 0.2
  %v113 = vsel %vm111, %v110, %v112
  %v114 = vld [vmem:[%s3 + $0x7] sm:$0x1]
  %v115 = vperm.slane %v114, 0
  %v116 = vmul.f32 %v113, %v115
  %v117 = vadd.f32 %v106, %v116
  %v118 = vld [vmem:[%s0 + $0x20] sm:$0xf]
  %v119 = vunpack.c.l.bf16 %v118
  %v120 = vmul.f32 %v119, %v27
  %v121 = vadd.f32 %v120, %v31
  %vm122 = vcmp.ge.f32.partialorder %v121, 0.0
  %v123 = vmul.f32 %v121, 0.2
  %v124 = vsel %vm122, %v121, %v123
  %v125 = vld [vmem:[%s3 + $0x8] sm:$0x1]
  %v126 = vperm.slane %v125, 0
  %v127 = vmul.f32 %v124, %v126
  %v128 = vadd.f32 %v117, %v127
  %v129 = vld [vmem:[%s0 + $0x24] sm:$0xf]
  %v130 = vunpack.c.l.bf16 %v129
  %v131 = vmul.f32 %v130, %v27
  %v132 = vadd.f32 %v131, %v31
  %vm133 = vcmp.ge.f32.partialorder %v132, 0.0
  %v134 = vmul.f32 %v132, 0.2
  %v135 = vsel %vm133, %v132, %v134
  %v136 = vld [vmem:[%s3 + $0x9] sm:$0x1]
  %v137 = vperm.slane %v136, 0
  %v138 = vmul.f32 %v135, %v137
  %v139 = vadd.f32 %v128, %v138
  %v140 = vld [vmem:[%s0 + $0x28] sm:$0xf]
  %v141 = vunpack.c.l.bf16 %v140
  %v142 = vmul.f32 %v141, %v27
  %v143 = vadd.f32 %v142, %v31
  %vm144 = vcmp.ge.f32.partialorder %v143, 0.0
  %v145 = vmul.f32 %v143, 0.2
  %v146 = vsel %vm144, %v143, %v145
  %v147 = vld [vmem:[%s3 + $0xa] sm:$0x1]
  %v148 = vperm.slane %v147, 0
  %v149 = vmul.f32 %v146, %v148
  %v150 = vadd.f32 %v139, %v149
  %v151 = vld [vmem:[%s0 + $0x2c] sm:$0xf]
  %v152 = vunpack.c.l.bf16 %v151
  %v153 = vmul.f32 %v152, %v27
  %v154 = vadd.f32 %v153, %v31
  %vm155 = vcmp.ge.f32.partialorder %v154, 0.0
  %v156 = vmul.f32 %v154, 0.2
  %v157 = vsel %vm155, %v154, %v156
  %v158 = vld [vmem:[%s3 + $0xb] sm:$0x1]
  %v159 = vperm.slane %v158, 0
  %v160 = vmul.f32 %v157, %v159
  %v161 = vadd.f32 %v150, %v160
  %v162 = vld [vmem:[%s0 + $0x30] sm:$0xf]
  %v163 = vunpack.c.l.bf16 %v162
  %v164 = vmul.f32 %v163, %v27
  %v165 = vadd.f32 %v164, %v31
  %vm166 = vcmp.ge.f32.partialorder %v165, 0.0
  %v167 = vmul.f32 %v165, 0.2
  %v168 = vsel %vm166, %v165, %v167
  %v169 = vld [vmem:[%s3 + $0xc] sm:$0x1]
  %v170 = vperm.slane %v169, 0
  %v171 = vmul.f32 %v168, %v170
  %v172 = vadd.f32 %v161, %v171
  %v173 = vld [vmem:[%s0 + $0x34] sm:$0xf]
  %v174 = vunpack.c.l.bf16 %v173
  %v175 = vmul.f32 %v174, %v27
  %v176 = vadd.f32 %v175, %v31
  %vm177 = vcmp.ge.f32.partialorder %v176, 0.0
  %v178 = vmul.f32 %v176, 0.2
  %v179 = vsel %vm177, %v176, %v178
  %v180 = vld [vmem:[%s3 + $0xd] sm:$0x1]
  %v181 = vperm.slane %v180, 0
  %v182 = vmul.f32 %v179, %v181
  %v183 = vadd.f32 %v172, %v182
  %v184 = vld [vmem:[%s0 + $0x38] sm:$0xf]
  %v185 = vunpack.c.l.bf16 %v184
  %v186 = vmul.f32 %v185, %v27
  %v187 = vadd.f32 %v186, %v31
  %vm188 = vcmp.ge.f32.partialorder %v187, 0.0
  %v189 = vmul.f32 %v187, 0.2
  %v190 = vsel %vm188, %v187, %v189
  %v191 = vld [vmem:[%s3 + $0xe] sm:$0x1]
  %v192 = vperm.slane %v191, 0
  %v193 = vmul.f32 %v190, %v192
  %v194 = vadd.f32 %v183, %v193
  %v195 = vld [vmem:[%s0 + $0x3c] sm:$0xf]
  %v196 = vunpack.c.l.bf16 %v195
  %v197 = vmul.f32 %v196, %v27
  %v198 = vadd.f32 %v197, %v31
  %vm199 = vcmp.ge.f32.partialorder %v198, 0.0
  %v200 = vmul.f32 %v198, 0.2
  %v201 = vsel %vm199, %v198, %v200
  %v202 = vld [vmem:[%s3 + $0xf] sm:$0x1]
  %v203 = vperm.slane %v202, 0
  %v204 = vmul.f32 %v201, %v203
  %v205 = vadd.f32 %v194, %v204
  %v206 = vld [vmem:[%s0 + $0x40] sm:$0xf]
  %v207 = vunpack.c.l.bf16 %v206
  %v208 = vmul.f32 %v207, %v27
  %v209 = vadd.f32 %v208, %v31
  %vm210 = vcmp.ge.f32.partialorder %v209, 0.0
  %v211 = vmul.f32 %v209, 0.2
  %v212 = vsel %vm210, %v209, %v211
  %v213 = vld [vmem:[%s3 + $0x10] sm:$0x1]
  %v214 = vperm.slane %v213, 0
  %v215 = vmul.f32 %v212, %v214
  %v216 = vadd.f32 %v205, %v215
  %v217 = vld [vmem:[%s0 + $0x44] sm:$0xf]
  %v218 = vunpack.c.l.bf16 %v217
  %v219 = vmul.f32 %v218, %v27
  %v220 = vadd.f32 %v219, %v31
  %vm221 = vcmp.ge.f32.partialorder %v220, 0.0
  %v222 = vmul.f32 %v220, 0.2
  %v223 = vsel %vm221, %v220, %v222
  %v224 = vld [vmem:[%s3 + $0x11] sm:$0x1]
  %v225 = vperm.slane %v224, 0
  %v226 = vmul.f32 %v223, %v225
  %v227 = vadd.f32 %v216, %v226
  %v228 = vld [vmem:[%s0 + $0x48] sm:$0xf]
  %v229 = vunpack.c.l.bf16 %v228
  %v230 = vmul.f32 %v229, %v27
  %v231 = vadd.f32 %v230, %v31
  %vm232 = vcmp.ge.f32.partialorder %v231, 0.0
  %v233 = vmul.f32 %v231, 0.2
  %v234 = vsel %vm232, %v231, %v233
  %v235 = vld [vmem:[%s3 + $0x12] sm:$0x1]
  %v236 = vperm.slane %v235, 0
  %v237 = vmul.f32 %v234, %v236
  %v238 = vadd.f32 %v227, %v237
  %v239 = vld [vmem:[%s0 + $0x4c] sm:$0xf]
  %v240 = vunpack.c.l.bf16 %v239
  %v241 = vmul.f32 %v240, %v27
  %v242 = vadd.f32 %v241, %v31
  %vm243 = vcmp.ge.f32.partialorder %v242, 0.0
  %v244 = vmul.f32 %v242, 0.2
  %v245 = vsel %vm243, %v242, %v244
  %v246 = vld [vmem:[%s3 + $0x13] sm:$0x1]
  %v247 = vperm.slane %v246, 0
  %v248 = vmul.f32 %v245, %v247
  %v249 = vadd.f32 %v238, %v248
  %v250 = vld [vmem:[%s0 + $0x50] sm:$0xf]
  %v251 = vunpack.c.l.bf16 %v250
  %v252 = vmul.f32 %v251, %v27
  %v253 = vadd.f32 %v252, %v31
  %vm254 = vcmp.ge.f32.partialorder %v253, 0.0
  %v255 = vmul.f32 %v253, 0.2
  %v256 = vsel %vm254, %v253, %v255
  %v257 = vld [vmem:[%s3 + $0x14] sm:$0x1]
  %v258 = vperm.slane %v257, 0
  %v259 = vmul.f32 %v256, %v258
  %v260 = vadd.f32 %v249, %v259
  %v261 = vld [vmem:[%s0 + $0x54] sm:$0xf]
  %v262 = vunpack.c.l.bf16 %v261
  %v263 = vmul.f32 %v262, %v27
  %v264 = vadd.f32 %v263, %v31
  %vm265 = vcmp.ge.f32.partialorder %v264, 0.0
  %v266 = vmul.f32 %v264, 0.2
  %v267 = vsel %vm265, %v264, %v266
  %v268 = vld [vmem:[%s3 + $0x15] sm:$0x1]
  %v269 = vperm.slane %v268, 0
  %v270 = vmul.f32 %v267, %v269
  %v271 = vadd.f32 %v260, %v270
  %v272 = vld [vmem:[%s0 + $0x58] sm:$0xf]
  %v273 = vunpack.c.l.bf16 %v272
  %v274 = vmul.f32 %v273, %v27
  %v275 = vadd.f32 %v274, %v31
  %vm276 = vcmp.ge.f32.partialorder %v275, 0.0
  %v277 = vmul.f32 %v275, 0.2
  %v278 = vsel %vm276, %v275, %v277
  %v279 = vld [vmem:[%s3 + $0x16] sm:$0x1]
  %v280 = vperm.slane %v279, 0
  %v281 = vmul.f32 %v278, %v280
  %v282 = vadd.f32 %v271, %v281
  %v283 = vld [vmem:[%s0 + $0x5c] sm:$0xf]
  %v284 = vunpack.c.l.bf16 %v283
  %v285 = vmul.f32 %v284, %v27
  %v286 = vadd.f32 %v285, %v31
  %vm287 = vcmp.ge.f32.partialorder %v286, 0.0
  %v288 = vmul.f32 %v286, 0.2
  %v289 = vsel %vm287, %v286, %v288
  %v290 = vld [vmem:[%s3 + $0x17] sm:$0x1]
  %v291 = vperm.slane %v290, 0
  %v292 = vmul.f32 %v289, %v291
  %v293 = vadd.f32 %v282, %v292
  %v294 = vld [vmem:[%s0 + $0x60] sm:$0xf]
  %v295 = vunpack.c.l.bf16 %v294
  %v296 = vmul.f32 %v295, %v27
  %v297 = vadd.f32 %v296, %v31
  %vm298 = vcmp.ge.f32.partialorder %v297, 0.0
  %v299 = vmul.f32 %v297, 0.2
  %v300 = vsel %vm298, %v297, %v299
  %v301 = vld [vmem:[%s3 + $0x18] sm:$0x1]
  %v302 = vperm.slane %v301, 0
  %v303 = vmul.f32 %v300, %v302
  %v304 = vadd.f32 %v293, %v303
  %v305 = vld [vmem:[%s0 + $0x64] sm:$0xf]
  %v306 = vunpack.c.l.bf16 %v305
  %v307 = vmul.f32 %v306, %v27
  %v308 = vadd.f32 %v307, %v31
  %vm309 = vcmp.ge.f32.partialorder %v308, 0.0
  %v310 = vmul.f32 %v308, 0.2
  %v311 = vsel %vm309, %v308, %v310
  %v312 = vld [vmem:[%s3 + $0x19] sm:$0x1]
  %v313 = vperm.slane %v312, 0
  %v314 = vmul.f32 %v311, %v313
  %v315 = vadd.f32 %v304, %v314
  %v316 = vld [vmem:[%s0 + $0x68] sm:$0xf]
  %v317 = vunpack.c.l.bf16 %v316
  %v318 = vmul.f32 %v317, %v27
  %v319 = vadd.f32 %v318, %v31
  %vm320 = vcmp.ge.f32.partialorder %v319, 0.0
  %v321 = vmul.f32 %v319, 0.2
  %v322 = vsel %vm320, %v319, %v321
  %v323 = vld [vmem:[%s3 + $0x1a] sm:$0x1]
  %v324 = vperm.slane %v323, 0
  %v325 = vmul.f32 %v322, %v324
  %v326 = vadd.f32 %v315, %v325
  %v327 = vld [vmem:[%s0 + $0x6c] sm:$0xf]
  %v328 = vunpack.c.l.bf16 %v327
  %v329 = vmul.f32 %v328, %v27
  %v330 = vadd.f32 %v329, %v31
  %vm331 = vcmp.ge.f32.partialorder %v330, 0.0
  %v332 = vmul.f32 %v330, 0.2
  %v333 = vsel %vm331, %v330, %v332
  %v334 = vld [vmem:[%s3 + $0x1b] sm:$0x1]
  %v335 = vperm.slane %v334, 0
  %v336 = vmul.f32 %v333, %v335
  %v337 = vadd.f32 %v326, %v336
  %v338 = vld [vmem:[%s0 + $0x70] sm:$0xf]
  %v339 = vunpack.c.l.bf16 %v338
  %v340 = vmul.f32 %v339, %v27
  %v341 = vadd.f32 %v340, %v31
  %vm342 = vcmp.ge.f32.partialorder %v341, 0.0
  %v343 = vmul.f32 %v341, 0.2
  %v344 = vsel %vm342, %v341, %v343
  %v345 = vld [vmem:[%s3 + $0x1c] sm:$0x1]
  %v346 = vperm.slane %v345, 0
  %v347 = vmul.f32 %v344, %v346
  %v348 = vadd.f32 %v337, %v347
  %v349 = vld [vmem:[%s0 + $0x74] sm:$0xf]
  %v350 = vunpack.c.l.bf16 %v349
  %v351 = vmul.f32 %v350, %v27
  %v352 = vadd.f32 %v351, %v31
  %vm353 = vcmp.ge.f32.partialorder %v352, 0.0
  %v354 = vmul.f32 %v352, 0.2
  %v355 = vsel %vm353, %v352, %v354
  %v356 = vld [vmem:[%s3 + $0x1d] sm:$0x1]
  %v357 = vperm.slane %v356, 0
  %v358 = vmul.f32 %v355, %v357
  %v359 = vadd.f32 %v348, %v358
  %v360 = vld [vmem:[%s0 + $0x78] sm:$0xf]
  %v361 = vunpack.c.l.bf16 %v360
  %v362 = vmul.f32 %v361, %v27
  %v363 = vadd.f32 %v362, %v31
  %vm364 = vcmp.ge.f32.partialorder %v363, 0.0
  %v365 = vmul.f32 %v363, 0.2
  %v366 = vsel %vm364, %v363, %v365
  %v367 = vld [vmem:[%s3 + $0x1e] sm:$0x1]
  %v368 = vperm.slane %v367, 0
  %v369 = vmul.f32 %v366, %v368
  %v370 = vadd.f32 %v359, %v369
  %v371 = vld [vmem:[%s0 + $0x7c] sm:$0xf]
  %v372 = vunpack.c.l.bf16 %v371
  %v373 = vmul.f32 %v372, %v27
  %v374 = vadd.f32 %v373, %v31
  %vm375 = vcmp.ge.f32.partialorder %v374, 0.0
  %v376 = vmul.f32 %v374, 0.2
  %v377 = vsel %vm375, %v374, %v376
  %v378 = vld [vmem:[%s3 + $0x1f] sm:$0x1]
  %v379 = vperm.slane %v378, 0
  %v380 = vmul.f32 %v377, %v379
  %v381 = vadd.f32 %v370, %v380
  %v382 = vld [vmem:[%s0 + $0x80] sm:$0xf]
  %v383 = vunpack.c.l.bf16 %v382
  %v384 = vmul.f32 %v383, %v27
  %v385 = vadd.f32 %v384, %v31
  %vm386 = vcmp.ge.f32.partialorder %v385, 0.0
  %v387 = vmul.f32 %v385, 0.2
  %v388 = vsel %vm386, %v385, %v387
  %v389 = vld [vmem:[%s3 + $0x20] sm:$0x1]
  %v390 = vperm.slane %v389, 0
  %v391 = vmul.f32 %v388, %v390
  %v392 = vadd.f32 %v381, %v391
  %v393 = vld [vmem:[%s0 + $0x84] sm:$0xf]
  %v394 = vunpack.c.l.bf16 %v393
  %v395 = vmul.f32 %v394, %v27
  %v396 = vadd.f32 %v395, %v31
  %vm397 = vcmp.ge.f32.partialorder %v396, 0.0
  %v398 = vmul.f32 %v396, 0.2
  %v399 = vsel %vm397, %v396, %v398
  %v400 = vld [vmem:[%s3 + $0x21] sm:$0x1]
  %v401 = vperm.slane %v400, 0
  %v402 = vmul.f32 %v399, %v401
  %v403 = vadd.f32 %v392, %v402
  %v404 = vld [vmem:[%s0 + $0x88] sm:$0xf]
  %v405 = vunpack.c.l.bf16 %v404
  %v406 = vmul.f32 %v405, %v27
  %v407 = vadd.f32 %v406, %v31
  %vm408 = vcmp.ge.f32.partialorder %v407, 0.0
  %v409 = vmul.f32 %v407, 0.2
  %v410 = vsel %vm408, %v407, %v409
  %v411 = vld [vmem:[%s3 + $0x22] sm:$0x1]
  %v412 = vperm.slane %v411, 0
  %v413 = vmul.f32 %v410, %v412
  %v414 = vadd.f32 %v403, %v413
  %v415 = vld [vmem:[%s0 + $0x8c] sm:$0xf]
  %v416 = vunpack.c.l.bf16 %v415
  %v417 = vmul.f32 %v416, %v27
  %v418 = vadd.f32 %v417, %v31
  %vm419 = vcmp.ge.f32.partialorder %v418, 0.0
  %v420 = vmul.f32 %v418, 0.2
  %v421 = vsel %vm419, %v418, %v420
  %v422 = vld [vmem:[%s3 + $0x23] sm:$0x1]
  %v423 = vperm.slane %v422, 0
  %v424 = vmul.f32 %v421, %v423
  %v425 = vadd.f32 %v414, %v424
  %v426 = vld [vmem:[%s0 + $0x90] sm:$0xf]
  %v427 = vunpack.c.l.bf16 %v426
  %v428 = vmul.f32 %v427, %v27
  %v429 = vadd.f32 %v428, %v31
  %vm430 = vcmp.ge.f32.partialorder %v429, 0.0
  %v431 = vmul.f32 %v429, 0.2
  %v432 = vsel %vm430, %v429, %v431
  %v433 = vld [vmem:[%s3 + $0x24] sm:$0x1]
  %v434 = vperm.slane %v433, 0
  %v435 = vmul.f32 %v432, %v434
  %v436 = vadd.f32 %v425, %v435
  %v437 = vld [vmem:[%s0 + $0x94] sm:$0xf]
  %v438 = vunpack.c.l.bf16 %v437
  %v439 = vmul.f32 %v438, %v27
  %v440 = vadd.f32 %v439, %v31
  %vm441 = vcmp.ge.f32.partialorder %v440, 0.0
  %v442 = vmul.f32 %v440, 0.2
  %v443 = vsel %vm441, %v440, %v442
  %v444 = vld [vmem:[%s3 + $0x25] sm:$0x1]
  %v445 = vperm.slane %v444, 0
  %v446 = vmul.f32 %v443, %v445
  %v447 = vadd.f32 %v436, %v446
  %v448 = vld [vmem:[%s0 + $0x98] sm:$0xf]
  %v449 = vunpack.c.l.bf16 %v448
  %v450 = vmul.f32 %v449, %v27
  %v451 = vadd.f32 %v450, %v31
  %vm452 = vcmp.ge.f32.partialorder %v451, 0.0
  %v453 = vmul.f32 %v451, 0.2
  %v454 = vsel %vm452, %v451, %v453
  %v455 = vld [vmem:[%s3 + $0x26] sm:$0x1]
  %v456 = vperm.slane %v455, 0
  %v457 = vmul.f32 %v454, %v456
  %v458 = vadd.f32 %v447, %v457
  %v459 = vld [vmem:[%s0 + $0x9c] sm:$0xf]
  %v460 = vunpack.c.l.bf16 %v459
  %v461 = vmul.f32 %v460, %v27
  %v462 = vadd.f32 %v461, %v31
  %vm463 = vcmp.ge.f32.partialorder %v462, 0.0
  %v464 = vmul.f32 %v462, 0.2
  %v465 = vsel %vm463, %v462, %v464
  %v466 = vld [vmem:[%s3 + $0x27] sm:$0x1]
  %v467 = vperm.slane %v466, 0
  %v468 = vmul.f32 %v465, %v467
  %v469 = vadd.f32 %v458, %v468
  %v470 = vld [vmem:[%s0 + $0xa0] sm:$0xf]
  %v471 = vunpack.c.l.bf16 %v470
  %v472 = vmul.f32 %v471, %v27
  %v473 = vadd.f32 %v472, %v31
  %vm474 = vcmp.ge.f32.partialorder %v473, 0.0
  %v475 = vmul.f32 %v473, 0.2
  %v476 = vsel %vm474, %v473, %v475
  %v477 = vld [vmem:[%s3 + $0x28] sm:$0x1]
  %v478 = vperm.slane %v477, 0
  %v479 = vmul.f32 %v476, %v478
  %v480 = vadd.f32 %v469, %v479
  %v481 = vld [vmem:[%s0 + $0xa4] sm:$0xf]
  %v482 = vunpack.c.l.bf16 %v481
  %v483 = vmul.f32 %v482, %v27
  %v484 = vadd.f32 %v483, %v31
  %vm485 = vcmp.ge.f32.partialorder %v484, 0.0
  %v486 = vmul.f32 %v484, 0.2
  %v487 = vsel %vm485, %v484, %v486
  %v488 = vld [vmem:[%s3 + $0x29] sm:$0x1]
  %v489 = vperm.slane %v488, 0
  %v490 = vmul.f32 %v487, %v489
  %v491 = vadd.f32 %v480, %v490
  %v492 = vld [vmem:[%s0 + $0xa8] sm:$0xf]
  %v493 = vunpack.c.l.bf16 %v492
  %v494 = vmul.f32 %v493, %v27
  %v495 = vadd.f32 %v494, %v31
  %vm496 = vcmp.ge.f32.partialorder %v495, 0.0
  %v497 = vmul.f32 %v495, 0.2
  %v498 = vsel %vm496, %v495, %v497
  %v499 = vld [vmem:[%s3 + $0x2a] sm:$0x1]
  %v500 = vperm.slane %v499, 0
  %v501 = vmul.f32 %v498, %v500
  %v502 = vadd.f32 %v491, %v501
  %v503 = vld [vmem:[%s0 + $0xac] sm:$0xf]
  %v504 = vunpack.c.l.bf16 %v503
  %v505 = vmul.f32 %v504, %v27
  %v506 = vadd.f32 %v505, %v31
  %vm507 = vcmp.ge.f32.partialorder %v506, 0.0
  %v508 = vmul.f32 %v506, 0.2
  %v509 = vsel %vm507, %v506, %v508
  %v510 = vld [vmem:[%s3 + $0x2b] sm:$0x1]
  %v511 = vperm.slane %v510, 0
  %v512 = vmul.f32 %v509, %v511
  %v513 = vadd.f32 %v502, %v512
  %v514 = vld [vmem:[%s0 + $0xb0] sm:$0xf]
  %v515 = vunpack.c.l.bf16 %v514
  %v516 = vmul.f32 %v515, %v27
  %v517 = vadd.f32 %v516, %v31
  %vm518 = vcmp.ge.f32.partialorder %v517, 0.0
  %v519 = vmul.f32 %v517, 0.2
  %v520 = vsel %vm518, %v517, %v519
  %v521 = vld [vmem:[%s3 + $0x2c] sm:$0x1]
  %v522 = vperm.slane %v521, 0
  %v523 = vmul.f32 %v520, %v522
  %v524 = vadd.f32 %v513, %v523
  %v525 = vld [vmem:[%s0 + $0xb4] sm:$0xf]
  %v526 = vunpack.c.l.bf16 %v525
  %v527 = vmul.f32 %v526, %v27
  %v528 = vadd.f32 %v527, %v31
  %vm529 = vcmp.ge.f32.partialorder %v528, 0.0
  %v530 = vmul.f32 %v528, 0.2
  %v531 = vsel %vm529, %v528, %v530
  %v532 = vld [vmem:[%s3 + $0x2d] sm:$0x1]
  %v533 = vperm.slane %v532, 0
  %v534 = vmul.f32 %v531, %v533
  %v535 = vadd.f32 %v524, %v534
  %v536 = vld [vmem:[%s0 + $0xb8] sm:$0xf]
  %v537 = vunpack.c.l.bf16 %v536
  %v538 = vmul.f32 %v537, %v27
  %v539 = vadd.f32 %v538, %v31
  %vm540 = vcmp.ge.f32.partialorder %v539, 0.0
  %v541 = vmul.f32 %v539, 0.2
  %v542 = vsel %vm540, %v539, %v541
  %v543 = vld [vmem:[%s3 + $0x2e] sm:$0x1]
  %v544 = vperm.slane %v543, 0
  %v545 = vmul.f32 %v542, %v544
  %v546 = vadd.f32 %v535, %v545
  %v547 = vld [vmem:[%s0 + $0xbc] sm:$0xf]
  %v548 = vunpack.c.l.bf16 %v547
  %v549 = vmul.f32 %v548, %v27
  %v550 = vadd.f32 %v549, %v31
  %vm551 = vcmp.ge.f32.partialorder %v550, 0.0
  %v552 = vmul.f32 %v550, 0.2
  %v553 = vsel %vm551, %v550, %v552
  %v554 = vld [vmem:[%s3 + $0x2f] sm:$0x1]
  %v555 = vperm.slane %v554, 0
  %v556 = vmul.f32 %v553, %v555
  %v557 = vadd.f32 %v546, %v556
  %v558 = vld [vmem:[%s0 + $0xc0] sm:$0xf]
  %v559 = vunpack.c.l.bf16 %v558
  %v560 = vmul.f32 %v559, %v27
  %v561 = vadd.f32 %v560, %v31
  %vm562 = vcmp.ge.f32.partialorder %v561, 0.0
  %v563 = vmul.f32 %v561, 0.2
  %v564 = vsel %vm562, %v561, %v563
  %v565 = vld [vmem:[%s3 + $0x30] sm:$0x1]
  %v566 = vperm.slane %v565, 0
  %v567 = vmul.f32 %v564, %v566
  %v568 = vadd.f32 %v557, %v567
  %569 = vadd.xlane.f32.xlu0 %v568
  %v570 = vpop.xlane.xlu0 %569
  %v571 = vld [vmem:[#allocation2] sm:$0x1]
  %v573 = vperm.slane %v571, 0
  %v575 = vadd.f32 %v570, %v573
  %v576 = vsub.f32 0.0, %v575
  %v577 = vmul.f32 %v576, 1.442695
  %v578 = vpow.pop %v577
  %v579 = vadd.f32 %v578, 1.0
  %v580 = vrcp.pop %v579
  %vm581 = vcmask 7168
  %582 = vst.msk [vmem:[%s5] sm:$0xff] %vm581, %v580
  // Predicated region
  $region22: #{discriminator_forward.3} parent=0 // pred_check
    _
  $region23: #{discriminator_forward.3} parent=0 // pred_check_branch
    %584 = sbr.rel (0) target = $region25
  $region24: #{discriminator_forward.3} parent=0 // pred_region
    _
  $region25: #{discriminator_forward.3} parent=0 // pred_fallthru
    _
  // Predicated region
  $region26: #{discriminator_forward.3} parent=0 // pred_check
    _
  $region27: #{discriminator_forward.3} parent=0 // pred_check_branch
    %586 = sbr.rel (0) target = $region29
  $region28: #{discriminator_forward.3} parent=0 // pred_region
    _
  $region29: #{discriminator_forward.3} parent=0 // pred_fallthru
    _

// kernel: discriminator_forward.2
$region0: #{discriminator_forward.2}
  #allocation0 [shape = 'u32[]', space=smem, size = 0x4, offset = 0x4, fixed_abs, tag = 'smem constant byte address 0x4 - core index']
  #allocation1 [shape = 'u32[72,128]{1,0:T(1,128)}', space=vmem, size = 0x9000, scoped, tag = 'internal scratch']
  #allocation2 [shape = 'bf16[392,256]{1,0:T(8,128)(2,1)}', space=vmem, size = 0x31000, scoped, tag = 'scratch operand']
  %s0 = inlined_call_operand.vmem [shape: bf16[392,64], index: 0, kind: input, shape index: {}]
  %s1 = inlined_call_operand.vmem [shape: bf16[64,256], index: 1, kind: input, shape index: {}]
  %s2 = inlined_call_operand.vmem [shape: f32[1,256], index: 2, kind: input, shape index: {}]
  %s3 = inlined_call_operand.vmem [shape: bf16[4,256,128], index: 3, kind: input, shape index: {}]
  %s4 = inlined_call_operand.vmem [shape: f32[1,128], index: 4, kind: input, shape index: {}]
  %s5 = inlined_call_operand.vmem [shape: bf16[392,128], index: 5, kind: output, shape index: {0}]
  %s6 = inlined_call_operand.vmem [shape: f32[1,2,128], index: 6, kind: output, shape index: {1}]
  %7 = xla_tuple %s5, %s6
  %s8 = sld [smem:[#allocation0]]
  $region38: #{discriminator_forward.2} parent=0
    _
  %s10 = ssub.s32 1, %s8
  %s11 = scalar_select 0, %s10, %s8
  // Predicated region
  $region2: #{discriminator_forward.2} parent=0 // pred_check
    _
  $region3: #{discriminator_forward.2} parent=0 // pred_check_branch
    %13 = sbr.rel (0) target = $region5
  $region4: #{discriminator_forward.2} parent=0 // pred_region
    _
  $region5: #{discriminator_forward.2} parent=0 // pred_fallthru
    _
  // Predicated region
  $region6: #{discriminator_forward.2} parent=0 // pred_check
    _
  $region7: #{discriminator_forward.2} parent=0 // pred_check_branch
    %15 = sbr.rel (0) target = $region9
  $region8: #{discriminator_forward.2} parent=0 // pred_region
    _
  $region9: #{discriminator_forward.2} parent=0 // pred_fallthru
    _
  // Predicated region
  $region10: #{discriminator_forward.2} parent=0 // pred_check
    _
  $region11: #{discriminator_forward.2} parent=0 // pred_check_branch
    %17 = sbr.rel (0) target = $region13
  $region12: #{discriminator_forward.2} parent=0 // pred_region
    _
  $region13: #{discriminator_forward.2} parent=0 // pred_fallthru
    _
  // Predicated region
  $region14: #{discriminator_forward.2} parent=0 // pred_check
    _
  $region15: #{discriminator_forward.2} parent=0 // pred_check_branch
    %19 = sbr.rel (0) target = $region17
  $region16: #{discriminator_forward.2} parent=0 // pred_region
    _
  $region17: #{discriminator_forward.2} parent=0 // pred_fallthru
    _
  // Predicated region
  $region18: #{discriminator_forward.2} parent=0 // pred_check
    _
  $region19: #{discriminator_forward.2} parent=0 // pred_check_branch
    %21 = sbr.rel (0) target = $region21
  $region20: #{discriminator_forward.2} parent=0 // pred_region
    _
  $region21: #{discriminator_forward.2} parent=0 // pred_fallthru
    _
  %v23 = vld [vmem:[%s1] sm:$0xff]
  %v24 = vld [vmem:[%s1 + $0x8] sm:$0xff]
  %v25 = vld [vmem:[%s1 + $0x10] sm:$0xff]
  %v26 = vld [vmem:[%s1 + $0x18] sm:$0xff]
  %v27 = vld [vmem:[%s1 + $0x20] sm:$0xff]
  %v28 = vld [vmem:[%s1 + $0x28] sm:$0xff]
  %v29 = vld [vmem:[%s1 + $0x30] sm:$0xff]
  %v30 = vld [vmem:[%s1 + $0x38] sm:$0xff]
  %v31 = vld [vmem:[%s2] sm:$0x3]
  %v32 = vld [vmem:[%s4] sm:$0x1]
  %v33 = vld [vmem:[%s0] sm:$0xf]
  %v34 = vld [vmem:[%s0 + $0x4] sm:$0xf]
  %v35 = vld [vmem:[%s0 + $0x8] sm:$0xf]
  %v36 = vld [vmem:[%s0 + $0xc] sm:$0xf]
  %v37 = vld [vmem:[%s0 + $0x10] sm:$0xf]
  %v38 = vld [vmem:[%s0 + $0x14] sm:$0xf]
  %v39 = vld [vmem:[%s0 + $0x18] sm:$0xf]
  %v41 = vperm.slane %v31, 0
  %v42 = vperm.slane %v31, 1
  %v52 = vunpack.c.l.b16 %v33
  %v53 = vunpack.c.l.b16 %v34
  %v54 = vunpack.c.l.b16 %v35
  %v55 = vunpack.c.l.b16 %v36
  %v56 = vunpack.c.l.b16 %v37
  %v57 = vunpack.c.l.b16 %v38
  %v58 = vunpack.c.l.b16 %v39
  %v59 = vpack.c.b16 %v53, %v52
  %v60 = vpack.c.b16 %v55, %v54
  %v61 = vpack.c.b16 %v57, %v56
  %v62 = vpack.c.b16 %v58, %v58
  %v71 = vunpack.c.l.b16 %v23
  %v72 = vunpack.c.h.b16 %v23
  %v73 = vunpack.c.l.b16 %v24
  %v74 = vunpack.c.h.b16 %v24
  %v75 = vunpack.c.l.b16 %v25
  %v76 = vunpack.c.h.b16 %v25
  %v77 = vunpack.c.l.b16 %v26
  %v78 = vunpack.c.h.b16 %v26
  %v79 = vunpack.c.l.b16 %v27
  %v80 = vunpack.c.h.b16 %v27
  %v81 = vunpack.c.l.b16 %v28
  %v82 = vunpack.c.h.b16 %v28
  %v83 = vunpack.c.l.b16 %v29
  %v84 = vunpack.c.h.b16 %v29
  %v85 = vunpack.c.l.b16 %v30
  %v86 = vunpack.c.h.b16 %v30
  %v87 = vpack.c.b16 %v73, %v71
  %v88 = vpack.c.b16 %v74, %v72
  %v89 = vpack.c.b16 %v77, %v75
  %v90 = vpack.c.b16 %v78, %v76
  %v91 = vpack.c.b16 %v81, %v79
  %v92 = vpack.c.b16 %v82, %v80
  %v93 = vpack.c.b16 %v85, %v83
  %v94 = vpack.c.b16 %v86, %v84
  %vm103 = vcmask 523264
  %v105 = vsel %vm103, %v59, 0
  %v108 = vsel %vm103, %v60, 0
  %v111 = vsel %vm103, %v61, 0
  %v114 = vsel %vm103, %v62, 0
  %116 = vmatpush.bf16.msra.mxu0 0
  %117 = vmatpush.bf16.msra.mxu0 0
  %118 = vmatpush.bf16.msra.mxu0 0
  %119 = vmatpush.bf16.msra.mxu0 0
  %120 = vmatpush.bf16.msra.mxu0 %v93
  %121 = vmatpush.bf16.msra.mxu0 %v91
  %122 = vmatpush.bf16.msra.mxu0 %v89
  %123 = vmatpush.bf16.msra.mxu0 %v87
  %124 = vmatmul.bf16.gmra.mxu0 %v105
  %v125 = vpop.f32.mrf.mxu0
  %v126 = vadd.f32 %v41, %v125
  %v127 = vpop.f32.mrf.mxu0
  %v128 = vadd.f32 %v41, %v127
  %129 = vmatmul.bf16.gmra.mxu0 %v108
  %v130 = vpop.f32.mrf.mxu0
  %v131 = vadd.f32 %v41, %v130
  %v132 = vpop.f32.mrf.mxu0
  %v133 = vadd.f32 %v41, %v132
  %134 = vmatmul.bf16.gmra.mxu0 %v111
  %v135 = vpop.f32.mrf.mxu0
  %v136 = vadd.f32 %v41, %v135
  %v137 = vpop.f32.mrf.mxu0
  %v138 = vadd.f32 %v41, %v137
  %139 = vmatmul.bf16.gmra.mxu0 %v114
  %v140 = vpop.f32.mrf.mxu0
  %v141 = vadd.f32 %v41, %v140
  %v142 = vpop.f32.mrf.mxu0
  %143 = vdwg.mxu0
  %144 = vmatpush.bf16.msra.mxu0 0
  %145 = vmatpush.bf16.msra.mxu0 0
  %146 = vmatpush.bf16.msra.mxu0 0
  %147 = vmatpush.bf16.msra.mxu0 0
  %148 = vmatpush.bf16.msra.mxu0 %v94
  %149 = vmatpush.bf16.msra.mxu0 %v92
  %150 = vmatpush.bf16.msra.mxu0 %v90
  %151 = vmatpush.bf16.msra.mxu0 %v88
  %152 = vmatmul.bf16.gmra.mxu0 %v105
  %v153 = vpop.f32.mrf.mxu0
  %v154 = vadd.f32 %v42, %v153
  %v155 = vpop.f32.mrf.mxu0
  %v156 = vadd.f32 %v42, %v155
  %157 = vmatmul.bf16.gmra.mxu0 %v108
  %v158 = vpop.f32.mrf.mxu0
  %v159 = vadd.f32 %v42, %v158
  %v160 = vpop.f32.mrf.mxu0
  %v161 = vadd.f32 %v42, %v160
  %162 = vmatmul.bf16.gmra.mxu0 %v111
  %v163 = vpop.f32.mrf.mxu0
  %v164 = vadd.f32 %v42, %v163
  %v165 = vpop.f32.mrf.mxu0
  %v166 = vadd.f32 %v42, %v165
  %167 = vmatmul.bf16.gmra.mxu0 %v114
  %v168 = vpop.f32.mrf.mxu0
  %v169 = vadd.f32 %v42, %v168
  %v170 = vpop.f32.mrf.mxu0
  %171 = vdwg.mxu0
  %vm172 = vcmp.ge.f32.partialorder %v126, 0.0
  %vm173 = vcmp.ge.f32.partialorder %v154, 0.0
  %vm174 = vcmp.ge.f32.partialorder %v128, 0.0
  %vm175 = vcmp.ge.f32.partialorder %v156, 0.0
  %vm176 = vcmp.ge.f32.partialorder %v131, 0.0
  %vm177 = vcmp.ge.f32.partialorder %v159, 0.0
  %vm178 = vcmp.ge.f32.partialorder %v133, 0.0
  %vm179 = vcmp.ge.f32.partialorder %v161, 0.0
  %vm180 = vcmp.ge.f32.partialorder %v136, 0.0
  %vm181 = vcmp.ge.f32.partialorder %v164, 0.0
  %vm182 = vcmp.ge.f32.partialorder %v138, 0.0
  %vm183 = vcmp.ge.f32.partialorder %v166, 0.0
  %vm184 = vcmp.ge.f32.partialorder %v141, 0.0
  %vm185 = vcmp.ge.f32.partialorder %v169, 0.0
  %v186 = vmul.f32 %v126, 0.2
  %v187 = vmul.f32 %v154, 0.2
  %v188 = vmul.f32 %v128, 0.2
  %v189 = vmul.f32 %v156, 0.2
  %v190 = vmul.f32 %v131, 0.2
  %v191 = vmul.f32 %v159, 0.2
  %v192 = vmul.f32 %v133, 0.2
  %v193 = vmul.f32 %v161, 0.2
  %v194 = vmul.f32 %v136, 0.2
  %v195 = vmul.f32 %v164, 0.2
  %v196 = vmul.f32 %v138, 0.2
  %v197 = vmul.f32 %v166, 0.2
  %v198 = vmul.f32 %v141, 0.2
  %v199 = vmul.f32 %v169, 0.2
  %v200 = vsel %vm172, %v126, %v186
  %v201 = vsel %vm173, %v154, %v187
  %v202 = vsel %vm174, %v128, %v188
  %v203 = vsel %vm175, %v156, %v189
  %v204 = vsel %vm176, %v131, %v190
  %v205 = vsel %vm177, %v159, %v191
  %v206 = vsel %vm178, %v133, %v192
  %v207 = vsel %vm179, %v161, %v193
  %v208 = vsel %vm180, %v136, %v194
  %v209 = vsel %vm181, %v164, %v195
  %v210 = vsel %vm182, %v138, %v196
  %v211 = vsel %vm183, %v166, %v197
  %v212 = vsel %vm184, %v141, %v198
  %v213 = vsel %vm185, %v169, %v199
  %v214 = vpack.c.bf16 %v201, %v200
  %v215 = vpack.c.bf16 %v203, %v202
  %v216 = vpack.c.bf16 %v205, %v204
  %v217 = vpack.c.bf16 %v207, %v206
  %v218 = vpack.c.bf16 %v209, %v208
  %v219 = vpack.c.bf16 %v211, %v210
  %v220 = vpack.c.bf16 %v213, %v212
  %221 = vst [vmem:[#allocation2] sm:$0xff] %v214
  %222 = vst [vmem:[#allocation2 + $0x8] sm:$0xff] %v215
  %223 = vst [vmem:[#allocation2 + $0x10] sm:$0xff] %v216
  %224 = vst [vmem:[#allocation2 + $0x18] sm:$0xff] %v217
  %225 = vst [vmem:[#allocation2 + $0x20] sm:$0xff] %v218
  %226 = vst [vmem:[#allocation2 + $0x28] sm:$0xff] %v219
  %227 = vst [vmem:[#allocation2 + $0x30] sm:$0xff] %v220
  %v228 = vld [vmem:[%s0 + $0x1c] sm:$0xf]
  %v229 = vld [vmem:[%s0 + $0x20] sm:$0xf]
  %v230 = vld [vmem:[%s0 + $0x24] sm:$0xf]
  %v231 = vld [vmem:[%s0 + $0x28] sm:$0xf]
  %v232 = vld [vmem:[%s0 + $0x2c] sm:$0xf]
  %v233 = vld [vmem:[%s0 + $0x30] sm:$0xf]
  %v234 = vld [vmem:[%s0 + $0x34] sm:$0xf]
  %v242 = vunpack.c.l.b16 %v228
  %v243 = vunpack.c.l.b16 %v229
  %v244 = vunpack.c.l.b16 %v230
  %v245 = vunpack.c.l.b16 %v231
  %v246 = vunpack.c.l.b16 %v232
  %v247 = vunpack.c.l.b16 %v233
  %v248 = vunpack.c.l.b16 %v234
  %v249 = vpack.c.b16 %v243, %v242
  %v250 = vpack.c.b16 %v245, %v244
  %v251 = vpack.c.b16 %v247, %v246
  %v252 = vpack.c.b16 %v248, %v248
  %v254 = vsel %vm103, %v249, 0
  %v257 = vsel %vm103, %v250, 0
  %v260 = vsel %vm103, %v251, 0
  %v263 = vsel %vm103, %v252, 0
  %265 = vmatpush.bf16.msra.mxu0 0
  %266 = vmatpush.bf16.msra.mxu0 0
  %267 = vmatpush.bf16.msra.mxu0 0
  %268 = vmatpush.bf16.msra.mxu0 0
  %269 = vmatpush.bf16.msra.mxu0 %v93
  %270 = vmatpush.bf16.msra.mxu0 %v91
  %271 = vmatpush.bf16.msra.mxu0 %v89
  %272 = vmatpush.bf16.msra.mxu0 %v87
  %273 = vmatmul.bf16.gmra.mxu0 %v254
  %v274 = vpop.f32.mrf.mxu0
  %v275 = vadd.f32 %v41, %v274
  %v276 = vpop.f32.mrf.mxu0
  %v277 = vadd.f32 %v41, %v276
  %278 = vmatmul.bf16.gmra.mxu0 %v257
  %v279 = vpop.f32.mrf.mxu0
  %v280 = vadd.f32 %v41, %v279
  %v281 = vpop.f32.mrf.mxu0
  %v282 = vadd.f32 %v41, %v281
  %283 = vmatmul.bf16.gmra.mxu0 %v260
  %v284 = vpop.f32.mrf.mxu0
  %v285 = vadd.f32 %v41, %v284
  %v286 = vpop.f32.mrf.mxu0
  %v287 = vadd.f32 %v41, %v286
  %288 = vmatmul.bf16.gmra.mxu0 %v263
  %v289 = vpop.f32.mrf.mxu0
  %v290 = vadd.f32 %v41, %v289
  %v291 = vpop.f32.mrf.mxu0
  %292 = vdwg.mxu0
  %293 = vmatpush.bf16.msra.mxu0 0
  %294 = vmatpush.bf16.msra.mxu0 0
  %295 = vmatpush.bf16.msra.mxu0 0
  %296 = vmatpush.bf16.msra.mxu0 0
  %297 = vmatpush.bf16.msra.mxu0 %v94
  %298 = vmatpush.bf16.msra.mxu0 %v92
  %299 = vmatpush.bf16.msra.mxu0 %v90
  %300 = vmatpush.bf16.msra.mxu0 %v88
  %301 = vmatmul.bf16.gmra.mxu0 %v254
  %v302 = vpop.f32.mrf.mxu0
  %v303 = vadd.f32 %v42, %v302
  %v304 = vpop.f32.mrf.mxu0
  %v305 = vadd.f32 %v42, %v304
  %306 = vmatmul.bf16.gmra.mxu0 %v257
  %v307 = vpop.f32.mrf.mxu0
  %v308 = vadd.f32 %v42, %v307
  %v309 = vpop.f32.mrf.mxu0
  %v310 = vadd.f32 %v42, %v309
  %311 = vmatmul.bf16.gmra.mxu0 %v260
  %v312 = vpop.f32.mrf.mxu0
  %v313 = vadd.f32 %v42, %v312
  %v314 = vpop.f32.mrf.mxu0
  %v315 = vadd.f32 %v42, %v314
  %316 = vmatmul.bf16.gmra.mxu0 %v263
  %v317 = vpop.f32.mrf.mxu0
  %v318 = vadd.f32 %v42, %v317
  %v319 = vpop.f32.mrf.mxu0
  %320 = vdwg.mxu0
  %vm321 = vcmp.ge.f32.partialorder %v275, 0.0
  %vm322 = vcmp.ge.f32.partialorder %v303, 0.0
  %vm323 = vcmp.ge.f32.partialorder %v277, 0.0
  %vm324 = vcmp.ge.f32.partialorder %v305, 0.0
  %vm325 = vcmp.ge.f32.partialorder %v280, 0.0
  %vm326 = vcmp.ge.f32.partialorder %v308, 0.0
  %vm327 = vcmp.ge.f32.partialorder %v282, 0.0
  %vm328 = vcmp.ge.f32.partialorder %v310, 0.0
  %vm329 = vcmp.ge.f32.partialorder %v285, 0.0
  %vm330 = vcmp.ge.f32.partialorder %v313, 0.0
  %vm331 = vcmp.ge.f32.partialorder %v287, 0.0
  %vm332 = vcmp.ge.f32.partialorder %v315, 0.0
  %vm333 = vcmp.ge.f32.partialorder %v290, 0.0
  %vm334 = vcmp.ge.f32.partialorder %v318, 0.0
  %v335 = vmul.f32 %v275, 0.2
  %v336 = vmul.f32 %v303, 0.2
  %v337 = vmul.f32 %v277, 0.2
  %v338 = vmul.f32 %v305, 0.2
  %v339 = vmul.f32 %v280, 0.2
  %v340 = vmul.f32 %v308, 0.2
  %v341 = vmul.f32 %v282, 0.2
  %v342 = vmul.f32 %v310, 0.2
  %v343 = vmul.f32 %v285, 0.2
  %v344 = vmul.f32 %v313, 0.2
  %v345 = vmul.f32 %v287, 0.2
  %v346 = vmul.f32 %v315, 0.2
  %v347 = vmul.f32 %v290, 0.2
  %v348 = vmul.f32 %v318, 0.2
  %v349 = vsel %vm321, %v275, %v335
  %v350 = vsel %vm322, %v303, %v336
  %v351 = vsel %vm323, %v277, %v337
  %v352 = vsel %vm324, %v305, %v338
  %v353 = vsel %vm325, %v280, %v339
  %v354 = vsel %vm326, %v308, %v340
  %v355 = vsel %vm327, %v282, %v341
  %v356 = vsel %vm328, %v310, %v342
  %v357 = vsel %vm329, %v285, %v343
  %v358 = vsel %vm330, %v313, %v344
  %v359 = vsel %vm331, %v287, %v345
  %v360 = vsel %vm332, %v315, %v346
  %v361 = vsel %vm333, %v290, %v347
  %v362 = vsel %vm334, %v318, %v348
  %v363 = vpack.c.bf16 %v350, %v349
  %v364 = vpack.c.bf16 %v352, %v351
  %v365 = vpack.c.bf16 %v354, %v353
  %v366 = vpack.c.bf16 %v356, %v355
  %v367 = vpack.c.bf16 %v358, %v357
  %v368 = vpack.c.bf16 %v360, %v359
  %v369 = vpack.c.bf16 %v362, %v361
  %370 = vst [vmem:[#allocation2 + $0x38] sm:$0xff] %v363
  %371 = vst [vmem:[#allocation2 + $0x40] sm:$0xff] %v364
  %372 = vst [vmem:[#allocation2 + $0x48] sm:$0xff] %v365
  %373 = vst [vmem:[#allocation2 + $0x50] sm:$0xff] %v366
  %374 = vst [vmem:[#allocation2 + $0x58] sm:$0xff] %v367
  %375 = vst [vmem:[#allocation2 + $0x60] sm:$0xff] %v368
  %376 = vst [vmem:[#allocation2 + $0x68] sm:$0xff] %v369
  %v377 = vld [vmem:[%s0 + $0x38] sm:$0xf]
  %v378 = vld [vmem:[%s0 + $0x3c] sm:$0xf]
  %v379 = vld [vmem:[%s0 + $0x40] sm:$0xf]
  %v380 = vld [vmem:[%s0 + $0x44] sm:$0xf]
  %v381 = vld [vmem:[%s0 + $0x48] sm:$0xf]
  %v382 = vld [vmem:[%s0 + $0x4c] sm:$0xf]
  %v383 = vld [vmem:[%s0 + $0x50] sm:$0xf]
  %v391 = vunpack.c.l.b16 %v377
  %v392 = vunpack.c.l.b16 %v378
  %v393 = vunpack.c.l.b16 %v379
  %v394 = vunpack.c.l.b16 %v380
  %v395 = vunpack.c.l.b16 %v381
  %v396 = vunpack.c.l.b16 %v382
  %v397 = vunpack.c.l.b16 %v383
  %v398 = vpack.c.b16 %v392, %v391
  %v399 = vpack.c.b16 %v394, %v393
  %v400 = vpack.c.b16 %v396, %v395
  %v401 = vpack.c.b16 %v397, %v397
  %v403 = vsel %vm103, %v398, 0
  %v406 = vsel %vm103, %v399, 0
  %v409 = vsel %vm103, %v400, 0
  %v412 = vsel %vm103, %v401, 0
  %414 = vmatpush.bf16.msra.mxu0 0
  %415 = vmatpush.bf16.msra.mxu0 0
  %416 = vmatpush.bf16.msra.mxu0 0
  %417 = vmatpush.bf16.msra.mxu0 0
  %418 = vmatpush.bf16.msra.mxu0 %v93
  %419 = vmatpush.bf16.msra.mxu0 %v91
  %420 = vmatpush.bf16.msra.mxu0 %v89
  %421 = vmatpush.bf16.msra.mxu0 %v87
  %422 = vmatmul.bf16.gmra.mxu0 %v403
  %v423 = vpop.f32.mrf.mxu0
  %v424 = vadd.f32 %v41, %v423
  %v425 = vpop.f32.mrf.mxu0
  %v426 = vadd.f32 %v41, %v425
  %427 = vmatmul.bf16.gmra.mxu0 %v406
  %v428 = vpop.f32.mrf.mxu0
  %v429 = vadd.f32 %v41, %v428
  %v430 = vpop.f32.mrf.mxu0
  %v431 = vadd.f32 %v41, %v430
  %432 = vmatmul.bf16.gmra.mxu0 %v409
  %v433 = vpop.f32.mrf.mxu0
  %v434 = vadd.f32 %v41, %v433
  %v435 = vpop.f32.mrf.mxu0
  %v436 = vadd.f32 %v41, %v435
  %437 = vmatmul.bf16.gmra.mxu0 %v412
  %v438 = vpop.f32.mrf.mxu0
  %v439 = vadd.f32 %v41, %v438
  %v440 = vpop.f32.mrf.mxu0
  %441 = vdwg.mxu0
  %442 = vmatpush.bf16.msra.mxu0 0
  %443 = vmatpush.bf16.msra.mxu0 0
  %444 = vmatpush.bf16.msra.mxu0 0
  %445 = vmatpush.bf16.msra.mxu0 0
  %446 = vmatpush.bf16.msra.mxu0 %v94
  %447 = vmatpush.bf16.msra.mxu0 %v92
  %448 = vmatpush.bf16.msra.mxu0 %v90
  %449 = vmatpush.bf16.msra.mxu0 %v88
  %450 = vmatmul.bf16.gmra.mxu0 %v403
  %v451 = vpop.f32.mrf.mxu0
  %v452 = vadd.f32 %v42, %v451
  %v453 = vpop.f32.mrf.mxu0
  %v454 = vadd.f32 %v42, %v453
  %455 = vmatmul.bf16.gmra.mxu0 %v406
  %v456 = vpop.f32.mrf.mxu0
  %v457 = vadd.f32 %v42, %v456
  %v458 = vpop.f32.mrf.mxu0
  %v459 = vadd.f32 %v42, %v458
  %460 = vmatmul.bf16.gmra.mxu0 %v409
  %v461 = vpop.f32.mrf.mxu0
  %v462 = vadd.f32 %v42, %v461
  %v463 = vpop.f32.mrf.mxu0
  %v464 = vadd.f32 %v42, %v463
  %465 = vmatmul.bf16.gmra.mxu0 %v412
  %v466 = vpop.f32.mrf.mxu0
  %v467 = vadd.f32 %v42, %v466
  %v468 = vpop.f32.mrf.mxu0
  %469 = vdwg.mxu0
  %vm470 = vcmp.ge.f32.partialorder %v424, 0.0
  %vm471 = vcmp.ge.f32.partialorder %v452, 0.0
  %vm472 = vcmp.ge.f32.partialorder %v426, 0.0
  %vm473 = vcmp.ge.f32.partialorder %v454, 0.0
  %vm474 = vcmp.ge.f32.partialorder %v429, 0.0
  %vm475 = vcmp.ge.f32.partialorder %v457, 0.0
  %vm476 = vcmp.ge.f32.partialorder %v431, 0.0
  %vm477 = vcmp.ge.f32.partialorder %v459, 0.0
  %vm478 = vcmp.ge.f32.partialorder %v434, 0.0
  %vm479 = vcmp.ge.f32.partialorder %v462, 0.0
  %vm480 = vcmp.ge.f32.partialorder %v436, 0.0
  %vm481 = vcmp.ge.f32.partialorder %v464, 0.0
  %vm482 = vcmp.ge.f32.partialorder %v439, 0.0
  %vm483 = vcmp.ge.f32.partialorder %v467, 0.0
  %v484 = vmul.f32 %v424, 0.2
  %v485 = vmul.f32 %v452, 0.2
  %v486 = vmul.f32 %v426, 0.2
  %v487 = vmul.f32 %v454, 0.2
  %v488 = vmul.f32 %v429, 0.2
  %v489 = vmul.f32 %v457, 0.2
  %v490 = vmul.f32 %v431, 0.2
  %v491 = vmul.f32 %v459, 0.2
  %v492 = vmul.f32 %v434, 0.2
  %v493 = vmul.f32 %v462, 0.2
  %v494 = vmul.f32 %v436, 0.2
  %v495 = vmul.f32 %v464, 0.2
  %v496 = vmul.f32 %v439, 0.2
  %v497 = vmul.f32 %v467, 0.2
  %v498 = vsel %vm470, %v424, %v484
  %v499 = vsel %vm471, %v452, %v485
  %v500 = vsel %vm472, %v426, %v486
  %v501 = vsel %vm473, %v454, %v487
  %v502 = vsel %vm474, %v429, %v488
  %v503 = vsel %vm475, %v457, %v489
  %v504 = vsel %vm476, %v431, %v490
  %v505 = vsel %vm477, %v459, %v491
  %v506 = vsel %vm478, %v434, %v492
  %v507 = vsel %vm479, %v462, %v493
  %v508 = vsel %vm480, %v436, %v494
  %v509 = vsel %vm481, %v464, %v495
  %v510 = vsel %vm482, %v439, %v496
  %v511 = vsel %vm483, %v467, %v497
  %v512 = vpack.c.bf16 %v499, %v498
  %v513 = vpack.c.bf16 %v501, %v500
  %v514 = vpack.c.bf16 %v503, %v502
  %v515 = vpack.c.bf16 %v505, %v504
  %v516 = vpack.c.bf16 %v507, %v506
  %v517 = vpack.c.bf16 %v509, %v508
  %v518 = vpack.c.bf16 %v511, %v510
  %519 = vst [vmem:[#allocation2 + $0x70] sm:$0xff] %v512
  %520 = vst [vmem:[#allocation2 + $0x78] sm:$0xff] %v513
  %521 = vst [vmem:[#allocation2 + $0x80] sm:$0xff] %v514
  %522 = vst [vmem:[#allocation2 + $0x88] sm:$0xff] %v515
  %523 = vst [vmem:[#allocation2 + $0x90] sm:$0xff] %v516
  %524 = vst [vmem:[#allocation2 + $0x98] sm:$0xff] %v517
  %525 = vst [vmem:[#allocation2 + $0xa0] sm:$0xff] %v518
  %v526 = vld [vmem:[%s0 + $0x54] sm:$0xf]
  %v527 = vld [vmem:[%s0 + $0x58] sm:$0xf]
  %v528 = vld [vmem:[%s0 + $0x5c] sm:$0xf]
  %v529 = vld [vmem:[%s0 + $0x60] sm:$0xf]
  %v530 = vld [vmem:[%s0 + $0x64] sm:$0xf]
  %v531 = vld [vmem:[%s0 + $0x68] sm:$0xf]
  %v532 = vld [vmem:[%s0 + $0x6c] sm:$0xf]
  %v540 = vunpack.c.l.b16 %v526
  %v541 = vunpack.c.l.b16 %v527
  %v542 = vunpack.c.l.b16 %v528
  %v543 = vunpack.c.l.b16 %v529
  %v544 = vunpack.c.l.b16 %v530
  %v545 = vunpack.c.l.b16 %v531
  %v546 = vunpack.c.l.b16 %v532
  %v547 = vpack.c.b16 %v541, %v540
  %v548 = vpack.c.b16 %v543, %v542
  %v549 = vpack.c.b16 %v545, %v544
  %v550 = vpack.c.b16 %v546, %v546
  %v552 = vsel %vm103, %v547, 0
  %v555 = vsel %vm103, %v548, 0
  %v558 = vsel %vm103, %v549, 0
  %v561 = vsel %vm103, %v550, 0
  %563 = vmatpush.bf16.msra.mxu0 0
  %564 = vmatpush.bf16.msra.mxu0 0
  %565 = vmatpush.bf16.msra.mxu0 0
  %566 = vmatpush.bf16.msra.mxu0 0
  %567 = vmatpush.bf16.msra.mxu0 %v93
  %568 = vmatpush.bf16.msra.mxu0 %v91
  %569 = vmatpush.bf16.msra.mxu0 %v89
  %570 = vmatpush.bf16.msra.mxu0 %v87
  %571 = vmatmul.bf16.gmra.mxu0 %v552
  %v572 = vpop.f32.mrf.mxu0
  %v573 = vadd.f32 %v41, %v572
  %v574 = vpop.f32.mrf.mxu0
  %v575 = vadd.f32 %v41, %v574
  %576 = vmatmul.bf16.gmra.mxu0 %v555
  %v577 = vpop.f32.mrf.mxu0
  %v578 = vadd.f32 %v41, %v577
  %v579 = vpop.f32.mrf.mxu0
  %v580 = vadd.f32 %v41, %v579
  %581 = vmatmul.bf16.gmra.mxu0 %v558
  %v582 = vpop.f32.mrf.mxu0
  %v583 = vadd.f32 %v41, %v582
  %v584 = vpop.f32.mrf.mxu0
  %v585 = vadd.f32 %v41, %v584
  %586 = vmatmul.bf16.gmra.mxu0 %v561
  %v587 = vpop.f32.mrf.mxu0
  %v588 = vadd.f32 %v41, %v587
  %v589 = vpop.f32.mrf.mxu0
  %590 = vdwg.mxu0
  %591 = vmatpush.bf16.msra.mxu0 0
  %592 = vmatpush.bf16.msra.mxu0 0
  %593 = vmatpush.bf16.msra.mxu0 0
  %594 = vmatpush.bf16.msra.mxu0 0
  %595 = vmatpush.bf16.msra.mxu0 %v94
  %596 = vmatpush.bf16.msra.mxu0 %v92
  %597 = vmatpush.bf16.msra.mxu0 %v90
  %598 = vmatpush.bf16.msra.mxu0 %v88
  %599 = vmatmul.bf16.gmra.mxu0 %v552
  %v600 = vpop.f32.mrf.mxu0
  %v601 = vadd.f32 %v42, %v600
  %v602 = vpop.f32.mrf.mxu0
  %v603 = vadd.f32 %v42, %v602
  %604 = vmatmul.bf16.gmra.mxu0 %v555
  %v605 = vpop.f32.mrf.mxu0
  %v606 = vadd.f32 %v42, %v605
  %v607 = vpop.f32.mrf.mxu0
  %v608 = vadd.f32 %v42, %v607
  %609 = vmatmul.bf16.gmra.mxu0 %v558
  %v610 = vpop.f32.mrf.mxu0
  %v611 = vadd.f32 %v42, %v610
  %v612 = vpop.f32.mrf.mxu0
  %v613 = vadd.f32 %v42, %v612
  %614 = vmatmul.bf16.gmra.mxu0 %v561
  %v615 = vpop.f32.mrf.mxu0
  %v616 = vadd.f32 %v42, %v615
  %v617 = vpop.f32.mrf.mxu0
  %618 = vdwg.mxu0
  %vm619 = vcmp.ge.f32.partialorder %v573, 0.0
  %vm620 = vcmp.ge.f32.partialorder %v601, 0.0
  %vm621 = vcmp.ge.f32.partialorder %v575, 0.0
  %vm622 = vcmp.ge.f32.partialorder %v603, 0.0
  %vm623 = vcmp.ge.f32.partialorder %v578, 0.0
  %vm624 = vcmp.ge.f32.partialorder %v606, 0.0
  %vm625 = vcmp.ge.f32.partialorder %v580, 0.0
  %vm626 = vcmp.ge.f32.partialorder %v608, 0.0
  %vm627 = vcmp.ge.f32.partialorder %v583, 0.0
  %vm628 = vcmp.ge.f32.partialorder %v611, 0.0
  %vm629 = vcmp.ge.f32.partialorder %v585, 0.0
  %vm630 = vcmp.ge.f32.partialorder %v613, 0.0
  %vm631 = vcmp.ge.f32.partialorder %v588, 0.0
  %vm632 = vcmp.ge.f32.partialorder %v616, 0.0
  %v633 = vmul.f32 %v573, 0.2
  %v634 = vmul.f32 %v601, 0.2
  %v635 = vmul.f32 %v575, 0.2
  %v636 = vmul.f32 %v603, 0.2
  %v637 = vmul.f32 %v578, 0.2
  %v638 = vmul.f32 %v606, 0.2
  %v639 = vmul.f32 %v580, 0.2
  %v640 = vmul.f32 %v608, 0.2
  %v641 = vmul.f32 %v583, 0.2
  %v642 = vmul.f32 %v611, 0.2
  %v643 = vmul.f32 %v585, 0.2
  %v644 = vmul.f32 %v613, 0.2
  %v645 = vmul.f32 %v588, 0.2
  %v646 = vmul.f32 %v616, 0.2
  %v647 = vsel %vm619, %v573, %v633
  %v648 = vsel %vm620, %v601, %v634
  %v649 = vsel %vm621, %v575, %v635
  %v650 = vsel %vm622, %v603, %v636
  %v651 = vsel %vm623, %v578, %v637
  %v652 = vsel %vm624, %v606, %v638
  %v653 = vsel %vm625, %v580, %v639
  %v654 = vsel %vm626, %v608, %v640
  %v655 = vsel %vm627, %v583, %v641
  %v656 = vsel %vm628, %v611, %v642
  %v657 = vsel %vm629, %v585, %v643
  %v658 = vsel %vm630, %v613, %v644
  %v659 = vsel %vm631, %v588, %v645
  %v660 = vsel %vm632, %v616, %v646
  %v661 = vpack.c.bf16 %v648, %v647
  %v662 = vpack.c.bf16 %v650, %v649
  %v663 = vpack.c.bf16 %v652, %v651
  %v664 = vpack.c.bf16 %v654, %v653
  %v665 = vpack.c.bf16 %v656, %v655
  %v666 = vpack.c.bf16 %v658, %v657
  %v667 = vpack.c.bf16 %v660, %v659
  %668 = vst [vmem:[#allocation2 + $0xa8] sm:$0xff] %v661
  %669 = vst [vmem:[#allocation2 + $0xb0] sm:$0xff] %v662
  %670 = vst [vmem:[#allocation2 + $0xb8] sm:$0xff] %v663
  %671 = vst [vmem:[#allocation2 + $0xc0] sm:$0xff] %v664
  %672 = vst [vmem:[#allocation2 + $0xc8] sm:$0xff] %v665
  %673 = vst [vmem:[#allocation2 + $0xd0] sm:$0xff] %v666
  %674 = vst [vmem:[#allocation2 + $0xd8] sm:$0xff] %v667
  %v675 = vld [vmem:[%s0 + $0x70] sm:$0xf]
  %v676 = vld [vmem:[%s0 + $0x74] sm:$0xf]
  %v677 = vld [vmem:[%s0 + $0x78] sm:$0xf]
  %v678 = vld [vmem:[%s0 + $0x7c] sm:$0xf]
  %v679 = vld [vmem:[%s0 + $0x80] sm:$0xf]
  %v680 = vld [vmem:[%s0 + $0x84] sm:$0xf]
  %v681 = vld [vmem:[%s0 + $0x88] sm:$0xf]
  %v689 = vunpack.c.l.b16 %v675
  %v690 = vunpack.c.l.b16 %v676
  %v691 = vunpack.c.l.b16 %v677
  %v692 = vunpack.c.l.b16 %v678
  %v693 = vunpack.c.l.b16 %v679
  %v694 = vunpack.c.l.b16 %v680
  %v695 = vunpack.c.l.b16 %v681
  %v696 = vpack.c.b16 %v690, %v689
  %v697 = vpack.c.b16 %v692, %v691
  %v698 = vpack.c.b16 %v694, %v693
  %v699 = vpack.c.b16 %v695, %v695
  %v701 = vsel %vm103, %v696, 0
  %v704 = vsel %vm103, %v697, 0
  %v707 = vsel %vm103, %v698, 0
  %v710 = vsel %vm103, %v699, 0
  %712 = vmatpush.bf16.msra.mxu0 0
  %713 = vmatpush.bf16.msra.mxu0 0
  %714 = vmatpush.bf16.msra.mxu0 0
  %715 = vmatpush.bf16.msra.mxu0 0
  %716 = vmatpush.bf16.msra.mxu0 %v93
  %717 = vmatpush.bf16.msra.mxu0 %v91
  %718 = vmatpush.bf16.msra.mxu0 %v89
  %719 = vmatpush.bf16.msra.mxu0 %v87
  %720 = vmatmul.bf16.gmra.mxu0 %v701
  %v721 = vpop.f32.mrf.mxu0
  %v722 = vadd.f32 %v41, %v721
  %v723 = vpop.f32.mrf.mxu0
  %v724 = vadd.f32 %v41, %v723
  %725 = vmatmul.bf16.gmra.mxu0 %v704
  %v726 = vpop.f32.mrf.mxu0
  %v727 = vadd.f32 %v41, %v726
  %v728 = vpop.f32.mrf.mxu0
  %v729 = vadd.f32 %v41, %v728
  %730 = vmatmul.bf16.gmra.mxu0 %v707
  %v731 = vpop.f32.mrf.mxu0
  %v732 = vadd.f32 %v41, %v731
  %v733 = vpop.f32.mrf.mxu0
  %v734 = vadd.f32 %v41, %v733
  %735 = vmatmul.bf16.gmra.mxu0 %v710
  %v736 = vpop.f32.mrf.mxu0
  %v737 = vadd.f32 %v41, %v736
  %v738 = vpop.f32.mrf.mxu0
  %739 = vdwg.mxu0
  %740 = vmatpush.bf16.msra.mxu0 0
  %741 = vmatpush.bf16.msra.mxu0 0
  %742 = vmatpush.bf16.msra.mxu0 0
  %743 = vmatpush.bf16.msra.mxu0 0
  %744 = vmatpush.bf16.msra.mxu0 %v94
  %745 = vmatpush.bf16.msra.mxu0 %v92
  %746 = vmatpush.bf16.msra.mxu0 %v90
  %747 = vmatpush.bf16.msra.mxu0 %v88
  %748 = vmatmul.bf16.gmra.mxu0 %v701
  %v749 = vpop.f32.mrf.mxu0
  %v750 = vadd.f32 %v42, %v749
  %v751 = vpop.f32.mrf.mxu0
  %v752 = vadd.f32 %v42, %v751
  %753 = vmatmul.bf16.gmra.mxu0 %v704
  %v754 = vpop.f32.mrf.mxu0
  %v755 = vadd.f32 %v42, %v754
  %v756 = vpop.f32.mrf.mxu0
  %v757 = vadd.f32 %v42, %v756
  %758 = vmatmul.bf16.gmra.mxu0 %v707
  %v759 = vpop.f32.mrf.mxu0
  %v760 = vadd.f32 %v42, %v759
  %v761 = vpop.f32.mrf.mxu0
  %v762 = vadd.f32 %v42, %v761
  %763 = vmatmul.bf16.gmra.mxu0 %v710
  %v764 = vpop.f32.mrf.mxu0
  %v765 = vadd.f32 %v42, %v764
  %v766 = vpop.f32.mrf.mxu0
  %767 = vdwg.mxu0
  %vm768 = vcmp.ge.f32.partialorder %v722, 0.0
  %vm769 = vcmp.ge.f32.partialorder %v750, 0.0
  %vm770 = vcmp.ge.f32.partialorder %v724, 0.0
  %vm771 = vcmp.ge.f32.partialorder %v752, 0.0
  %vm772 = vcmp.ge.f32.partialorder %v727, 0.0
  %vm773 = vcmp.ge.f32.partialorder %v755, 0.0
  %vm774 = vcmp.ge.f32.partialorder %v729, 0.0
  %vm775 = vcmp.ge.f32.partialorder %v757, 0.0
  %vm776 = vcmp.ge.f32.partialorder %v732, 0.0
  %vm777 = vcmp.ge.f32.partialorder %v760, 0.0
  %vm778 = vcmp.ge.f32.partialorder %v734, 0.0
  %vm779 = vcmp.ge.f32.partialorder %v762, 0.0
  %vm780 = vcmp.ge.f32.partialorder %v737, 0.0
  %vm781 = vcmp.ge.f32.partialorder %v765, 0.0
  %v782 = vmul.f32 %v722, 0.2
  %v783 = vmul.f32 %v750, 0.2
  %v784 = vmul.f32 %v724, 0.2
  %v785 = vmul.f32 %v752, 0.2
  %v786 = vmul.f32 %v727, 0.2
  %v787 = vmul.f32 %v755, 0.2
  %v788 = vmul.f32 %v729, 0.2
  %v789 = vmul.f32 %v757, 0.2
  %v790 = vmul.f32 %v732, 0.2
  %v791 = vmul.f32 %v760, 0.2
  %v792 = vmul.f32 %v734, 0.2
  %v793 = vmul.f32 %v762, 0.2
  %v794 = vmul.f32 %v737, 0.2
  %v795 = vmul.f32 %v765, 0.2
  %v796 = vsel %vm768, %v722, %v782
  %v797 = vsel %vm769, %v750, %v783
  %v798 = vsel %vm770, %v724, %v784
  %v799 = vsel %vm771, %v752, %v785
  %v800 = vsel %vm772, %v727, %v786
  %v801 = vsel %vm773, %v755, %v787
  %v802 = vsel %vm774, %v729, %v788
  %v803 = vsel %vm775, %v757, %v789
  %v804 = vsel %vm776, %v732, %v790
  %v805 = vsel %vm777, %v760, %v791
  %v806 = vsel %vm778, %v734, %v792
  %v807 = vsel %vm779, %v762, %v793
  %v808 = vsel %vm780, %v737, %v794
  %v809 = vsel %vm781, %v765, %v795
  %v810 = vpack.c.bf16 %v797, %v796
  %v811 = vpack.c.bf16 %v799, %v798
  %v812 = vpack.c.bf16 %v801, %v800
  %v813 = vpack.c.bf16 %v803, %v802
  %v814 = vpack.c.bf16 %v805, %v804
  %v815 = vpack.c.bf16 %v807, %v806
  %v816 = vpack.c.bf16 %v809, %v808
  %817 = vst [vmem:[#allocation2 + $0xe0] sm:$0xff] %v810
  %818 = vst [vmem:[#allocation2 + $0xe8] sm:$0xff] %v811
  %819 = vst [vmem:[#allocation2 + $0xf0] sm:$0xff] %v812
  %820 = vst [vmem:[#allocation2 + $0xf8] sm:$0xff] %v813
  %821 = vst [vmem:[#allocation2 + $0x100] sm:$0xff] %v814
  %822 = vst [vmem:[#allocation2 + $0x108] sm:$0xff] %v815
  %823 = vst [vmem:[#allocation2 + $0x110] sm:$0xff] %v816
  %v824 = vld [vmem:[%s0 + $0x8c] sm:$0xf]
  %v825 = vld [vmem:[%s0 + $0x90] sm:$0xf]
  %v826 = vld [vmem:[%s0 + $0x94] sm:$0xf]
  %v827 = vld [vmem:[%s0 + $0x98] sm:$0xf]
  %v828 = vld [vmem:[%s0 + $0x9c] sm:$0xf]
  %v829 = vld [vmem:[%s0 + $0xa0] sm:$0xf]
  %v830 = vld [vmem:[%s0 + $0xa4] sm:$0xf]
  %v838 = vunpack.c.l.b16 %v824
  %v839 = vunpack.c.l.b16 %v825
  %v840 = vunpack.c.l.b16 %v826
  %v841 = vunpack.c.l.b16 %v827
  %v842 = vunpack.c.l.b16 %v828
  %v843 = vunpack.c.l.b16 %v829
  %v844 = vunpack.c.l.b16 %v830
  %v845 = vpack.c.b16 %v839, %v838
  %v846 = vpack.c.b16 %v841, %v840
  %v847 = vpack.c.b16 %v843, %v842
  %v848 = vpack.c.b16 %v844, %v844
  %v850 = vsel %vm103, %v845, 0
  %v853 = vsel %vm103, %v846, 0
  %v856 = vsel %vm103, %v847, 0
  %v859 = vsel %vm103, %v848, 0
  %861 = vmatpush.bf16.msra.mxu0 0
  %862 = vmatpush.bf16.msra.mxu0 0
  %863 = vmatpush.bf16.msra.mxu0 0
  %864 = vmatpush.bf16.msra.mxu0 0
  %865 = vmatpush.bf16.msra.mxu0 %v93
  %866 = vmatpush.bf16.msra.mxu0 %v91
  %867 = vmatpush.bf16.msra.mxu0 %v89
  %868 = vmatpush.bf16.msra.mxu0 %v87
  %869 = vmatmul.bf16.gmra.mxu0 %v850
  %v870 = vpop.f32.mrf.mxu0
  %v871 = vadd.f32 %v41, %v870
  %v872 = vpop.f32.mrf.mxu0
  %v873 = vadd.f32 %v41, %v872
  %874 = vmatmul.bf16.gmra.mxu0 %v853
  %v875 = vpop.f32.mrf.mxu0
  %v876 = vadd.f32 %v41, %v875
  %v877 = vpop.f32.mrf.mxu0
  %v878 = vadd.f32 %v41, %v877
  %879 = vmatmul.bf16.gmra.mxu0 %v856
  %v880 = vpop.f32.mrf.mxu0
  %v881 = vadd.f32 %v41, %v880
  %v882 = vpop.f32.mrf.mxu0
  %v883 = vadd.f32 %v41, %v882
  %884 = vmatmul.bf16.gmra.mxu0 %v859
  %v885 = vpop.f32.mrf.mxu0
  %v886 = vadd.f32 %v41, %v885
  %v887 = vpop.f32.mrf.mxu0
  %888 = vdwg.mxu0
  %889 = vmatpush.bf16.msra.mxu0 0
  %890 = vmatpush.bf16.msra.mxu0 0
  %891 = vmatpush.bf16.msra.mxu0 0
  %892 = vmatpush.bf16.msra.mxu0 0
  %893 = vmatpush.bf16.msra.mxu0 %v94
  %894 = vmatpush.bf16.msra.mxu0 %v92
  %895 = vmatpush.bf16.msra.mxu0 %v90
  %896 = vmatpush.bf16.msra.mxu0 %v88
  %897 = vmatmul.bf16.gmra.mxu0 %v850
  %v898 = vpop.f32.mrf.mxu0
  %v899 = vadd.f32 %v42, %v898
  %v900 = vpop.f32.mrf.mxu0
  %v901 = vadd.f32 %v42, %v900
  %902 = vmatmul.bf16.gmra.mxu0 %v853
  %v903 = vpop.f32.mrf.mxu0
  %v904 = vadd.f32 %v42, %v903
  %v905 = vpop.f32.mrf.mxu0
  %v906 = vadd.f32 %v42, %v905
  %907 = vmatmul.bf16.gmra.mxu0 %v856
  %v908 = vpop.f32.mrf.mxu0
  %v909 = vadd.f32 %v42, %v908
  %v910 = vpop.f32.mrf.mxu0
  %v911 = vadd.f32 %v42, %v910
  %912 = vmatmul.bf16.gmra.mxu0 %v859
  %v913 = vpop.f32.mrf.mxu0
  %v914 = vadd.f32 %v42, %v913
  %v915 = vpop.f32.mrf.mxu0
  %916 = vdwg.mxu0
  %vm917 = vcmp.ge.f32.partialorder %v871, 0.0
  %vm918 = vcmp.ge.f32.partialorder %v899, 0.0
  %vm919 = vcmp.ge.f32.partialorder %v873, 0.0
  %vm920 = vcmp.ge.f32.partialorder %v901, 0.0
  %vm921 = vcmp.ge.f32.partialorder %v876, 0.0
  %vm922 = vcmp.ge.f32.partialorder %v904, 0.0
  %vm923 = vcmp.ge.f32.partialorder %v878, 0.0
  %vm924 = vcmp.ge.f32.partialorder %v906, 0.0
  %vm925 = vcmp.ge.f32.partialorder %v881, 0.0
  %vm926 = vcmp.ge.f32.partialorder %v909, 0.0
  %vm927 = vcmp.ge.f32.partialorder %v883, 0.0
  %vm928 = vcmp.ge.f32.partialorder %v911, 0.0
  %vm929 = vcmp.ge.f32.partialorder %v886, 0.0
  %vm930 = vcmp.ge.f32.partialorder %v914, 0.0
  %v931 = vmul.f32 %v871, 0.2
  %v932 = vmul.f32 %v899, 0.2
  %v933 = vmul.f32 %v873, 0.2
  %v934 = vmul.f32 %v901, 0.2
  %v935 = vmul.f32 %v876, 0.2
  %v936 = vmul.f32 %v904, 0.2
  %v937 = vmul.f32 %v878, 0.2
  %v938 = vmul.f32 %v906, 0.2
  %v939 = vmul.f32 %v881, 0.2
  %v940 = vmul.f32 %v909, 0.2
  %v941 = vmul.f32 %v883, 0.2
  %v942 = vmul.f32 %v911, 0.2
  %v943 = vmul.f32 %v886, 0.2
  %v944 = vmul.f32 %v914, 0.2
  %v945 = vsel %vm917, %v871, %v931
  %v946 = vsel %vm918, %v899, %v932
  %v947 = vsel %vm919, %v873, %v933
  %v948 = vsel %vm920, %v901, %v934
  %v949 = vsel %vm921, %v876, %v935
  %v950 = vsel %vm922, %v904, %v936
  %v951 = vsel %vm923, %v878, %v937
  %v952 = vsel %vm924, %v906, %v938
  %v953 = vsel %vm925, %v881, %v939
  %v954 = vsel %vm926, %v909, %v940
  %v955 = vsel %vm927, %v883, %v941
  %v956 = vsel %vm928, %v911, %v942
  %v957 = vsel %vm929, %v886, %v943
  %v958 = vsel %vm930, %v914, %v944
  %v959 = vpack.c.bf16 %v946, %v945
  %v960 = vpack.c.bf16 %v948, %v947
  %v961 = vpack.c.bf16 %v950, %v949
  %v962 = vpack.c.bf16 %v952, %v951
  %v963 = vpack.c.bf16 %v954, %v953
  %v964 = vpack.c.bf16 %v956, %v955
  %v965 = vpack.c.bf16 %v958, %v957
  %966 = vst [vmem:[#allocation2 + $0x118] sm:$0xff] %v959
  %967 = vst [vmem:[#allocation2 + $0x120] sm:$0xff] %v960
  %968 = vst [vmem:[#allocation2 + $0x128] sm:$0xff] %v961
  %969 = vst [vmem:[#allocation2 + $0x130] sm:$0xff] %v962
  %970 = vst [vmem:[#allocation2 + $0x138] sm:$0xff] %v963
  %971 = vst [vmem:[#allocation2 + $0x140] sm:$0xff] %v964
  %972 = vst [vmem:[#allocation2 + $0x148] sm:$0xff] %v965
  %v973 = vld [vmem:[%s0 + $0xa8] sm:$0xf]
  %v974 = vld [vmem:[%s0 + $0xac] sm:$0xf]
  %v975 = vld [vmem:[%s0 + $0xb0] sm:$0xf]
  %v976 = vld [vmem:[%s0 + $0xb4] sm:$0xf]
  %v977 = vld [vmem:[%s0 + $0xb8] sm:$0xf]
  %v978 = vld [vmem:[%s0 + $0xbc] sm:$0xf]
  %v979 = vld [vmem:[%s0 + $0xc0] sm:$0xf]
  %v987 = vunpack.c.l.b16 %v973
  %v988 = vunpack.c.l.b16 %v974
  %v989 = vunpack.c.l.b16 %v975
  %v990 = vunpack.c.l.b16 %v976
  %v991 = vunpack.c.l.b16 %v977
  %v992 = vunpack.c.l.b16 %v978
  %v993 = vunpack.c.l.b16 %v979
  %v994 = vpack.c.b16 %v988, %v987
  %v995 = vpack.c.b16 %v990, %v989
  %v996 = vpack.c.b16 %v992, %v991
  %v997 = vpack.c.b16 %v993, %v993
  %v999 = vsel %vm103, %v994, 0
  %v1002 = vsel %vm103, %v995, 0
  %v1005 = vsel %vm103, %v996, 0
  %v1008 = vsel %vm103, %v997, 0
  %1010 = vmatpush.bf16.msra.mxu0 0
  %1011 = vmatpush.bf16.msra.mxu0 0
  %1012 = vmatpush.bf16.msra.mxu0 0
  %1013 = vmatpush.bf16.msra.mxu0 0
  %1014 = vmatpush.bf16.msra.mxu0 %v93
  %1015 = vmatpush.bf16.msra.mxu0 %v91
  %1016 = vmatpush.bf16.msra.mxu0 %v89
  %1017 = vmatpush.bf16.msra.mxu0 %v87
  %1018 = vmatmul.bf16.gmra.mxu0 %v999
  %v1019 = vpop.f32.mrf.mxu0
  %v1020 = vadd.f32 %v41, %v1019
  %v1021 = vpop.f32.mrf.mxu0
  %v1022 = vadd.f32 %v41, %v1021
  %1023 = vmatmul.bf16.gmra.mxu0 %v1002
  %v1024 = vpop.f32.mrf.mxu0
  %v1025 = vadd.f32 %v41, %v1024
  %v1026 = vpop.f32.mrf.mxu0
  %v1027 = vadd.f32 %v41, %v1026
  %1028 = vmatmul.bf16.gmra.mxu0 %v1005
  %v1029 = vpop.f32.mrf.mxu0
  %v1030 = vadd.f32 %v41, %v1029
  %v1031 = vpop.f32.mrf.mxu0
  %v1032 = vadd.f32 %v41, %v1031
  %1033 = vmatmul.bf16.gmra.mxu0 %v1008
  %v1034 = vpop.f32.mrf.mxu0
  %v1035 = vadd.f32 %v41, %v1034
  %v1036 = vpop.f32.mrf.mxu0
  %1037 = vdwg.mxu0
  %1038 = vmatpush.bf16.msra.mxu0 0
  %1039 = vmatpush.bf16.msra.mxu0 0
  %1040 = vmatpush.bf16.msra.mxu0 0
  %1041 = vmatpush.bf16.msra.mxu0 0
  %1042 = vmatpush.bf16.msra.mxu0 %v94
  %1043 = vmatpush.bf16.msra.mxu0 %v92
  %1044 = vmatpush.bf16.msra.mxu0 %v90
  %1045 = vmatpush.bf16.msra.mxu0 %v88
  %1046 = vmatmul.bf16.gmra.mxu0 %v999
  %v1047 = vpop.f32.mrf.mxu0
  %v1048 = vadd.f32 %v42, %v1047
  %v1049 = vpop.f32.mrf.mxu0
  %v1050 = vadd.f32 %v42, %v1049
  %1051 = vmatmul.bf16.gmra.mxu0 %v1002
  %v1052 = vpop.f32.mrf.mxu0
  %v1053 = vadd.f32 %v42, %v1052
  %v1054 = vpop.f32.mrf.mxu0
  %v1055 = vadd.f32 %v42, %v1054
  %1056 = vmatmul.bf16.gmra.mxu0 %v1005
  %v1057 = vpop.f32.mrf.mxu0
  %v1058 = vadd.f32 %v42, %v1057
  %v1059 = vpop.f32.mrf.mxu0
  %v1060 = vadd.f32 %v42, %v1059
  %1061 = vmatmul.bf16.gmra.mxu0 %v1008
  %v1062 = vpop.f32.mrf.mxu0
  %v1063 = vadd.f32 %v42, %v1062
  %v1064 = vpop.f32.mrf.mxu0
  %1065 = vdwg.mxu0
  %vm1066 = vcmp.ge.f32.partialorder %v1020, 0.0
  %vm1067 = vcmp.ge.f32.partialorder %v1048, 0.0
  %vm1068 = vcmp.ge.f32.partialorder %v1022, 0.0
  %vm1069 = vcmp.ge.f32.partialorder %v1050, 0.0
  %vm1070 = vcmp.ge.f32.partialorder %v1025, 0.0
  %vm1071 = vcmp.ge.f32.partialorder %v1053, 0.0
  %vm1072 = vcmp.ge.f32.partialorder %v1027, 0.0
  %vm1073 = vcmp.ge.f32.partialorder %v1055, 0.0
  %vm1074 = vcmp.ge.f32.partialorder %v1030, 0.0
  %vm1075 = vcmp.ge.f32.partialorder %v1058, 0.0
  %vm1076 = vcmp.ge.f32.partialorder %v1032, 0.0
  %vm1077 = vcmp.ge.f32.partialorder %v1060, 0.0
  %vm1078 = vcmp.ge.f32.partialorder %v1035, 0.0
  %vm1079 = vcmp.ge.f32.partialorder %v1063, 0.0
  %v1080 = vmul.f32 %v1020, 0.2
  %v1081 = vmul.f32 %v1048, 0.2
  %v1082 = vmul.f32 %v1022, 0.2
  %v1083 = vmul.f32 %v1050, 0.2
  %v1084 = vmul.f32 %v1025, 0.2
  %v1085 = vmul.f32 %v1053, 0.2
  %v1086 = vmul.f32 %v1027, 0.2
  %v1087 = vmul.f32 %v1055, 0.2
  %v1088 = vmul.f32 %v1030, 0.2
  %v1089 = vmul.f32 %v1058, 0.2
  %v1090 = vmul.f32 %v1032, 0.2
  %v1091 = vmul.f32 %v1060, 0.2
  %v1092 = vmul.f32 %v1035, 0.2
  %v1093 = vmul.f32 %v1063, 0.2
  %v1094 = vsel %vm1066, %v1020, %v1080
  %v1095 = vsel %vm1067, %v1048, %v1081
  %v1096 = vsel %vm1068, %v1022, %v1082
  %v1097 = vsel %vm1069, %v1050, %v1083
  %v1098 = vsel %vm1070, %v1025, %v1084
  %v1099 = vsel %vm1071, %v1053, %v1085
  %v1100 = vsel %vm1072, %v1027, %v1086
  %v1101 = vsel %vm1073, %v1055, %v1087
  %v1102 = vsel %vm1074, %v1030, %v1088
  %v1103 = vsel %vm1075, %v1058, %v1089
  %v1104 = vsel %vm1076, %v1032, %v1090
  %v1105 = vsel %vm1077, %v1060, %v1091
  %v1106 = vsel %vm1078, %v1035, %v1092
  %v1107 = vsel %vm1079, %v1063, %v1093
  %v1108 = vpack.c.bf16 %v1095, %v1094
  %v1109 = vpack.c.bf16 %v1097, %v1096
  %v1110 = vpack.c.bf16 %v1099, %v1098
  %v1111 = vpack.c.bf16 %v1101, %v1100
  %v1112 = vpack.c.bf16 %v1103, %v1102
  %v1113 = vpack.c.bf16 %v1105, %v1104
  %v1114 = vpack.c.bf16 %v1107, %v1106
  %1115 = vst [vmem:[#allocation2 + $0x150] sm:$0xff] %v1108
  %1116 = vst [vmem:[#allocation2 + $0x158] sm:$0xff] %v1109
  %1117 = vst [vmem:[#allocation2 + $0x160] sm:$0xff] %v1110
  %1118 = vst [vmem:[#allocation2 + $0x168] sm:$0xff] %v1111
  %1119 = vst [vmem:[#allocation2 + $0x170] sm:$0xff] %v1112
  %1120 = vst [vmem:[#allocation2 + $0x178] sm:$0xff] %v1113
  %1121 = vst [vmem:[#allocation2 + $0x180] sm:$0xff] %v1114
  %v1122 = vlaneseq
  %v1123 = vshrl.u32 %v1122, 7
  %v1124 = vadd.s32 %v1123, 8
  %v1125 = vadd.s32 %v1123, 16
  %v1126 = vadd.s32 %v1123, 24
  %v1127 = vadd.s32 %v1123, 32
  %v1128 = vadd.s32 %v1123, 40
  %v1129 = vadd.s32 %v1123, 48
  %v1130 = vand.u32 %v1123, 7
  %v1131 = vand.u32 %v1124, 7
  %v1132 = vand.u32 %v1125, 7
  %v1133 = vand.u32 %v1126, 7
  %v1134 = vand.u32 %v1127, 7
  %v1135 = vand.u32 %v1128, 7
  %v1136 = vand.u32 %v1129, 7
  %s1137 = smul.u32 0, 8
  %v1138 = vstv %s1137
  %v1139 = vadd.s32 %v1138, %v1130
  %v1140 = vadd.s32 %v1138, %v1131
  %v1141 = vadd.s32 %v1138, %v1132
  %v1142 = vadd.s32 %v1138, %v1133
  %v1143 = vadd.s32 %v1138, %v1134
  %v1144 = vadd.s32 %v1138, %v1135
  %v1145 = vadd.s32 %v1138, %v1136
  %vm1146 = vcmp.lt.s32.totalorder %v1139, 2
  %vm1147 = vcmp.lt.s32.totalorder %v1140, 2
  %vm1148 = vcmp.lt.s32.totalorder %v1141, 2
  %vm1149 = vcmp.lt.s32.totalorder %v1142, 2
  %vm1150 = vcmp.lt.s32.totalorder %v1143, 2
  %vm1151 = vcmp.lt.s32.totalorder %v1144, 2
  %vm1152 = vcmp.lt.s32.totalorder %v1145, 2
  %v1153 = vsel %vm1146, 1, 0
  %v1154 = vsel %vm1147, 1, 0
  %v1155 = vsel %vm1148, 1, 0
  %v1156 = vsel %vm1149, 1, 0
  %v1157 = vsel %vm1150, 1, 0
  %v1158 = vsel %vm1151, 1, 0
  %v1159 = vsel %vm1152, 1, 0
  %v1160 = vcvt.s32.f32 %v1153
  %v1161 = vcvt.s32.f32 %v1154
  %v1162 = vcvt.s32.f32 %v1155
  %v1163 = vcvt.s32.f32 %v1156
  %v1164 = vcvt.s32.f32 %v1157
  %v1165 = vcvt.s32.f32 %v1158
  %v1166 = vcvt.s32.f32 %v1159
  %v1167 = vld [vmem:[#allocation2] sm:$0xf]
  %v1168 = vld [vmem:[#allocation2 + $0x8] sm:$0xf]
  %v1169 = vld [vmem:[#allocation2 + $0x10] sm:$0xf]
  %v1170 = vld [vmem:[#allocation2 + $0x18] sm:$0xf]
  %v1171 = vld [vmem:[#allocation2 + $0x20] sm:$0xf]
  %v1172 = vld [vmem:[#allocation2 + $0x28] sm:$0xf]
  %v1173 = vld [vmem:[#allocation2 + $0x30] sm:$0xf]
  %v1180 = vunpack.c.l.b16 %v1168
  %v1181 = vunpack.c.l.b16 %v1169
  %v1182 = vunpack.c.l.b16 %v1170
  %v1183 = vunpack.c.l.b16 %v1171
  %v1184 = vunpack.c.l.b16 %v1172
  %v1185 = vunpack.c.l.b16 %v1173
  %v1186 = vpack.c.b16 %v1181, %v1180
  %v1187 = vpack.c.b16 %v1183, %v1182
  %v1188 = vpack.c.b16 %v1185, %v1184
  %v1189 = vld [vmem:[#allocation2 + $0x38] sm:$0xf]
  %v1190 = vld [vmem:[#allocation2 + $0x40] sm:$0xf]
  %v1191 = vld [vmem:[#allocation2 + $0x48] sm:$0xf]
  %v1192 = vld [vmem:[#allocation2 + $0x50] sm:$0xf]
  %v1193 = vld [vmem:[#allocation2 + $0x58] sm:$0xf]
  %v1194 = vld [vmem:[#allocation2 + $0x60] sm:$0xf]
  %v1195 = vld [vmem:[#allocation2 + $0x68] sm:$0xf]
  %v1202 = vunpack.c.l.b16 %v1190
  %v1203 = vunpack.c.l.b16 %v1191
  %v1204 = vunpack.c.l.b16 %v1192
  %v1205 = vunpack.c.l.b16 %v1193
  %v1206 = vunpack.c.l.b16 %v1194
  %v1207 = vunpack.c.l.b16 %v1195
  %v1208 = vpack.c.b16 %v1203, %v1202
  %v1209 = vpack.c.b16 %v1205, %v1204
  %v1210 = vpack.c.b16 %v1207, %v1206
  %v1212 = vunpack.c.l.b16 %v1167
  %v1213 = vpack.c.b16 %v1212, %v1212
  %v1214 = vpack.c.b16 %v1184, %v1184
  %1215 = vrot.lane.b32.xlu0 %v1213, 64
  %v1216 = vpop.permute.xlu0 %1215
  %1217 = vrot.lane.b32.xlu0 %v1186, 64
  %v1218 = vpop.permute.xlu0 %1217
  %1219 = vrot.lane.b32.xlu0 %v1187, 64
  %v1220 = vpop.permute.xlu0 %1219
  %1221 = vrot.lane.b32.xlu0 %v1214, 64
  %v1222 = vpop.permute.xlu0 %1221
  %vm1223 = vcmask 1043456
  %v1226 = vsel %vm1223, 0, %v1216
  %v1228 = vunpack.c.l.b16 %v1189
  %v1229 = vpack.c.b16 %v1228, %v1228
  %v1230 = vpack.c.b16 %v1206, %v1206
  %1231 = vrot.lane.b32.xlu0 %v1229, 64
  %v1232 = vpop.permute.xlu0 %1231
  %1233 = vrot.lane.b32.xlu0 %v1208, 64
  %v1234 = vpop.permute.xlu0 %1233
  %1235 = vrot.lane.b32.xlu0 %v1209, 64
  %v1236 = vpop.permute.xlu0 %1235
  %1237 = vrot.lane.b32.xlu0 %v1230, 64
  %v1238 = vpop.permute.xlu0 %1237
  %v1240 = vsel %vm1223, 0, %v1232
  %v1241 = vld [vmem:[#allocation2 + $0x4] sm:$0xf]
  %v1242 = vld [vmem:[#allocation2 + $0xc] sm:$0xf]
  %v1243 = vld [vmem:[#allocation2 + $0x14] sm:$0xf]
  %v1244 = vld [vmem:[#allocation2 + $0x1c] sm:$0xf]
  %v1245 = vld [vmem:[#allocation2 + $0x24] sm:$0xf]
  %v1246 = vld [vmem:[#allocation2 + $0x2c] sm:$0xf]
  %v1247 = vld [vmem:[#allocation2 + $0x34] sm:$0xf]
  %v1254 = vunpack.c.l.b16 %v1242
  %v1255 = vunpack.c.l.b16 %v1243
  %v1256 = vunpack.c.l.b16 %v1244
  %v1257 = vunpack.c.l.b16 %v1245
  %v1258 = vunpack.c.l.b16 %v1246
  %v1259 = vunpack.c.l.b16 %v1247
  %v1260 = vpack.c.b16 %v1255, %v1254
  %v1261 = vpack.c.b16 %v1257, %v1256
  %v1262 = vpack.c.b16 %v1259, %v1258
  %v1264 = vunpack.c.l.b16 %v1241
  %v1265 = vpack.c.b16 %v1264, %v1264
  %v1266 = vpack.c.b16 %v1258, %v1258
  %1267 = vrot.lane.b32.xlu0 %v1265, 64
  %v1268 = vpop.permute.xlu0 %1267
  %1269 = vrot.lane.b32.xlu0 %v1260, 64
  %v1270 = vpop.permute.xlu0 %1269
  %1271 = vrot.lane.b32.xlu0 %v1261, 64
  %v1272 = vpop.permute.xlu0 %1271
  %1273 = vrot.lane.b32.xlu0 %v1266, 64
  %v1274 = vpop.permute.xlu0 %1273
  %v1276 = vsel %vm1223, 0, %v1268
  %v1277 = vpack.c.b16 %v1180, %v1212
  %v1278 = vpack.c.b16 %v1182, %v1181
  %v1279 = vpack.c.b16 %v1184, %v1183
  %v1280 = vpack.c.b16 %v1185, %v1185
  %1282 = vrot.lane.b32.xlu0 %v1188, 64
  %v1283 = vpop.permute.xlu0 %1282
  %1284 = vrot.lane.b32.xlu0 0, 64
  %v1285 = vpop.permute.xlu0 %1284
  %v1286 = vpack.c.b16 %v1202, %v1228
  %v1287 = vpack.c.b16 %v1204, %v1203
  %v1288 = vpack.c.b16 %v1206, %v1205
  %v1289 = vpack.c.b16 %v1207, %v1207
  %1290 = vrot.lane.b32.xlu0 %v1210, 64
  %v1291 = vpop.permute.xlu0 %1290
  %v1294 = vsel %vm103, %v1277, %v1218
  %v1298 = vsel %vm103, %v1278, %v1220
  %v1302 = vsel %vm103, %v1279, %v1283
  %v1306 = vsel %vm103, %v1280, %v1285
  %v1310 = vsel %vm103, %v1286, %v1234
  %v1314 = vsel %vm103, %v1287, %v1236
  %v1318 = vsel %vm103, %v1288, %v1291
  %v1321 = vsel %vm103, %v1289, %v1285
  %v1323 = vld [vmem:[%s3] sm:$0xf]
  %v1324 = vld [vmem:[%s3 + $0x4] sm:$0xf]
  %v1325 = vld [vmem:[%s3 + $0x8] sm:$0xf]
  %v1326 = vld [vmem:[%s3 + $0xc] sm:$0xf]
  %v1327 = vld [vmem:[%s3 + $0x10] sm:$0xf]
  %v1328 = vld [vmem:[%s3 + $0x14] sm:$0xf]
  %v1329 = vld [vmem:[%s3 + $0x18] sm:$0xf]
  %v1330 = vld [vmem:[%s3 + $0x1c] sm:$0xf]
  %v1331 = vld [vmem:[%s3 + $0x20] sm:$0xf]
  %v1332 = vld [vmem:[%s3 + $0x24] sm:$0xf]
  %v1333 = vld [vmem:[%s3 + $0x28] sm:$0xf]
  %v1334 = vld [vmem:[%s3 + $0x2c] sm:$0xf]
  %v1335 = vld [vmem:[%s3 + $0x30] sm:$0xf]
  %v1336 = vld [vmem:[%s3 + $0x34] sm:$0xf]
  %v1337 = vld [vmem:[%s3 + $0x38] sm:$0xf]
  %v1338 = vld [vmem:[%s3 + $0x3c] sm:$0xf]
  %v1339 = vld [vmem:[%s3 + $0x40] sm:$0xf]
  %v1340 = vld [vmem:[%s3 + $0x44] sm:$0xf]
  %v1341 = vld [vmem:[%s3 + $0x48] sm:$0xf]
  %v1342 = vld [vmem:[%s3 + $0x4c] sm:$0xf]
  %v1343 = vld [vmem:[%s3 + $0x50] sm:$0xf]
  %v1344 = vld [vmem:[%s3 + $0x54] sm:$0xf]
  %v1345 = vld [vmem:[%s3 + $0x58] sm:$0xf]
  %v1346 = vld [vmem:[%s3 + $0x5c] sm:$0xf]
  %v1347 = vld [vmem:[%s3 + $0x60] sm:$0xf]
  %v1348 = vld [vmem:[%s3 + $0x64] sm:$0xf]
  %v1349 = vld [vmem:[%s3 + $0x68] sm:$0xf]
  %v1350 = vld [vmem:[%s3 + $0x6c] sm:$0xf]
  %v1351 = vld [vmem:[%s3 + $0x70] sm:$0xf]
  %v1352 = vld [vmem:[%s3 + $0x74] sm:$0xf]
  %v1353 = vld [vmem:[%s3 + $0x78] sm:$0xf]
  %v1354 = vld [vmem:[%s3 + $0x7c] sm:$0xf]
  %v1355 = vsel %vm103, %v1226, %v1277
  %v1357 = vsel %vm103, %v1218, %v1278
  %v1359 = vsel %vm103, %v1220, %v1279
  %v1362 = vsel %vm103, %v1222, %v1280
  %v1364 = vsel %vm103, %v1240, %v1286
  %v1366 = vsel %vm103, %v1234, %v1287
  %v1368 = vsel %vm103, %v1236, %v1288
  %v1371 = vsel %vm103, %v1238, %v1289
  %s1373 = scalar_lea.vmem %s3, 128
  %v1374 = vld [vmem:[%s1373] sm:$0xf]
  %v1375 = vld [vmem:[%s1373 + $0x4] sm:$0xf]
  %v1376 = vld [vmem:[%s1373 + $0x8] sm:$0xf]
  %v1377 = vld [vmem:[%s1373 + $0xc] sm:$0xf]
  %v1378 = vld [vmem:[%s1373 + $0x10] sm:$0xf]
  %v1379 = vld [vmem:[%s1373 + $0x14] sm:$0xf]
  %v1380 = vld [vmem:[%s1373 + $0x18] sm:$0xf]
  %v1381 = vld [vmem:[%s1373 + $0x1c] sm:$0xf]
  %v1382 = vld [vmem:[%s1373 + $0x20] sm:$0xf]
  %v1383 = vld [vmem:[%s1373 + $0x24] sm:$0xf]
  %v1384 = vld [vmem:[%s1373 + $0x28] sm:$0xf]
  %v1385 = vld [vmem:[%s1373 + $0x2c] sm:$0xf]
  %v1386 = vld [vmem:[%s1373 + $0x30] sm:$0xf]
  %v1387 = vld [vmem:[%s1373 + $0x34] sm:$0xf]
  %v1388 = vld [vmem:[%s1373 + $0x38] sm:$0xf]
  %v1389 = vld [vmem:[%s1373 + $0x3c] sm:$0xf]
  %v1390 = vld [vmem:[%s1373 + $0x40] sm:$0xf]
  %v1391 = vld [vmem:[%s1373 + $0x44] sm:$0xf]
  %v1392 = vld [vmem:[%s1373 + $0x48] sm:$0xf]
  %v1393 = vld [vmem:[%s1373 + $0x4c] sm:$0xf]
  %v1394 = vld [vmem:[%s1373 + $0x50] sm:$0xf]
  %v1395 = vld [vmem:[%s1373 + $0x54] sm:$0xf]
  %v1396 = vld [vmem:[%s1373 + $0x58] sm:$0xf]
  %v1397 = vld [vmem:[%s1373 + $0x5c] sm:$0xf]
  %v1398 = vld [vmem:[%s1373 + $0x60] sm:$0xf]
  %v1399 = vld [vmem:[%s1373 + $0x64] sm:$0xf]
  %v1400 = vld [vmem:[%s1373 + $0x68] sm:$0xf]
  %v1401 = vld [vmem:[%s1373 + $0x6c] sm:$0xf]
  %v1402 = vld [vmem:[%s1373 + $0x70] sm:$0xf]
  %v1403 = vld [vmem:[%s1373 + $0x74] sm:$0xf]
  %v1404 = vld [vmem:[%s1373 + $0x78] sm:$0xf]
  %v1405 = vld [vmem:[%s1373 + $0x7c] sm:$0xf]
  %v1438 = vunpack.c.l.b16 %v1374
  %v1439 = vunpack.c.l.b16 %v1375
  %v1440 = vunpack.c.l.b16 %v1376
  %v1441 = vunpack.c.l.b16 %v1377
  %v1442 = vunpack.c.l.b16 %v1378
  %v1443 = vunpack.c.l.b16 %v1379
  %v1444 = vunpack.c.l.b16 %v1380
  %v1445 = vunpack.c.l.b16 %v1381
  %v1446 = vunpack.c.l.b16 %v1382
  %v1447 = vunpack.c.l.b16 %v1383
  %v1448 = vunpack.c.l.b16 %v1384
  %v1449 = vunpack.c.l.b16 %v1385
  %v1450 = vunpack.c.l.b16 %v1386
  %v1451 = vunpack.c.l.b16 %v1387
  %v1452 = vunpack.c.l.b16 %v1388
  %v1453 = vunpack.c.l.b16 %v1389
  %v1454 = vunpack.c.l.b16 %v1390
  %v1455 = vunpack.c.l.b16 %v1391
  %v1456 = vunpack.c.l.b16 %v1392
  %v1457 = vunpack.c.l.b16 %v1393
  %v1458 = vunpack.c.l.b16 %v1394
  %v1459 = vunpack.c.l.b16 %v1395
  %v1460 = vunpack.c.l.b16 %v1396
  %v1461 = vunpack.c.l.b16 %v1397
  %v1462 = vunpack.c.l.b16 %v1398
  %v1463 = vunpack.c.l.b16 %v1399
  %v1464 = vunpack.c.l.b16 %v1400
  %v1465 = vunpack.c.l.b16 %v1401
  %v1466 = vunpack.c.l.b16 %v1402
  %v1467 = vunpack.c.l.b16 %v1403
  %v1468 = vunpack.c.l.b16 %v1404
  %v1469 = vunpack.c.l.b16 %v1405
  %v1470 = vpack.c.b16 %v1439, %v1438
  %v1471 = vpack.c.b16 %v1441, %v1440
  %v1472 = vpack.c.b16 %v1443, %v1442
  %v1473 = vpack.c.b16 %v1445, %v1444
  %v1474 = vpack.c.b16 %v1447, %v1446
  %v1475 = vpack.c.b16 %v1449, %v1448
  %v1476 = vpack.c.b16 %v1451, %v1450
  %v1477 = vpack.c.b16 %v1453, %v1452
  %v1478 = vpack.c.b16 %v1455, %v1454
  %v1479 = vpack.c.b16 %v1457, %v1456
  %v1480 = vpack.c.b16 %v1459, %v1458
  %v1481 = vpack.c.b16 %v1461, %v1460
  %v1482 = vpack.c.b16 %v1463, %v1462
  %v1483 = vpack.c.b16 %v1465, %v1464
  %v1484 = vpack.c.b16 %v1467, %v1466
  %v1485 = vpack.c.b16 %v1469, %v1468
  %1502 = vmatpush.bf16.msra.mxu0 %v1477
  %1503 = vmatpush.bf16.msra.mxu0 %v1476
  %1504 = vmatpush.bf16.msra.mxu0 %v1475
  %1505 = vmatpush.bf16.msra.mxu0 %v1474
  %1506 = vmatpush.bf16.msra.mxu0 %v1473
  %1507 = vmatpush.bf16.msra.mxu0 %v1472
  %1508 = vmatpush.bf16.msra.mxu0 %v1471
  %1509 = vmatpush.bf16.msra.mxu0 %v1470
  %1510 = vmatmul.bf16.gmra.mxu0 %v1355
  %v1511 = vpop.f32.mrf.mxu0
  %v1512 = vadd.f32 0.0, %v1511
  %v1513 = vpop.f32.mrf.mxu0
  %v1514 = vadd.f32 0.0, %v1513
  %1515 = vmatmul.bf16.gmra.mxu0 %v1357
  %v1516 = vpop.f32.mrf.mxu0
  %v1517 = vadd.f32 0.0, %v1516
  %v1518 = vpop.f32.mrf.mxu0
  %v1519 = vadd.f32 0.0, %v1518
  %1520 = vmatmul.bf16.gmra.mxu0 %v1359
  %v1521 = vpop.f32.mrf.mxu0
  %v1522 = vadd.f32 0.0, %v1521
  %v1523 = vpop.f32.mrf.mxu0
  %v1524 = vadd.f32 0.0, %v1523
  %1525 = vmatmul.bf16.gmra.mxu0 %v1362
  %v1526 = vpop.f32.mrf.mxu0
  %v1527 = vadd.f32 0.0, %v1526
  %v1528 = vpop.f32.mrf.mxu0
  %1529 = vdwg.mxu0
  %1530 = vmatpush.bf16.msra.mxu0 %v1485
  %1531 = vmatpush.bf16.msra.mxu0 %v1484
  %1532 = vmatpush.bf16.msra.mxu0 %v1483
  %1533 = vmatpush.bf16.msra.mxu0 %v1482
  %1534 = vmatpush.bf16.msra.mxu0 %v1481
  %1535 = vmatpush.bf16.msra.mxu0 %v1480
  %1536 = vmatpush.bf16.msra.mxu0 %v1479
  %1537 = vmatpush.bf16.msra.mxu0 %v1478
  %1538 = vmatmul.bf16.gmra.mxu0 %v1364
  %v1539 = vpop.f32.mrf.mxu0
  %v1540 = vadd.f32 %v1512, %v1539
  %v1541 = vpop.f32.mrf.mxu0
  %v1542 = vadd.f32 %v1514, %v1541
  %1543 = vmatmul.bf16.gmra.mxu0 %v1366
  %v1544 = vpop.f32.mrf.mxu0
  %v1545 = vadd.f32 %v1517, %v1544
  %v1546 = vpop.f32.mrf.mxu0
  %v1547 = vadd.f32 %v1519, %v1546
  %1548 = vmatmul.bf16.gmra.mxu0 %v1368
  %v1549 = vpop.f32.mrf.mxu0
  %v1550 = vadd.f32 %v1522, %v1549
  %v1551 = vpop.f32.mrf.mxu0
  %v1552 = vadd.f32 %v1524, %v1551
  %1553 = vmatmul.bf16.gmra.mxu0 %v1371
  %v1554 = vpop.f32.mrf.mxu0
  %v1555 = vadd.f32 %v1527, %v1554
  %v1556 = vpop.f32.mrf.mxu0
  %1557 = vdwg.mxu0
  %v1590 = vunpack.c.l.b16 %v1323
  %v1591 = vunpack.c.l.b16 %v1324
  %v1592 = vunpack.c.l.b16 %v1325
  %v1593 = vunpack.c.l.b16 %v1326
  %v1594 = vunpack.c.l.b16 %v1327
  %v1595 = vunpack.c.l.b16 %v1328
  %v1596 = vunpack.c.l.b16 %v1329
  %v1597 = vunpack.c.l.b16 %v1330
  %v1598 = vunpack.c.l.b16 %v1331
  %v1599 = vunpack.c.l.b16 %v1332
  %v1600 = vunpack.c.l.b16 %v1333
  %v1601 = vunpack.c.l.b16 %v1334
  %v1602 = vunpack.c.l.b16 %v1335
  %v1603 = vunpack.c.l.b16 %v1336
  %v1604 = vunpack.c.l.b16 %v1337
  %v1605 = vunpack.c.l.b16 %v1338
  %v1606 = vunpack.c.l.b16 %v1339
  %v1607 = vunpack.c.l.b16 %v1340
  %v1608 = vunpack.c.l.b16 %v1341
  %v1609 = vunpack.c.l.b16 %v1342
  %v1610 = vunpack.c.l.b16 %v1343
  %v1611 = vunpack.c.l.b16 %v1344
  %v1612 = vunpack.c.l.b16 %v1345
  %v1613 = vunpack.c.l.b16 %v1346
  %v1614 = vunpack.c.l.b16 %v1347
  %v1615 = vunpack.c.l.b16 %v1348
  %v1616 = vunpack.c.l.b16 %v1349
  %v1617 = vunpack.c.l.b16 %v1350
  %v1618 = vunpack.c.l.b16 %v1351
  %v1619 = vunpack.c.l.b16 %v1352
  %v1620 = vunpack.c.l.b16 %v1353
  %v1621 = vunpack.c.l.b16 %v1354
  %v1622 = vpack.c.b16 %v1591, %v1590
  %v1623 = vpack.c.b16 %v1593, %v1592
  %v1624 = vpack.c.b16 %v1595, %v1594
  %v1625 = vpack.c.b16 %v1597, %v1596
  %v1626 = vpack.c.b16 %v1599, %v1598
  %v1627 = vpack.c.b16 %v1601, %v1600
  %v1628 = vpack.c.b16 %v1603, %v1602
  %v1629 = vpack.c.b16 %v1605, %v1604
  %v1630 = vpack.c.b16 %v1607, %v1606
  %v1631 = vpack.c.b16 %v1609, %v1608
  %v1632 = vpack.c.b16 %v1611, %v1610
  %v1633 = vpack.c.b16 %v1613, %v1612
  %v1634 = vpack.c.b16 %v1615, %v1614
  %v1635 = vpack.c.b16 %v1617, %v1616
  %v1636 = vpack.c.b16 %v1619, %v1618
  %v1637 = vpack.c.b16 %v1621, %v1620
  %1654 = vmatpush.bf16.msra.mxu0 %v1629
  %1655 = vmatpush.bf16.msra.mxu0 %v1628
  %1656 = vmatpush.bf16.msra.mxu0 %v1627
  %1657 = vmatpush.bf16.msra.mxu0 %v1626
  %1658 = vmatpush.bf16.msra.mxu0 %v1625
  %1659 = vmatpush.bf16.msra.mxu0 %v1624
  %1660 = vmatpush.bf16.msra.mxu0 %v1623
  %1661 = vmatpush.bf16.msra.mxu0 %v1622
  %1662 = vmatmul.bf16.gmra.mxu0 %v1294
  %v1663 = vpop.f32.mrf.mxu0
  %v1664 = vadd.f32 %v1540, %v1663
  %v1665 = vpop.f32.mrf.mxu0
  %v1666 = vadd.f32 %v1542, %v1665
  %1667 = vmatmul.bf16.gmra.mxu0 %v1298
  %v1668 = vpop.f32.mrf.mxu0
  %v1669 = vadd.f32 %v1545, %v1668
  %v1670 = vpop.f32.mrf.mxu0
  %v1671 = vadd.f32 %v1547, %v1670
  %1672 = vmatmul.bf16.gmra.mxu0 %v1302
  %v1673 = vpop.f32.mrf.mxu0
  %v1674 = vadd.f32 %v1550, %v1673
  %v1675 = vpop.f32.mrf.mxu0
  %v1676 = vadd.f32 %v1552, %v1675
  %1677 = vmatmul.bf16.gmra.mxu0 %v1306
  %v1678 = vpop.f32.mrf.mxu0
  %v1679 = vadd.f32 %v1555, %v1678
  %v1680 = vpop.f32.mrf.mxu0
  %1681 = vdwg.mxu0
  %1682 = vmatpush.bf16.msra.mxu0 %v1637
  %1683 = vmatpush.bf16.msra.mxu0 %v1636
  %1684 = vmatpush.bf16.msra.mxu0 %v1635
  %1685 = vmatpush.bf16.msra.mxu0 %v1634
  %1686 = vmatpush.bf16.msra.mxu0 %v1633
  %1687 = vmatpush.bf16.msra.mxu0 %v1632
  %1688 = vmatpush.bf16.msra.mxu0 %v1631
  %1689 = vmatpush.bf16.msra.mxu0 %v1630
  %1690 = vmatmul.bf16.gmra.mxu0 %v1310
  %v1691 = vpop.f32.mrf.mxu0
  %v1692 = vadd.f32 %v1664, %v1691
  %v1693 = vpop.f32.mrf.mxu0
  %v1694 = vadd.f32 %v1666, %v1693
  %1695 = vmatmul.bf16.gmra.mxu0 %v1314
  %v1696 = vpop.f32.mrf.mxu0
  %v1697 = vadd.f32 %v1669, %v1696
  %v1698 = vpop.f32.mrf.mxu0
  %v1699 = vadd.f32 %v1671, %v1698
  %1700 = vmatmul.bf16.gmra.mxu0 %v1318
  %v1701 = vpop.f32.mrf.mxu0
  %v1702 = vadd.f32 %v1674, %v1701
  %v1703 = vpop.f32.mrf.mxu0
  %v1704 = vadd.f32 %v1676, %v1703
  %1705 = vmatmul.bf16.gmra.mxu0 %v1321
  %v1706 = vpop.f32.mrf.mxu0
  %v1707 = vadd.f32 %v1679, %v1706
  %v1708 = vpop.f32.mrf.mxu0
  %1709 = vdwg.mxu0
  %v1710 = vpack.c.b16 %v1254, %v1264
  %v1711 = vpack.c.b16 %v1256, %v1255
  %v1712 = vpack.c.b16 %v1258, %v1257
  %v1713 = vpack.c.b16 %v1259, %v1259
  %1714 = vrot.lane.b32.xlu0 %v1262, 64
  %v1715 = vpop.permute.xlu0 %1714
  %v1719 = vsel %vm103, %v1710, %v1270
  %v1723 = vsel %vm103, %v1711, %v1272
  %v1727 = vsel %vm103, %v1712, %v1715
  %v1730 = vsel %vm103, %v1713, %v1285
  %s1732 = scalar_lea.vmem %s3, 256
  %v1733 = vld [vmem:[%s1732] sm:$0xf]
  %v1734 = vld [vmem:[%s1732 + $0x4] sm:$0xf]
  %v1735 = vld [vmem:[%s1732 + $0x8] sm:$0xf]
  %v1736 = vld [vmem:[%s1732 + $0xc] sm:$0xf]
  %v1737 = vld [vmem:[%s1732 + $0x10] sm:$0xf]
  %v1738 = vld [vmem:[%s1732 + $0x14] sm:$0xf]
  %v1739 = vld [vmem:[%s1732 + $0x18] sm:$0xf]
  %v1740 = vld [vmem:[%s1732 + $0x1c] sm:$0xf]
  %v1741 = vld [vmem:[%s1732 + $0x20] sm:$0xf]
  %v1742 = vld [vmem:[%s1732 + $0x24] sm:$0xf]
  %v1743 = vld [vmem:[%s1732 + $0x28] sm:$0xf]
  %v1744 = vld [vmem:[%s1732 + $0x2c] sm:$0xf]
  %v1745 = vld [vmem:[%s1732 + $0x30] sm:$0xf]
  %v1746 = vld [vmem:[%s1732 + $0x34] sm:$0xf]
  %v1747 = vld [vmem:[%s1732 + $0x38] sm:$0xf]
  %v1748 = vld [vmem:[%s1732 + $0x3c] sm:$0xf]
  %v1749 = vld [vmem:[%s1732 + $0x40] sm:$0xf]
  %v1750 = vld [vmem:[%s1732 + $0x44] sm:$0xf]
  %v1751 = vld [vmem:[%s1732 + $0x48] sm:$0xf]
  %v1752 = vld [vmem:[%s1732 + $0x4c] sm:$0xf]
  %v1753 = vld [vmem:[%s1732 + $0x50] sm:$0xf]
  %v1754 = vld [vmem:[%s1732 + $0x54] sm:$0xf]
  %v1755 = vld [vmem:[%s1732 + $0x58] sm:$0xf]
  %v1756 = vld [vmem:[%s1732 + $0x5c] sm:$0xf]
  %v1757 = vld [vmem:[%s1732 + $0x60] sm:$0xf]
  %v1758 = vld [vmem:[%s1732 + $0x64] sm:$0xf]
  %v1759 = vld [vmem:[%s1732 + $0x68] sm:$0xf]
  %v1760 = vld [vmem:[%s1732 + $0x6c] sm:$0xf]
  %v1761 = vld [vmem:[%s1732 + $0x70] sm:$0xf]
  %v1762 = vld [vmem:[%s1732 + $0x74] sm:$0xf]
  %v1763 = vld [vmem:[%s1732 + $0x78] sm:$0xf]
  %v1764 = vld [vmem:[%s1732 + $0x7c] sm:$0xf]
  %v1797 = vunpack.c.l.b16 %v1733
  %v1798 = vunpack.c.l.b16 %v1734
  %v1799 = vunpack.c.l.b16 %v1735
  %v1800 = vunpack.c.l.b16 %v1736
  %v1801 = vunpack.c.l.b16 %v1737
  %v1802 = vunpack.c.l.b16 %v1738
  %v1803 = vunpack.c.l.b16 %v1739
  %v1804 = vunpack.c.l.b16 %v1740
  %v1805 = vunpack.c.l.b16 %v1741
  %v1806 = vunpack.c.l.b16 %v1742
  %v1807 = vunpack.c.l.b16 %v1743
  %v1808 = vunpack.c.l.b16 %v1744
  %v1809 = vunpack.c.l.b16 %v1745
  %v1810 = vunpack.c.l.b16 %v1746
  %v1811 = vunpack.c.l.b16 %v1747
  %v1812 = vunpack.c.l.b16 %v1748
  %v1813 = vunpack.c.l.b16 %v1749
  %v1814 = vunpack.c.l.b16 %v1750
  %v1815 = vunpack.c.l.b16 %v1751
  %v1816 = vunpack.c.l.b16 %v1752
  %v1817 = vunpack.c.l.b16 %v1753
  %v1818 = vunpack.c.l.b16 %v1754
  %v1819 = vunpack.c.l.b16 %v1755
  %v1820 = vunpack.c.l.b16 %v1756
  %v1821 = vunpack.c.l.b16 %v1757
  %v1822 = vunpack.c.l.b16 %v1758
  %v1823 = vunpack.c.l.b16 %v1759
  %v1824 = vunpack.c.l.b16 %v1760
  %v1825 = vunpack.c.l.b16 %v1761
  %v1826 = vunpack.c.l.b16 %v1762
  %v1827 = vunpack.c.l.b16 %v1763
  %v1828 = vunpack.c.l.b16 %v1764
  %v1829 = vpack.c.b16 %v1798, %v1797
  %v1830 = vpack.c.b16 %v1800, %v1799
  %v1831 = vpack.c.b16 %v1802, %v1801
  %v1832 = vpack.c.b16 %v1804, %v1803
  %v1833 = vpack.c.b16 %v1806, %v1805
  %v1834 = vpack.c.b16 %v1808, %v1807
  %v1835 = vpack.c.b16 %v1810, %v1809
  %v1836 = vpack.c.b16 %v1812, %v1811
  %v1837 = vpack.c.b16 %v1814, %v1813
  %v1838 = vpack.c.b16 %v1816, %v1815
  %v1839 = vpack.c.b16 %v1818, %v1817
  %v1840 = vpack.c.b16 %v1820, %v1819
  %v1841 = vpack.c.b16 %v1822, %v1821
  %v1842 = vpack.c.b16 %v1824, %v1823
  %v1843 = vpack.c.b16 %v1826, %v1825
  %v1844 = vpack.c.b16 %v1828, %v1827
  %1861 = vmatpush.bf16.msra.mxu0 %v1836
  %1862 = vmatpush.bf16.msra.mxu0 %v1835
  %1863 = vmatpush.bf16.msra.mxu0 %v1834
  %1864 = vmatpush.bf16.msra.mxu0 %v1833
  %1865 = vmatpush.bf16.msra.mxu0 %v1832
  %1866 = vmatpush.bf16.msra.mxu0 %v1831
  %1867 = vmatpush.bf16.msra.mxu0 %v1830
  %1868 = vmatpush.bf16.msra.mxu0 %v1829
  %1869 = vmatmul.bf16.gmra.mxu0 0
  %v1870 = vpop.f32.mrf.mxu0
  %v1871 = vadd.f32 0.0, %v1870
  %v1872 = vpop.f32.mrf.mxu0
  %v1873 = vadd.f32 0.0, %v1872
  %1874 = vmatmul.bf16.gmra.mxu0 0
  %v1875 = vpop.f32.mrf.mxu0
  %v1876 = vadd.f32 0.0, %v1875
  %v1877 = vpop.f32.mrf.mxu0
  %v1878 = vadd.f32 0.0, %v1877
  %1879 = vmatmul.bf16.gmra.mxu0 0
  %v1880 = vpop.f32.mrf.mxu0
  %v1881 = vadd.f32 0.0, %v1880
  %v1882 = vpop.f32.mrf.mxu0
  %v1883 = vadd.f32 0.0, %v1882
  %1884 = vmatmul.bf16.gmra.mxu0 0
  %v1885 = vpop.f32.mrf.mxu0
  %v1886 = vadd.f32 0.0, %v1885
  %v1887 = vpop.f32.mrf.mxu0
  %1888 = vdwg.mxu0
  %1889 = vmatpush.bf16.msra.mxu0 %v1844
  %1890 = vmatpush.bf16.msra.mxu0 %v1843
  %1891 = vmatpush.bf16.msra.mxu0 %v1842
  %1892 = vmatpush.bf16.msra.mxu0 %v1841
  %1893 = vmatpush.bf16.msra.mxu0 %v1840
  %1894 = vmatpush.bf16.msra.mxu0 %v1839
  %1895 = vmatpush.bf16.msra.mxu0 %v1838
  %1896 = vmatpush.bf16.msra.mxu0 %v1837
  %1897 = vmatmul.bf16.gmra.mxu0 %v1719
  %v1898 = vpop.f32.mrf.mxu0
  %v1899 = vadd.f32 %v1871, %v1898
  %v1900 = vpop.f32.mrf.mxu0
  %v1901 = vadd.f32 %v1873, %v1900
  %1902 = vmatmul.bf16.gmra.mxu0 %v1723
  %v1903 = vpop.f32.mrf.mxu0
  %v1904 = vadd.f32 %v1876, %v1903
  %v1905 = vpop.f32.mrf.mxu0
  %v1906 = vadd.f32 %v1878, %v1905
  %1907 = vmatmul.bf16.gmra.mxu0 %v1727
  %v1908 = vpop.f32.mrf.mxu0
  %v1909 = vadd.f32 %v1881, %v1908
  %v1910 = vpop.f32.mrf.mxu0
  %v1911 = vadd.f32 %v1883, %v1910
  %1912 = vmatmul.bf16.gmra.mxu0 %v1730
  %v1913 = vpop.f32.mrf.mxu0
  %v1914 = vadd.f32 %v1886, %v1913
  %v1915 = vpop.f32.mrf.mxu0
  %1916 = vdwg.mxu0
  %v1917 = vadd.f32 %v1692, %v1899
  %v1918 = vadd.f32 %v1694, %v1901
  %v1919 = vadd.f32 %v1697, %v1904
  %v1920 = vadd.f32 %v1699, %v1906
  %v1921 = vadd.f32 %v1702, %v1909
  %v1922 = vadd.f32 %v1704, %v1911
  %v1923 = vadd.f32 %v1707, %v1914
  %v1924 = vsel %vm103, %v1276, %v1710
  %v1926 = vsel %vm103, %v1270, %v1711
  %v1928 = vsel %vm103, %v1272, %v1712
  %v1931 = vsel %vm103, %v1274, %v1713
  %s1933 = scalar_lea.vmem %s3, 384
  %v1934 = vld [vmem:[%s1933] sm:$0xf]
  %v1935 = vld [vmem:[%s1933 + $0x4] sm:$0xf]
  %v1936 = vld [vmem:[%s1933 + $0x8] sm:$0xf]
  %v1937 = vld [vmem:[%s1933 + $0xc] sm:$0xf]
  %v1938 = vld [vmem:[%s1933 + $0x10] sm:$0xf]
  %v1939 = vld [vmem:[%s1933 + $0x14] sm:$0xf]
  %v1940 = vld [vmem:[%s1933 + $0x18] sm:$0xf]
  %v1941 = vld [vmem:[%s1933 + $0x1c] sm:$0xf]
  %v1942 = vld [vmem:[%s1933 + $0x20] sm:$0xf]
  %v1943 = vld [vmem:[%s1933 + $0x24] sm:$0xf]
  %v1944 = vld [vmem:[%s1933 + $0x28] sm:$0xf]
  %v1945 = vld [vmem:[%s1933 + $0x2c] sm:$0xf]
  %v1946 = vld [vmem:[%s1933 + $0x30] sm:$0xf]
  %v1947 = vld [vmem:[%s1933 + $0x34] sm:$0xf]
  %v1948 = vld [vmem:[%s1933 + $0x38] sm:$0xf]
  %v1949 = vld [vmem:[%s1933 + $0x3c] sm:$0xf]
  %v1950 = vld [vmem:[%s1933 + $0x40] sm:$0xf]
  %v1951 = vld [vmem:[%s1933 + $0x44] sm:$0xf]
  %v1952 = vld [vmem:[%s1933 + $0x48] sm:$0xf]
  %v1953 = vld [vmem:[%s1933 + $0x4c] sm:$0xf]
  %v1954 = vld [vmem:[%s1933 + $0x50] sm:$0xf]
  %v1955 = vld [vmem:[%s1933 + $0x54] sm:$0xf]
  %v1956 = vld [vmem:[%s1933 + $0x58] sm:$0xf]
  %v1957 = vld [vmem:[%s1933 + $0x5c] sm:$0xf]
  %v1958 = vld [vmem:[%s1933 + $0x60] sm:$0xf]
  %v1959 = vld [vmem:[%s1933 + $0x64] sm:$0xf]
  %v1960 = vld [vmem:[%s1933 + $0x68] sm:$0xf]
  %v1961 = vld [vmem:[%s1933 + $0x6c] sm:$0xf]
  %v1962 = vld [vmem:[%s1933 + $0x70] sm:$0xf]
  %v1963 = vld [vmem:[%s1933 + $0x74] sm:$0xf]
  %v1964 = vld [vmem:[%s1933 + $0x78] sm:$0xf]
  %v1965 = vld [vmem:[%s1933 + $0x7c] sm:$0xf]
  %v1998 = vunpack.c.l.b16 %v1934
  %v1999 = vunpack.c.l.b16 %v1935
  %v2000 = vunpack.c.l.b16 %v1936
  %v2001 = vunpack.c.l.b16 %v1937
  %v2002 = vunpack.c.l.b16 %v1938
  %v2003 = vunpack.c.l.b16 %v1939
  %v2004 = vunpack.c.l.b16 %v1940
  %v2005 = vunpack.c.l.b16 %v1941
  %v2006 = vunpack.c.l.b16 %v1942
  %v2007 = vunpack.c.l.b16 %v1943
  %v2008 = vunpack.c.l.b16 %v1944
  %v2009 = vunpack.c.l.b16 %v1945
  %v2010 = vunpack.c.l.b16 %v1946
  %v2011 = vunpack.c.l.b16 %v1947
  %v2012 = vunpack.c.l.b16 %v1948
  %v2013 = vunpack.c.l.b16 %v1949
  %v2014 = vunpack.c.l.b16 %v1950
  %v2015 = vunpack.c.l.b16 %v1951
  %v2016 = vunpack.c.l.b16 %v1952
  %v2017 = vunpack.c.l.b16 %v1953
  %v2018 = vunpack.c.l.b16 %v1954
  %v2019 = vunpack.c.l.b16 %v1955
  %v2020 = vunpack.c.l.b16 %v1956
  %v2021 = vunpack.c.l.b16 %v1957
  %v2022 = vunpack.c.l.b16 %v1958
  %v2023 = vunpack.c.l.b16 %v1959
  %v2024 = vunpack.c.l.b16 %v1960
  %v2025 = vunpack.c.l.b16 %v1961
  %v2026 = vunpack.c.l.b16 %v1962
  %v2027 = vunpack.c.l.b16 %v1963
  %v2028 = vunpack.c.l.b16 %v1964
  %v2029 = vunpack.c.l.b16 %v1965
  %v2030 = vpack.c.b16 %v1999, %v1998
  %v2031 = vpack.c.b16 %v2001, %v2000
  %v2032 = vpack.c.b16 %v2003, %v2002
  %v2033 = vpack.c.b16 %v2005, %v2004
  %v2034 = vpack.c.b16 %v2007, %v2006
  %v2035 = vpack.c.b16 %v2009, %v2008
  %v2036 = vpack.c.b16 %v2011, %v2010
  %v2037 = vpack.c.b16 %v2013, %v2012
  %v2038 = vpack.c.b16 %v2015, %v2014
  %v2039 = vpack.c.b16 %v2017, %v2016
  %v2040 = vpack.c.b16 %v2019, %v2018
  %v2041 = vpack.c.b16 %v2021, %v2020
  %v2042 = vpack.c.b16 %v2023, %v2022
  %v2043 = vpack.c.b16 %v2025, %v2024
  %v2044 = vpack.c.b16 %v2027, %v2026
  %v2045 = vpack.c.b16 %v2029, %v2028
  %2062 = vmatpush.bf16.msra.mxu0 %v2037
  %2063 = vmatpush.bf16.msra.mxu0 %v2036
  %2064 = vmatpush.bf16.msra.mxu0 %v2035
  %2065 = vmatpush.bf16.msra.mxu0 %v2034
  %2066 = vmatpush.bf16.msra.mxu0 %v2033
  %2067 = vmatpush.bf16.msra.mxu0 %v2032
  %2068 = vmatpush.bf16.msra.mxu0 %v2031
  %2069 = vmatpush.bf16.msra.mxu0 %v2030
  %2070 = vmatmul.bf16.gmra.mxu0 0
  %v2071 = vpop.f32.mrf.mxu0
  %v2072 = vadd.f32 0.0, %v2071
  %v2073 = vpop.f32.mrf.mxu0
  %v2074 = vadd.f32 0.0, %v2073
  %2075 = vmatmul.bf16.gmra.mxu0 0
  %v2076 = vpop.f32.mrf.mxu0
  %v2077 = vadd.f32 0.0, %v2076
  %v2078 = vpop.f32.mrf.mxu0
  %v2079 = vadd.f32 0.0, %v2078
  %2080 = vmatmul.bf16.gmra.mxu0 0
  %v2081 = vpop.f32.mrf.mxu0
  %v2082 = vadd.f32 0.0, %v2081
  %v2083 = vpop.f32.mrf.mxu0
  %v2084 = vadd.f32 0.0, %v2083
  %2085 = vmatmul.bf16.gmra.mxu0 0
  %v2086 = vpop.f32.mrf.mxu0
  %v2087 = vadd.f32 0.0, %v2086
  %v2088 = vpop.f32.mrf.mxu0
  %2089 = vdwg.mxu0
  %2090 = vmatpush.bf16.msra.mxu0 %v2045
  %2091 = vmatpush.bf16.msra.mxu0 %v2044
  %2092 = vmatpush.bf16.msra.mxu0 %v2043
  %2093 = vmatpush.bf16.msra.mxu0 %v2042
  %2094 = vmatpush.bf16.msra.mxu0 %v2041
  %2095 = vmatpush.bf16.msra.mxu0 %v2040
  %2096 = vmatpush.bf16.msra.mxu0 %v2039
  %2097 = vmatpush.bf16.msra.mxu0 %v2038
  %2098 = vmatmul.bf16.gmra.mxu0 %v1924
  %v2099 = vpop.f32.mrf.mxu0
  %v2100 = vadd.f32 %v2072, %v2099
  %v2101 = vpop.f32.mrf.mxu0
  %v2102 = vadd.f32 %v2074, %v2101
  %2103 = vmatmul.bf16.gmra.mxu0 %v1926
  %v2104 = vpop.f32.mrf.mxu0
  %v2105 = vadd.f32 %v2077, %v2104
  %v2106 = vpop.f32.mrf.mxu0
  %v2107 = vadd.f32 %v2079, %v2106
  %2108 = vmatmul.bf16.gmra.mxu0 %v1928
  %v2109 = vpop.f32.mrf.mxu0
  %v2110 = vadd.f32 %v2082, %v2109
  %v2111 = vpop.f32.mrf.mxu0
  %v2112 = vadd.f32 %v2084, %v2111
  %2113 = vmatmul.bf16.gmra.mxu0 %v1931
  %v2114 = vpop.f32.mrf.mxu0
  %v2115 = vadd.f32 %v2087, %v2114
  %v2116 = vpop.f32.mrf.mxu0
  %2117 = vdwg.mxu0
  %v2118 = vadd.f32 %v1917, %v2100
  %v2119 = vadd.f32 %v1918, %v2102
  %v2120 = vadd.f32 %v1919, %v2105
  %v2121 = vadd.f32 %v1920, %v2107
  %v2122 = vadd.f32 %v1921, %v2110
  %v2123 = vadd.f32 %v1922, %v2112
  %v2124 = vadd.f32 %v1923, %v2115
  %v2126 = vperm.slane %v32, 0
  %v2128 = vadd.f32 %v2118, %v2126
  %v2129 = vadd.f32 %v2119, %v2126
  %v2130 = vadd.f32 %v2120, %v2126
  %v2131 = vadd.f32 %v2121, %v2126
  %v2132 = vadd.f32 %v2122, %v2126
  %v2133 = vadd.f32 %v2123, %v2126
  %v2134 = vadd.f32 %v2124, %v2126
  %v2135 = vpack.c.bf16 %v2128, %v2128
  %v2136 = vpack.c.bf16 %v2129, %v2129
  %v2137 = vpack.c.bf16 %v2130, %v2130
  %v2138 = vpack.c.bf16 %v2131, %v2131
  %v2139 = vpack.c.bf16 %v2132, %v2132
  %v2140 = vpack.c.bf16 %v2133, %v2133
  %v2141 = vpack.c.bf16 %v2134, %v2134
  %2142 = vst [vmem:[%s5] sm:$0xf] %v2135
  %2143 = vst [vmem:[%s5 + $0x4] sm:$0xf] %v2136
  %2144 = vst [vmem:[%s5 + $0x8] sm:$0xf] %v2137
  %2145 = vst [vmem:[%s5 + $0xc] sm:$0xf] %v2138
  %2146 = vst [vmem:[%s5 + $0x10] sm:$0xf] %v2139
  %2147 = vst [vmem:[%s5 + $0x14] sm:$0xf] %v2140
  %2148 = vst [vmem:[%s5 + $0x18] sm:$0xf] %v2141
  %v2149 = vmul.f32 %v2128, %v1160
  %v2150 = vmul.f32 %v2129, %v1161
  %v2151 = vmul.f32 %v2130, %v1162
  %v2152 = vmul.f32 %v2131, %v1163
  %v2153 = vmul.f32 %v2132, %v1164
  %v2154 = vmul.f32 %v2133, %v1165
  %v2155 = vmul.f32 %v2134, %v1166
  %v2156 = vadd.f32 %v2149, %v2150
  %v2157 = vadd.f32 %v2156, %v2151
  %v2158 = vadd.f32 %v2157, %v2152
  %v2159 = vadd.f32 %v2158, %v2153
  %v2160 = vadd.f32 %v2159, %v2154
  %v2161 = vadd.f32 %v2160, %v2155
  %v2162 = vrot.slane %v2161, 4
  %v2163 = vadd.f32 %v2161, %v2162
  %v2164 = vrot.slane %v2163, 2
  %v2165 = vadd.f32 %v2163, %v2164
  %v2166 = vrot.slane %v2165, 1
  %v2167 = vadd.f32 %v2165, %v2166
  %v2168 = vadd.f32 %v2167, 0.0
  %v2169 = vmul.f32 %v2149, %v2128
  %v2170 = vmul.f32 %v2150, %v2129
  %v2171 = vmul.f32 %v2151, %v2130
  %v2172 = vmul.f32 %v2152, %v2131
  %v2173 = vmul.f32 %v2153, %v2132
  %v2174 = vmul.f32 %v2154, %v2133
  %v2175 = vmul.f32 %v2155, %v2134
  %v2176 = vadd.f32 %v2169, %v2170
  %v2177 = vadd.f32 %v2176, %v2171
  %v2178 = vadd.f32 %v2177, %v2172
  %v2179 = vadd.f32 %v2178, %v2173
  %v2180 = vadd.f32 %v2179, %v2174
  %v2181 = vadd.f32 %v2180, %v2175
  %v2182 = vrot.slane %v2181, 4
  %v2183 = vadd.f32 %v2181, %v2182
  %v2184 = vrot.slane %v2183, 2
  %v2185 = vadd.f32 %v2183, %v2184
  %v2186 = vrot.slane %v2185, 1
  %v2187 = vadd.f32 %v2185, %v2186
  %v2188 = vadd.f32 %v2187, 0.0
  %v2189 = vld [vmem:[#allocation2 + $0x38] sm:$0xf]
  %v2190 = vld [vmem:[#allocation2 + $0x40] sm:$0xf]
  %v2191 = vld [vmem:[#allocation2 + $0x48] sm:$0xf]
  %v2192 = vld [vmem:[#allocation2 + $0x50] sm:$0xf]
  %v2193 = vld [vmem:[#allocation2 + $0x58] sm:$0xf]
  %v2194 = vld [vmem:[#allocation2 + $0x60] sm:$0xf]
  %v2195 = vld [vmem:[#allocation2 + $0x68] sm:$0xf]
  %v2202 = vunpack.c.l.b16 %v2190
  %v2203 = vunpack.c.l.b16 %v2191
  %v2204 = vunpack.c.l.b16 %v2192
  %v2205 = vunpack.c.l.b16 %v2193
  %v2206 = vunpack.c.l.b16 %v2194
  %v2207 = vunpack.c.l.b16 %v2195
  %v2208 = vpack.c.b16 %v2203, %v2202
  %v2209 = vpack.c.b16 %v2205, %v2204
  %v2210 = vpack.c.b16 %v2207, %v2206
  %v2211 = vld [vmem:[#allocation2 + $0x70] sm:$0xf]
  %v2212 = vld [vmem:[#allocation2 + $0x78] sm:$0xf]
  %v2213 = vld [vmem:[#allocation2 + $0x80] sm:$0xf]
  %v2214 = vld [vmem:[#allocation2 + $0x88] sm:$0xf]
  %v2215 = vld [vmem:[#allocation2 + $0x90] sm:$0xf]
  %v2216 = vld [vmem:[#allocation2 + $0x98] sm:$0xf]
  %v2217 = vld [vmem:[#allocation2 + $0xa0] sm:$0xf]
  %v2224 = vunpack.c.l.b16 %v2212
  %v2225 = vunpack.c.l.b16 %v2213
  %v2226 = vunpack.c.l.b16 %v2214
  %v2227 = vunpack.c.l.b16 %v2215
  %v2228 = vunpack.c.l.b16 %v2216
  %v2229 = vunpack.c.l.b16 %v2217
  %v2230 = vpack.c.b16 %v2225, %v2224
  %v2231 = vpack.c.b16 %v2227, %v2226
  %v2232 = vpack.c.b16 %v2229, %v2228
  %v2234 = vunpack.c.l.b16 %v2189
  %v2235 = vpack.c.b16 %v2234, %v2234
  %v2236 = vpack.c.b16 %v2206, %v2206
  %2237 = vrot.lane.b32.xlu0 %v2235, 64
  %v2238 = vpop.permute.xlu0 %2237
  %2239 = vrot.lane.b32.xlu0 %v2208, 64
  %v2240 = vpop.permute.xlu0 %2239
  %2241 = vrot.lane.b32.xlu0 %v2209, 64
  %v2242 = vpop.permute.xlu0 %2241
  %2243 = vrot.lane.b32.xlu0 %v2236, 64
  %v2244 = vpop.permute.xlu0 %2243
  %v2246 = vsel %vm1223, 0, %v2238
  %v2248 = vunpack.c.l.b16 %v2211
  %v2249 = vpack.c.b16 %v2248, %v2248
  %v2250 = vpack.c.b16 %v2228, %v2228
  %2251 = vrot.lane.b32.xlu0 %v2249, 64
  %v2252 = vpop.permute.xlu0 %2251
  %2253 = vrot.lane.b32.xlu0 %v2230, 64
  %v2254 = vpop.permute.xlu0 %2253
  %2255 = vrot.lane.b32.xlu0 %v2231, 64
  %v2256 = vpop.permute.xlu0 %2255
  %2257 = vrot.lane.b32.xlu0 %v2250, 64
  %v2258 = vpop.permute.xlu0 %2257
  %v2260 = vsel %vm1223, 0, %v2252
  %v2261 = vld [vmem:[#allocation2 + $0x4] sm:$0xf]
  %v2262 = vld [vmem:[#allocation2 + $0xc] sm:$0xf]
  %v2263 = vld [vmem:[#allocation2 + $0x14] sm:$0xf]
  %v2264 = vld [vmem:[#allocation2 + $0x1c] sm:$0xf]
  %v2265 = vld [vmem:[#allocation2 + $0x24] sm:$0xf]
  %v2266 = vld [vmem:[#allocation2 + $0x2c] sm:$0xf]
  %v2267 = vld [vmem:[#allocation2 + $0x34] sm:$0xf]
  %v2274 = vunpack.c.l.b16 %v2262
  %v2275 = vunpack.c.l.b16 %v2263
  %v2276 = vunpack.c.l.b16 %v2264
  %v2277 = vunpack.c.l.b16 %v2265
  %v2278 = vunpack.c.l.b16 %v2266
  %v2279 = vunpack.c.l.b16 %v2267
  %v2280 = vpack.c.b16 %v2275, %v2274
  %v2281 = vpack.c.b16 %v2277, %v2276
  %v2282 = vpack.c.b16 %v2279, %v2278
  %v2283 = vld [vmem:[#allocation2 + $0x3c] sm:$0xf]
  %v2284 = vld [vmem:[#allocation2 + $0x44] sm:$0xf]
  %v2285 = vld [vmem:[#allocation2 + $0x4c] sm:$0xf]
  %v2286 = vld [vmem:[#allocation2 + $0x54] sm:$0xf]
  %v2287 = vld [vmem:[#allocation2 + $0x5c] sm:$0xf]
  %v2288 = vld [vmem:[#allocation2 + $0x64] sm:$0xf]
  %v2289 = vld [vmem:[#allocation2 + $0x6c] sm:$0xf]
  %v2296 = vunpack.c.l.b16 %v2284
  %v2297 = vunpack.c.l.b16 %v2285
  %v2298 = vunpack.c.l.b16 %v2286
  %v2299 = vunpack.c.l.b16 %v2287
  %v2300 = vunpack.c.l.b16 %v2288
  %v2301 = vunpack.c.l.b16 %v2289
  %v2302 = vpack.c.b16 %v2297, %v2296
  %v2303 = vpack.c.b16 %v2299, %v2298
  %v2304 = vpack.c.b16 %v2301, %v2300
  %v2306 = vunpack.c.l.b16 %v2261
  %v2307 = vpack.c.b16 %v2306, %v2306
  %v2308 = vpack.c.b16 %v2278, %v2278
  %2309 = vrot.lane.b32.xlu0 %v2307, 64
  %v2310 = vpop.permute.xlu0 %2309
  %2311 = vrot.lane.b32.xlu0 %v2280, 64
  %v2312 = vpop.permute.xlu0 %2311
  %2313 = vrot.lane.b32.xlu0 %v2281, 64
  %v2314 = vpop.permute.xlu0 %2313
  %2315 = vrot.lane.b32.xlu0 %v2308, 64
  %v2316 = vpop.permute.xlu0 %2315
  %v2318 = vsel %vm1223, 0, %v2310
  %v2320 = vunpack.c.l.b16 %v2283
  %v2321 = vpack.c.b16 %v2320, %v2320
  %v2322 = vpack.c.b16 %v2300, %v2300
  %2323 = vrot.lane.b32.xlu0 %v2321, 64
  %v2324 = vpop.permute.xlu0 %2323
  %2325 = vrot.lane.b32.xlu0 %v2302, 64
  %v2326 = vpop.permute.xlu0 %2325
  %2327 = vrot.lane.b32.xlu0 %v2303, 64
  %v2328 = vpop.permute.xlu0 %2327
  %2329 = vrot.lane.b32.xlu0 %v2322, 64
  %v2330 = vpop.permute.xlu0 %2329
  %v2332 = vsel %vm1223, 0, %v2324
  %v2333 = vpack.c.b16 %v2202, %v2234
  %v2334 = vpack.c.b16 %v2204, %v2203
  %v2335 = vpack.c.b16 %v2206, %v2205
  %v2336 = vpack.c.b16 %v2207, %v2207
  %2337 = vrot.lane.b32.xlu0 %v2210, 64
  %v2338 = vpop.permute.xlu0 %2337
  %v2339 = vpack.c.b16 %v2224, %v2248
  %v2340 = vpack.c.b16 %v2226, %v2225
  %v2341 = vpack.c.b16 %v2228, %v2227
  %v2342 = vpack.c.b16 %v2229, %v2229
  %2343 = vrot.lane.b32.xlu0 %v2232, 64
  %v2344 = vpop.permute.xlu0 %2343
  %v2347 = vsel %vm103, %v2333, %v2240
  %v2351 = vsel %vm103, %v2334, %v2242
  %v2355 = vsel %vm103, %v2335, %v2338
  %v2358 = vsel %vm103, %v2336, %v1285
  %v2362 = vsel %vm103, %v2339, %v2254
  %v2366 = vsel %vm103, %v2340, %v2256
  %v2370 = vsel %vm103, %v2341, %v2344
  %v2373 = vsel %vm103, %v2342, %v1285
  %v2375 = vld [vmem:[%s3] sm:$0xf]
  %v2376 = vld [vmem:[%s3 + $0x4] sm:$0xf]
  %v2377 = vld [vmem:[%s3 + $0x8] sm:$0xf]
  %v2378 = vld [vmem:[%s3 + $0xc] sm:$0xf]
  %v2379 = vld [vmem:[%s3 + $0x10] sm:$0xf]
  %v2380 = vld [vmem:[%s3 + $0x14] sm:$0xf]
  %v2381 = vld [vmem:[%s3 + $0x18] sm:$0xf]
  %v2382 = vld [vmem:[%s3 + $0x1c] sm:$0xf]
  %v2383 = vld [vmem:[%s3 + $0x20] sm:$0xf]
  %v2384 = vld [vmem:[%s3 + $0x24] sm:$0xf]
  %v2385 = vld [vmem:[%s3 + $0x28] sm:$0xf]
  %v2386 = vld [vmem:[%s3 + $0x2c] sm:$0xf]
  %v2387 = vld [vmem:[%s3 + $0x30] sm:$0xf]
  %v2388 = vld [vmem:[%s3 + $0x34] sm:$0xf]
  %v2389 = vld [vmem:[%s3 + $0x38] sm:$0xf]
  %v2390 = vld [vmem:[%s3 + $0x3c] sm:$0xf]
  %v2391 = vld [vmem:[%s3 + $0x40] sm:$0xf]
  %v2392 = vld [vmem:[%s3 + $0x44] sm:$0xf]
  %v2393 = vld [vmem:[%s3 + $0x48] sm:$0xf]
  %v2394 = vld [vmem:[%s3 + $0x4c] sm:$0xf]
  %v2395 = vld [vmem:[%s3 + $0x50] sm:$0xf]
  %v2396 = vld [vmem:[%s3 + $0x54] sm:$0xf]
  %v2397 = vld [vmem:[%s3 + $0x58] sm:$0xf]
  %v2398 = vld [vmem:[%s3 + $0x5c] sm:$0xf]
  %v2399 = vld [vmem:[%s3 + $0x60] sm:$0xf]
  %v2400 = vld [vmem:[%s3 + $0x64] sm:$0xf]
  %v2401 = vld [vmem:[%s3 + $0x68] sm:$0xf]
  %v2402 = vld [vmem:[%s3 + $0x6c] sm:$0xf]
  %v2403 = vld [vmem:[%s3 + $0x70] sm:$0xf]
  %v2404 = vld [vmem:[%s3 + $0x74] sm:$0xf]
  %v2405 = vld [vmem:[%s3 + $0x78] sm:$0xf]
  %v2406 = vld [vmem:[%s3 + $0x7c] sm:$0xf]
  %v2407 = vsel %vm103, %v2246, %v2333
  %v2409 = vsel %vm103, %v2240, %v2334
  %v2411 = vsel %vm103, %v2242, %v2335
  %v2414 = vsel %vm103, %v2244, %v2336
  %v2416 = vsel %vm103, %v2260, %v2339
  %v2418 = vsel %vm103, %v2254, %v2340
  %v2420 = vsel %vm103, %v2256, %v2341
  %v2423 = vsel %vm103, %v2258, %v2342
  %v2425 = vld [vmem:[%s1373] sm:$0xf]
  %v2426 = vld [vmem:[%s1373 + $0x4] sm:$0xf]
  %v2427 = vld [vmem:[%s1373 + $0x8] sm:$0xf]
  %v2428 = vld [vmem:[%s1373 + $0xc] sm:$0xf]
  %v2429 = vld [vmem:[%s1373 + $0x10] sm:$0xf]
  %v2430 = vld [vmem:[%s1373 + $0x14] sm:$0xf]
  %v2431 = vld [vmem:[%s1373 + $0x18] sm:$0xf]
  %v2432 = vld [vmem:[%s1373 + $0x1c] sm:$0xf]
  %v2433 = vld [vmem:[%s1373 + $0x20] sm:$0xf]
  %v2434 = vld [vmem:[%s1373 + $0x24] sm:$0xf]
  %v2435 = vld [vmem:[%s1373 + $0x28] sm:$0xf]
  %v2436 = vld [vmem:[%s1373 + $0x2c] sm:$0xf]
  %v2437 = vld [vmem:[%s1373 + $0x30] sm:$0xf]
  %v2438 = vld [vmem:[%s1373 + $0x34] sm:$0xf]
  %v2439 = vld [vmem:[%s1373 + $0x38] sm:$0xf]
  %v2440 = vld [vmem:[%s1373 + $0x3c] sm:$0xf]
  %v2441 = vld [vmem:[%s1373 + $0x40] sm:$0xf]
  %v2442 = vld [vmem:[%s1373 + $0x44] sm:$0xf]
  %v2443 = vld [vmem:[%s1373 + $0x48] sm:$0xf]
  %v2444 = vld [vmem:[%s1373 + $0x4c] sm:$0xf]
  %v2445 = vld [vmem:[%s1373 + $0x50] sm:$0xf]
  %v2446 = vld [vmem:[%s1373 + $0x54] sm:$0xf]
  %v2447 = vld [vmem:[%s1373 + $0x58] sm:$0xf]
  %v2448 = vld [vmem:[%s1373 + $0x5c] sm:$0xf]
  %v2449 = vld [vmem:[%s1373 + $0x60] sm:$0xf]
  %v2450 = vld [vmem:[%s1373 + $0x64] sm:$0xf]
  %v2451 = vld [vmem:[%s1373 + $0x68] sm:$0xf]
  %v2452 = vld [vmem:[%s1373 + $0x6c] sm:$0xf]
  %v2453 = vld [vmem:[%s1373 + $0x70] sm:$0xf]
  %v2454 = vld [vmem:[%s1373 + $0x74] sm:$0xf]
  %v2455 = vld [vmem:[%s1373 + $0x78] sm:$0xf]
  %v2456 = vld [vmem:[%s1373 + $0x7c] sm:$0xf]
  %v2489 = vunpack.c.l.b16 %v2425
  %v2490 = vunpack.c.l.b16 %v2426
  %v2491 = vunpack.c.l.b16 %v2427
  %v2492 = vunpack.c.l.b16 %v2428
  %v2493 = vunpack.c.l.b16 %v2429
  %v2494 = vunpack.c.l.b16 %v2430
  %v2495 = vunpack.c.l.b16 %v2431
  %v2496 = vunpack.c.l.b16 %v2432
  %v2497 = vunpack.c.l.b16 %v2433
  %v2498 = vunpack.c.l.b16 %v2434
  %v2499 = vunpack.c.l.b16 %v2435
  %v2500 = vunpack.c.l.b16 %v2436
  %v2501 = vunpack.c.l.b16 %v2437
  %v2502 = vunpack.c.l.b16 %v2438
  %v2503 = vunpack.c.l.b16 %v2439
  %v2504 = vunpack.c.l.b16 %v2440
  %v2505 = vunpack.c.l.b16 %v2441
  %v2506 = vunpack.c.l.b16 %v2442
  %v2507 = vunpack.c.l.b16 %v2443
  %v2508 = vunpack.c.l.b16 %v2444
  %v2509 = vunpack.c.l.b16 %v2445
  %v2510 = vunpack.c.l.b16 %v2446
  %v2511 = vunpack.c.l.b16 %v2447
  %v2512 = vunpack.c.l.b16 %v2448
  %v2513 = vunpack.c.l.b16 %v2449
  %v2514 = vunpack.c.l.b16 %v2450
  %v2515 = vunpack.c.l.b16 %v2451
  %v2516 = vunpack.c.l.b16 %v2452
  %v2517 = vunpack.c.l.b16 %v2453
  %v2518 = vunpack.c.l.b16 %v2454
  %v2519 = vunpack.c.l.b16 %v2455
  %v2520 = vunpack.c.l.b16 %v2456
  %v2521 = vpack.c.b16 %v2490, %v2489
  %v2522 = vpack.c.b16 %v2492, %v2491
  %v2523 = vpack.c.b16 %v2494, %v2493
  %v2524 = vpack.c.b16 %v2496, %v2495
  %v2525 = vpack.c.b16 %v2498, %v2497
  %v2526 = vpack.c.b16 %v2500, %v2499
  %v2527 = vpack.c.b16 %v2502, %v2501
  %v2528 = vpack.c.b16 %v2504, %v2503
  %v2529 = vpack.c.b16 %v2506, %v2505
  %v2530 = vpack.c.b16 %v2508, %v2507
  %v2531 = vpack.c.b16 %v2510, %v2509
  %v2532 = vpack.c.b16 %v2512, %v2511
  %v2533 = vpack.c.b16 %v2514, %v2513
  %v2534 = vpack.c.b16 %v2516, %v2515
  %v2535 = vpack.c.b16 %v2518, %v2517
  %v2536 = vpack.c.b16 %v2520, %v2519
  %2553 = vmatpush.bf16.msra.mxu0 %v2528
  %2554 = vmatpush.bf16.msra.mxu0 %v2527
  %2555 = vmatpush.bf16.msra.mxu0 %v2526
  %2556 = vmatpush.bf16.msra.mxu0 %v2525
  %2557 = vmatpush.bf16.msra.mxu0 %v2524
  %2558 = vmatpush.bf16.msra.mxu0 %v2523
  %2559 = vmatpush.bf16.msra.mxu0 %v2522
  %2560 = vmatpush.bf16.msra.mxu0 %v2521
  %2561 = vmatmul.bf16.gmra.mxu0 %v2407
  %v2562 = vpop.f32.mrf.mxu0
  %v2563 = vadd.f32 0.0, %v2562
  %v2564 = vpop.f32.mrf.mxu0
  %v2565 = vadd.f32 0.0, %v2564
  %2566 = vmatmul.bf16.gmra.mxu0 %v2409
  %v2567 = vpop.f32.mrf.mxu0
  %v2568 = vadd.f32 0.0, %v2567
  %v2569 = vpop.f32.mrf.mxu0
  %v2570 = vadd.f32 0.0, %v2569
  %2571 = vmatmul.bf16.gmra.mxu0 %v2411
  %v2572 = vpop.f32.mrf.mxu0
  %v2573 = vadd.f32 0.0, %v2572
  %v2574 = vpop.f32.mrf.mxu0
  %v2575 = vadd.f32 0.0, %v2574
  %2576 = vmatmul.bf16.gmra.mxu0 %v2414
  %v2577 = vpop.f32.mrf.mxu0
  %v2578 = vadd.f32 0.0, %v2577
  %v2579 = vpop.f32.mrf.mxu0
  %2580 = vdwg.mxu0
  %2581 = vmatpush.bf16.msra.mxu0 %v2536
  %2582 = vmatpush.bf16.msra.mxu0 %v2535
  %2583 = vmatpush.bf16.msra.mxu0 %v2534
  %2584 = vmatpush.bf16.msra.mxu0 %v2533
  %2585 = vmatpush.bf16.msra.mxu0 %v2532
  %2586 = vmatpush.bf16.msra.mxu0 %v2531
  %2587 = vmatpush.bf16.msra.mxu0 %v2530
  %2588 = vmatpush.bf16.msra.mxu0 %v2529
  %2589 = vmatmul.bf16.gmra.mxu0 %v2416
  %v2590 = vpop.f32.mrf.mxu0
  %v2591 = vadd.f32 %v2563, %v2590
  %v2592 = vpop.f32.mrf.mxu0
  %v2593 = vadd.f32 %v2565, %v2592
  %2594 = vmatmul.bf16.gmra.mxu0 %v2418
  %v2595 = vpop.f32.mrf.mxu0
  %v2596 = vadd.f32 %v2568, %v2595
  %v2597 = vpop.f32.mrf.mxu0
  %v2598 = vadd.f32 %v2570, %v2597
  %2599 = vmatmul.bf16.gmra.mxu0 %v2420
  %v2600 = vpop.f32.mrf.mxu0
  %v2601 = vadd.f32 %v2573, %v2600
  %v2602 = vpop.f32.mrf.mxu0
  %v2603 = vadd.f32 %v2575, %v2602
  %2604 = vmatmul.bf16.gmra.mxu0 %v2423
  %v2605 = vpop.f32.mrf.mxu0
  %v2606 = vadd.f32 %v2578, %v2605
  %v2607 = vpop.f32.mrf.mxu0
  %2608 = vdwg.mxu0
  %v2641 = vunpack.c.l.b16 %v2375
  %v2642 = vunpack.c.l.b16 %v2376
  %v2643 = vunpack.c.l.b16 %v2377
  %v2644 = vunpack.c.l.b16 %v2378
  %v2645 = vunpack.c.l.b16 %v2379
  %v2646 = vunpack.c.l.b16 %v2380
  %v2647 = vunpack.c.l.b16 %v2381
  %v2648 = vunpack.c.l.b16 %v2382
  %v2649 = vunpack.c.l.b16 %v2383
  %v2650 = vunpack.c.l.b16 %v2384
  %v2651 = vunpack.c.l.b16 %v2385
  %v2652 = vunpack.c.l.b16 %v2386
  %v2653 = vunpack.c.l.b16 %v2387
  %v2654 = vunpack.c.l.b16 %v2388
  %v2655 = vunpack.c.l.b16 %v2389
  %v2656 = vunpack.c.l.b16 %v2390
  %v2657 = vunpack.c.l.b16 %v2391
  %v2658 = vunpack.c.l.b16 %v2392
  %v2659 = vunpack.c.l.b16 %v2393
  %v2660 = vunpack.c.l.b16 %v2394
  %v2661 = vunpack.c.l.b16 %v2395
  %v2662 = vunpack.c.l.b16 %v2396
  %v2663 = vunpack.c.l.b16 %v2397
  %v2664 = vunpack.c.l.b16 %v2398
  %v2665 = vunpack.c.l.b16 %v2399
  %v2666 = vunpack.c.l.b16 %v2400
  %v2667 = vunpack.c.l.b16 %v2401
  %v2668 = vunpack.c.l.b16 %v2402
  %v2669 = vunpack.c.l.b16 %v2403
  %v2670 = vunpack.c.l.b16 %v2404
  %v2671 = vunpack.c.l.b16 %v2405
  %v2672 = vunpack.c.l.b16 %v2406
  %v2673 = vpack.c.b16 %v2642, %v2641
  %v2674 = vpack.c.b16 %v2644, %v2643
  %v2675 = vpack.c.b16 %v2646, %v2645
  %v2676 = vpack.c.b16 %v2648, %v2647
  %v2677 = vpack.c.b16 %v2650, %v2649
  %v2678 = vpack.c.b16 %v2652, %v2651
  %v2679 = vpack.c.b16 %v2654, %v2653
  %v2680 = vpack.c.b16 %v2656, %v2655
  %v2681 = vpack.c.b16 %v2658, %v2657
  %v2682 = vpack.c.b16 %v2660, %v2659
  %v2683 = vpack.c.b16 %v2662, %v2661
  %v2684 = vpack.c.b16 %v2664, %v2663
  %v2685 = vpack.c.b16 %v2666, %v2665
  %v2686 = vpack.c.b16 %v2668, %v2667
  %v2687 = vpack.c.b16 %v2670, %v2669
  %v2688 = vpack.c.b16 %v2672, %v2671
  %2705 = vmatpush.bf16.msra.mxu0 %v2680
  %2706 = vmatpush.bf16.msra.mxu0 %v2679
  %2707 = vmatpush.bf16.msra.mxu0 %v2678
  %2708 = vmatpush.bf16.msra.mxu0 %v2677
  %2709 = vmatpush.bf16.msra.mxu0 %v2676
  %2710 = vmatpush.bf16.msra.mxu0 %v2675
  %2711 = vmatpush.bf16.msra.mxu0 %v2674
  %2712 = vmatpush.bf16.msra.mxu0 %v2673
  %2713 = vmatmul.bf16.gmra.mxu0 %v2347
  %v2714 = vpop.f32.mrf.mxu0
  %v2715 = vadd.f32 %v2591, %v2714
  %v2716 = vpop.f32.mrf.mxu0
  %v2717 = vadd.f32 %v2593, %v2716
  %2718 = vmatmul.bf16.gmra.mxu0 %v2351
  %v2719 = vpop.f32.mrf.mxu0
  %v2720 = vadd.f32 %v2596, %v2719
  %v2721 = vpop.f32.mrf.mxu0
  %v2722 = vadd.f32 %v2598, %v2721
  %2723 = vmatmul.bf16.gmra.mxu0 %v2355
  %v2724 = vpop.f32.mrf.mxu0
  %v2725 = vadd.f32 %v2601, %v2724
  %v2726 = vpop.f32.mrf.mxu0
  %v2727 = vadd.f32 %v2603, %v2726
  %2728 = vmatmul.bf16.gmra.mxu0 %v2358
  %v2729 = vpop.f32.mrf.mxu0
  %v2730 = vadd.f32 %v2606, %v2729
  %v2731 = vpop.f32.mrf.mxu0
  %2732 = vdwg.mxu0
  %2733 = vmatpush.bf16.msra.mxu0 %v2688
  %2734 = vmatpush.bf16.msra.mxu0 %v2687
  %2735 = vmatpush.bf16.msra.mxu0 %v2686
  %2736 = vmatpush.bf16.msra.mxu0 %v2685
  %2737 = vmatpush.bf16.msra.mxu0 %v2684
  %2738 = vmatpush.bf16.msra.mxu0 %v2683
  %2739 = vmatpush.bf16.msra.mxu0 %v2682
  %2740 = vmatpush.bf16.msra.mxu0 %v2681
  %2741 = vmatmul.bf16.gmra.mxu0 %v2362
  %v2742 = vpop.f32.mrf.mxu0
  %v2743 = vadd.f32 %v2715, %v2742
  %v2744 = vpop.f32.mrf.mxu0
  %v2745 = vadd.f32 %v2717, %v2744
  %2746 = vmatmul.bf16.gmra.mxu0 %v2366
  %v2747 = vpop.f32.mrf.mxu0
  %v2748 = vadd.f32 %v2720, %v2747
  %v2749 = vpop.f32.mrf.mxu0
  %v2750 = vadd.f32 %v2722, %v2749
  %2751 = vmatmul.bf16.gmra.mxu0 %v2370
  %v2752 = vpop.f32.mrf.mxu0
  %v2753 = vadd.f32 %v2725, %v2752
  %v2754 = vpop.f32.mrf.mxu0
  %v2755 = vadd.f32 %v2727, %v2754
  %2756 = vmatmul.bf16.gmra.mxu0 %v2373
  %v2757 = vpop.f32.mrf.mxu0
  %v2758 = vadd.f32 %v2730, %v2757
  %v2759 = vpop.f32.mrf.mxu0
  %2760 = vdwg.mxu0
  %v2761 = vpack.c.b16 %v2274, %v2306
  %v2762 = vpack.c.b16 %v2276, %v2275
  %v2763 = vpack.c.b16 %v2278, %v2277
  %v2764 = vpack.c.b16 %v2279, %v2279
  %2765 = vrot.lane.b32.xlu0 %v2282, 64
  %v2766 = vpop.permute.xlu0 %2765
  %v2767 = vpack.c.b16 %v2296, %v2320
  %v2768 = vpack.c.b16 %v2298, %v2297
  %v2769 = vpack.c.b16 %v2300, %v2299
  %v2770 = vpack.c.b16 %v2301, %v2301
  %2771 = vrot.lane.b32.xlu0 %v2304, 64
  %v2772 = vpop.permute.xlu0 %2771
  %v2775 = vsel %vm103, %v2761, %v2312
  %v2779 = vsel %vm103, %v2762, %v2314
  %v2783 = vsel %vm103, %v2763, %v2766
  %v2786 = vsel %vm103, %v2764, %v1285
  %v2790 = vsel %vm103, %v2767, %v2326
  %v2794 = vsel %vm103, %v2768, %v2328
  %v2798 = vsel %vm103, %v2769, %v2772
  %v2801 = vsel %vm103, %v2770, %v1285
  %v2803 = vld [vmem:[%s1732] sm:$0xf]
  %v2804 = vld [vmem:[%s1732 + $0x4] sm:$0xf]
  %v2805 = vld [vmem:[%s1732 + $0x8] sm:$0xf]
  %v2806 = vld [vmem:[%s1732 + $0xc] sm:$0xf]
  %v2807 = vld [vmem:[%s1732 + $0x10] sm:$0xf]
  %v2808 = vld [vmem:[%s1732 + $0x14] sm:$0xf]
  %v2809 = vld [vmem:[%s1732 + $0x18] sm:$0xf]
  %v2810 = vld [vmem:[%s1732 + $0x1c] sm:$0xf]
  %v2811 = vld [vmem:[%s1732 + $0x20] sm:$0xf]
  %v2812 = vld [vmem:[%s1732 + $0x24] sm:$0xf]
  %v2813 = vld [vmem:[%s1732 + $0x28] sm:$0xf]
  %v2814 = vld [vmem:[%s1732 + $0x2c] sm:$0xf]
  %v2815 = vld [vmem:[%s1732 + $0x30] sm:$0xf]
  %v2816 = vld [vmem:[%s1732 + $0x34] sm:$0xf]
  %v2817 = vld [vmem:[%s1732 + $0x38] sm:$0xf]
  %v2818 = vld [vmem:[%s1732 + $0x3c] sm:$0xf]
  %v2819 = vld [vmem:[%s1732 + $0x40] sm:$0xf]
  %v2820 = vld [vmem:[%s1732 + $0x44] sm:$0xf]
  %v2821 = vld [vmem:[%s1732 + $0x48] sm:$0xf]
  %v2822 = vld [vmem:[%s1732 + $0x4c] sm:$0xf]
  %v2823 = vld [vmem:[%s1732 + $0x50] sm:$0xf]
  %v2824 = vld [vmem:[%s1732 + $0x54] sm:$0xf]
  %v2825 = vld [vmem:[%s1732 + $0x58] sm:$0xf]
  %v2826 = vld [vmem:[%s1732 + $0x5c] sm:$0xf]
  %v2827 = vld [vmem:[%s1732 + $0x60] sm:$0xf]
  %v2828 = vld [vmem:[%s1732 + $0x64] sm:$0xf]
  %v2829 = vld [vmem:[%s1732 + $0x68] sm:$0xf]
  %v2830 = vld [vmem:[%s1732 + $0x6c] sm:$0xf]
  %v2831 = vld [vmem:[%s1732 + $0x70] sm:$0xf]
  %v2832 = vld [vmem:[%s1732 + $0x74] sm:$0xf]
  %v2833 = vld [vmem:[%s1732 + $0x78] sm:$0xf]
  %v2834 = vld [vmem:[%s1732 + $0x7c] sm:$0xf]
  %v2867 = vunpack.c.l.b16 %v2803
  %v2868 = vunpack.c.l.b16 %v2804
  %v2869 = vunpack.c.l.b16 %v2805
  %v2870 = vunpack.c.l.b16 %v2806
  %v2871 = vunpack.c.l.b16 %v2807
  %v2872 = vunpack.c.l.b16 %v2808
  %v2873 = vunpack.c.l.b16 %v2809
  %v2874 = vunpack.c.l.b16 %v2810
  %v2875 = vunpack.c.l.b16 %v2811
  %v2876 = vunpack.c.l.b16 %v2812
  %v2877 = vunpack.c.l.b16 %v2813
  %v2878 = vunpack.c.l.b16 %v2814
  %v2879 = vunpack.c.l.b16 %v2815
  %v2880 = vunpack.c.l.b16 %v2816
  %v2881 = vunpack.c.l.b16 %v2817
  %v2882 = vunpack.c.l.b16 %v2818
  %v2883 = vunpack.c.l.b16 %v2819
  %v2884 = vunpack.c.l.b16 %v2820
  %v2885 = vunpack.c.l.b16 %v2821
  %v2886 = vunpack.c.l.b16 %v2822
  %v2887 = vunpack.c.l.b16 %v2823
  %v2888 = vunpack.c.l.b16 %v2824
  %v2889 = vunpack.c.l.b16 %v2825
  %v2890 = vunpack.c.l.b16 %v2826
  %v2891 = vunpack.c.l.b16 %v2827
  %v2892 = vunpack.c.l.b16 %v2828
  %v2893 = vunpack.c.l.b16 %v2829
  %v2894 = vunpack.c.l.b16 %v2830
  %v2895 = vunpack.c.l.b16 %v2831
  %v2896 = vunpack.c.l.b16 %v2832
  %v2897 = vunpack.c.l.b16 %v2833
  %v2898 = vunpack.c.l.b16 %v2834
  %v2899 = vpack.c.b16 %v2868, %v2867
  %v2900 = vpack.c.b16 %v2870, %v2869
  %v2901 = vpack.c.b16 %v2872, %v2871
  %v2902 = vpack.c.b16 %v2874, %v2873
  %v2903 = vpack.c.b16 %v2876, %v2875
  %v2904 = vpack.c.b16 %v2878, %v2877
  %v2905 = vpack.c.b16 %v2880, %v2879
  %v2906 = vpack.c.b16 %v2882, %v2881
  %v2907 = vpack.c.b16 %v2884, %v2883
  %v2908 = vpack.c.b16 %v2886, %v2885
  %v2909 = vpack.c.b16 %v2888, %v2887
  %v2910 = vpack.c.b16 %v2890, %v2889
  %v2911 = vpack.c.b16 %v2892, %v2891
  %v2912 = vpack.c.b16 %v2894, %v2893
  %v2913 = vpack.c.b16 %v2896, %v2895
  %v2914 = vpack.c.b16 %v2898, %v2897
  %2931 = vmatpush.bf16.msra.mxu0 %v2906
  %2932 = vmatpush.bf16.msra.mxu0 %v2905
  %2933 = vmatpush.bf16.msra.mxu0 %v2904
  %2934 = vmatpush.bf16.msra.mxu0 %v2903
  %2935 = vmatpush.bf16.msra.mxu0 %v2902
  %2936 = vmatpush.bf16.msra.mxu0 %v2901
  %2937 = vmatpush.bf16.msra.mxu0 %v2900
  %2938 = vmatpush.bf16.msra.mxu0 %v2899
  %2939 = vmatmul.bf16.gmra.mxu0 %v2775
  %v2940 = vpop.f32.mrf.mxu0
  %v2941 = vadd.f32 0.0, %v2940
  %v2942 = vpop.f32.mrf.mxu0
  %v2943 = vadd.f32 0.0, %v2942
  %2944 = vmatmul.bf16.gmra.mxu0 %v2779
  %v2945 = vpop.f32.mrf.mxu0
  %v2946 = vadd.f32 0.0, %v2945
  %v2947 = vpop.f32.mrf.mxu0
  %v2948 = vadd.f32 0.0, %v2947
  %2949 = vmatmul.bf16.gmra.mxu0 %v2783
  %v2950 = vpop.f32.mrf.mxu0
  %v2951 = vadd.f32 0.0, %v2950
  %v2952 = vpop.f32.mrf.mxu0
  %v2953 = vadd.f32 0.0, %v2952
  %2954 = vmatmul.bf16.gmra.mxu0 %v2786
  %v2955 = vpop.f32.mrf.mxu0
  %v2956 = vadd.f32 0.0, %v2955
  %v2957 = vpop.f32.mrf.mxu0
  %2958 = vdwg.mxu0
  %2959 = vmatpush.bf16.msra.mxu0 %v2914
  %2960 = vmatpush.bf16.msra.mxu0 %v2913
  %2961 = vmatpush.bf16.msra.mxu0 %v2912
  %2962 = vmatpush.bf16.msra.mxu0 %v2911
  %2963 = vmatpush.bf16.msra.mxu0 %v2910
  %2964 = vmatpush.bf16.msra.mxu0 %v2909
  %2965 = vmatpush.bf16.msra.mxu0 %v2908
  %2966 = vmatpush.bf16.msra.mxu0 %v2907
  %2967 = vmatmul.bf16.gmra.mxu0 %v2790
  %v2968 = vpop.f32.mrf.mxu0
  %v2969 = vadd.f32 %v2941, %v2968
  %v2970 = vpop.f32.mrf.mxu0
  %v2971 = vadd.f32 %v2943, %v2970
  %2972 = vmatmul.bf16.gmra.mxu0 %v2794
  %v2973 = vpop.f32.mrf.mxu0
  %v2974 = vadd.f32 %v2946, %v2973
  %v2975 = vpop.f32.mrf.mxu0
  %v2976 = vadd.f32 %v2948, %v2975
  %2977 = vmatmul.bf16.gmra.mxu0 %v2798
  %v2978 = vpop.f32.mrf.mxu0
  %v2979 = vadd.f32 %v2951, %v2978
  %v2980 = vpop.f32.mrf.mxu0
  %v2981 = vadd.f32 %v2953, %v2980
  %2982 = vmatmul.bf16.gmra.mxu0 %v2801
  %v2983 = vpop.f32.mrf.mxu0
  %v2984 = vadd.f32 %v2956, %v2983
  %v2985 = vpop.f32.mrf.mxu0
  %2986 = vdwg.mxu0
  %v2987 = vadd.f32 %v2743, %v2969
  %v2988 = vadd.f32 %v2745, %v2971
  %v2989 = vadd.f32 %v2748, %v2974
  %v2990 = vadd.f32 %v2750, %v2976
  %v2991 = vadd.f32 %v2753, %v2979
  %v2992 = vadd.f32 %v2755, %v2981
  %v2993 = vadd.f32 %v2758, %v2984
  %v2994 = vsel %vm103, %v2318, %v2761
  %v2996 = vsel %vm103, %v2312, %v2762
  %v2998 = vsel %vm103, %v2314, %v2763
  %v3001 = vsel %vm103, %v2316, %v2764
  %v3003 = vsel %vm103, %v2332, %v2767
  %v3005 = vsel %vm103, %v2326, %v2768
  %v3007 = vsel %vm103, %v2328, %v2769
  %v3010 = vsel %vm103, %v2330, %v2770
  %v3012 = vld [vmem:[%s1933] sm:$0xf]
  %v3013 = vld [vmem:[%s1933 + $0x4] sm:$0xf]
  %v3014 = vld [vmem:[%s1933 + $0x8] sm:$0xf]
  %v3015 = vld [vmem:[%s1933 + $0xc] sm:$0xf]
  %v3016 = vld [vmem:[%s1933 + $0x10] sm:$0xf]
  %v3017 = vld [vmem:[%s1933 + $0x14] sm:$0xf]
  %v3018 = vld [vmem:[%s1933 + $0x18] sm:$0xf]
  %v3019 = vld [vmem:[%s1933 + $0x1c] sm:$0xf]
  %v3020 = vld [vmem:[%s1933 + $0x20] sm:$0xf]
  %v3021 = vld [vmem:[%s1933 + $0x24] sm:$0xf]
  %v3022 = vld [vmem:[%s1933 + $0x28] sm:$0xf]
  %v3023 = vld [vmem:[%s1933 + $0x2c] sm:$0xf]
  %v3024 = vld [vmem:[%s1933 + $0x30] sm:$0xf]
  %v3025 = vld [vmem:[%s1933 + $0x34] sm:$0xf]
  %v3026 = vld [vmem:[%s1933 + $0x38] sm:$0xf]
  %v3027 = vld [vmem:[%s1933 + $0x3c] sm:$0xf]
  %v3028 = vld [vmem:[%s1933 + $0x40] sm:$0xf]
  %v3029 = vld [vmem:[%s1933 + $0x44] sm:$0xf]
  %v3030 = vld [vmem:[%s1933 + $0x48] sm:$0xf]
  %v3031 = vld [vmem:[%s1933 + $0x4c] sm:$0xf]
  %v3032 = vld [vmem:[%s1933 + $0x50] sm:$0xf]
  %v3033 = vld [vmem:[%s1933 + $0x54] sm:$0xf]
  %v3034 = vld [vmem:[%s1933 + $0x58] sm:$0xf]
  %v3035 = vld [vmem:[%s1933 + $0x5c] sm:$0xf]
  %v3036 = vld [vmem:[%s1933 + $0x60] sm:$0xf]
  %v3037 = vld [vmem:[%s1933 + $0x64] sm:$0xf]
  %v3038 = vld [vmem:[%s1933 + $0x68] sm:$0xf]
  %v3039 = vld [vmem:[%s1933 + $0x6c] sm:$0xf]
  %v3040 = vld [vmem:[%s1933 + $0x70] sm:$0xf]
  %v3041 = vld [vmem:[%s1933 + $0x74] sm:$0xf]
  %v3042 = vld [vmem:[%s1933 + $0x78] sm:$0xf]
  %v3043 = vld [vmem:[%s1933 + $0x7c] sm:$0xf]
  %v3076 = vunpack.c.l.b16 %v3012
  %v3077 = vunpack.c.l.b16 %v3013
  %v3078 = vunpack.c.l.b16 %v3014
  %v3079 = vunpack.c.l.b16 %v3015
  %v3080 = vunpack.c.l.b16 %v3016
  %v3081 = vunpack.c.l.b16 %v3017
  %v3082 = vunpack.c.l.b16 %v3018
  %v3083 = vunpack.c.l.b16 %v3019
  %v3084 = vunpack.c.l.b16 %v3020
  %v3085 = vunpack.c.l.b16 %v3021
  %v3086 = vunpack.c.l.b16 %v3022
  %v3087 = vunpack.c.l.b16 %v3023
  %v3088 = vunpack.c.l.b16 %v3024
  %v3089 = vunpack.c.l.b16 %v3025
  %v3090 = vunpack.c.l.b16 %v3026
  %v3091 = vunpack.c.l.b16 %v3027
  %v3092 = vunpack.c.l.b16 %v3028
  %v3093 = vunpack.c.l.b16 %v3029
  %v3094 = vunpack.c.l.b16 %v3030
  %v3095 = vunpack.c.l.b16 %v3031
  %v3096 = vunpack.c.l.b16 %v3032
  %v3097 = vunpack.c.l.b16 %v3033
  %v3098 = vunpack.c.l.b16 %v3034
  %v3099 = vunpack.c.l.b16 %v3035
  %v3100 = vunpack.c.l.b16 %v3036
  %v3101 = vunpack.c.l.b16 %v3037
  %v3102 = vunpack.c.l.b16 %v3038
  %v3103 = vunpack.c.l.b16 %v3039
  %v3104 = vunpack.c.l.b16 %v3040
  %v3105 = vunpack.c.l.b16 %v3041
  %v3106 = vunpack.c.l.b16 %v3042
  %v3107 = vunpack.c.l.b16 %v3043
  %v3108 = vpack.c.b16 %v3077, %v3076
  %v3109 = vpack.c.b16 %v3079, %v3078
  %v3110 = vpack.c.b16 %v3081, %v3080
  %v3111 = vpack.c.b16 %v3083, %v3082
  %v3112 = vpack.c.b16 %v3085, %v3084
  %v3113 = vpack.c.b16 %v3087, %v3086
  %v3114 = vpack.c.b16 %v3089, %v3088
  %v3115 = vpack.c.b16 %v3091, %v3090
  %v3116 = vpack.c.b16 %v3093, %v3092
  %v3117 = vpack.c.b16 %v3095, %v3094
  %v3118 = vpack.c.b16 %v3097, %v3096
  %v3119 = vpack.c.b16 %v3099, %v3098
  %v3120 = vpack.c.b16 %v3101, %v3100
  %v3121 = vpack.c.b16 %v3103, %v3102
  %v3122 = vpack.c.b16 %v3105, %v3104
  %v3123 = vpack.c.b16 %v3107, %v3106
  %3140 = vmatpush.bf16.msra.mxu0 %v3115
  %3141 = vmatpush.bf16.msra.mxu0 %v3114
  %3142 = vmatpush.bf16.msra.mxu0 %v3113
  %3143 = vmatpush.bf16.msra.mxu0 %v3112
  %3144 = vmatpush.bf16.msra.mxu0 %v3111
  %3145 = vmatpush.bf16.msra.mxu0 %v3110
  %3146 = vmatpush.bf16.msra.mxu0 %v3109
  %3147 = vmatpush.bf16.msra.mxu0 %v3108
  %3148 = vmatmul.bf16.gmra.mxu0 %v2994
  %v3149 = vpop.f32.mrf.mxu0
  %v3150 = vadd.f32 0.0, %v3149
  %v3151 = vpop.f32.mrf.mxu0
  %v3152 = vadd.f32 0.0, %v3151
  %3153 = vmatmul.bf16.gmra.mxu0 %v2996
  %v3154 = vpop.f32.mrf.mxu0
  %v3155 = vadd.f32 0.0, %v3154
  %v3156 = vpop.f32.mrf.mxu0
  %v3157 = vadd.f32 0.0, %v3156
  %3158 = vmatmul.bf16.gmra.mxu0 %v2998
  %v3159 = vpop.f32.mrf.mxu0
  %v3160 = vadd.f32 0.0, %v3159
  %v3161 = vpop.f32.mrf.mxu0
  %v3162 = vadd.f32 0.0, %v3161
  %3163 = vmatmul.bf16.gmra.mxu0 %v3001
  %v3164 = vpop.f32.mrf.mxu0
  %v3165 = vadd.f32 0.0, %v3164
  %v3166 = vpop.f32.mrf.mxu0
  %3167 = vdwg.mxu0
  %3168 = vmatpush.bf16.msra.mxu0 %v3123
  %3169 = vmatpush.bf16.msra.mxu0 %v3122
  %3170 = vmatpush.bf16.msra.mxu0 %v3121
  %3171 = vmatpush.bf16.msra.mxu0 %v3120
  %3172 = vmatpush.bf16.msra.mxu0 %v3119
  %3173 = vmatpush.bf16.msra.mxu0 %v3118
  %3174 = vmatpush.bf16.msra.mxu0 %v3117
  %3175 = vmatpush.bf16.msra.mxu0 %v3116
  %3176 = vmatmul.bf16.gmra.mxu0 %v3003
  %v3177 = vpop.f32.mrf.mxu0
  %v3178 = vadd.f32 %v3150, %v3177
  %v3179 = vpop.f32.mrf.mxu0
  %v3180 = vadd.f32 %v3152, %v3179
  %3181 = vmatmul.bf16.gmra.mxu0 %v3005
  %v3182 = vpop.f32.mrf.mxu0
  %v3183 = vadd.f32 %v3155, %v3182
  %v3184 = vpop.f32.mrf.mxu0
  %v3185 = vadd.f32 %v3157, %v3184
  %3186 = vmatmul.bf16.gmra.mxu0 %v3007
  %v3187 = vpop.f32.mrf.mxu0
  %v3188 = vadd.f32 %v3160, %v3187
  %v3189 = vpop.f32.mrf.mxu0
  %v3190 = vadd.f32 %v3162, %v3189
  %3191 = vmatmul.bf16.gmra.mxu0 %v3010
  %v3192 = vpop.f32.mrf.mxu0
  %v3193 = vadd.f32 %v3165, %v3192
  %v3194 = vpop.f32.mrf.mxu0
  %3195 = vdwg.mxu0
  %v3196 = vadd.f32 %v2987, %v3178
  %v3197 = vadd.f32 %v2988, %v3180
  %v3198 = vadd.f32 %v2989, %v3183
  %v3199 = vadd.f32 %v2990, %v3185
  %v3200 = vadd.f32 %v2991, %v3188
  %v3201 = vadd.f32 %v2992, %v3190
  %v3202 = vadd.f32 %v2993, %v3193
  %v3203 = vadd.f32 %v3196, %v2126
  %v3204 = vadd.f32 %v3197, %v2126
  %v3205 = vadd.f32 %v3198, %v2126
  %v3206 = vadd.f32 %v3199, %v2126
  %v3207 = vadd.f32 %v3200, %v2126
  %v3208 = vadd.f32 %v3201, %v2126
  %v3209 = vadd.f32 %v3202, %v2126
  %v3210 = vpack.c.bf16 %v3203, %v3203
  %v3211 = vpack.c.bf16 %v3204, %v3204
  %v3212 = vpack.c.bf16 %v3205, %v3205
  %v3213 = vpack.c.bf16 %v3206, %v3206
  %v3214 = vpack.c.bf16 %v3207, %v3207
  %v3215 = vpack.c.bf16 %v3208, %v3208
  %v3216 = vpack.c.bf16 %v3209, %v3209
  %3217 = vst [vmem:[%s5 + $0x1c] sm:$0xf] %v3210
  %3218 = vst [vmem:[%s5 + $0x20] sm:$0xf] %v3211
  %3219 = vst [vmem:[%s5 + $0x24] sm:$0xf] %v3212
  %3220 = vst [vmem:[%s5 + $0x28] sm:$0xf] %v3213
  %3221 = vst [vmem:[%s5 + $0x2c] sm:$0xf] %v3214
  %3222 = vst [vmem:[%s5 + $0x30] sm:$0xf] %v3215
  %3223 = vst [vmem:[%s5 + $0x34] sm:$0xf] %v3216
  %v3224 = vmul.f32 %v3203, %v1160
  %v3225 = vmul.f32 %v3204, %v1161
  %v3226 = vmul.f32 %v3205, %v1162
  %v3227 = vmul.f32 %v3206, %v1163
  %v3228 = vmul.f32 %v3207, %v1164
  %v3229 = vmul.f32 %v3208, %v1165
  %v3230 = vmul.f32 %v3209, %v1166
  %v3231 = vadd.f32 %v3224, %v3225
  %v3232 = vadd.f32 %v3231, %v3226
  %v3233 = vadd.f32 %v3232, %v3227
  %v3234 = vadd.f32 %v3233, %v3228
  %v3235 = vadd.f32 %v3234, %v3229
  %v3236 = vadd.f32 %v3235, %v3230
  %v3237 = vrot.slane %v3236, 4
  %v3238 = vadd.f32 %v3236, %v3237
  %v3239 = vrot.slane %v3238, 2
  %v3240 = vadd.f32 %v3238, %v3239
  %v3241 = vrot.slane %v3240, 1
  %v3242 = vadd.f32 %v3240, %v3241
  %v3243 = vadd.f32 %v2168, %v3242
  %v3244 = vmul.f32 %v3224, %v3203
  %v3245 = vmul.f32 %v3225, %v3204
  %v3246 = vmul.f32 %v3226, %v3205
  %v3247 = vmul.f32 %v3227, %v3206
  %v3248 = vmul.f32 %v3228, %v3207
  %v3249 = vmul.f32 %v3229, %v3208
  %v3250 = vmul.f32 %v3230, %v3209
  %v3251 = vadd.f32 %v3244, %v3245
  %v3252 = vadd.f32 %v3251, %v3246
  %v3253 = vadd.f32 %v3252, %v3247
  %v3254 = vadd.f32 %v3253, %v3248
  %v3255 = vadd.f32 %v3254, %v3249
  %v3256 = vadd.f32 %v3255, %v3250
  %v3257 = vrot.slane %v3256, 4
  %v3258 = vadd.f32 %v3256, %v3257
  %v3259 = vrot.slane %v3258, 2
  %v3260 = vadd.f32 %v3258, %v3259
  %v3261 = vrot.slane %v3260, 1
  %v3262 = vadd.f32 %v3260, %v3261
  %v3263 = vadd.f32 %v2188, %v3262
  %v3264 = vld [vmem:[#allocation2 + $0x70] sm:$0xf]
  %v3265 = vld [vmem:[#allocation2 + $0x78] sm:$0xf]
  %v3266 = vld [vmem:[#allocation2 + $0x80] sm:$0xf]
  %v3267 = vld [vmem:[#allocation2 + $0x88] sm:$0xf]
  %v3268 = vld [vmem:[#allocation2 + $0x90] sm:$0xf]
  %v3269 = vld [vmem:[#allocation2 + $0x98] sm:$0xf]
  %v3270 = vld [vmem:[#allocation2 + $0xa0] sm:$0xf]
  %v3277 = vunpack.c.l.b16 %v3265
  %v3278 = vunpack.c.l.b16 %v3266
  %v3279 = vunpack.c.l.b16 %v3267
  %v3280 = vunpack.c.l.b16 %v3268
  %v3281 = vunpack.c.l.b16 %v3269
  %v3282 = vunpack.c.l.b16 %v3270
  %v3283 = vpack.c.b16 %v3278, %v3277
  %v3284 = vpack.c.b16 %v3280, %v3279
  %v3285 = vpack.c.b16 %v3282, %v3281
  %v3286 = vld [vmem:[#allocation2 + $0xa8] sm:$0xf]
  %v3287 = vld [vmem:[#allocation2 + $0xb0] sm:$0xf]
  %v3288 = vld [vmem:[#allocation2 + $0xb8] sm:$0xf]
  %v3289 = vld [vmem:[#allocation2 + $0xc0] sm:$0xf]
  %v3290 = vld [vmem:[#allocation2 + $0xc8] sm:$0xf]
  %v3291 = vld [vmem:[#allocation2 + $0xd0] sm:$0xf]
  %v3292 = vld [vmem:[#allocation2 + $0xd8] sm:$0xf]
  %v3299 = vunpack.c.l.b16 %v3287
  %v3300 = vunpack.c.l.b16 %v3288
  %v3301 = vunpack.c.l.b16 %v3289
  %v3302 = vunpack.c.l.b16 %v3290
  %v3303 = vunpack.c.l.b16 %v3291
  %v3304 = vunpack.c.l.b16 %v3292
  %v3305 = vpack.c.b16 %v3300, %v3299
  %v3306 = vpack.c.b16 %v3302, %v3301
  %v3307 = vpack.c.b16 %v3304, %v3303
  %v3309 = vunpack.c.l.b16 %v3264
  %v3310 = vpack.c.b16 %v3309, %v3309
  %v3311 = vpack.c.b16 %v3281, %v3281
  %3312 = vrot.lane.b32.xlu0 %v3310, 64
  %v3313 = vpop.permute.xlu0 %3312
  %3314 = vrot.lane.b32.xlu0 %v3283, 64
  %v3315 = vpop.permute.xlu0 %3314
  %3316 = vrot.lane.b32.xlu0 %v3284, 64
  %v3317 = vpop.permute.xlu0 %3316
  %3318 = vrot.lane.b32.xlu0 %v3311, 64
  %v3319 = vpop.permute.xlu0 %3318
  %v3321 = vsel %vm1223, 0, %v3313
  %v3323 = vunpack.c.l.b16 %v3286
  %v3324 = vpack.c.b16 %v3323, %v3323
  %v3325 = vpack.c.b16 %v3303, %v3303
  %3326 = vrot.lane.b32.xlu0 %v3324, 64
  %v3327 = vpop.permute.xlu0 %3326
  %3328 = vrot.lane.b32.xlu0 %v3305, 64
  %v3329 = vpop.permute.xlu0 %3328
  %3330 = vrot.lane.b32.xlu0 %v3306, 64
  %v3331 = vpop.permute.xlu0 %3330
  %3332 = vrot.lane.b32.xlu0 %v3325, 64
  %v3333 = vpop.permute.xlu0 %3332
  %v3335 = vsel %vm1223, 0, %v3327
  %v3336 = vld [vmem:[#allocation2 + $0x3c] sm:$0xf]
  %v3337 = vld [vmem:[#allocation2 + $0x44] sm:$0xf]
  %v3338 = vld [vmem:[#allocation2 + $0x4c] sm:$0xf]
  %v3339 = vld [vmem:[#allocation2 + $0x54] sm:$0xf]
  %v3340 = vld [vmem:[#allocation2 + $0x5c] sm:$0xf]
  %v3341 = vld [vmem:[#allocation2 + $0x64] sm:$0xf]
  %v3342 = vld [vmem:[#allocation2 + $0x6c] sm:$0xf]
  %v3349 = vunpack.c.l.b16 %v3337
  %v3350 = vunpack.c.l.b16 %v3338
  %v3351 = vunpack.c.l.b16 %v3339
  %v3352 = vunpack.c.l.b16 %v3340
  %v3353 = vunpack.c.l.b16 %v3341
  %v3354 = vunpack.c.l.b16 %v3342
  %v3355 = vpack.c.b16 %v3350, %v3349
  %v3356 = vpack.c.b16 %v3352, %v3351
  %v3357 = vpack.c.b16 %v3354, %v3353
  %v3358 = vld [vmem:[#allocation2 + $0x74] sm:$0xf]
  %v3359 = vld [vmem:[#allocation2 + $0x7c] sm:$0xf]
  %v3360 = vld [vmem:[#allocation2 + $0x84] sm:$0xf]
  %v3361 = vld [vmem:[#allocation2 + $0x8c] sm:$0xf]
  %v3362 = vld [vmem:[#allocation2 + $0x94] sm:$0xf]
  %v3363 = vld [vmem:[#allocation2 + $0x9c] sm:$0xf]
  %v3364 = vld [vmem:[#allocation2 + $0xa4] sm:$0xf]
  %v3371 = vunpack.c.l.b16 %v3359
  %v3372 = vunpack.c.l.b16 %v3360
  %v3373 = vunpack.c.l.b16 %v3361
  %v3374 = vunpack.c.l.b16 %v3362
  %v3375 = vunpack.c.l.b16 %v3363
  %v3376 = vunpack.c.l.b16 %v3364
  %v3377 = vpack.c.b16 %v3372, %v3371
  %v3378 = vpack.c.b16 %v3374, %v3373
  %v3379 = vpack.c.b16 %v3376, %v3375
  %v3381 = vunpack.c.l.b16 %v3336
  %v3382 = vpack.c.b16 %v3381, %v3381
  %v3383 = vpack.c.b16 %v3353, %v3353
  %3384 = vrot.lane.b32.xlu0 %v3382, 64
  %v3385 = vpop.permute.xlu0 %3384
  %3386 = vrot.lane.b32.xlu0 %v3355, 64
  %v3387 = vpop.permute.xlu0 %3386
  %3388 = vrot.lane.b32.xlu0 %v3356, 64
  %v3389 = vpop.permute.xlu0 %3388
  %3390 = vrot.lane.b32.xlu0 %v3383, 64
  %v3391 = vpop.permute.xlu0 %3390
  %v3393 = vsel %vm1223, 0, %v3385
  %v3395 = vunpack.c.l.b16 %v3358
  %v3396 = vpack.c.b16 %v3395, %v3395
  %v3397 = vpack.c.b16 %v3375, %v3375
  %3398 = vrot.lane.b32.xlu0 %v3396, 64
  %v3399 = vpop.permute.xlu0 %3398
  %3400 = vrot.lane.b32.xlu0 %v3377, 64
  %v3401 = vpop.permute.xlu0 %3400
  %3402 = vrot.lane.b32.xlu0 %v3378, 64
  %v3403 = vpop.permute.xlu0 %3402
  %3404 = vrot.lane.b32.xlu0 %v3397, 64
  %v3405 = vpop.permute.xlu0 %3404
  %v3407 = vsel %vm1223, 0, %v3399
  %v3408 = vpack.c.b16 %v3277, %v3309
  %v3409 = vpack.c.b16 %v3279, %v3278
  %v3410 = vpack.c.b16 %v3281, %v3280
  %v3411 = vpack.c.b16 %v3282, %v3282
  %3412 = vrot.lane.b32.xlu0 %v3285, 64
  %v3413 = vpop.permute.xlu0 %3412
  %v3414 = vpack.c.b16 %v3299, %v3323
  %v3415 = vpack.c.b16 %v3301, %v3300
  %v3416 = vpack.c.b16 %v3303, %v3302
  %v3417 = vpack.c.b16 %v3304, %v3304
  %3418 = vrot.lane.b32.xlu0 %v3307, 64
  %v3419 = vpop.permute.xlu0 %3418
  %v3422 = vsel %vm103, %v3408, %v3315
  %v3426 = vsel %vm103, %v3409, %v3317
  %v3430 = vsel %vm103, %v3410, %v3413
  %v3433 = vsel %vm103, %v3411, %v1285
  %v3437 = vsel %vm103, %v3414, %v3329
  %v3441 = vsel %vm103, %v3415, %v3331
  %v3445 = vsel %vm103, %v3416, %v3419
  %v3448 = vsel %vm103, %v3417, %v1285
  %v3450 = vld [vmem:[%s3] sm:$0xf]
  %v3451 = vld [vmem:[%s3 + $0x4] sm:$0xf]
  %v3452 = vld [vmem:[%s3 + $0x8] sm:$0xf]
  %v3453 = vld [vmem:[%s3 + $0xc] sm:$0xf]
  %v3454 = vld [vmem:[%s3 + $0x10] sm:$0xf]
  %v3455 = vld [vmem:[%s3 + $0x14] sm:$0xf]
  %v3456 = vld [vmem:[%s3 + $0x18] sm:$0xf]
  %v3457 = vld [vmem:[%s3 + $0x1c] sm:$0xf]
  %v3458 = vld [vmem:[%s3 + $0x20] sm:$0xf]
  %v3459 = vld [vmem:[%s3 + $0x24] sm:$0xf]
  %v3460 = vld [vmem:[%s3 + $0x28] sm:$0xf]
  %v3461 = vld [vmem:[%s3 + $0x2c] sm:$0xf]
  %v3462 = vld [vmem:[%s3 + $0x30] sm:$0xf]
  %v3463 = vld [vmem:[%s3 + $0x34] sm:$0xf]
  %v3464 = vld [vmem:[%s3 + $0x38] sm:$0xf]
  %v3465 = vld [vmem:[%s3 + $0x3c] sm:$0xf]
  %v3466 = vld [vmem:[%s3 + $0x40] sm:$0xf]
  %v3467 = vld [vmem:[%s3 + $0x44] sm:$0xf]
  %v3468 = vld [vmem:[%s3 + $0x48] sm:$0xf]
  %v3469 = vld [vmem:[%s3 + $0x4c] sm:$0xf]
  %v3470 = vld [vmem:[%s3 + $0x50] sm:$0xf]
  %v3471 = vld [vmem:[%s3 + $0x54] sm:$0xf]
  %v3472 = vld [vmem:[%s3 + $0x58] sm:$0xf]
  %v3473 = vld [vmem:[%s3 + $0x5c] sm:$0xf]
  %v3474 = vld [vmem:[%s3 + $0x60] sm:$0xf]
  %v3475 = vld [vmem:[%s3 + $0x64] sm:$0xf]
  %v3476 = vld [vmem:[%s3 + $0x68] sm:$0xf]
  %v3477 = vld [vmem:[%s3 + $0x6c] sm:$0xf]
  %v3478 = vld [vmem:[%s3 + $0x70] sm:$0xf]
  %v3479 = vld [vmem:[%s3 + $0x74] sm:$0xf]
  %v3480 = vld [vmem:[%s3 + $0x78] sm:$0xf]
  %v3481 = vld [vmem:[%s3 + $0x7c] sm:$0xf]
  %v3482 = vsel %vm103, %v3321, %v3408
  %v3484 = vsel %vm103, %v3315, %v3409
  %v3486 = vsel %vm103, %v3317, %v3410
  %v3489 = vsel %vm103, %v3319, %v3411
  %v3491 = vsel %vm103, %v3335, %v3414
  %v3493 = vsel %vm103, %v3329, %v3415
  %v3495 = vsel %vm103, %v3331, %v3416
  %v3498 = vsel %vm103, %v3333, %v3417
  %v3500 = vld [vmem:[%s1373] sm:$0xf]
  %v3501 = vld [vmem:[%s1373 + $0x4] sm:$0xf]
  %v3502 = vld [vmem:[%s1373 + $0x8] sm:$0xf]
  %v3503 = vld [vmem:[%s1373 + $0xc] sm:$0xf]
  %v3504 = vld [vmem:[%s1373 + $0x10] sm:$0xf]
  %v3505 = vld [vmem:[%s1373 + $0x14] sm:$0xf]
  %v3506 = vld [vmem:[%s1373 + $0x18] sm:$0xf]
  %v3507 = vld [vmem:[%s1373 + $0x1c] sm:$0xf]
  %v3508 = vld [vmem:[%s1373 + $0x20] sm:$0xf]
  %v3509 = vld [vmem:[%s1373 + $0x24] sm:$0xf]
  %v3510 = vld [vmem:[%s1373 + $0x28] sm:$0xf]
  %v3511 = vld [vmem:[%s1373 + $0x2c] sm:$0xf]
  %v3512 = vld [vmem:[%s1373 + $0x30] sm:$0xf]
  %v3513 = vld [vmem:[%s1373 + $0x34] sm:$0xf]
  %v3514 = vld [vmem:[%s1373 + $0x38] sm:$0xf]
  %v3515 = vld [vmem:[%s1373 + $0x3c] sm:$0xf]
  %v3516 = vld [vmem:[%s1373 + $0x40] sm:$0xf]
  %v3517 = vld [vmem:[%s1373 + $0x44] sm:$0xf]
  %v3518 = vld [vmem:[%s1373 + $0x48] sm:$0xf]
  %v3519 = vld [vmem:[%s1373 + $0x4c] sm:$0xf]
  %v3520 = vld [vmem:[%s1373 + $0x50] sm:$0xf]
  %v3521 = vld [vmem:[%s1373 + $0x54] sm:$0xf]
  %v3522 = vld [vmem:[%s1373 + $0x58] sm:$0xf]
  %v3523 = vld [vmem:[%s1373 + $0x5c] sm:$0xf]
  %v3524 = vld [vmem:[%s1373 + $0x60] sm:$0xf]
  %v3525 = vld [vmem:[%s1373 + $0x64] sm:$0xf]
  %v3526 = vld [vmem:[%s1373 + $0x68] sm:$0xf]
  %v3527 = vld [vmem:[%s1373 + $0x6c] sm:$0xf]
  %v3528 = vld [vmem:[%s1373 + $0x70] sm:$0xf]
  %v3529 = vld [vmem:[%s1373 + $0x74] sm:$0xf]
  %v3530 = vld [vmem:[%s1373 + $0x78] sm:$0xf]
  %v3531 = vld [vmem:[%s1373 + $0x7c] sm:$0xf]
  %v3564 = vunpack.c.l.b16 %v3500
  %v3565 = vunpack.c.l.b16 %v3501
  %v3566 = vunpack.c.l.b16 %v3502
  %v3567 = vunpack.c.l.b16 %v3503
  %v3568 = vunpack.c.l.b16 %v3504
  %v3569 = vunpack.c.l.b16 %v3505
  %v3570 = vunpack.c.l.b16 %v3506
  %v3571 = vunpack.c.l.b16 %v3507
  %v3572 = vunpack.c.l.b16 %v3508
  %v3573 = vunpack.c.l.b16 %v3509
  %v3574 = vunpack.c.l.b16 %v3510
  %v3575 = vunpack.c.l.b16 %v3511
  %v3576 = vunpack.c.l.b16 %v3512
  %v3577 = vunpack.c.l.b16 %v3513
  %v3578 = vunpack.c.l.b16 %v3514
  %v3579 = vunpack.c.l.b16 %v3515
  %v3580 = vunpack.c.l.b16 %v3516
  %v3581 = vunpack.c.l.b16 %v3517
  %v3582 = vunpack.c.l.b16 %v3518
  %v3583 = vunpack.c.l.b16 %v3519
  %v3584 = vunpack.c.l.b16 %v3520
  %v3585 = vunpack.c.l.b16 %v3521
  %v3586 = vunpack.c.l.b16 %v3522
  %v3587 = vunpack.c.l.b16 %v3523
  %v3588 = vunpack.c.l.b16 %v3524
  %v3589 = vunpack.c.l.b16 %v3525
  %v3590 = vunpack.c.l.b16 %v3526
  %v3591 = vunpack.c.l.b16 %v3527
  %v3592 = vunpack.c.l.b16 %v3528
  %v3593 = vunpack.c.l.b16 %v3529
  %v3594 = vunpack.c.l.b16 %v3530
  %v3595 = vunpack.c.l.b16 %v3531
  %v3596 = vpack.c.b16 %v3565, %v3564
  %v3597 = vpack.c.b16 %v3567, %v3566
  %v3598 = vpack.c.b16 %v3569, %v3568
  %v3599 = vpack.c.b16 %v3571, %v3570
  %v3600 = vpack.c.b16 %v3573, %v3572
  %v3601 = vpack.c.b16 %v3575, %v3574
  %v3602 = vpack.c.b16 %v3577, %v3576
  %v3603 = vpack.c.b16 %v3579, %v3578
  %v3604 = vpack.c.b16 %v3581, %v3580
  %v3605 = vpack.c.b16 %v3583, %v3582
  %v3606 = vpack.c.b16 %v3585, %v3584
  %v3607 = vpack.c.b16 %v3587, %v3586
  %v3608 = vpack.c.b16 %v3589, %v3588
  %v3609 = vpack.c.b16 %v3591, %v3590
  %v3610 = vpack.c.b16 %v3593, %v3592
  %v3611 = vpack.c.b16 %v3595, %v3594
  %3628 = vmatpush.bf16.msra.mxu0 %v3603
  %3629 = vmatpush.bf16.msra.mxu0 %v3602
  %3630 = vmatpush.bf16.msra.mxu0 %v3601
  %3631 = vmatpush.bf16.msra.mxu0 %v3600
  %3632 = vmatpush.bf16.msra.mxu0 %v3599
  %3633 = vmatpush.bf16.msra.mxu0 %v3598
  %3634 = vmatpush.bf16.msra.mxu0 %v3597
  %3635 = vmatpush.bf16.msra.mxu0 %v3596
  %3636 = vmatmul.bf16.gmra.mxu0 %v3482
  %v3637 = vpop.f32.mrf.mxu0
  %v3638 = vadd.f32 0.0, %v3637
  %v3639 = vpop.f32.mrf.mxu0
  %v3640 = vadd.f32 0.0, %v3639
  %3641 = vmatmul.bf16.gmra.mxu0 %v3484
  %v3642 = vpop.f32.mrf.mxu0
  %v3643 = vadd.f32 0.0, %v3642
  %v3644 = vpop.f32.mrf.mxu0
  %v3645 = vadd.f32 0.0, %v3644
  %3646 = vmatmul.bf16.gmra.mxu0 %v3486
  %v3647 = vpop.f32.mrf.mxu0
  %v3648 = vadd.f32 0.0, %v3647
  %v3649 = vpop.f32.mrf.mxu0
  %v3650 = vadd.f32 0.0, %v3649
  %3651 = vmatmul.bf16.gmra.mxu0 %v3489
  %v3652 = vpop.f32.mrf.mxu0
  %v3653 = vadd.f32 0.0, %v3652
  %v3654 = vpop.f32.mrf.mxu0
  %3655 = vdwg.mxu0
  %3656 = vmatpush.bf16.msra.mxu0 %v3611
  %3657 = vmatpush.bf16.msra.mxu0 %v3610
  %3658 = vmatpush.bf16.msra.mxu0 %v3609
  %3659 = vmatpush.bf16.msra.mxu0 %v3608
  %3660 = vmatpush.bf16.msra.mxu0 %v3607
  %3661 = vmatpush.bf16.msra.mxu0 %v3606
  %3662 = vmatpush.bf16.msra.mxu0 %v3605
  %3663 = vmatpush.bf16.msra.mxu0 %v3604
  %3664 = vmatmul.bf16.gmra.mxu0 %v3491
  %v3665 = vpop.f32.mrf.mxu0
  %v3666 = vadd.f32 %v3638, %v3665
  %v3667 = vpop.f32.mrf.mxu0
  %v3668 = vadd.f32 %v3640, %v3667
  %3669 = vmatmul.bf16.gmra.mxu0 %v3493
  %v3670 = vpop.f32.mrf.mxu0
  %v3671 = vadd.f32 %v3643, %v3670
  %v3672 = vpop.f32.mrf.mxu0
  %v3673 = vadd.f32 %v3645, %v3672
  %3674 = vmatmul.bf16.gmra.mxu0 %v3495
  %v3675 = vpop.f32.mrf.mxu0
  %v3676 = vadd.f32 %v3648, %v3675
  %v3677 = vpop.f32.mrf.mxu0
  %v3678 = vadd.f32 %v3650, %v3677
  %3679 = vmatmul.bf16.gmra.mxu0 %v3498
  %v3680 = vpop.f32.mrf.mxu0
  %v3681 = vadd.f32 %v3653, %v3680
  %v3682 = vpop.f32.mrf.mxu0
  %3683 = vdwg.mxu0
  %v3716 = vunpack.c.l.b16 %v3450
  %v3717 = vunpack.c.l.b16 %v3451
  %v3718 = vunpack.c.l.b16 %v3452
  %v3719 = vunpack.c.l.b16 %v3453
  %v3720 = vunpack.c.l.b16 %v3454
  %v3721 = vunpack.c.l.b16 %v3455
  %v3722 = vunpack.c.l.b16 %v3456
  %v3723 = vunpack.c.l.b16 %v3457
  %v3724 = vunpack.c.l.b16 %v3458
  %v3725 = vunpack.c.l.b16 %v3459
  %v3726 = vunpack.c.l.b16 %v3460
  %v3727 = vunpack.c.l.b16 %v3461
  %v3728 = vunpack.c.l.b16 %v3462
  %v3729 = vunpack.c.l.b16 %v3463
  %v3730 = vunpack.c.l.b16 %v3464
  %v3731 = vunpack.c.l.b16 %v3465
  %v3732 = vunpack.c.l.b16 %v3466
  %v3733 = vunpack.c.l.b16 %v3467
  %v3734 = vunpack.c.l.b16 %v3468
  %v3735 = vunpack.c.l.b16 %v3469
  %v3736 = vunpack.c.l.b16 %v3470
  %v3737 = vunpack.c.l.b16 %v3471
  %v3738 = vunpack.c.l.b16 %v3472
  %v3739 = vunpack.c.l.b16 %v3473
  %v3740 = vunpack.c.l.b16 %v3474
  %v3741 = vunpack.c.l.b16 %v3475
  %v3742 = vunpack.c.l.b16 %v3476
  %v3743 = vunpack.c.l.b16 %v3477
  %v3744 = vunpack.c.l.b16 %v3478
  %v3745 = vunpack.c.l.b16 %v3479
  %v3746 = vunpack.c.l.b16 %v3480
  %v3747 = vunpack.c.l.b16 %v3481
  %v3748 = vpack.c.b16 %v3717, %v3716
  %v3749 = vpack.c.b16 %v3719, %v3718
  %v3750 = vpack.c.b16 %v3721, %v3720
  %v3751 = vpack.c.b16 %v3723, %v3722
  %v3752 = vpack.c.b16 %v3725, %v3724
  %v3753 = vpack.c.b16 %v3727, %v3726
  %v3754 = vpack.c.b16 %v3729, %v3728
  %v3755 = vpack.c.b16 %v3731, %v3730
  %v3756 = vpack.c.b16 %v3733, %v3732
  %v3757 = vpack.c.b16 %v3735, %v3734
  %v3758 = vpack.c.b16 %v3737, %v3736
  %v3759 = vpack.c.b16 %v3739, %v3738
  %v3760 = vpack.c.b16 %v3741, %v3740
  %v3761 = vpack.c.b16 %v3743, %v3742
  %v3762 = vpack.c.b16 %v3745, %v3744
  %v3763 = vpack.c.b16 %v3747, %v3746
  %3780 = vmatpush.bf16.msra.mxu0 %v3755
  %3781 = vmatpush.bf16.msra.mxu0 %v3754
  %3782 = vmatpush.bf16.msra.mxu0 %v3753
  %3783 = vmatpush.bf16.msra.mxu0 %v3752
  %3784 = vmatpush.bf16.msra.mxu0 %v3751
  %3785 = vmatpush.bf16.msra.mxu0 %v3750
  %3786 = vmatpush.bf16.msra.mxu0 %v3749
  %3787 = vmatpush.bf16.msra.mxu0 %v3748
  %3788 = vmatmul.bf16.gmra.mxu0 %v3422
  %v3789 = vpop.f32.mrf.mxu0
  %v3790 = vadd.f32 %v3666, %v3789
  %v3791 = vpop.f32.mrf.mxu0
  %v3792 = vadd.f32 %v3668, %v3791
  %3793 = vmatmul.bf16.gmra.mxu0 %v3426
  %v3794 = vpop.f32.mrf.mxu0
  %v3795 = vadd.f32 %v3671, %v3794
  %v3796 = vpop.f32.mrf.mxu0
  %v3797 = vadd.f32 %v3673, %v3796
  %3798 = vmatmul.bf16.gmra.mxu0 %v3430
  %v3799 = vpop.f32.mrf.mxu0
  %v3800 = vadd.f32 %v3676, %v3799
  %v3801 = vpop.f32.mrf.mxu0
  %v3802 = vadd.f32 %v3678, %v3801
  %3803 = vmatmul.bf16.gmra.mxu0 %v3433
  %v3804 = vpop.f32.mrf.mxu0
  %v3805 = vadd.f32 %v3681, %v3804
  %v3806 = vpop.f32.mrf.mxu0
  %3807 = vdwg.mxu0
  %3808 = vmatpush.bf16.msra.mxu0 %v3763
  %3809 = vmatpush.bf16.msra.mxu0 %v3762
  %3810 = vmatpush.bf16.msra.mxu0 %v3761
  %3811 = vmatpush.bf16.msra.mxu0 %v3760
  %3812 = vmatpush.bf16.msra.mxu0 %v3759
  %3813 = vmatpush.bf16.msra.mxu0 %v3758
  %3814 = vmatpush.bf16.msra.mxu0 %v3757
  %3815 = vmatpush.bf16.msra.mxu0 %v3756
  %3816 = vmatmul.bf16.gmra.mxu0 %v3437
  %v3817 = vpop.f32.mrf.mxu0
  %v3818 = vadd.f32 %v3790, %v3817
  %v3819 = vpop.f32.mrf.mxu0
  %v3820 = vadd.f32 %v3792, %v3819
  %3821 = vmatmul.bf16.gmra.mxu0 %v3441
  %v3822 = vpop.f32.mrf.mxu0
  %v3823 = vadd.f32 %v3795, %v3822
  %v3824 = vpop.f32.mrf.mxu0
  %v3825 = vadd.f32 %v3797, %v3824
  %3826 = vmatmul.bf16.gmra.mxu0 %v3445
  %v3827 = vpop.f32.mrf.mxu0
  %v3828 = vadd.f32 %v3800, %v3827
  %v3829 = vpop.f32.mrf.mxu0
  %v3830 = vadd.f32 %v3802, %v3829
  %3831 = vmatmul.bf16.gmra.mxu0 %v3448
  %v3832 = vpop.f32.mrf.mxu0
  %v3833 = vadd.f32 %v3805, %v3832
  %v3834 = vpop.f32.mrf.mxu0
  %3835 = vdwg.mxu0
  %v3836 = vpack.c.b16 %v3349, %v3381
  %v3837 = vpack.c.b16 %v3351, %v3350
  %v3838 = vpack.c.b16 %v3353, %v3352
  %v3839 = vpack.c.b16 %v3354, %v3354
  %3840 = vrot.lane.b32.xlu0 %v3357, 64
  %v3841 = vpop.permute.xlu0 %3840
  %v3842 = vpack.c.b16 %v3371, %v3395
  %v3843 = vpack.c.b16 %v3373, %v3372
  %v3844 = vpack.c.b16 %v3375, %v3374
  %v3845 = vpack.c.b16 %v3376, %v3376
  %3846 = vrot.lane.b32.xlu0 %v3379, 64
  %v3847 = vpop.permute.xlu0 %3846
  %v3850 = vsel %vm103, %v3836, %v3387
  %v3854 = vsel %vm103, %v3837, %v3389
  %v3858 = vsel %vm103, %v3838, %v3841
  %v3861 = vsel %vm103, %v3839, %v1285
  %v3865 = vsel %vm103, %v3842, %v3401
  %v3869 = vsel %vm103, %v3843, %v3403
  %v3873 = vsel %vm103, %v3844, %v3847
  %v3876 = vsel %vm103, %v3845, %v1285
  %v3878 = vld [vmem:[%s1732] sm:$0xf]
  %v3879 = vld [vmem:[%s1732 + $0x4] sm:$0xf]
  %v3880 = vld [vmem:[%s1732 + $0x8] sm:$0xf]
  %v3881 = vld [vmem:[%s1732 + $0xc] sm:$0xf]
  %v3882 = vld [vmem:[%s1732 + $0x10] sm:$0xf]
  %v3883 = vld [vmem:[%s1732 + $0x14] sm:$0xf]
  %v3884 = vld [vmem:[%s1732 + $0x18] sm:$0xf]
  %v3885 = vld [vmem:[%s1732 + $0x1c] sm:$0xf]
  %v3886 = vld [vmem:[%s1732 + $0x20] sm:$0xf]
  %v3887 = vld [vmem:[%s1732 + $0x24] sm:$0xf]
  %v3888 = vld [vmem:[%s1732 + $0x28] sm:$0xf]
  %v3889 = vld [vmem:[%s1732 + $0x2c] sm:$0xf]
  %v3890 = vld [vmem:[%s1732 + $0x30] sm:$0xf]
  %v3891 = vld [vmem:[%s1732 + $0x34] sm:$0xf]
  %v3892 = vld [vmem:[%s1732 + $0x38] sm:$0xf]
  %v3893 = vld [vmem:[%s1732 + $0x3c] sm:$0xf]
  %v3894 = vld [vmem:[%s1732 + $0x40] sm:$0xf]
  %v3895 = vld [vmem:[%s1732 + $0x44] sm:$0xf]
  %v3896 = vld [vmem:[%s1732 + $0x48] sm:$0xf]
  %v3897 = vld [vmem:[%s1732 + $0x4c] sm:$0xf]
  %v3898 = vld [vmem:[%s1732 + $0x50] sm:$0xf]
  %v3899 = vld [vmem:[%s1732 + $0x54] sm:$0xf]
  %v3900 = vld [vmem:[%s1732 + $0x58] sm:$0xf]
  %v3901 = vld [vmem:[%s1732 + $0x5c] sm:$0xf]
  %v3902 = vld [vmem:[%s1732 + $0x60] sm:$0xf]
  %v3903 = vld [vmem:[%s1732 + $0x64] sm:$0xf]
  %v3904 = vld [vmem:[%s1732 + $0x68] sm:$0xf]
  %v3905 = vld [vmem:[%s1732 + $0x6c] sm:$0xf]
  %v3906 = vld [vmem:[%s1732 + $0x70] sm:$0xf]
  %v3907 = vld [vmem:[%s1732 + $0x74] sm:$0xf]
  %v3908 = vld [vmem:[%s1732 + $0x78] sm:$0xf]
  %v3909 = vld [vmem:[%s1732 + $0x7c] sm:$0xf]
  %v3942 = vunpack.c.l.b16 %v3878
  %v3943 = vunpack.c.l.b16 %v3879
  %v3944 = vunpack.c.l.b16 %v3880
  %v3945 = vunpack.c.l.b16 %v3881
  %v3946 = vunpack.c.l.b16 %v3882
  %v3947 = vunpack.c.l.b16 %v3883
  %v3948 = vunpack.c.l.b16 %v3884
  %v3949 = vunpack.c.l.b16 %v3885
  %v3950 = vunpack.c.l.b16 %v3886
  %v3951 = vunpack.c.l.b16 %v3887
  %v3952 = vunpack.c.l.b16 %v3888
  %v3953 = vunpack.c.l.b16 %v3889
  %v3954 = vunpack.c.l.b16 %v3890
  %v3955 = vunpack.c.l.b16 %v3891
  %v3956 = vunpack.c.l.b16 %v3892
  %v3957 = vunpack.c.l.b16 %v3893
  %v3958 = vunpack.c.l.b16 %v3894
  %v3959 = vunpack.c.l.b16 %v3895
  %v3960 = vunpack.c.l.b16 %v3896
  %v3961 = vunpack.c.l.b16 %v3897
  %v3962 = vunpack.c.l.b16 %v3898
  %v3963 = vunpack.c.l.b16 %v3899
  %v3964 = vunpack.c.l.b16 %v3900
  %v3965 = vunpack.c.l.b16 %v3901
  %v3966 = vunpack.c.l.b16 %v3902
  %v3967 = vunpack.c.l.b16 %v3903
  %v3968 = vunpack.c.l.b16 %v3904
  %v3969 = vunpack.c.l.b16 %v3905
  %v3970 = vunpack.c.l.b16 %v3906
  %v3971 = vunpack.c.l.b16 %v3907
  %v3972 = vunpack.c.l.b16 %v3908
  %v3973 = vunpack.c.l.b16 %v3909
  %v3974 = vpack.c.b16 %v3943, %v3942
  %v3975 = vpack.c.b16 %v3945, %v3944
  %v3976 = vpack.c.b16 %v3947, %v3946
  %v3977 = vpack.c.b16 %v3949, %v3948
  %v3978 = vpack.c.b16 %v3951, %v3950
  %v3979 = vpack.c.b16 %v3953, %v3952
  %v3980 = vpack.c.b16 %v3955, %v3954
  %v3981 = vpack.c.b16 %v3957, %v3956
  %v3982 = vpack.c.b16 %v3959, %v3958
  %v3983 = vpack.c.b16 %v3961, %v3960
  %v3984 = vpack.c.b16 %v3963, %v3962
  %v3985 = vpack.c.b16 %v3965, %v3964
  %v3986 = vpack.c.b16 %v3967, %v3966
  %v3987 = vpack.c.b16 %v3969, %v3968
  %v3988 = vpack.c.b16 %v3971, %v3970
  %v3989 = vpack.c.b16 %v3973, %v3972
  %4006 = vmatpush.bf16.msra.mxu0 %v3981
  %4007 = vmatpush.bf16.msra.mxu0 %v3980
  %4008 = vmatpush.bf16.msra.mxu0 %v3979
  %4009 = vmatpush.bf16.msra.mxu0 %v3978
  %4010 = vmatpush.bf16.msra.mxu0 %v3977
  %4011 = vmatpush.bf16.msra.mxu0 %v3976
  %4012 = vmatpush.bf16.msra.mxu0 %v3975
  %4013 = vmatpush.bf16.msra.mxu0 %v3974
  %4014 = vmatmul.bf16.gmra.mxu0 %v3850
  %v4015 = vpop.f32.mrf.mxu0
  %v4016 = vadd.f32 0.0, %v4015
  %v4017 = vpop.f32.mrf.mxu0
  %v4018 = vadd.f32 0.0, %v4017
  %4019 = vmatmul.bf16.gmra.mxu0 %v3854
  %v4020 = vpop.f32.mrf.mxu0
  %v4021 = vadd.f32 0.0, %v4020
  %v4022 = vpop.f32.mrf.mxu0
  %v4023 = vadd.f32 0.0, %v4022
  %4024 = vmatmul.bf16.gmra.mxu0 %v3858
  %v4025 = vpop.f32.mrf.mxu0
  %v4026 = vadd.f32 0.0, %v4025
  %v4027 = vpop.f32.mrf.mxu0
  %v4028 = vadd.f32 0.0, %v4027
  %4029 = vmatmul.bf16.gmra.mxu0 %v3861
  %v4030 = vpop.f32.mrf.mxu0
  %v4031 = vadd.f32 0.0, %v4030
  %v4032 = vpop.f32.mrf.mxu0
  %4033 = vdwg.mxu0
  %4034 = vmatpush.bf16.msra.mxu0 %v3989
  %4035 = vmatpush.bf16.msra.mxu0 %v3988
  %4036 = vmatpush.bf16.msra.mxu0 %v3987
  %4037 = vmatpush.bf16.msra.mxu0 %v3986
  %4038 = vmatpush.bf16.msra.mxu0 %v3985
  %4039 = vmatpush.bf16.msra.mxu0 %v3984
  %4040 = vmatpush.bf16.msra.mxu0 %v3983
  %4041 = vmatpush.bf16.msra.mxu0 %v3982
  %4042 = vmatmul.bf16.gmra.mxu0 %v3865
  %v4043 = vpop.f32.mrf.mxu0
  %v4044 = vadd.f32 %v4016, %v4043
  %v4045 = vpop.f32.mrf.mxu0
  %v4046 = vadd.f32 %v4018, %v4045
  %4047 = vmatmul.bf16.gmra.mxu0 %v3869
  %v4048 = vpop.f32.mrf.mxu0
  %v4049 = vadd.f32 %v4021, %v4048
  %v4050 = vpop.f32.mrf.mxu0
  %v4051 = vadd.f32 %v4023, %v4050
  %4052 = vmatmul.bf16.gmra.mxu0 %v3873
  %v4053 = vpop.f32.mrf.mxu0
  %v4054 = vadd.f32 %v4026, %v4053
  %v4055 = vpop.f32.mrf.mxu0
  %v4056 = vadd.f32 %v4028, %v4055
  %4057 = vmatmul.bf16.gmra.mxu0 %v3876
  %v4058 = vpop.f32.mrf.mxu0
  %v4059 = vadd.f32 %v4031, %v4058
  %v4060 = vpop.f32.mrf.mxu0
  %4061 = vdwg.mxu0
  %v4062 = vadd.f32 %v3818, %v4044
  %v4063 = vadd.f32 %v3820, %v4046
  %v4064 = vadd.f32 %v3823, %v4049
  %v4065 = vadd.f32 %v3825, %v4051
  %v4066 = vadd.f32 %v3828, %v4054
  %v4067 = vadd.f32 %v3830, %v4056
  %v4068 = vadd.f32 %v3833, %v4059
  %v4069 = vsel %vm103, %v3393, %v3836
  %v4071 = vsel %vm103, %v3387, %v3837
  %v4073 = vsel %vm103, %v3389, %v3838
  %v4076 = vsel %vm103, %v3391, %v3839
  %v4078 = vsel %vm103, %v3407, %v3842
  %v4080 = vsel %vm103, %v3401, %v3843
  %v4082 = vsel %vm103, %v3403, %v3844
  %v4085 = vsel %vm103, %v3405, %v3845
  %v4087 = vld [vmem:[%s1933] sm:$0xf]
  %v4088 = vld [vmem:[%s1933 + $0x4] sm:$0xf]
  %v4089 = vld [vmem:[%s1933 + $0x8] sm:$0xf]
  %v4090 = vld [vmem:[%s1933 + $0xc] sm:$0xf]
  %v4091 = vld [vmem:[%s1933 + $0x10] sm:$0xf]
  %v4092 = vld [vmem:[%s1933 + $0x14] sm:$0xf]
  %v4093 = vld [vmem:[%s1933 + $0x18] sm:$0xf]
  %v4094 = vld [vmem:[%s1933 + $0x1c] sm:$0xf]
  %v4095 = vld [vmem:[%s1933 + $0x20] sm:$0xf]
  %v4096 = vld [vmem:[%s1933 + $0x24] sm:$0xf]
  %v4097 = vld [vmem:[%s1933 + $0x28] sm:$0xf]
  %v4098 = vld [vmem:[%s1933 + $0x2c] sm:$0xf]
  %v4099 = vld [vmem:[%s1933 + $0x30] sm:$0xf]
  %v4100 = vld [vmem:[%s1933 + $0x34] sm:$0xf]
  %v4101 = vld [vmem:[%s1933 + $0x38] sm:$0xf]
  %v4102 = vld [vmem:[%s1933 + $0x3c] sm:$0xf]
  %v4103 = vld [vmem:[%s1933 + $0x40] sm:$0xf]
  %v4104 = vld [vmem:[%s1933 + $0x44] sm:$0xf]
  %v4105 = vld [vmem:[%s1933 + $0x48] sm:$0xf]
  %v4106 = vld [vmem:[%s1933 + $0x4c] sm:$0xf]
  %v4107 = vld [vmem:[%s1933 + $0x50] sm:$0xf]
  %v4108 = vld [vmem:[%s1933 + $0x54] sm:$0xf]
  %v4109 = vld [vmem:[%s1933 + $0x58] sm:$0xf]
  %v4110 = vld [vmem:[%s1933 + $0x5c] sm:$0xf]
  %v4111 = vld [vmem:[%s1933 + $0x60] sm:$0xf]
  %v4112 = vld [vmem:[%s1933 + $0x64] sm:$0xf]
  %v4113 = vld [vmem:[%s1933 + $0x68] sm:$0xf]
  %v4114 = vld [vmem:[%s1933 + $0x6c] sm:$0xf]
  %v4115 = vld [vmem:[%s1933 + $0x70] sm:$0xf]
  %v4116 = vld [vmem:[%s1933 + $0x74] sm:$0xf]
  %v4117 = vld [vmem:[%s1933 + $0x78] sm:$0xf]
  %v4118 = vld [vmem:[%s1933 + $0x7c] sm:$0xf]
  %v4151 = vunpack.c.l.b16 %v4087
  %v4152 = vunpack.c.l.b16 %v4088
  %v4153 = vunpack.c.l.b16 %v4089
  %v4154 = vunpack.c.l.b16 %v4090
  %v4155 = vunpack.c.l.b16 %v4091
  %v4156 = vunpack.c.l.b16 %v4092
  %v4157 = vunpack.c.l.b16 %v4093
  %v4158 = vunpack.c.l.b16 %v4094
  %v4159 = vunpack.c.l.b16 %v4095
  %v4160 = vunpack.c.l.b16 %v4096
  %v4161 = vunpack.c.l.b16 %v4097
  %v4162 = vunpack.c.l.b16 %v4098
  %v4163 = vunpack.c.l.b16 %v4099
  %v4164 = vunpack.c.l.b16 %v4100
  %v4165 = vunpack.c.l.b16 %v4101
  %v4166 = vunpack.c.l.b16 %v4102
  %v4167 = vunpack.c.l.b16 %v4103
  %v4168 = vunpack.c.l.b16 %v4104
  %v4169 = vunpack.c.l.b16 %v4105
  %v4170 = vunpack.c.l.b16 %v4106
  %v4171 = vunpack.c.l.b16 %v4107
  %v4172 = vunpack.c.l.b16 %v4108
  %v4173 = vunpack.c.l.b16 %v4109
  %v4174 = vunpack.c.l.b16 %v4110
  %v4175 = vunpack.c.l.b16 %v4111
  %v4176 = vunpack.c.l.b16 %v4112
  %v4177 = vunpack.c.l.b16 %v4113
  %v4178 = vunpack.c.l.b16 %v4114
  %v4179 = vunpack.c.l.b16 %v4115
  %v4180 = vunpack.c.l.b16 %v4116
  %v4181 = vunpack.c.l.b16 %v4117
  %v4182 = vunpack.c.l.b16 %v4118
  %v4183 = vpack.c.b16 %v4152, %v4151
  %v4184 = vpack.c.b16 %v4154, %v4153
  %v4185 = vpack.c.b16 %v4156, %v4155
  %v4186 = vpack.c.b16 %v4158, %v4157
  %v4187 = vpack.c.b16 %v4160, %v4159
  %v4188 = vpack.c.b16 %v4162, %v4161
  %v4189 = vpack.c.b16 %v4164, %v4163
  %v4190 = vpack.c.b16 %v4166, %v4165
  %v4191 = vpack.c.b16 %v4168, %v4167
  %v4192 = vpack.c.b16 %v4170, %v4169
  %v4193 = vpack.c.b16 %v4172, %v4171
  %v4194 = vpack.c.b16 %v4174, %v4173
  %v4195 = vpack.c.b16 %v4176, %v4175
  %v4196 = vpack.c.b16 %v4178, %v4177
  %v4197 = vpack.c.b16 %v4180, %v4179
  %v4198 = vpack.c.b16 %v4182, %v4181
  %4215 = vmatpush.bf16.msra.mxu0 %v4190
  %4216 = vmatpush.bf16.msra.mxu0 %v4189
  %4217 = vmatpush.bf16.msra.mxu0 %v4188
  %4218 = vmatpush.bf16.msra.mxu0 %v4187
  %4219 = vmatpush.bf16.msra.mxu0 %v4186
  %4220 = vmatpush.bf16.msra.mxu0 %v4185
  %4221 = vmatpush.bf16.msra.mxu0 %v4184
  %4222 = vmatpush.bf16.msra.mxu0 %v4183
  %4223 = vmatmul.bf16.gmra.mxu0 %v4069
  %v4224 = vpop.f32.mrf.mxu0
  %v4225 = vadd.f32 0.0, %v4224
  %v4226 = vpop.f32.mrf.mxu0
  %v4227 = vadd.f32 0.0, %v4226
  %4228 = vmatmul.bf16.gmra.mxu0 %v4071
  %v4229 = vpop.f32.mrf.mxu0
  %v4230 = vadd.f32 0.0, %v4229
  %v4231 = vpop.f32.mrf.mxu0
  %v4232 = vadd.f32 0.0, %v4231
  %4233 = vmatmul.bf16.gmra.mxu0 %v4073
  %v4234 = vpop.f32.mrf.mxu0
  %v4235 = vadd.f32 0.0, %v4234
  %v4236 = vpop.f32.mrf.mxu0
  %v4237 = vadd.f32 0.0, %v4236
  %4238 = vmatmul.bf16.gmra.mxu0 %v4076
  %v4239 = vpop.f32.mrf.mxu0
  %v4240 = vadd.f32 0.0, %v4239
  %v4241 = vpop.f32.mrf.mxu0
  %4242 = vdwg.mxu0
  %4243 = vmatpush.bf16.msra.mxu0 %v4198
  %4244 = vmatpush.bf16.msra.mxu0 %v4197
  %4245 = vmatpush.bf16.msra.mxu0 %v4196
  %4246 = vmatpush.bf16.msra.mxu0 %v4195
  %4247 = vmatpush.bf16.msra.mxu0 %v4194
  %4248 = vmatpush.bf16.msra.mxu0 %v4193
  %4249 = vmatpush.bf16.msra.mxu0 %v4192
  %4250 = vmatpush.bf16.msra.mxu0 %v4191
  %4251 = vmatmul.bf16.gmra.mxu0 %v4078
  %v4252 = vpop.f32.mrf.mxu0
  %v4253 = vadd.f32 %v4225, %v4252
  %v4254 = vpop.f32.mrf.mxu0
  %v4255 = vadd.f32 %v4227, %v4254
  %4256 = vmatmul.bf16.gmra.mxu0 %v4080
  %v4257 = vpop.f32.mrf.mxu0
  %v4258 = vadd.f32 %v4230, %v4257
  %v4259 = vpop.f32.mrf.mxu0
  %v4260 = vadd.f32 %v4232, %v4259
  %4261 = vmatmul.bf16.gmra.mxu0 %v4082
  %v4262 = vpop.f32.mrf.mxu0
  %v4263 = vadd.f32 %v4235, %v4262
  %v4264 = vpop.f32.mrf.mxu0
  %v4265 = vadd.f32 %v4237, %v4264
  %4266 = vmatmul.bf16.gmra.mxu0 %v4085
  %v4267 = vpop.f32.mrf.mxu0
  %v4268 = vadd.f32 %v4240, %v4267
  %v4269 = vpop.f32.mrf.mxu0
  %4270 = vdwg.mxu0
  %v4271 = vadd.f32 %v4062, %v4253
  %v4272 = vadd.f32 %v4063, %v4255
  %v4273 = vadd.f32 %v4064, %v4258
  %v4274 = vadd.f32 %v4065, %v4260
  %v4275 = vadd.f32 %v4066, %v4263
  %v4276 = vadd.f32 %v4067, %v4265
  %v4277 = vadd.f32 %v4068, %v4268
  %v4278 = vadd.f32 %v4271, %v2126
  %v4279 = vadd.f32 %v4272, %v2126
  %v4280 = vadd.f32 %v4273, %v2126
  %v4281 = vadd.f32 %v4274, %v2126
  %v4282 = vadd.f32 %v4275, %v2126
  %v4283 = vadd.f32 %v4276, %v2126
  %v4284 = vadd.f32 %v4277, %v2126
  %v4285 = vpack.c.bf16 %v4278, %v4278
  %v4286 = vpack.c.bf16 %v4279, %v4279
  %v4287 = vpack.c.bf16 %v4280, %v4280
  %v4288 = vpack.c.bf16 %v4281, %v4281
  %v4289 = vpack.c.bf16 %v4282, %v4282
  %v4290 = vpack.c.bf16 %v4283, %v4283
  %v4291 = vpack.c.bf16 %v4284, %v4284
  %4292 = vst [vmem:[%s5 + $0x38] sm:$0xf] %v4285
  %4293 = vst [vmem:[%s5 + $0x3c] sm:$0xf] %v4286
  %4294 = vst [vmem:[%s5 + $0x40] sm:$0xf] %v4287
  %4295 = vst [vmem:[%s5 + $0x44] sm:$0xf] %v4288
  %4296 = vst [vmem:[%s5 + $0x48] sm:$0xf] %v4289
  %4297 = vst [vmem:[%s5 + $0x4c] sm:$0xf] %v4290
  %4298 = vst [vmem:[%s5 + $0x50] sm:$0xf] %v4291
  %v4299 = vmul.f32 %v4278, %v1160
  %v4300 = vmul.f32 %v4279, %v1161
  %v4301 = vmul.f32 %v4280, %v1162
  %v4302 = vmul.f32 %v4281, %v1163
  %v4303 = vmul.f32 %v4282, %v1164
  %v4304 = vmul.f32 %v4283, %v1165
  %v4305 = vmul.f32 %v4284, %v1166
  %v4306 = vadd.f32 %v4299, %v4300
  %v4307 = vadd.f32 %v4306, %v4301
  %v4308 = vadd.f32 %v4307, %v4302
  %v4309 = vadd.f32 %v4308, %v4303
  %v4310 = vadd.f32 %v4309, %v4304
  %v4311 = vadd.f32 %v4310, %v4305
  %v4312 = vrot.slane %v4311, 4
  %v4313 = vadd.f32 %v4311, %v4312
  %v4314 = vrot.slane %v4313, 2
  %v4315 = vadd.f32 %v4313, %v4314
  %v4316 = vrot.slane %v4315, 1
  %v4317 = vadd.f32 %v4315, %v4316
  %v4318 = vadd.f32 %v3243, %v4317
  %v4319 = vmul.f32 %v4299, %v4278
  %v4320 = vmul.f32 %v4300, %v4279
  %v4321 = vmul.f32 %v4301, %v4280
  %v4322 = vmul.f32 %v4302, %v4281
  %v4323 = vmul.f32 %v4303, %v4282
  %v4324 = vmul.f32 %v4304, %v4283
  %v4325 = vmul.f32 %v4305, %v4284
  %v4326 = vadd.f32 %v4319, %v4320
  %v4327 = vadd.f32 %v4326, %v4321
  %v4328 = vadd.f32 %v4327, %v4322
  %v4329 = vadd.f32 %v4328, %v4323
  %v4330 = vadd.f32 %v4329, %v4324
  %v4331 = vadd.f32 %v4330, %v4325
  %v4332 = vrot.slane %v4331, 4
  %v4333 = vadd.f32 %v4331, %v4332
  %v4334 = vrot.slane %v4333, 2
  %v4335 = vadd.f32 %v4333, %v4334
  %v4336 = vrot.slane %v4335, 1
  %v4337 = vadd.f32 %v4335, %v4336
  %v4338 = vadd.f32 %v3263, %v4337
  %v4339 = vld [vmem:[#allocation2 + $0xa8] sm:$0xf]
  %v4340 = vld [vmem:[#allocation2 + $0xb0] sm:$0xf]
  %v4341 = vld [vmem:[#allocation2 + $0xb8] sm:$0xf]
  %v4342 = vld [vmem:[#allocation2 + $0xc0] sm:$0xf]
  %v4343 = vld [vmem:[#allocation2 + $0xc8] sm:$0xf]
  %v4344 = vld [vmem:[#allocation2 + $0xd0] sm:$0xf]
  %v4345 = vld [vmem:[#allocation2 + $0xd8] sm:$0xf]
  %v4352 = vunpack.c.l.b16 %v4340
  %v4353 = vunpack.c.l.b16 %v4341
  %v4354 = vunpack.c.l.b16 %v4342
  %v4355 = vunpack.c.l.b16 %v4343
  %v4356 = vunpack.c.l.b16 %v4344
  %v4357 = vunpack.c.l.b16 %v4345
  %v4358 = vpack.c.b16 %v4353, %v4352
  %v4359 = vpack.c.b16 %v4355, %v4354
  %v4360 = vpack.c.b16 %v4357, %v4356
  %v4361 = vld [vmem:[#allocation2 + $0xe0] sm:$0xf]
  %v4362 = vld [vmem:[#allocation2 + $0xe8] sm:$0xf]
  %v4363 = vld [vmem:[#allocation2 + $0xf0] sm:$0xf]
  %v4364 = vld [vmem:[#allocation2 + $0xf8] sm:$0xf]
  %v4365 = vld [vmem:[#allocation2 + $0x100] sm:$0xf]
  %v4366 = vld [vmem:[#allocation2 + $0x108] sm:$0xf]
  %v4367 = vld [vmem:[#allocation2 + $0x110] sm:$0xf]
  %v4374 = vunpack.c.l.b16 %v4362
  %v4375 = vunpack.c.l.b16 %v4363
  %v4376 = vunpack.c.l.b16 %v4364
  %v4377 = vunpack.c.l.b16 %v4365
  %v4378 = vunpack.c.l.b16 %v4366
  %v4379 = vunpack.c.l.b16 %v4367
  %v4380 = vpack.c.b16 %v4375, %v4374
  %v4381 = vpack.c.b16 %v4377, %v4376
  %v4382 = vpack.c.b16 %v4379, %v4378
  %v4384 = vunpack.c.l.b16 %v4339
  %v4385 = vpack.c.b16 %v4384, %v4384
  %v4386 = vpack.c.b16 %v4356, %v4356
  %4387 = vrot.lane.b32.xlu0 %v4385, 64
  %v4388 = vpop.permute.xlu0 %4387
  %4389 = vrot.lane.b32.xlu0 %v4358, 64
  %v4390 = vpop.permute.xlu0 %4389
  %4391 = vrot.lane.b32.xlu0 %v4359, 64
  %v4392 = vpop.permute.xlu0 %4391
  %4393 = vrot.lane.b32.xlu0 %v4386, 64
  %v4394 = vpop.permute.xlu0 %4393
  %v4396 = vsel %vm1223, 0, %v4388
  %v4398 = vunpack.c.l.b16 %v4361
  %v4399 = vpack.c.b16 %v4398, %v4398
  %v4400 = vpack.c.b16 %v4378, %v4378
  %4401 = vrot.lane.b32.xlu0 %v4399, 64
  %v4402 = vpop.permute.xlu0 %4401
  %4403 = vrot.lane.b32.xlu0 %v4380, 64
  %v4404 = vpop.permute.xlu0 %4403
  %4405 = vrot.lane.b32.xlu0 %v4381, 64
  %v4406 = vpop.permute.xlu0 %4405
  %4407 = vrot.lane.b32.xlu0 %v4400, 64
  %v4408 = vpop.permute.xlu0 %4407
  %v4410 = vsel %vm1223, 0, %v4402
  %v4411 = vld [vmem:[#allocation2 + $0x74] sm:$0xf]
  %v4412 = vld [vmem:[#allocation2 + $0x7c] sm:$0xf]
  %v4413 = vld [vmem:[#allocation2 + $0x84] sm:$0xf]
  %v4414 = vld [vmem:[#allocation2 + $0x8c] sm:$0xf]
  %v4415 = vld [vmem:[#allocation2 + $0x94] sm:$0xf]
  %v4416 = vld [vmem:[#allocation2 + $0x9c] sm:$0xf]
  %v4417 = vld [vmem:[#allocation2 + $0xa4] sm:$0xf]
  %v4424 = vunpack.c.l.b16 %v4412
  %v4425 = vunpack.c.l.b16 %v4413
  %v4426 = vunpack.c.l.b16 %v4414
  %v4427 = vunpack.c.l.b16 %v4415
  %v4428 = vunpack.c.l.b16 %v4416
  %v4429 = vunpack.c.l.b16 %v4417
  %v4430 = vpack.c.b16 %v4425, %v4424
  %v4431 = vpack.c.b16 %v4427, %v4426
  %v4432 = vpack.c.b16 %v4429, %v4428
  %v4433 = vld [vmem:[#allocation2 + $0xac] sm:$0xf]
  %v4434 = vld [vmem:[#allocation2 + $0xb4] sm:$0xf]
  %v4435 = vld [vmem:[#allocation2 + $0xbc] sm:$0xf]
  %v4436 = vld [vmem:[#allocation2 + $0xc4] sm:$0xf]
  %v4437 = vld [vmem:[#allocation2 + $0xcc] sm:$0xf]
  %v4438 = vld [vmem:[#allocation2 + $0xd4] sm:$0xf]
  %v4439 = vld [vmem:[#allocation2 + $0xdc] sm:$0xf]
  %v4446 = vunpack.c.l.b16 %v4434
  %v4447 = vunpack.c.l.b16 %v4435
  %v4448 = vunpack.c.l.b16 %v4436
  %v4449 = vunpack.c.l.b16 %v4437
  %v4450 = vunpack.c.l.b16 %v4438
  %v4451 = vunpack.c.l.b16 %v4439
  %v4452 = vpack.c.b16 %v4447, %v4446
  %v4453 = vpack.c.b16 %v4449, %v4448
  %v4454 = vpack.c.b16 %v4451, %v4450
  %v4456 = vunpack.c.l.b16 %v4411
  %v4457 = vpack.c.b16 %v4456, %v4456
  %v4458 = vpack.c.b16 %v4428, %v4428
  %4459 = vrot.lane.b32.xlu0 %v4457, 64
  %v4460 = vpop.permute.xlu0 %4459
  %4461 = vrot.lane.b32.xlu0 %v4430, 64
  %v4462 = vpop.permute.xlu0 %4461
  %4463 = vrot.lane.b32.xlu0 %v4431, 64
  %v4464 = vpop.permute.xlu0 %4463
  %4465 = vrot.lane.b32.xlu0 %v4458, 64
  %v4466 = vpop.permute.xlu0 %4465
  %v4468 = vsel %vm1223, 0, %v4460
  %v4470 = vunpack.c.l.b16 %v4433
  %v4471 = vpack.c.b16 %v4470, %v4470
  %v4472 = vpack.c.b16 %v4450, %v4450
  %4473 = vrot.lane.b32.xlu0 %v4471, 64
  %v4474 = vpop.permute.xlu0 %4473
  %4475 = vrot.lane.b32.xlu0 %v4452, 64
  %v4476 = vpop.permute.xlu0 %4475
  %4477 = vrot.lane.b32.xlu0 %v4453, 64
  %v4478 = vpop.permute.xlu0 %4477
  %4479 = vrot.lane.b32.xlu0 %v4472, 64
  %v4480 = vpop.permute.xlu0 %4479
  %v4482 = vsel %vm1223, 0, %v4474
  %v4483 = vpack.c.b16 %v4352, %v4384
  %v4484 = vpack.c.b16 %v4354, %v4353
  %v4485 = vpack.c.b16 %v4356, %v4355
  %v4486 = vpack.c.b16 %v4357, %v4357
  %4487 = vrot.lane.b32.xlu0 %v4360, 64
  %v4488 = vpop.permute.xlu0 %4487
  %v4489 = vpack.c.b16 %v4374, %v4398
  %v4490 = vpack.c.b16 %v4376, %v4375
  %v4491 = vpack.c.b16 %v4378, %v4377
  %v4492 = vpack.c.b16 %v4379, %v4379
  %4493 = vrot.lane.b32.xlu0 %v4382, 64
  %v4494 = vpop.permute.xlu0 %4493
  %v4497 = vsel %vm103, %v4483, %v4390
  %v4501 = vsel %vm103, %v4484, %v4392
  %v4505 = vsel %vm103, %v4485, %v4488
  %v4508 = vsel %vm103, %v4486, %v1285
  %v4512 = vsel %vm103, %v4489, %v4404
  %v4516 = vsel %vm103, %v4490, %v4406
  %v4520 = vsel %vm103, %v4491, %v4494
  %v4523 = vsel %vm103, %v4492, %v1285
  %v4525 = vld [vmem:[%s3] sm:$0xf]
  %v4526 = vld [vmem:[%s3 + $0x4] sm:$0xf]
  %v4527 = vld [vmem:[%s3 + $0x8] sm:$0xf]
  %v4528 = vld [vmem:[%s3 + $0xc] sm:$0xf]
  %v4529 = vld [vmem:[%s3 + $0x10] sm:$0xf]
  %v4530 = vld [vmem:[%s3 + $0x14] sm:$0xf]
  %v4531 = vld [vmem:[%s3 + $0x18] sm:$0xf]
  %v4532 = vld [vmem:[%s3 + $0x1c] sm:$0xf]
  %v4533 = vld [vmem:[%s3 + $0x20] sm:$0xf]
  %v4534 = vld [vmem:[%s3 + $0x24] sm:$0xf]
  %v4535 = vld [vmem:[%s3 + $0x28] sm:$0xf]
  %v4536 = vld [vmem:[%s3 + $0x2c] sm:$0xf]
  %v4537 = vld [vmem:[%s3 + $0x30] sm:$0xf]
  %v4538 = vld [vmem:[%s3 + $0x34] sm:$0xf]
  %v4539 = vld [vmem:[%s3 + $0x38] sm:$0xf]
  %v4540 = vld [vmem:[%s3 + $0x3c] sm:$0xf]
  %v4541 = vld [vmem:[%s3 + $0x40] sm:$0xf]
  %v4542 = vld [vmem:[%s3 + $0x44] sm:$0xf]
  %v4543 = vld [vmem:[%s3 + $0x48] sm:$0xf]
  %v4544 = vld [vmem:[%s3 + $0x4c] sm:$0xf]
  %v4545 = vld [vmem:[%s3 + $0x50] sm:$0xf]
  %v4546 = vld [vmem:[%s3 + $0x54] sm:$0xf]
  %v4547 = vld [vmem:[%s3 + $0x58] sm:$0xf]
  %v4548 = vld [vmem:[%s3 + $0x5c] sm:$0xf]
  %v4549 = vld [vmem:[%s3 + $0x60] sm:$0xf]
  %v4550 = vld [vmem:[%s3 + $0x64] sm:$0xf]
  %v4551 = vld [vmem:[%s3 + $0x68] sm:$0xf]
  %v4552 = vld [vmem:[%s3 + $0x6c] sm:$0xf]
  %v4553 = vld [vmem:[%s3 + $0x70] sm:$0xf]
  %v4554 = vld [vmem:[%s3 + $0x74] sm:$0xf]
  %v4555 = vld [vmem:[%s3 + $0x78] sm:$0xf]
  %v4556 = vld [vmem:[%s3 + $0x7c] sm:$0xf]
  %v4557 = vsel %vm103, %v4396, %v4483
  %v4559 = vsel %vm103, %v4390, %v4484
  %v4561 = vsel %vm103, %v4392, %v4485
  %v4564 = vsel %vm103, %v4394, %v4486
  %v4566 = vsel %vm103, %v4410, %v4489
  %v4568 = vsel %vm103, %v4404, %v4490
  %v4570 = vsel %vm103, %v4406, %v4491
  %v4573 = vsel %vm103, %v4408, %v4492
  %v4575 = vld [vmem:[%s1373] sm:$0xf]
  %v4576 = vld [vmem:[%s1373 + $0x4] sm:$0xf]
  %v4577 = vld [vmem:[%s1373 + $0x8] sm:$0xf]
  %v4578 = vld [vmem:[%s1373 + $0xc] sm:$0xf]
  %v4579 = vld [vmem:[%s1373 + $0x10] sm:$0xf]
  %v4580 = vld [vmem:[%s1373 + $0x14] sm:$0xf]
  %v4581 = vld [vmem:[%s1373 + $0x18] sm:$0xf]
  %v4582 = vld [vmem:[%s1373 + $0x1c] sm:$0xf]
  %v4583 = vld [vmem:[%s1373 + $0x20] sm:$0xf]
  %v4584 = vld [vmem:[%s1373 + $0x24] sm:$0xf]
  %v4585 = vld [vmem:[%s1373 + $0x28] sm:$0xf]
  %v4586 = vld [vmem:[%s1373 + $0x2c] sm:$0xf]
  %v4587 = vld [vmem:[%s1373 + $0x30] sm:$0xf]
  %v4588 = vld [vmem:[%s1373 + $0x34] sm:$0xf]
  %v4589 = vld [vmem:[%s1373 + $0x38] sm:$0xf]
  %v4590 = vld [vmem:[%s1373 + $0x3c] sm:$0xf]
  %v4591 = vld [vmem:[%s1373 + $0x40] sm:$0xf]
  %v4592 = vld [vmem:[%s1373 + $0x44] sm:$0xf]
  %v4593 = vld [vmem:[%s1373 + $0x48] sm:$0xf]
  %v4594 = vld [vmem:[%s1373 + $0x4c] sm:$0xf]
  %v4595 = vld [vmem:[%s1373 + $0x50] sm:$0xf]
  %v4596 = vld [vmem:[%s1373 + $0x54] sm:$0xf]
  %v4597 = vld [vmem:[%s1373 + $0x58] sm:$0xf]
  %v4598 = vld [vmem:[%s1373 + $0x5c] sm:$0xf]
  %v4599 = vld [vmem:[%s1373 + $0x60] sm:$0xf]
  %v4600 = vld [vmem:[%s1373 + $0x64] sm:$0xf]
  %v4601 = vld [vmem:[%s1373 + $0x68] sm:$0xf]
  %v4602 = vld [vmem:[%s1373 + $0x6c] sm:$0xf]
  %v4603 = vld [vmem:[%s1373 + $0x70] sm:$0xf]
  %v4604 = vld [vmem:[%s1373 + $0x74] sm:$0xf]
  %v4605 = vld [vmem:[%s1373 + $0x78] sm:$0xf]
  %v4606 = vld [vmem:[%s1373 + $0x7c] sm:$0xf]
  %v4639 = vunpack.c.l.b16 %v4575
  %v4640 = vunpack.c.l.b16 %v4576
  %v4641 = vunpack.c.l.b16 %v4577
  %v4642 = vunpack.c.l.b16 %v4578
  %v4643 = vunpack.c.l.b16 %v4579
  %v4644 = vunpack.c.l.b16 %v4580
  %v4645 = vunpack.c.l.b16 %v4581
  %v4646 = vunpack.c.l.b16 %v4582
  %v4647 = vunpack.c.l.b16 %v4583
  %v4648 = vunpack.c.l.b16 %v4584
  %v4649 = vunpack.c.l.b16 %v4585
  %v4650 = vunpack.c.l.b16 %v4586
  %v4651 = vunpack.c.l.b16 %v4587
  %v4652 = vunpack.c.l.b16 %v4588
  %v4653 = vunpack.c.l.b16 %v4589
  %v4654 = vunpack.c.l.b16 %v4590
  %v4655 = vunpack.c.l.b16 %v4591
  %v4656 = vunpack.c.l.b16 %v4592
  %v4657 = vunpack.c.l.b16 %v4593
  %v4658 = vunpack.c.l.b16 %v4594
  %v4659 = vunpack.c.l.b16 %v4595
  %v4660 = vunpack.c.l.b16 %v4596
  %v4661 = vunpack.c.l.b16 %v4597
  %v4662 = vunpack.c.l.b16 %v4598
  %v4663 = vunpack.c.l.b16 %v4599
  %v4664 = vunpack.c.l.b16 %v4600
  %v4665 = vunpack.c.l.b16 %v4601
  %v4666 = vunpack.c.l.b16 %v4602
  %v4667 = vunpack.c.l.b16 %v4603
  %v4668 = vunpack.c.l.b16 %v4604
  %v4669 = vunpack.c.l.b16 %v4605
  %v4670 = vunpack.c.l.b16 %v4606
  %v4671 = vpack.c.b16 %v4640, %v4639
  %v4672 = vpack.c.b16 %v4642, %v4641
  %v4673 = vpack.c.b16 %v4644, %v4643
  %v4674 = vpack.c.b16 %v4646, %v4645
  %v4675 = vpack.c.b16 %v4648, %v4647
  %v4676 = vpack.c.b16 %v4650, %v4649
  %v4677 = vpack.c.b16 %v4652, %v4651
  %v4678 = vpack.c.b16 %v4654, %v4653
  %v4679 = vpack.c.b16 %v4656, %v4655
  %v4680 = vpack.c.b16 %v4658, %v4657
  %v4681 = vpack.c.b16 %v4660, %v4659
  %v4682 = vpack.c.b16 %v4662, %v4661
  %v4683 = vpack.c.b16 %v4664, %v4663
  %v4684 = vpack.c.b16 %v4666, %v4665
  %v4685 = vpack.c.b16 %v4668, %v4667
  %v4686 = vpack.c.b16 %v4670, %v4669
  %4703 = vmatpush.bf16.msra.mxu0 %v4678
  %4704 = vmatpush.bf16.msra.mxu0 %v4677
  %4705 = vmatpush.bf16.msra.mxu0 %v4676
  %4706 = vmatpush.bf16.msra.mxu0 %v4675
  %4707 = vmatpush.bf16.msra.mxu0 %v4674
  %4708 = vmatpush.bf16.msra.mxu0 %v4673
  %4709 = vmatpush.bf16.msra.mxu0 %v4672
  %4710 = vmatpush.bf16.msra.mxu0 %v4671
  %4711 = vmatmul.bf16.gmra.mxu0 %v4557
  %v4712 = vpop.f32.mrf.mxu0
  %v4713 = vadd.f32 0.0, %v4712
  %v4714 = vpop.f32.mrf.mxu0
  %v4715 = vadd.f32 0.0, %v4714
  %4716 = vmatmul.bf16.gmra.mxu0 %v4559
  %v4717 = vpop.f32.mrf.mxu0
  %v4718 = vadd.f32 0.0, %v4717
  %v4719 = vpop.f32.mrf.mxu0
  %v4720 = vadd.f32 0.0, %v4719
  %4721 = vmatmul.bf16.gmra.mxu0 %v4561
  %v4722 = vpop.f32.mrf.mxu0
  %v4723 = vadd.f32 0.0, %v4722
  %v4724 = vpop.f32.mrf.mxu0
  %v4725 = vadd.f32 0.0, %v4724
  %4726 = vmatmul.bf16.gmra.mxu0 %v4564
  %v4727 = vpop.f32.mrf.mxu0
  %v4728 = vadd.f32 0.0, %v4727
  %v4729 = vpop.f32.mrf.mxu0
  %4730 = vdwg.mxu0
  %4731 = vmatpush.bf16.msra.mxu0 %v4686
  %4732 = vmatpush.bf16.msra.mxu0 %v4685
  %4733 = vmatpush.bf16.msra.mxu0 %v4684
  %4734 = vmatpush.bf16.msra.mxu0 %v4683
  %4735 = vmatpush.bf16.msra.mxu0 %v4682
  %4736 = vmatpush.bf16.msra.mxu0 %v4681
  %4737 = vmatpush.bf16.msra.mxu0 %v4680
  %4738 = vmatpush.bf16.msra.mxu0 %v4679
  %4739 = vmatmul.bf16.gmra.mxu0 %v4566
  %v4740 = vpop.f32.mrf.mxu0
  %v4741 = vadd.f32 %v4713, %v4740
  %v4742 = vpop.f32.mrf.mxu0
  %v4743 = vadd.f32 %v4715, %v4742
  %4744 = vmatmul.bf16.gmra.mxu0 %v4568
  %v4745 = vpop.f32.mrf.mxu0
  %v4746 = vadd.f32 %v4718, %v4745
  %v4747 = vpop.f32.mrf.mxu0
  %v4748 = vadd.f32 %v4720, %v4747
  %4749 = vmatmul.bf16.gmra.mxu0 %v4570
  %v4750 = vpop.f32.mrf.mxu0
  %v4751 = vadd.f32 %v4723, %v4750
  %v4752 = vpop.f32.mrf.mxu0
  %v4753 = vadd.f32 %v4725, %v4752
  %4754 = vmatmul.bf16.gmra.mxu0 %v4573
  %v4755 = vpop.f32.mrf.mxu0
  %v4756 = vadd.f32 %v4728, %v4755
  %v4757 = vpop.f32.mrf.mxu0
  %4758 = vdwg.mxu0
  %v4791 = vunpack.c.l.b16 %v4525
  %v4792 = vunpack.c.l.b16 %v4526
  %v4793 = vunpack.c.l.b16 %v4527
  %v4794 = vunpack.c.l.b16 %v4528
  %v4795 = vunpack.c.l.b16 %v4529
  %v4796 = vunpack.c.l.b16 %v4530
  %v4797 = vunpack.c.l.b16 %v4531
  %v4798 = vunpack.c.l.b16 %v4532
  %v4799 = vunpack.c.l.b16 %v4533
  %v4800 = vunpack.c.l.b16 %v4534
  %v4801 = vunpack.c.l.b16 %v4535
  %v4802 = vunpack.c.l.b16 %v4536
  %v4803 = vunpack.c.l.b16 %v4537
  %v4804 = vunpack.c.l.b16 %v4538
  %v4805 = vunpack.c.l.b16 %v4539
  %v4806 = vunpack.c.l.b16 %v4540
  %v4807 = vunpack.c.l.b16 %v4541
  %v4808 = vunpack.c.l.b16 %v4542
  %v4809 = vunpack.c.l.b16 %v4543
  %v4810 = vunpack.c.l.b16 %v4544
  %v4811 = vunpack.c.l.b16 %v4545
  %v4812 = vunpack.c.l.b16 %v4546
  %v4813 = vunpack.c.l.b16 %v4547
  %v4814 = vunpack.c.l.b16 %v4548
  %v4815 = vunpack.c.l.b16 %v4549
  %v4816 = vunpack.c.l.b16 %v4550
  %v4817 = vunpack.c.l.b16 %v4551
  %v4818 = vunpack.c.l.b16 %v4552
  %v4819 = vunpack.c.l.b16 %v4553
  %v4820 = vunpack.c.l.b16 %v4554
  %v4821 = vunpack.c.l.b16 %v4555
  %v4822 = vunpack.c.l.b16 %v4556
  %v4823 = vpack.c.b16 %v4792, %v4791
  %v4824 = vpack.c.b16 %v4794, %v4793
  %v4825 = vpack.c.b16 %v4796, %v4795
  %v4826 = vpack.c.b16 %v4798, %v4797
  %v4827 = vpack.c.b16 %v4800, %v4799
  %v4828 = vpack.c.b16 %v4802, %v4801
  %v4829 = vpack.c.b16 %v4804, %v4803
  %v4830 = vpack.c.b16 %v4806, %v4805
  %v4831 = vpack.c.b16 %v4808, %v4807
  %v4832 = vpack.c.b16 %v4810, %v4809
  %v4833 = vpack.c.b16 %v4812, %v4811
  %v4834 = vpack.c.b16 %v4814, %v4813
  %v4835 = vpack.c.b16 %v4816, %v4815
  %v4836 = vpack.c.b16 %v4818, %v4817
  %v4837 = vpack.c.b16 %v4820, %v4819
  %v4838 = vpack.c.b16 %v4822, %v4821
  %4855 = vmatpush.bf16.msra.mxu0 %v4830
  %4856 = vmatpush.bf16.msra.mxu0 %v4829
  %4857 = vmatpush.bf16.msra.mxu0 %v4828
  %4858 = vmatpush.bf16.msra.mxu0 %v4827
  %4859 = vmatpush.bf16.msra.mxu0 %v4826
  %4860 = vmatpush.bf16.msra.mxu0 %v4825
  %4861 = vmatpush.bf16.msra.mxu0 %v4824
  %4862 = vmatpush.bf16.msra.mxu0 %v4823
  %4863 = vmatmul.bf16.gmra.mxu0 %v4497
  %v4864 = vpop.f32.mrf.mxu0
  %v4865 = vadd.f32 %v4741, %v4864
  %v4866 = vpop.f32.mrf.mxu0
  %v4867 = vadd.f32 %v4743, %v4866
  %4868 = vmatmul.bf16.gmra.mxu0 %v4501
  %v4869 = vpop.f32.mrf.mxu0
  %v4870 = vadd.f32 %v4746, %v4869
  %v4871 = vpop.f32.mrf.mxu0
  %v4872 = vadd.f32 %v4748, %v4871
  %4873 = vmatmul.bf16.gmra.mxu0 %v4505
  %v4874 = vpop.f32.mrf.mxu0
  %v4875 = vadd.f32 %v4751, %v4874
  %v4876 = vpop.f32.mrf.mxu0
  %v4877 = vadd.f32 %v4753, %v4876
  %4878 = vmatmul.bf16.gmra.mxu0 %v4508
  %v4879 = vpop.f32.mrf.mxu0
  %v4880 = vadd.f32 %v4756, %v4879
  %v4881 = vpop.f32.mrf.mxu0
  %4882 = vdwg.mxu0
  %4883 = vmatpush.bf16.msra.mxu0 %v4838
  %4884 = vmatpush.bf16.msra.mxu0 %v4837
  %4885 = vmatpush.bf16.msra.mxu0 %v4836
  %4886 = vmatpush.bf16.msra.mxu0 %v4835
  %4887 = vmatpush.bf16.msra.mxu0 %v4834
  %4888 = vmatpush.bf16.msra.mxu0 %v4833
  %4889 = vmatpush.bf16.msra.mxu0 %v4832
  %4890 = vmatpush.bf16.msra.mxu0 %v4831
  %4891 = vmatmul.bf16.gmra.mxu0 %v4512
  %v4892 = vpop.f32.mrf.mxu0
  %v4893 = vadd.f32 %v4865, %v4892
  %v4894 = vpop.f32.mrf.mxu0
  %v4895 = vadd.f32 %v4867, %v4894
  %4896 = vmatmul.bf16.gmra.mxu0 %v4516
  %v4897 = vpop.f32.mrf.mxu0
  %v4898 = vadd.f32 %v4870, %v4897
  %v4899 = vpop.f32.mrf.mxu0
  %v4900 = vadd.f32 %v4872, %v4899
  %4901 = vmatmul.bf16.gmra.mxu0 %v4520
  %v4902 = vpop.f32.mrf.mxu0
  %v4903 = vadd.f32 %v4875, %v4902
  %v4904 = vpop.f32.mrf.mxu0
  %v4905 = vadd.f32 %v4877, %v4904
  %4906 = vmatmul.bf16.gmra.mxu0 %v4523
  %v4907 = vpop.f32.mrf.mxu0
  %v4908 = vadd.f32 %v4880, %v4907
  %v4909 = vpop.f32.mrf.mxu0
  %4910 = vdwg.mxu0
  %v4911 = vpack.c.b16 %v4424, %v4456
  %v4912 = vpack.c.b16 %v4426, %v4425
  %v4913 = vpack.c.b16 %v4428, %v4427
  %v4914 = vpack.c.b16 %v4429, %v4429
  %4915 = vrot.lane.b32.xlu0 %v4432, 64
  %v4916 = vpop.permute.xlu0 %4915
  %v4917 = vpack.c.b16 %v4446, %v4470
  %v4918 = vpack.c.b16 %v4448, %v4447
  %v4919 = vpack.c.b16 %v4450, %v4449
  %v4920 = vpack.c.b16 %v4451, %v4451
  %4921 = vrot.lane.b32.xlu0 %v4454, 64
  %v4922 = vpop.permute.xlu0 %4921
  %v4925 = vsel %vm103, %v4911, %v4462
  %v4929 = vsel %vm103, %v4912, %v4464
  %v4933 = vsel %vm103, %v4913, %v4916
  %v4936 = vsel %vm103, %v4914, %v1285
  %v4940 = vsel %vm103, %v4917, %v4476
  %v4944 = vsel %vm103, %v4918, %v4478
  %v4948 = vsel %vm103, %v4919, %v4922
  %v4951 = vsel %vm103, %v4920, %v1285
  %v4953 = vld [vmem:[%s1732] sm:$0xf]
  %v4954 = vld [vmem:[%s1732 + $0x4] sm:$0xf]
  %v4955 = vld [vmem:[%s1732 + $0x8] sm:$0xf]
  %v4956 = vld [vmem:[%s1732 + $0xc] sm:$0xf]
  %v4957 = vld [vmem:[%s1732 + $0x10] sm:$0xf]
  %v4958 = vld [vmem:[%s1732 + $0x14] sm:$0xf]
  %v4959 = vld [vmem:[%s1732 + $0x18] sm:$0xf]
  %v4960 = vld [vmem:[%s1732 + $0x1c] sm:$0xf]
  %v4961 = vld [vmem:[%s1732 + $0x20] sm:$0xf]
  %v4962 = vld [vmem:[%s1732 + $0x24] sm:$0xf]
  %v4963 = vld [vmem:[%s1732 + $0x28] sm:$0xf]
  %v4964 = vld [vmem:[%s1732 + $0x2c] sm:$0xf]
  %v4965 = vld [vmem:[%s1732 + $0x30] sm:$0xf]
  %v4966 = vld [vmem:[%s1732 + $0x34] sm:$0xf]
  %v4967 = vld [vmem:[%s1732 + $0x38] sm:$0xf]
  %v4968 = vld [vmem:[%s1732 + $0x3c] sm:$0xf]
  %v4969 = vld [vmem:[%s1732 + $0x40] sm:$0xf]
  %v4970 = vld [vmem:[%s1732 + $0x44] sm:$0xf]
  %v4971 = vld [vmem:[%s1732 + $0x48] sm:$0xf]
  %v4972 = vld [vmem:[%s1732 + $0x4c] sm:$0xf]
  %v4973 = vld [vmem:[%s1732 + $0x50] sm:$0xf]
  %v4974 = vld [vmem:[%s1732 + $0x54] sm:$0xf]
  %v4975 = vld [vmem:[%s1732 + $0x58] sm:$0xf]
  %v4976 = vld [vmem:[%s1732 + $0x5c] sm:$0xf]
  %v4977 = vld [vmem:[%s1732 + $0x60] sm:$0xf]
  %v4978 = vld [vmem:[%s1732 + $0x64] sm:$0xf]
  %v4979 = vld [vmem:[%s1732 + $0x68] sm:$0xf]
  %v4980 = vld [vmem:[%s1732 + $0x6c] sm:$0xf]
  %v4981 = vld [vmem:[%s1732 + $0x70] sm:$0xf]
  %v4982 = vld [vmem:[%s1732 + $0x74] sm:$0xf]
  %v4983 = vld [vmem:[%s1732 + $0x78] sm:$0xf]
  %v4984 = vld [vmem:[%s1732 + $0x7c] sm:$0xf]
  %v5017 = vunpack.c.l.b16 %v4953
  %v5018 = vunpack.c.l.b16 %v4954
  %v5019 = vunpack.c.l.b16 %v4955
  %v5020 = vunpack.c.l.b16 %v4956
  %v5021 = vunpack.c.l.b16 %v4957
  %v5022 = vunpack.c.l.b16 %v4958
  %v5023 = vunpack.c.l.b16 %v4959
  %v5024 = vunpack.c.l.b16 %v4960
  %v5025 = vunpack.c.l.b16 %v4961
  %v5026 = vunpack.c.l.b16 %v4962
  %v5027 = vunpack.c.l.b16 %v4963
  %v5028 = vunpack.c.l.b16 %v4964
  %v5029 = vunpack.c.l.b16 %v4965
  %v5030 = vunpack.c.l.b16 %v4966
  %v5031 = vunpack.c.l.b16 %v4967
  %v5032 = vunpack.c.l.b16 %v4968
  %v5033 = vunpack.c.l.b16 %v4969
  %v5034 = vunpack.c.l.b16 %v4970
  %v5035 = vunpack.c.l.b16 %v4971
  %v5036 = vunpack.c.l.b16 %v4972
  %v5037 = vunpack.c.l.b16 %v4973
  %v5038 = vunpack.c.l.b16 %v4974
  %v5039 = vunpack.c.l.b16 %v4975
  %v5040 = vunpack.c.l.b16 %v4976
  %v5041 = vunpack.c.l.b16 %v4977
  %v5042 = vunpack.c.l.b16 %v4978
  %v5043 = vunpack.c.l.b16 %v4979
  %v5044 = vunpack.c.l.b16 %v4980
  %v5045 = vunpack.c.l.b16 %v4981
  %v5046 = vunpack.c.l.b16 %v4982
  %v5047 = vunpack.c.l.b16 %v4983
  %v5048 = vunpack.c.l.b16 %v4984
  %v5049 = vpack.c.b16 %v5018, %v5017
  %v5050 = vpack.c.b16 %v5020, %v5019
  %v5051 = vpack.c.b16 %v5022, %v5021
  %v5052 = vpack.c.b16 %v5024, %v5023
  %v5053 = vpack.c.b16 %v5026, %v5025
  %v5054 = vpack.c.b16 %v5028, %v5027
  %v5055 = vpack.c.b16 %v5030, %v5029
  %v5056 = vpack.c.b16 %v5032, %v5031
  %v5057 = vpack.c.b16 %v5034, %v5033
  %v5058 = vpack.c.b16 %v5036, %v5035
  %v5059 = vpack.c.b16 %v5038, %v5037
  %v5060 = vpack.c.b16 %v5040, %v5039
  %v5061 = vpack.c.b16 %v5042, %v5041
  %v5062 = vpack.c.b16 %v5044, %v5043
  %v5063 = vpack.c.b16 %v5046, %v5045
  %v5064 = vpack.c.b16 %v5048, %v5047
  %5081 = vmatpush.bf16.msra.mxu0 %v5056
  %5082 = vmatpush.bf16.msra.mxu0 %v5055
  %5083 = vmatpush.bf16.msra.mxu0 %v5054
  %5084 = vmatpush.bf16.msra.mxu0 %v5053
  %5085 = vmatpush.bf16.msra.mxu0 %v5052
  %5086 = vmatpush.bf16.msra.mxu0 %v5051
  %5087 = vmatpush.bf16.msra.mxu0 %v5050
  %5088 = vmatpush.bf16.msra.mxu0 %v5049
  %5089 = vmatmul.bf16.gmra.mxu0 %v4925
  %v5090 = vpop.f32.mrf.mxu0
  %v5091 = vadd.f32 0.0, %v5090
  %v5092 = vpop.f32.mrf.mxu0
  %v5093 = vadd.f32 0.0, %v5092
  %5094 = vmatmul.bf16.gmra.mxu0 %v4929
  %v5095 = vpop.f32.mrf.mxu0
  %v5096 = vadd.f32 0.0, %v5095
  %v5097 = vpop.f32.mrf.mxu0
  %v5098 = vadd.f32 0.0, %v5097
  %5099 = vmatmul.bf16.gmra.mxu0 %v4933
  %v5100 = vpop.f32.mrf.mxu0
  %v5101 = vadd.f32 0.0, %v5100
  %v5102 = vpop.f32.mrf.mxu0
  %v5103 = vadd.f32 0.0, %v5102
  %5104 = vmatmul.bf16.gmra.mxu0 %v4936
  %v5105 = vpop.f32.mrf.mxu0
  %v5106 = vadd.f32 0.0, %v5105
  %v5107 = vpop.f32.mrf.mxu0
  %5108 = vdwg.mxu0
  %5109 = vmatpush.bf16.msra.mxu0 %v5064
  %5110 = vmatpush.bf16.msra.mxu0 %v5063
  %5111 = vmatpush.bf16.msra.mxu0 %v5062
  %5112 = vmatpush.bf16.msra.mxu0 %v5061
  %5113 = vmatpush.bf16.msra.mxu0 %v5060
  %5114 = vmatpush.bf16.msra.mxu0 %v5059
  %5115 = vmatpush.bf16.msra.mxu0 %v5058
  %5116 = vmatpush.bf16.msra.mxu0 %v5057
  %5117 = vmatmul.bf16.gmra.mxu0 %v4940
  %v5118 = vpop.f32.mrf.mxu0
  %v5119 = vadd.f32 %v5091, %v5118
  %v5120 = vpop.f32.mrf.mxu0
  %v5121 = vadd.f32 %v5093, %v5120
  %5122 = vmatmul.bf16.gmra.mxu0 %v4944
  %v5123 = vpop.f32.mrf.mxu0
  %v5124 = vadd.f32 %v5096, %v5123
  %v5125 = vpop.f32.mrf.mxu0
  %v5126 = vadd.f32 %v5098, %v5125
  %5127 = vmatmul.bf16.gmra.mxu0 %v4948
  %v5128 = vpop.f32.mrf.mxu0
  %v5129 = vadd.f32 %v5101, %v5128
  %v5130 = vpop.f32.mrf.mxu0
  %v5131 = vadd.f32 %v5103, %v5130
  %5132 = vmatmul.bf16.gmra.mxu0 %v4951
  %v5133 = vpop.f32.mrf.mxu0
  %v5134 = vadd.f32 %v5106, %v5133
  %v5135 = vpop.f32.mrf.mxu0
  %5136 = vdwg.mxu0
  %v5137 = vadd.f32 %v4893, %v5119
  %v5138 = vadd.f32 %v4895, %v5121
  %v5139 = vadd.f32 %v4898, %v5124
  %v5140 = vadd.f32 %v4900, %v5126
  %v5141 = vadd.f32 %v4903, %v5129
  %v5142 = vadd.f32 %v4905, %v5131
  %v5143 = vadd.f32 %v4908, %v5134
  %v5144 = vsel %vm103, %v4468, %v4911
  %v5146 = vsel %vm103, %v4462, %v4912
  %v5148 = vsel %vm103, %v4464, %v4913
  %v5151 = vsel %vm103, %v4466, %v4914
  %v5153 = vsel %vm103, %v4482, %v4917
  %v5155 = vsel %vm103, %v4476, %v4918
  %v5157 = vsel %vm103, %v4478, %v4919
  %v5160 = vsel %vm103, %v4480, %v4920
  %v5162 = vld [vmem:[%s1933] sm:$0xf]
  %v5163 = vld [vmem:[%s1933 + $0x4] sm:$0xf]
  %v5164 = vld [vmem:[%s1933 + $0x8] sm:$0xf]
  %v5165 = vld [vmem:[%s1933 + $0xc] sm:$0xf]
  %v5166 = vld [vmem:[%s1933 + $0x10] sm:$0xf]
  %v5167 = vld [vmem:[%s1933 + $0x14] sm:$0xf]
  %v5168 = vld [vmem:[%s1933 + $0x18] sm:$0xf]
  %v5169 = vld [vmem:[%s1933 + $0x1c] sm:$0xf]
  %v5170 = vld [vmem:[%s1933 + $0x20] sm:$0xf]
  %v5171 = vld [vmem:[%s1933 + $0x24] sm:$0xf]
  %v5172 = vld [vmem:[%s1933 + $0x28] sm:$0xf]
  %v5173 = vld [vmem:[%s1933 + $0x2c] sm:$0xf]
  %v5174 = vld [vmem:[%s1933 + $0x30] sm:$0xf]
  %v5175 = vld [vmem:[%s1933 + $0x34] sm:$0xf]
  %v5176 = vld [vmem:[%s1933 + $0x38] sm:$0xf]
  %v5177 = vld [vmem:[%s1933 + $0x3c] sm:$0xf]
  %v5178 = vld [vmem:[%s1933 + $0x40] sm:$0xf]
  %v5179 = vld [vmem:[%s1933 + $0x44] sm:$0xf]
  %v5180 = vld [vmem:[%s1933 + $0x48] sm:$0xf]
  %v5181 = vld [vmem:[%s1933 + $0x4c] sm:$0xf]
  %v5182 = vld [vmem:[%s1933 + $0x50] sm:$0xf]
  %v5183 = vld [vmem:[%s1933 + $0x54] sm:$0xf]
  %v5184 = vld [vmem:[%s1933 + $0x58] sm:$0xf]
  %v5185 = vld [vmem:[%s1933 + $0x5c] sm:$0xf]
  %v5186 = vld [vmem:[%s1933 + $0x60] sm:$0xf]
  %v5187 = vld [vmem:[%s1933 + $0x64] sm:$0xf]
  %v5188 = vld [vmem:[%s1933 + $0x68] sm:$0xf]
  %v5189 = vld [vmem:[%s1933 + $0x6c] sm:$0xf]
  %v5190 = vld [vmem:[%s1933 + $0x70] sm:$0xf]
  %v5191 = vld [vmem:[%s1933 + $0x74] sm:$0xf]
  %v5192 = vld [vmem:[%s1933 + $0x78] sm:$0xf]
  %v5193 = vld [vmem:[%s1933 + $0x7c] sm:$0xf]
  %v5226 = vunpack.c.l.b16 %v5162
  %v5227 = vunpack.c.l.b16 %v5163
  %v5228 = vunpack.c.l.b16 %v5164
  %v5229 = vunpack.c.l.b16 %v5165
  %v5230 = vunpack.c.l.b16 %v5166
  %v5231 = vunpack.c.l.b16 %v5167
  %v5232 = vunpack.c.l.b16 %v5168
  %v5233 = vunpack.c.l.b16 %v5169
  %v5234 = vunpack.c.l.b16 %v5170
  %v5235 = vunpack.c.l.b16 %v5171
  %v5236 = vunpack.c.l.b16 %v5172
  %v5237 = vunpack.c.l.b16 %v5173
  %v5238 = vunpack.c.l.b16 %v5174
  %v5239 = vunpack.c.l.b16 %v5175
  %v5240 = vunpack.c.l.b16 %v5176
  %v5241 = vunpack.c.l.b16 %v5177
  %v5242 = vunpack.c.l.b16 %v5178
  %v5243 = vunpack.c.l.b16 %v5179
  %v5244 = vunpack.c.l.b16 %v5180
  %v5245 = vunpack.c.l.b16 %v5181
  %v5246 = vunpack.c.l.b16 %v5182
  %v5247 = vunpack.c.l.b16 %v5183
  %v5248 = vunpack.c.l.b16 %v5184
  %v5249 = vunpack.c.l.b16 %v5185
  %v5250 = vunpack.c.l.b16 %v5186
  %v5251 = vunpack.c.l.b16 %v5187
  %v5252 = vunpack.c.l.b16 %v5188
  %v5253 = vunpack.c.l.b16 %v5189
  %v5254 = vunpack.c.l.b16 %v5190
  %v5255 = vunpack.c.l.b16 %v5191
  %v5256 = vunpack.c.l.b16 %v5192
  %v5257 = vunpack.c.l.b16 %v5193
  %v5258 = vpack.c.b16 %v5227, %v5226
  %v5259 = vpack.c.b16 %v5229, %v5228
  %v5260 = vpack.c.b16 %v5231, %v5230
  %v5261 = vpack.c.b16 %v5233, %v5232
  %v5262 = vpack.c.b16 %v5235, %v5234
  %v5263 = vpack.c.b16 %v5237, %v5236
  %v5264 = vpack.c.b16 %v5239, %v5238
  %v5265 = vpack.c.b16 %v5241, %v5240
  %v5266 = vpack.c.b16 %v5243, %v5242
  %v5267 = vpack.c.b16 %v5245, %v5244
  %v5268 = vpack.c.b16 %v5247, %v5246
  %v5269 = vpack.c.b16 %v5249, %v5248
  %v5270 = vpack.c.b16 %v5251, %v5250
  %v5271 = vpack.c.b16 %v5253, %v5252
  %v5272 = vpack.c.b16 %v5255, %v5254
  %v5273 = vpack.c.b16 %v5257, %v5256
  %5290 = vmatpush.bf16.msra.mxu0 %v5265
  %5291 = vmatpush.bf16.msra.mxu0 %v5264
  %5292 = vmatpush.bf16.msra.mxu0 %v5263
  %5293 = vmatpush.bf16.msra.mxu0 %v5262
  %5294 = vmatpush.bf16.msra.mxu0 %v5261
  %5295 = vmatpush.bf16.msra.mxu0 %v5260
  %5296 = vmatpush.bf16.msra.mxu0 %v5259
  %5297 = vmatpush.bf16.msra.mxu0 %v5258
  %5298 = vmatmul.bf16.gmra.mxu0 %v5144
  %v5299 = vpop.f32.mrf.mxu0
  %v5300 = vadd.f32 0.0, %v5299
  %v5301 = vpop.f32.mrf.mxu0
  %v5302 = vadd.f32 0.0, %v5301
  %5303 = vmatmul.bf16.gmra.mxu0 %v5146
  %v5304 = vpop.f32.mrf.mxu0
  %v5305 = vadd.f32 0.0, %v5304
  %v5306 = vpop.f32.mrf.mxu0
  %v5307 = vadd.f32 0.0, %v5306
  %5308 = vmatmul.bf16.gmra.mxu0 %v5148
  %v5309 = vpop.f32.mrf.mxu0
  %v5310 = vadd.f32 0.0, %v5309
  %v5311 = vpop.f32.mrf.mxu0
  %v5312 = vadd.f32 0.0, %v5311
  %5313 = vmatmul.bf16.gmra.mxu0 %v5151
  %v5314 = vpop.f32.mrf.mxu0
  %v5315 = vadd.f32 0.0, %v5314
  %v5316 = vpop.f32.mrf.mxu0
  %5317 = vdwg.mxu0
  %5318 = vmatpush.bf16.msra.mxu0 %v5273
  %5319 = vmatpush.bf16.msra.mxu0 %v5272
  %5320 = vmatpush.bf16.msra.mxu0 %v5271
  %5321 = vmatpush.bf16.msra.mxu0 %v5270
  %5322 = vmatpush.bf16.msra.mxu0 %v5269
  %5323 = vmatpush.bf16.msra.mxu0 %v5268
  %5324 = vmatpush.bf16.msra.mxu0 %v5267
  %5325 = vmatpush.bf16.msra.mxu0 %v5266
  %5326 = vmatmul.bf16.gmra.mxu0 %v5153
  %v5327 = vpop.f32.mrf.mxu0
  %v5328 = vadd.f32 %v5300, %v5327
  %v5329 = vpop.f32.mrf.mxu0
  %v5330 = vadd.f32 %v5302, %v5329
  %5331 = vmatmul.bf16.gmra.mxu0 %v5155
  %v5332 = vpop.f32.mrf.mxu0
  %v5333 = vadd.f32 %v5305, %v5332
  %v5334 = vpop.f32.mrf.mxu0
  %v5335 = vadd.f32 %v5307, %v5334
  %5336 = vmatmul.bf16.gmra.mxu0 %v5157
  %v5337 = vpop.f32.mrf.mxu0
  %v5338 = vadd.f32 %v5310, %v5337
  %v5339 = vpop.f32.mrf.mxu0
  %v5340 = vadd.f32 %v5312, %v5339
  %5341 = vmatmul.bf16.gmra.mxu0 %v5160
  %v5342 = vpop.f32.mrf.mxu0
  %v5343 = vadd.f32 %v5315, %v5342
  %v5344 = vpop.f32.mrf.mxu0
  %5345 = vdwg.mxu0
  %v5346 = vadd.f32 %v5137, %v5328
  %v5347 = vadd.f32 %v5138, %v5330
  %v5348 = vadd.f32 %v5139, %v5333
  %v5349 = vadd.f32 %v5140, %v5335
  %v5350 = vadd.f32 %v5141, %v5338
  %v5351 = vadd.f32 %v5142, %v5340
  %v5352 = vadd.f32 %v5143, %v5343
  %v5353 = vadd.f32 %v5346, %v2126
  %v5354 = vadd.f32 %v5347, %v2126
  %v5355 = vadd.f32 %v5348, %v2126
  %v5356 = vadd.f32 %v5349, %v2126
  %v5357 = vadd.f32 %v5350, %v2126
  %v5358 = vadd.f32 %v5351, %v2126
  %v5359 = vadd.f32 %v5352, %v2126
  %v5360 = vpack.c.bf16 %v5353, %v5353
  %v5361 = vpack.c.bf16 %v5354, %v5354
  %v5362 = vpack.c.bf16 %v5355, %v5355
  %v5363 = vpack.c.bf16 %v5356, %v5356
  %v5364 = vpack.c.bf16 %v5357, %v5357
  %v5365 = vpack.c.bf16 %v5358, %v5358
  %v5366 = vpack.c.bf16 %v5359, %v5359
  %5367 = vst [vmem:[%s5 + $0x54] sm:$0xf] %v5360
  %5368 = vst [vmem:[%s5 + $0x58] sm:$0xf] %v5361
  %5369 = vst [vmem:[%s5 + $0x5c] sm:$0xf] %v5362
  %5370 = vst [vmem:[%s5 + $0x60] sm:$0xf] %v5363
  %5371 = vst [vmem:[%s5 + $0x64] sm:$0xf] %v5364
  %5372 = vst [vmem:[%s5 + $0x68] sm:$0xf] %v5365
  %5373 = vst [vmem:[%s5 + $0x6c] sm:$0xf] %v5366
  %v5374 = vmul.f32 %v5353, %v1160
  %v5375 = vmul.f32 %v5354, %v1161
  %v5376 = vmul.f32 %v5355, %v1162
  %v5377 = vmul.f32 %v5356, %v1163
  %v5378 = vmul.f32 %v5357, %v1164
  %v5379 = vmul.f32 %v5358, %v1165
  %v5380 = vmul.f32 %v5359, %v1166
  %v5381 = vadd.f32 %v5374, %v5375
  %v5382 = vadd.f32 %v5381, %v5376
  %v5383 = vadd.f32 %v5382, %v5377
  %v5384 = vadd.f32 %v5383, %v5378
  %v5385 = vadd.f32 %v5384, %v5379
  %v5386 = vadd.f32 %v5385, %v5380
  %v5387 = vrot.slane %v5386, 4
  %v5388 = vadd.f32 %v5386, %v5387
  %v5389 = vrot.slane %v5388, 2
  %v5390 = vadd.f32 %v5388, %v5389
  %v5391 = vrot.slane %v5390, 1
  %v5392 = vadd.f32 %v5390, %v5391
  %v5393 = vadd.f32 %v4318, %v5392
  %v5394 = vmul.f32 %v5374, %v5353
  %v5395 = vmul.f32 %v5375, %v5354
  %v5396 = vmul.f32 %v5376, %v5355
  %v5397 = vmul.f32 %v5377, %v5356
  %v5398 = vmul.f32 %v5378, %v5357
  %v5399 = vmul.f32 %v5379, %v5358
  %v5400 = vmul.f32 %v5380, %v5359
  %v5401 = vadd.f32 %v5394, %v5395
  %v5402 = vadd.f32 %v5401, %v5396
  %v5403 = vadd.f32 %v5402, %v5397
  %v5404 = vadd.f32 %v5403, %v5398
  %v5405 = vadd.f32 %v5404, %v5399
  %v5406 = vadd.f32 %v5405, %v5400
  %v5407 = vrot.slane %v5406, 4
  %v5408 = vadd.f32 %v5406, %v5407
  %v5409 = vrot.slane %v5408, 2
  %v5410 = vadd.f32 %v5408, %v5409
  %v5411 = vrot.slane %v5410, 1
  %v5412 = vadd.f32 %v5410, %v5411
  %v5413 = vadd.f32 %v4338, %v5412
  %v5414 = vld [vmem:[#allocation2 + $0xe0] sm:$0xf]
  %v5415 = vld [vmem:[#allocation2 + $0xe8] sm:$0xf]
  %v5416 = vld [vmem:[#allocation2 + $0xf0] sm:$0xf]
  %v5417 = vld [vmem:[#allocation2 + $0xf8] sm:$0xf]
  %v5418 = vld [vmem:[#allocation2 + $0x100] sm:$0xf]
  %v5419 = vld [vmem:[#allocation2 + $0x108] sm:$0xf]
  %v5420 = vld [vmem:[#allocation2 + $0x110] sm:$0xf]
  %v5427 = vunpack.c.l.b16 %v5415
  %v5428 = vunpack.c.l.b16 %v5416
  %v5429 = vunpack.c.l.b16 %v5417
  %v5430 = vunpack.c.l.b16 %v5418
  %v5431 = vunpack.c.l.b16 %v5419
  %v5432 = vunpack.c.l.b16 %v5420
  %v5433 = vpack.c.b16 %v5428, %v5427
  %v5434 = vpack.c.b16 %v5430, %v5429
  %v5435 = vpack.c.b16 %v5432, %v5431
  %v5436 = vld [vmem:[#allocation2 + $0x118] sm:$0xf]
  %v5437 = vld [vmem:[#allocation2 + $0x120] sm:$0xf]
  %v5438 = vld [vmem:[#allocation2 + $0x128] sm:$0xf]
  %v5439 = vld [vmem:[#allocation2 + $0x130] sm:$0xf]
  %v5440 = vld [vmem:[#allocation2 + $0x138] sm:$0xf]
  %v5441 = vld [vmem:[#allocation2 + $0x140] sm:$0xf]
  %v5442 = vld [vmem:[#allocation2 + $0x148] sm:$0xf]
  %v5449 = vunpack.c.l.b16 %v5437
  %v5450 = vunpack.c.l.b16 %v5438
  %v5451 = vunpack.c.l.b16 %v5439
  %v5452 = vunpack.c.l.b16 %v5440
  %v5453 = vunpack.c.l.b16 %v5441
  %v5454 = vunpack.c.l.b16 %v5442
  %v5455 = vpack.c.b16 %v5450, %v5449
  %v5456 = vpack.c.b16 %v5452, %v5451
  %v5457 = vpack.c.b16 %v5454, %v5453
  %v5459 = vunpack.c.l.b16 %v5414
  %v5460 = vpack.c.b16 %v5459, %v5459
  %v5461 = vpack.c.b16 %v5431, %v5431
  %5462 = vrot.lane.b32.xlu0 %v5460, 64
  %v5463 = vpop.permute.xlu0 %5462
  %5464 = vrot.lane.b32.xlu0 %v5433, 64
  %v5465 = vpop.permute.xlu0 %5464
  %5466 = vrot.lane.b32.xlu0 %v5434, 64
  %v5467 = vpop.permute.xlu0 %5466
  %5468 = vrot.lane.b32.xlu0 %v5461, 64
  %v5469 = vpop.permute.xlu0 %5468
  %v5471 = vsel %vm1223, 0, %v5463
  %v5473 = vunpack.c.l.b16 %v5436
  %v5474 = vpack.c.b16 %v5473, %v5473
  %v5475 = vpack.c.b16 %v5453, %v5453
  %5476 = vrot.lane.b32.xlu0 %v5474, 64
  %v5477 = vpop.permute.xlu0 %5476
  %5478 = vrot.lane.b32.xlu0 %v5455, 64
  %v5479 = vpop.permute.xlu0 %5478
  %5480 = vrot.lane.b32.xlu0 %v5456, 64
  %v5481 = vpop.permute.xlu0 %5480
  %5482 = vrot.lane.b32.xlu0 %v5475, 64
  %v5483 = vpop.permute.xlu0 %5482
  %v5485 = vsel %vm1223, 0, %v5477
  %v5486 = vld [vmem:[#allocation2 + $0xac] sm:$0xf]
  %v5487 = vld [vmem:[#allocation2 + $0xb4] sm:$0xf]
  %v5488 = vld [vmem:[#allocation2 + $0xbc] sm:$0xf]
  %v5489 = vld [vmem:[#allocation2 + $0xc4] sm:$0xf]
  %v5490 = vld [vmem:[#allocation2 + $0xcc] sm:$0xf]
  %v5491 = vld [vmem:[#allocation2 + $0xd4] sm:$0xf]
  %v5492 = vld [vmem:[#allocation2 + $0xdc] sm:$0xf]
  %v5499 = vunpack.c.l.b16 %v5487
  %v5500 = vunpack.c.l.b16 %v5488
  %v5501 = vunpack.c.l.b16 %v5489
  %v5502 = vunpack.c.l.b16 %v5490
  %v5503 = vunpack.c.l.b16 %v5491
  %v5504 = vunpack.c.l.b16 %v5492
  %v5505 = vpack.c.b16 %v5500, %v5499
  %v5506 = vpack.c.b16 %v5502, %v5501
  %v5507 = vpack.c.b16 %v5504, %v5503
  %v5508 = vld [vmem:[#allocation2 + $0xe4] sm:$0xf]
  %v5509 = vld [vmem:[#allocation2 + $0xec] sm:$0xf]
  %v5510 = vld [vmem:[#allocation2 + $0xf4] sm:$0xf]
  %v5511 = vld [vmem:[#allocation2 + $0xfc] sm:$0xf]
  %v5512 = vld [vmem:[#allocation2 + $0x104] sm:$0xf]
  %v5513 = vld [vmem:[#allocation2 + $0x10c] sm:$0xf]
  %v5514 = vld [vmem:[#allocation2 + $0x114] sm:$0xf]
  %v5521 = vunpack.c.l.b16 %v5509
  %v5522 = vunpack.c.l.b16 %v5510
  %v5523 = vunpack.c.l.b16 %v5511
  %v5524 = vunpack.c.l.b16 %v5512
  %v5525 = vunpack.c.l.b16 %v5513
  %v5526 = vunpack.c.l.b16 %v5514
  %v5527 = vpack.c.b16 %v5522, %v5521
  %v5528 = vpack.c.b16 %v5524, %v5523
  %v5529 = vpack.c.b16 %v5526, %v5525
  %v5531 = vunpack.c.l.b16 %v5486
  %v5532 = vpack.c.b16 %v5531, %v5531
  %v5533 = vpack.c.b16 %v5503, %v5503
  %5534 = vrot.lane.b32.xlu0 %v5532, 64
  %v5535 = vpop.permute.xlu0 %5534
  %5536 = vrot.lane.b32.xlu0 %v5505, 64
  %v5537 = vpop.permute.xlu0 %5536
  %5538 = vrot.lane.b32.xlu0 %v5506, 64
  %v5539 = vpop.permute.xlu0 %5538
  %5540 = vrot.lane.b32.xlu0 %v5533, 64
  %v5541 = vpop.permute.xlu0 %5540
  %v5543 = vsel %vm1223, 0, %v5535
  %v5545 = vunpack.c.l.b16 %v5508
  %v5546 = vpack.c.b16 %v5545, %v5545
  %v5547 = vpack.c.b16 %v5525, %v5525
  %5548 = vrot.lane.b32.xlu0 %v5546, 64
  %v5549 = vpop.permute.xlu0 %5548
  %5550 = vrot.lane.b32.xlu0 %v5527, 64
  %v5551 = vpop.permute.xlu0 %5550
  %5552 = vrot.lane.b32.xlu0 %v5528, 64
  %v5553 = vpop.permute.xlu0 %5552
  %5554 = vrot.lane.b32.xlu0 %v5547, 64
  %v5555 = vpop.permute.xlu0 %5554
  %v5557 = vsel %vm1223, 0, %v5549
  %v5558 = vpack.c.b16 %v5427, %v5459
  %v5559 = vpack.c.b16 %v5429, %v5428
  %v5560 = vpack.c.b16 %v5431, %v5430
  %v5561 = vpack.c.b16 %v5432, %v5432
  %5562 = vrot.lane.b32.xlu0 %v5435, 64
  %v5563 = vpop.permute.xlu0 %5562
  %v5564 = vpack.c.b16 %v5449, %v5473
  %v5565 = vpack.c.b16 %v5451, %v5450
  %v5566 = vpack.c.b16 %v5453, %v5452
  %v5567 = vpack.c.b16 %v5454, %v5454
  %5568 = vrot.lane.b32.xlu0 %v5457, 64
  %v5569 = vpop.permute.xlu0 %5568
  %v5572 = vsel %vm103, %v5558, %v5465
  %v5576 = vsel %vm103, %v5559, %v5467
  %v5580 = vsel %vm103, %v5560, %v5563
  %v5583 = vsel %vm103, %v5561, %v1285
  %v5587 = vsel %vm103, %v5564, %v5479
  %v5591 = vsel %vm103, %v5565, %v5481
  %v5595 = vsel %vm103, %v5566, %v5569
  %v5598 = vsel %vm103, %v5567, %v1285
  %v5600 = vld [vmem:[%s3] sm:$0xf]
  %v5601 = vld [vmem:[%s3 + $0x4] sm:$0xf]
  %v5602 = vld [vmem:[%s3 + $0x8] sm:$0xf]
  %v5603 = vld [vmem:[%s3 + $0xc] sm:$0xf]
  %v5604 = vld [vmem:[%s3 + $0x10] sm:$0xf]
  %v5605 = vld [vmem:[%s3 + $0x14] sm:$0xf]
  %v5606 = vld [vmem:[%s3 + $0x18] sm:$0xf]
  %v5607 = vld [vmem:[%s3 + $0x1c] sm:$0xf]
  %v5608 = vld [vmem:[%s3 + $0x20] sm:$0xf]
  %v5609 = vld [vmem:[%s3 + $0x24] sm:$0xf]
  %v5610 = vld [vmem:[%s3 + $0x28] sm:$0xf]
  %v5611 = vld [vmem:[%s3 + $0x2c] sm:$0xf]
  %v5612 = vld [vmem:[%s3 + $0x30] sm:$0xf]
  %v5613 = vld [vmem:[%s3 + $0x34] sm:$0xf]
  %v5614 = vld [vmem:[%s3 + $0x38] sm:$0xf]
  %v5615 = vld [vmem:[%s3 + $0x3c] sm:$0xf]
  %v5616 = vld [vmem:[%s3 + $0x40] sm:$0xf]
  %v5617 = vld [vmem:[%s3 + $0x44] sm:$0xf]
  %v5618 = vld [vmem:[%s3 + $0x48] sm:$0xf]
  %v5619 = vld [vmem:[%s3 + $0x4c] sm:$0xf]
  %v5620 = vld [vmem:[%s3 + $0x50] sm:$0xf]
  %v5621 = vld [vmem:[%s3 + $0x54] sm:$0xf]
  %v5622 = vld [vmem:[%s3 + $0x58] sm:$0xf]
  %v5623 = vld [vmem:[%s3 + $0x5c] sm:$0xf]
  %v5624 = vld [vmem:[%s3 + $0x60] sm:$0xf]
  %v5625 = vld [vmem:[%s3 + $0x64] sm:$0xf]
  %v5626 = vld [vmem:[%s3 + $0x68] sm:$0xf]
  %v5627 = vld [vmem:[%s3 + $0x6c] sm:$0xf]
  %v5628 = vld [vmem:[%s3 + $0x70] sm:$0xf]
  %v5629 = vld [vmem:[%s3 + $0x74] sm:$0xf]
  %v5630 = vld [vmem:[%s3 + $0x78] sm:$0xf]
  %v5631 = vld [vmem:[%s3 + $0x7c] sm:$0xf]
  %v5632 = vsel %vm103, %v5471, %v5558
  %v5634 = vsel %vm103, %v5465, %v5559
  %v5636 = vsel %vm103, %v5467, %v5560
  %v5639 = vsel %vm103, %v5469, %v5561
  %v5641 = vsel %vm103, %v5485, %v5564
  %v5643 = vsel %vm103, %v5479, %v5565
  %v5645 = vsel %vm103, %v5481, %v5566
  %v5648 = vsel %vm103, %v5483, %v5567
  %v5650 = vld [vmem:[%s1373] sm:$0xf]
  %v5651 = vld [vmem:[%s1373 + $0x4] sm:$0xf]
  %v5652 = vld [vmem:[%s1373 + $0x8] sm:$0xf]
  %v5653 = vld [vmem:[%s1373 + $0xc] sm:$0xf]
  %v5654 = vld [vmem:[%s1373 + $0x10] sm:$0xf]
  %v5655 = vld [vmem:[%s1373 + $0x14] sm:$0xf]
  %v5656 = vld [vmem:[%s1373 + $0x18] sm:$0xf]
  %v5657 = vld [vmem:[%s1373 + $0x1c] sm:$0xf]
  %v5658 = vld [vmem:[%s1373 + $0x20] sm:$0xf]
  %v5659 = vld [vmem:[%s1373 + $0x24] sm:$0xf]
  %v5660 = vld [vmem:[%s1373 + $0x28] sm:$0xf]
  %v5661 = vld [vmem:[%s1373 + $0x2c] sm:$0xf]
  %v5662 = vld [vmem:[%s1373 + $0x30] sm:$0xf]
  %v5663 = vld [vmem:[%s1373 + $0x34] sm:$0xf]
  %v5664 = vld [vmem:[%s1373 + $0x38] sm:$0xf]
  %v5665 = vld [vmem:[%s1373 + $0x3c] sm:$0xf]
  %v5666 = vld [vmem:[%s1373 + $0x40] sm:$0xf]
  %v5667 = vld [vmem:[%s1373 + $0x44] sm:$0xf]
  %v5668 = vld [vmem:[%s1373 + $0x48] sm:$0xf]
  %v5669 = vld [vmem:[%s1373 + $0x4c] sm:$0xf]
  %v5670 = vld [vmem:[%s1373 + $0x50] sm:$0xf]
  %v5671 = vld [vmem:[%s1373 + $0x54] sm:$0xf]
  %v5672 = vld [vmem:[%s1373 + $0x58] sm:$0xf]
  %v5673 = vld [vmem:[%s1373 + $0x5c] sm:$0xf]
  %v5674 = vld [vmem:[%s1373 + $0x60] sm:$0xf]
  %v5675 = vld [vmem:[%s1373 + $0x64] sm:$0xf]
  %v5676 = vld [vmem:[%s1373 + $0x68] sm:$0xf]
  %v5677 = vld [vmem:[%s1373 + $0x6c] sm:$0xf]
  %v5678 = vld [vmem:[%s1373 + $0x70] sm:$0xf]
  %v5679 = vld [vmem:[%s1373 + $0x74] sm:$0xf]
  %v5680 = vld [vmem:[%s1373 + $0x78] sm:$0xf]
  %v5681 = vld [vmem:[%s1373 + $0x7c] sm:$0xf]
  %v5714 = vunpack.c.l.b16 %v5650
  %v5715 = vunpack.c.l.b16 %v5651
  %v5716 = vunpack.c.l.b16 %v5652
  %v5717 = vunpack.c.l.b16 %v5653
  %v5718 = vunpack.c.l.b16 %v5654
  %v5719 = vunpack.c.l.b16 %v5655
  %v5720 = vunpack.c.l.b16 %v5656
  %v5721 = vunpack.c.l.b16 %v5657
  %v5722 = vunpack.c.l.b16 %v5658
  %v5723 = vunpack.c.l.b16 %v5659
  %v5724 = vunpack.c.l.b16 %v5660
  %v5725 = vunpack.c.l.b16 %v5661
  %v5726 = vunpack.c.l.b16 %v5662
  %v5727 = vunpack.c.l.b16 %v5663
  %v5728 = vunpack.c.l.b16 %v5664
  %v5729 = vunpack.c.l.b16 %v5665
  %v5730 = vunpack.c.l.b16 %v5666
  %v5731 = vunpack.c.l.b16 %v5667
  %v5732 = vunpack.c.l.b16 %v5668
  %v5733 = vunpack.c.l.b16 %v5669
  %v5734 = vunpack.c.l.b16 %v5670
  %v5735 = vunpack.c.l.b16 %v5671
  %v5736 = vunpack.c.l.b16 %v5672
  %v5737 = vunpack.c.l.b16 %v5673
  %v5738 = vunpack.c.l.b16 %v5674
  %v5739 = vunpack.c.l.b16 %v5675
  %v5740 = vunpack.c.l.b16 %v5676
  %v5741 = vunpack.c.l.b16 %v5677
  %v5742 = vunpack.c.l.b16 %v5678
  %v5743 = vunpack.c.l.b16 %v5679
  %v5744 = vunpack.c.l.b16 %v5680
  %v5745 = vunpack.c.l.b16 %v5681
  %v5746 = vpack.c.b16 %v5715, %v5714
  %v5747 = vpack.c.b16 %v5717, %v5716
  %v5748 = vpack.c.b16 %v5719, %v5718
  %v5749 = vpack.c.b16 %v5721, %v5720
  %v5750 = vpack.c.b16 %v5723, %v5722
  %v5751 = vpack.c.b16 %v5725, %v5724
  %v5752 = vpack.c.b16 %v5727, %v5726
  %v5753 = vpack.c.b16 %v5729, %v5728
  %v5754 = vpack.c.b16 %v5731, %v5730
  %v5755 = vpack.c.b16 %v5733, %v5732
  %v5756 = vpack.c.b16 %v5735, %v5734
  %v5757 = vpack.c.b16 %v5737, %v5736
  %v5758 = vpack.c.b16 %v5739, %v5738
  %v5759 = vpack.c.b16 %v5741, %v5740
  %v5760 = vpack.c.b16 %v5743, %v5742
  %v5761 = vpack.c.b16 %v5745, %v5744
  %5778 = vmatpush.bf16.msra.mxu0 %v5753
  %5779 = vmatpush.bf16.msra.mxu0 %v5752
  %5780 = vmatpush.bf16.msra.mxu0 %v5751
  %5781 = vmatpush.bf16.msra.mxu0 %v5750
  %5782 = vmatpush.bf16.msra.mxu0 %v5749
  %5783 = vmatpush.bf16.msra.mxu0 %v5748
  %5784 = vmatpush.bf16.msra.mxu0 %v5747
  %5785 = vmatpush.bf16.msra.mxu0 %v5746
  %5786 = vmatmul.bf16.gmra.mxu0 %v5632
  %v5787 = vpop.f32.mrf.mxu0
  %v5788 = vadd.f32 0.0, %v5787
  %v5789 = vpop.f32.mrf.mxu0
  %v5790 = vadd.f32 0.0, %v5789
  %5791 = vmatmul.bf16.gmra.mxu0 %v5634
  %v5792 = vpop.f32.mrf.mxu0
  %v5793 = vadd.f32 0.0, %v5792
  %v5794 = vpop.f32.mrf.mxu0
  %v5795 = vadd.f32 0.0, %v5794
  %5796 = vmatmul.bf16.gmra.mxu0 %v5636
  %v5797 = vpop.f32.mrf.mxu0
  %v5798 = vadd.f32 0.0, %v5797
  %v5799 = vpop.f32.mrf.mxu0
  %v5800 = vadd.f32 0.0, %v5799
  %5801 = vmatmul.bf16.gmra.mxu0 %v5639
  %v5802 = vpop.f32.mrf.mxu0
  %v5803 = vadd.f32 0.0, %v5802
  %v5804 = vpop.f32.mrf.mxu0
  %5805 = vdwg.mxu0
  %5806 = vmatpush.bf16.msra.mxu0 %v5761
  %5807 = vmatpush.bf16.msra.mxu0 %v5760
  %5808 = vmatpush.bf16.msra.mxu0 %v5759
  %5809 = vmatpush.bf16.msra.mxu0 %v5758
  %5810 = vmatpush.bf16.msra.mxu0 %v5757
  %5811 = vmatpush.bf16.msra.mxu0 %v5756
  %5812 = vmatpush.bf16.msra.mxu0 %v5755
  %5813 = vmatpush.bf16.msra.mxu0 %v5754
  %5814 = vmatmul.bf16.gmra.mxu0 %v5641
  %v5815 = vpop.f32.mrf.mxu0
  %v5816 = vadd.f32 %v5788, %v5815
  %v5817 = vpop.f32.mrf.mxu0
  %v5818 = vadd.f32 %v5790, %v5817
  %5819 = vmatmul.bf16.gmra.mxu0 %v5643
  %v5820 = vpop.f32.mrf.mxu0
  %v5821 = vadd.f32 %v5793, %v5820
  %v5822 = vpop.f32.mrf.mxu0
  %v5823 = vadd.f32 %v5795, %v5822
  %5824 = vmatmul.bf16.gmra.mxu0 %v5645
  %v5825 = vpop.f32.mrf.mxu0
  %v5826 = vadd.f32 %v5798, %v5825
  %v5827 = vpop.f32.mrf.mxu0
  %v5828 = vadd.f32 %v5800, %v5827
  %5829 = vmatmul.bf16.gmra.mxu0 %v5648
  %v5830 = vpop.f32.mrf.mxu0
  %v5831 = vadd.f32 %v5803, %v5830
  %v5832 = vpop.f32.mrf.mxu0
  %5833 = vdwg.mxu0
  %v5866 = vunpack.c.l.b16 %v5600
  %v5867 = vunpack.c.l.b16 %v5601
  %v5868 = vunpack.c.l.b16 %v5602
  %v5869 = vunpack.c.l.b16 %v5603
  %v5870 = vunpack.c.l.b16 %v5604
  %v5871 = vunpack.c.l.b16 %v5605
  %v5872 = vunpack.c.l.b16 %v5606
  %v5873 = vunpack.c.l.b16 %v5607
  %v5874 = vunpack.c.l.b16 %v5608
  %v5875 = vunpack.c.l.b16 %v5609
  %v5876 = vunpack.c.l.b16 %v5610
  %v5877 = vunpack.c.l.b16 %v5611
  %v5878 = vunpack.c.l.b16 %v5612
  %v5879 = vunpack.c.l.b16 %v5613
  %v5880 = vunpack.c.l.b16 %v5614
  %v5881 = vunpack.c.l.b16 %v5615
  %v5882 = vunpack.c.l.b16 %v5616
  %v5883 = vunpack.c.l.b16 %v5617
  %v5884 = vunpack.c.l.b16 %v5618
  %v5885 = vunpack.c.l.b16 %v5619
  %v5886 = vunpack.c.l.b16 %v5620
  %v5887 = vunpack.c.l.b16 %v5621
  %v5888 = vunpack.c.l.b16 %v5622
  %v5889 = vunpack.c.l.b16 %v5623
  %v5890 = vunpack.c.l.b16 %v5624
  %v5891 = vunpack.c.l.b16 %v5625
  %v5892 = vunpack.c.l.b16 %v5626
  %v5893 = vunpack.c.l.b16 %v5627
  %v5894 = vunpack.c.l.b16 %v5628
  %v5895 = vunpack.c.l.b16 %v5629
  %v5896 = vunpack.c.l.b16 %v5630
  %v5897 = vunpack.c.l.b16 %v5631
  %v5898 = vpack.c.b16 %v5867, %v5866
  %v5899 = vpack.c.b16 %v5869, %v5868
  %v5900 = vpack.c.b16 %v5871, %v5870
  %v5901 = vpack.c.b16 %v5873, %v5872
  %v5902 = vpack.c.b16 %v5875, %v5874
  %v5903 = vpack.c.b16 %v5877, %v5876
  %v5904 = vpack.c.b16 %v5879, %v5878
  %v5905 = vpack.c.b16 %v5881, %v5880
  %v5906 = vpack.c.b16 %v5883, %v5882
  %v5907 = vpack.c.b16 %v5885, %v5884
  %v5908 = vpack.c.b16 %v5887, %v5886
  %v5909 = vpack.c.b16 %v5889, %v5888
  %v5910 = vpack.c.b16 %v5891, %v5890
  %v5911 = vpack.c.b16 %v5893, %v5892
  %v5912 = vpack.c.b16 %v5895, %v5894
  %v5913 = vpack.c.b16 %v5897, %v5896
  %5930 = vmatpush.bf16.msra.mxu0 %v5905
  %5931 = vmatpush.bf16.msra.mxu0 %v5904
  %5932 = vmatpush.bf16.msra.mxu0 %v5903
  %5933 = vmatpush.bf16.msra.mxu0 %v5902
  %5934 = vmatpush.bf16.msra.mxu0 %v5901
  %5935 = vmatpush.bf16.msra.mxu0 %v5900
  %5936 = vmatpush.bf16.msra.mxu0 %v5899
  %5937 = vmatpush.bf16.msra.mxu0 %v5898
  %5938 = vmatmul.bf16.gmra.mxu0 %v5572
  %v5939 = vpop.f32.mrf.mxu0
  %v5940 = vadd.f32 %v5816, %v5939
  %v5941 = vpop.f32.mrf.mxu0
  %v5942 = vadd.f32 %v5818, %v5941
  %5943 = vmatmul.bf16.gmra.mxu0 %v5576
  %v5944 = vpop.f32.mrf.mxu0
  %v5945 = vadd.f32 %v5821, %v5944
  %v5946 = vpop.f32.mrf.mxu0
  %v5947 = vadd.f32 %v5823, %v5946
  %5948 = vmatmul.bf16.gmra.mxu0 %v5580
  %v5949 = vpop.f32.mrf.mxu0
  %v5950 = vadd.f32 %v5826, %v5949
  %v5951 = vpop.f32.mrf.mxu0
  %v5952 = vadd.f32 %v5828, %v5951
  %5953 = vmatmul.bf16.gmra.mxu0 %v5583
  %v5954 = vpop.f32.mrf.mxu0
  %v5955 = vadd.f32 %v5831, %v5954
  %v5956 = vpop.f32.mrf.mxu0
  %5957 = vdwg.mxu0
  %5958 = vmatpush.bf16.msra.mxu0 %v5913
  %5959 = vmatpush.bf16.msra.mxu0 %v5912
  %5960 = vmatpush.bf16.msra.mxu0 %v5911
  %5961 = vmatpush.bf16.msra.mxu0 %v5910
  %5962 = vmatpush.bf16.msra.mxu0 %v5909
  %5963 = vmatpush.bf16.msra.mxu0 %v5908
  %5964 = vmatpush.bf16.msra.mxu0 %v5907
  %5965 = vmatpush.bf16.msra.mxu0 %v5906
  %5966 = vmatmul.bf16.gmra.mxu0 %v5587
  %v5967 = vpop.f32.mrf.mxu0
  %v5968 = vadd.f32 %v5940, %v5967
  %v5969 = vpop.f32.mrf.mxu0
  %v5970 = vadd.f32 %v5942, %v5969
  %5971 = vmatmul.bf16.gmra.mxu0 %v5591
  %v5972 = vpop.f32.mrf.mxu0
  %v5973 = vadd.f32 %v5945, %v5972
  %v5974 = vpop.f32.mrf.mxu0
  %v5975 = vadd.f32 %v5947, %v5974
  %5976 = vmatmul.bf16.gmra.mxu0 %v5595
  %v5977 = vpop.f32.mrf.mxu0
  %v5978 = vadd.f32 %v5950, %v5977
  %v5979 = vpop.f32.mrf.mxu0
  %v5980 = vadd.f32 %v5952, %v5979
  %5981 = vmatmul.bf16.gmra.mxu0 %v5598
  %v5982 = vpop.f32.mrf.mxu0
  %v5983 = vadd.f32 %v5955, %v5982
  %v5984 = vpop.f32.mrf.mxu0
  %5985 = vdwg.mxu0
  %v5986 = vpack.c.b16 %v5499, %v5531
  %v5987 = vpack.c.b16 %v5501, %v5500
  %v5988 = vpack.c.b16 %v5503, %v5502
  %v5989 = vpack.c.b16 %v5504, %v5504
  %5990 = vrot.lane.b32.xlu0 %v5507, 64
  %v5991 = vpop.permute.xlu0 %5990
  %v5992 = vpack.c.b16 %v5521, %v5545
  %v5993 = vpack.c.b16 %v5523, %v5522
  %v5994 = vpack.c.b16 %v5525, %v5524
  %v5995 = vpack.c.b16 %v5526, %v5526
  %5996 = vrot.lane.b32.xlu0 %v5529, 64
  %v5997 = vpop.permute.xlu0 %5996
  %v6000 = vsel %vm103, %v5986, %v5537
  %v6004 = vsel %vm103, %v5987, %v5539
  %v6008 = vsel %vm103, %v5988, %v5991
  %v6011 = vsel %vm103, %v5989, %v1285
  %v6015 = vsel %vm103, %v5992, %v5551
  %v6019 = vsel %vm103, %v5993, %v5553
  %v6023 = vsel %vm103, %v5994, %v5997
  %v6026 = vsel %vm103, %v5995, %v1285
  %v6028 = vld [vmem:[%s1732] sm:$0xf]
  %v6029 = vld [vmem:[%s1732 + $0x4] sm:$0xf]
  %v6030 = vld [vmem:[%s1732 + $0x8] sm:$0xf]
  %v6031 = vld [vmem:[%s1732 + $0xc] sm:$0xf]
  %v6032 = vld [vmem:[%s1732 + $0x10] sm:$0xf]
  %v6033 = vld [vmem:[%s1732 + $0x14] sm:$0xf]
  %v6034 = vld [vmem:[%s1732 + $0x18] sm:$0xf]
  %v6035 = vld [vmem:[%s1732 + $0x1c] sm:$0xf]
  %v6036 = vld [vmem:[%s1732 + $0x20] sm:$0xf]
  %v6037 = vld [vmem:[%s1732 + $0x24] sm:$0xf]
  %v6038 = vld [vmem:[%s1732 + $0x28] sm:$0xf]
  %v6039 = vld [vmem:[%s1732 + $0x2c] sm:$0xf]
  %v6040 = vld [vmem:[%s1732 + $0x30] sm:$0xf]
  %v6041 = vld [vmem:[%s1732 + $0x34] sm:$0xf]
  %v6042 = vld [vmem:[%s1732 + $0x38] sm:$0xf]
  %v6043 = vld [vmem:[%s1732 + $0x3c] sm:$0xf]
  %v6044 = vld [vmem:[%s1732 + $0x40] sm:$0xf]
  %v6045 = vld [vmem:[%s1732 + $0x44] sm:$0xf]
  %v6046 = vld [vmem:[%s1732 + $0x48] sm:$0xf]
  %v6047 = vld [vmem:[%s1732 + $0x4c] sm:$0xf]
  %v6048 = vld [vmem:[%s1732 + $0x50] sm:$0xf]
  %v6049 = vld [vmem:[%s1732 + $0x54] sm:$0xf]
  %v6050 = vld [vmem:[%s1732 + $0x58] sm:$0xf]
  %v6051 = vld [vmem:[%s1732 + $0x5c] sm:$0xf]
  %v6052 = vld [vmem:[%s1732 + $0x60] sm:$0xf]
  %v6053 = vld [vmem:[%s1732 + $0x64] sm:$0xf]
  %v6054 = vld [vmem:[%s1732 + $0x68] sm:$0xf]
  %v6055 = vld [vmem:[%s1732 + $0x6c] sm:$0xf]
  %v6056 = vld [vmem:[%s1732 + $0x70] sm:$0xf]
  %v6057 = vld [vmem:[%s1732 + $0x74] sm:$0xf]
  %v6058 = vld [vmem:[%s1732 + $0x78] sm:$0xf]
  %v6059 = vld [vmem:[%s1732 + $0x7c] sm:$0xf]
  %v6092 = vunpack.c.l.b16 %v6028
  %v6093 = vunpack.c.l.b16 %v6029
  %v6094 = vunpack.c.l.b16 %v6030
  %v6095 = vunpack.c.l.b16 %v6031
  %v6096 = vunpack.c.l.b16 %v6032
  %v6097 = vunpack.c.l.b16 %v6033
  %v6098 = vunpack.c.l.b16 %v6034
  %v6099 = vunpack.c.l.b16 %v6035
  %v6100 = vunpack.c.l.b16 %v6036
  %v6101 = vunpack.c.l.b16 %v6037
  %v6102 = vunpack.c.l.b16 %v6038
  %v6103 = vunpack.c.l.b16 %v6039
  %v6104 = vunpack.c.l.b16 %v6040
  %v6105 = vunpack.c.l.b16 %v6041
  %v6106 = vunpack.c.l.b16 %v6042
  %v6107 = vunpack.c.l.b16 %v6043
  %v6108 = vunpack.c.l.b16 %v6044
  %v6109 = vunpack.c.l.b16 %v6045
  %v6110 = vunpack.c.l.b16 %v6046
  %v6111 = vunpack.c.l.b16 %v6047
  %v6112 = vunpack.c.l.b16 %v6048
  %v6113 = vunpack.c.l.b16 %v6049
  %v6114 = vunpack.c.l.b16 %v6050
  %v6115 = vunpack.c.l.b16 %v6051
  %v6116 = vunpack.c.l.b16 %v6052
  %v6117 = vunpack.c.l.b16 %v6053
  %v6118 = vunpack.c.l.b16 %v6054
  %v6119 = vunpack.c.l.b16 %v6055
  %v6120 = vunpack.c.l.b16 %v6056
  %v6121 = vunpack.c.l.b16 %v6057
  %v6122 = vunpack.c.l.b16 %v6058
  %v6123 = vunpack.c.l.b16 %v6059
  %v6124 = vpack.c.b16 %v6093, %v6092
  %v6125 = vpack.c.b16 %v6095, %v6094
  %v6126 = vpack.c.b16 %v6097, %v6096
  %v6127 = vpack.c.b16 %v6099, %v6098
  %v6128 = vpack.c.b16 %v6101, %v6100
  %v6129 = vpack.c.b16 %v6103, %v6102
  %v6130 = vpack.c.b16 %v6105, %v6104
  %v6131 = vpack.c.b16 %v6107, %v6106
  %v6132 = vpack.c.b16 %v6109, %v6108
  %v6133 = vpack.c.b16 %v6111, %v6110
  %v6134 = vpack.c.b16 %v6113, %v6112
  %v6135 = vpack.c.b16 %v6115, %v6114
  %v6136 = vpack.c.b16 %v6117, %v6116
  %v6137 = vpack.c.b16 %v6119, %v6118
  %v6138 = vpack.c.b16 %v6121, %v6120
  %v6139 = vpack.c.b16 %v6123, %v6122
  %6156 = vmatpush.bf16.msra.mxu0 %v6131
  %6157 = vmatpush.bf16.msra.mxu0 %v6130
  %6158 = vmatpush.bf16.msra.mxu0 %v6129
  %6159 = vmatpush.bf16.msra.mxu0 %v6128
  %6160 = vmatpush.bf16.msra.mxu0 %v6127
  %6161 = vmatpush.bf16.msra.mxu0 %v6126
  %6162 = vmatpush.bf16.msra.mxu0 %v6125
  %6163 = vmatpush.bf16.msra.mxu0 %v6124
  %6164 = vmatmul.bf16.gmra.mxu0 %v6000
  %v6165 = vpop.f32.mrf.mxu0
  %v6166 = vadd.f32 0.0, %v6165
  %v6167 = vpop.f32.mrf.mxu0
  %v6168 = vadd.f32 0.0, %v6167
  %6169 = vmatmul.bf16.gmra.mxu0 %v6004
  %v6170 = vpop.f32.mrf.mxu0
  %v6171 = vadd.f32 0.0, %v6170
  %v6172 = vpop.f32.mrf.mxu0
  %v6173 = vadd.f32 0.0, %v6172
  %6174 = vmatmul.bf16.gmra.mxu0 %v6008
  %v6175 = vpop.f32.mrf.mxu0
  %v6176 = vadd.f32 0.0, %v6175
  %v6177 = vpop.f32.mrf.mxu0
  %v6178 = vadd.f32 0.0, %v6177
  %6179 = vmatmul.bf16.gmra.mxu0 %v6011
  %v6180 = vpop.f32.mrf.mxu0
  %v6181 = vadd.f32 0.0, %v6180
  %v6182 = vpop.f32.mrf.mxu0
  %6183 = vdwg.mxu0
  %6184 = vmatpush.bf16.msra.mxu0 %v6139
  %6185 = vmatpush.bf16.msra.mxu0 %v6138
  %6186 = vmatpush.bf16.msra.mxu0 %v6137
  %6187 = vmatpush.bf16.msra.mxu0 %v6136
  %6188 = vmatpush.bf16.msra.mxu0 %v6135
  %6189 = vmatpush.bf16.msra.mxu0 %v6134
  %6190 = vmatpush.bf16.msra.mxu0 %v6133
  %6191 = vmatpush.bf16.msra.mxu0 %v6132
  %6192 = vmatmul.bf16.gmra.mxu0 %v6015
  %v6193 = vpop.f32.mrf.mxu0
  %v6194 = vadd.f32 %v6166, %v6193
  %v6195 = vpop.f32.mrf.mxu0
  %v6196 = vadd.f32 %v6168, %v6195
  %6197 = vmatmul.bf16.gmra.mxu0 %v6019
  %v6198 = vpop.f32.mrf.mxu0
  %v6199 = vadd.f32 %v6171, %v6198
  %v6200 = vpop.f32.mrf.mxu0
  %v6201 = vadd.f32 %v6173, %v6200
  %6202 = vmatmul.bf16.gmra.mxu0 %v6023
  %v6203 = vpop.f32.mrf.mxu0
  %v6204 = vadd.f32 %v6176, %v6203
  %v6205 = vpop.f32.mrf.mxu0
  %v6206 = vadd.f32 %v6178, %v6205
  %6207 = vmatmul.bf16.gmra.mxu0 %v6026
  %v6208 = vpop.f32.mrf.mxu0
  %v6209 = vadd.f32 %v6181, %v6208
  %v6210 = vpop.f32.mrf.mxu0
  %6211 = vdwg.mxu0
  %v6212 = vadd.f32 %v5968, %v6194
  %v6213 = vadd.f32 %v5970, %v6196
  %v6214 = vadd.f32 %v5973, %v6199
  %v6215 = vadd.f32 %v5975, %v6201
  %v6216 = vadd.f32 %v5978, %v6204
  %v6217 = vadd.f32 %v5980, %v6206
  %v6218 = vadd.f32 %v5983, %v6209
  %v6219 = vsel %vm103, %v5543, %v5986
  %v6221 = vsel %vm103, %v5537, %v5987
  %v6223 = vsel %vm103, %v5539, %v5988
  %v6226 = vsel %vm103, %v5541, %v5989
  %v6228 = vsel %vm103, %v5557, %v5992
  %v6230 = vsel %vm103, %v5551, %v5993
  %v6232 = vsel %vm103, %v5553, %v5994
  %v6235 = vsel %vm103, %v5555, %v5995
  %v6237 = vld [vmem:[%s1933] sm:$0xf]
  %v6238 = vld [vmem:[%s1933 + $0x4] sm:$0xf]
  %v6239 = vld [vmem:[%s1933 + $0x8] sm:$0xf]
  %v6240 = vld [vmem:[%s1933 + $0xc] sm:$0xf]
  %v6241 = vld [vmem:[%s1933 + $0x10] sm:$0xf]
  %v6242 = vld [vmem:[%s1933 + $0x14] sm:$0xf]
  %v6243 = vld [vmem:[%s1933 + $0x18] sm:$0xf]
  %v6244 = vld [vmem:[%s1933 + $0x1c] sm:$0xf]
  %v6245 = vld [vmem:[%s1933 + $0x20] sm:$0xf]
  %v6246 = vld [vmem:[%s1933 + $0x24] sm:$0xf]
  %v6247 = vld [vmem:[%s1933 + $0x28] sm:$0xf]
  %v6248 = vld [vmem:[%s1933 + $0x2c] sm:$0xf]
  %v6249 = vld [vmem:[%s1933 + $0x30] sm:$0xf]
  %v6250 = vld [vmem:[%s1933 + $0x34] sm:$0xf]
  %v6251 = vld [vmem:[%s1933 + $0x38] sm:$0xf]
  %v6252 = vld [vmem:[%s1933 + $0x3c] sm:$0xf]
  %v6253 = vld [vmem:[%s1933 + $0x40] sm:$0xf]
  %v6254 = vld [vmem:[%s1933 + $0x44] sm:$0xf]
  %v6255 = vld [vmem:[%s1933 + $0x48] sm:$0xf]
  %v6256 = vld [vmem:[%s1933 + $0x4c] sm:$0xf]
  %v6257 = vld [vmem:[%s1933 + $0x50] sm:$0xf]
  %v6258 = vld [vmem:[%s1933 + $0x54] sm:$0xf]
  %v6259 = vld [vmem:[%s1933 + $0x58] sm:$0xf]
  %v6260 = vld [vmem:[%s1933 + $0x5c] sm:$0xf]
  %v6261 = vld [vmem:[%s1933 + $0x60] sm:$0xf]
  %v6262 = vld [vmem:[%s1933 + $0x64] sm:$0xf]
  %v6263 = vld [vmem:[%s1933 + $0x68] sm:$0xf]
  %v6264 = vld [vmem:[%s1933 + $0x6c] sm:$0xf]
  %v6265 = vld [vmem:[%s1933 + $0x70] sm:$0xf]
  %v6266 = vld [vmem:[%s1933 + $0x74] sm:$0xf]
  %v6267 = vld [vmem:[%s1933 + $0x78] sm:$0xf]
  %v6268 = vld [vmem:[%s1933 + $0x7c] sm:$0xf]
  %v6301 = vunpack.c.l.b16 %v6237
  %v6302 = vunpack.c.l.b16 %v6238
  %v6303 = vunpack.c.l.b16 %v6239
  %v6304 = vunpack.c.l.b16 %v6240
  %v6305 = vunpack.c.l.b16 %v6241
  %v6306 = vunpack.c.l.b16 %v6242
  %v6307 = vunpack.c.l.b16 %v6243
  %v6308 = vunpack.c.l.b16 %v6244
  %v6309 = vunpack.c.l.b16 %v6245
  %v6310 = vunpack.c.l.b16 %v6246
  %v6311 = vunpack.c.l.b16 %v6247
  %v6312 = vunpack.c.l.b16 %v6248
  %v6313 = vunpack.c.l.b16 %v6249
  %v6314 = vunpack.c.l.b16 %v6250
  %v6315 = vunpack.c.l.b16 %v6251
  %v6316 = vunpack.c.l.b16 %v6252
  %v6317 = vunpack.c.l.b16 %v6253
  %v6318 = vunpack.c.l.b16 %v6254
  %v6319 = vunpack.c.l.b16 %v6255
  %v6320 = vunpack.c.l.b16 %v6256
  %v6321 = vunpack.c.l.b16 %v6257
  %v6322 = vunpack.c.l.b16 %v6258
  %v6323 = vunpack.c.l.b16 %v6259
  %v6324 = vunpack.c.l.b16 %v6260
  %v6325 = vunpack.c.l.b16 %v6261
  %v6326 = vunpack.c.l.b16 %v6262
  %v6327 = vunpack.c.l.b16 %v6263
  %v6328 = vunpack.c.l.b16 %v6264
  %v6329 = vunpack.c.l.b16 %v6265
  %v6330 = vunpack.c.l.b16 %v6266
  %v6331 = vunpack.c.l.b16 %v6267
  %v6332 = vunpack.c.l.b16 %v6268
  %v6333 = vpack.c.b16 %v6302, %v6301
  %v6334 = vpack.c.b16 %v6304, %v6303
  %v6335 = vpack.c.b16 %v6306, %v6305
  %v6336 = vpack.c.b16 %v6308, %v6307
  %v6337 = vpack.c.b16 %v6310, %v6309
  %v6338 = vpack.c.b16 %v6312, %v6311
  %v6339 = vpack.c.b16 %v6314, %v6313
  %v6340 = vpack.c.b16 %v6316, %v6315
  %v6341 = vpack.c.b16 %v6318, %v6317
  %v6342 = vpack.c.b16 %v6320, %v6319
  %v6343 = vpack.c.b16 %v6322, %v6321
  %v6344 = vpack.c.b16 %v6324, %v6323
  %v6345 = vpack.c.b16 %v6326, %v6325
  %v6346 = vpack.c.b16 %v6328, %v6327
  %v6347 = vpack.c.b16 %v6330, %v6329
  %v6348 = vpack.c.b16 %v6332, %v6331
  %6365 = vmatpush.bf16.msra.mxu0 %v6340
  %6366 = vmatpush.bf16.msra.mxu0 %v6339
  %6367 = vmatpush.bf16.msra.mxu0 %v6338
  %6368 = vmatpush.bf16.msra.mxu0 %v6337
  %6369 = vmatpush.bf16.msra.mxu0 %v6336
  %6370 = vmatpush.bf16.msra.mxu0 %v6335
  %6371 = vmatpush.bf16.msra.mxu0 %v6334
  %6372 = vmatpush.bf16.msra.mxu0 %v6333
  %6373 = vmatmul.bf16.gmra.mxu0 %v6219
  %v6374 = vpop.f32.mrf.mxu0
  %v6375 = vadd.f32 0.0, %v6374
  %v6376 = vpop.f32.mrf.mxu0
  %v6377 = vadd.f32 0.0, %v6376
  %6378 = vmatmul.bf16.gmra.mxu0 %v6221
  %v6379 = vpop.f32.mrf.mxu0
  %v6380 = vadd.f32 0.0, %v6379
  %v6381 = vpop.f32.mrf.mxu0
  %v6382 = vadd.f32 0.0, %v6381
  %6383 = vmatmul.bf16.gmra.mxu0 %v6223
  %v6384 = vpop.f32.mrf.mxu0
  %v6385 = vadd.f32 0.0, %v6384
  %v6386 = vpop.f32.mrf.mxu0
  %v6387 = vadd.f32 0.0, %v6386
  %6388 = vmatmul.bf16.gmra.mxu0 %v6226
  %v6389 = vpop.f32.mrf.mxu0
  %v6390 = vadd.f32 0.0, %v6389
  %v6391 = vpop.f32.mrf.mxu0
  %6392 = vdwg.mxu0
  %6393 = vmatpush.bf16.msra.mxu0 %v6348
  %6394 = vmatpush.bf16.msra.mxu0 %v6347
  %6395 = vmatpush.bf16.msra.mxu0 %v6346
  %6396 = vmatpush.bf16.msra.mxu0 %v6345
  %6397 = vmatpush.bf16.msra.mxu0 %v6344
  %6398 = vmatpush.bf16.msra.mxu0 %v6343
  %6399 = vmatpush.bf16.msra.mxu0 %v6342
  %6400 = vmatpush.bf16.msra.mxu0 %v6341
  %6401 = vmatmul.bf16.gmra.mxu0 %v6228
  %v6402 = vpop.f32.mrf.mxu0
  %v6403 = vadd.f32 %v6375, %v6402
  %v6404 = vpop.f32.mrf.mxu0
  %v6405 = vadd.f32 %v6377, %v6404
  %6406 = vmatmul.bf16.gmra.mxu0 %v6230
  %v6407 = vpop.f32.mrf.mxu0
  %v6408 = vadd.f32 %v6380, %v6407
  %v6409 = vpop.f32.mrf.mxu0
  %v6410 = vadd.f32 %v6382, %v6409
  %6411 = vmatmul.bf16.gmra.mxu0 %v6232
  %v6412 = vpop.f32.mrf.mxu0
  %v6413 = vadd.f32 %v6385, %v6412
  %v6414 = vpop.f32.mrf.mxu0
  %v6415 = vadd.f32 %v6387, %v6414
  %6416 = vmatmul.bf16.gmra.mxu0 %v6235
  %v6417 = vpop.f32.mrf.mxu0
  %v6418 = vadd.f32 %v6390, %v6417
  %v6419 = vpop.f32.mrf.mxu0
  %6420 = vdwg.mxu0
  %v6421 = vadd.f32 %v6212, %v6403
  %v6422 = vadd.f32 %v6213, %v6405
  %v6423 = vadd.f32 %v6214, %v6408
  %v6424 = vadd.f32 %v6215, %v6410
  %v6425 = vadd.f32 %v6216, %v6413
  %v6426 = vadd.f32 %v6217, %v6415
  %v6427 = vadd.f32 %v6218, %v6418
  %v6428 = vadd.f32 %v6421, %v2126
  %v6429 = vadd.f32 %v6422, %v2126
  %v6430 = vadd.f32 %v6423, %v2126
  %v6431 = vadd.f32 %v6424, %v2126
  %v6432 = vadd.f32 %v6425, %v2126
  %v6433 = vadd.f32 %v6426, %v2126
  %v6434 = vadd.f32 %v6427, %v2126
  %v6435 = vpack.c.bf16 %v6428, %v6428
  %v6436 = vpack.c.bf16 %v6429, %v6429
  %v6437 = vpack.c.bf16 %v6430, %v6430
  %v6438 = vpack.c.bf16 %v6431, %v6431
  %v6439 = vpack.c.bf16 %v6432, %v6432
  %v6440 = vpack.c.bf16 %v6433, %v6433
  %v6441 = vpack.c.bf16 %v6434, %v6434
  %6442 = vst [vmem:[%s5 + $0x70] sm:$0xf] %v6435
  %6443 = vst [vmem:[%s5 + $0x74] sm:$0xf] %v6436
  %6444 = vst [vmem:[%s5 + $0x78] sm:$0xf] %v6437
  %6445 = vst [vmem:[%s5 + $0x7c] sm:$0xf] %v6438
  %6446 = vst [vmem:[%s5 + $0x80] sm:$0xf] %v6439
  %6447 = vst [vmem:[%s5 + $0x84] sm:$0xf] %v6440
  %6448 = vst [vmem:[%s5 + $0x88] sm:$0xf] %v6441
  %v6449 = vmul.f32 %v6428, %v1160
  %v6450 = vmul.f32 %v6429, %v1161
  %v6451 = vmul.f32 %v6430, %v1162
  %v6452 = vmul.f32 %v6431, %v1163
  %v6453 = vmul.f32 %v6432, %v1164
  %v6454 = vmul.f32 %v6433, %v1165
  %v6455 = vmul.f32 %v6434, %v1166
  %v6456 = vadd.f32 %v6449, %v6450
  %v6457 = vadd.f32 %v6456, %v6451
  %v6458 = vadd.f32 %v6457, %v6452
  %v6459 = vadd.f32 %v6458, %v6453
  %v6460 = vadd.f32 %v6459, %v6454
  %v6461 = vadd.f32 %v6460, %v6455
  %v6462 = vrot.slane %v6461, 4
  %v6463 = vadd.f32 %v6461, %v6462
  %v6464 = vrot.slane %v6463, 2
  %v6465 = vadd.f32 %v6463, %v6464
  %v6466 = vrot.slane %v6465, 1
  %v6467 = vadd.f32 %v6465, %v6466
  %v6468 = vadd.f32 %v5393, %v6467
  %v6469 = vmul.f32 %v6449, %v6428
  %v6470 = vmul.f32 %v6450, %v6429
  %v6471 = vmul.f32 %v6451, %v6430
  %v6472 = vmul.f32 %v6452, %v6431
  %v6473 = vmul.f32 %v6453, %v6432
  %v6474 = vmul.f32 %v6454, %v6433
  %v6475 = vmul.f32 %v6455, %v6434
  %v6476 = vadd.f32 %v6469, %v6470
  %v6477 = vadd.f32 %v6476, %v6471
  %v6478 = vadd.f32 %v6477, %v6472
  %v6479 = vadd.f32 %v6478, %v6473
  %v6480 = vadd.f32 %v6479, %v6474
  %v6481 = vadd.f32 %v6480, %v6475
  %v6482 = vrot.slane %v6481, 4
  %v6483 = vadd.f32 %v6481, %v6482
  %v6484 = vrot.slane %v6483, 2
  %v6485 = vadd.f32 %v6483, %v6484
  %v6486 = vrot.slane %v6485, 1
  %v6487 = vadd.f32 %v6485, %v6486
  %v6488 = vadd.f32 %v5413, %v6487
  %v6489 = vld [vmem:[#allocation2 + $0x118] sm:$0xf]
  %v6490 = vld [vmem:[#allocation2 + $0x120] sm:$0xf]
  %v6491 = vld [vmem:[#allocation2 + $0x128] sm:$0xf]
  %v6492 = vld [vmem:[#allocation2 + $0x130] sm:$0xf]
  %v6493 = vld [vmem:[#allocation2 + $0x138] sm:$0xf]
  %v6494 = vld [vmem:[#allocation2 + $0x140] sm:$0xf]
  %v6495 = vld [vmem:[#allocation2 + $0x148] sm:$0xf]
  %v6502 = vunpack.c.l.b16 %v6490
  %v6503 = vunpack.c.l.b16 %v6491
  %v6504 = vunpack.c.l.b16 %v6492
  %v6505 = vunpack.c.l.b16 %v6493
  %v6506 = vunpack.c.l.b16 %v6494
  %v6507 = vunpack.c.l.b16 %v6495
  %v6508 = vpack.c.b16 %v6503, %v6502
  %v6509 = vpack.c.b16 %v6505, %v6504
  %v6510 = vpack.c.b16 %v6507, %v6506
  %v6511 = vld [vmem:[#allocation2 + $0x150] sm:$0xf]
  %v6512 = vld [vmem:[#allocation2 + $0x158] sm:$0xf]
  %v6513 = vld [vmem:[#allocation2 + $0x160] sm:$0xf]
  %v6514 = vld [vmem:[#allocation2 + $0x168] sm:$0xf]
  %v6515 = vld [vmem:[#allocation2 + $0x170] sm:$0xf]
  %v6516 = vld [vmem:[#allocation2 + $0x178] sm:$0xf]
  %v6517 = vld [vmem:[#allocation2 + $0x180] sm:$0xf]
  %v6524 = vunpack.c.l.b16 %v6512
  %v6525 = vunpack.c.l.b16 %v6513
  %v6526 = vunpack.c.l.b16 %v6514
  %v6527 = vunpack.c.l.b16 %v6515
  %v6528 = vunpack.c.l.b16 %v6516
  %v6529 = vunpack.c.l.b16 %v6517
  %v6530 = vpack.c.b16 %v6525, %v6524
  %v6531 = vpack.c.b16 %v6527, %v6526
  %v6532 = vpack.c.b16 %v6529, %v6528
  %v6534 = vunpack.c.l.b16 %v6489
  %v6535 = vpack.c.b16 %v6534, %v6534
  %v6536 = vpack.c.b16 %v6506, %v6506
  %6537 = vrot.lane.b32.xlu0 %v6535, 64
  %v6538 = vpop.permute.xlu0 %6537
  %6539 = vrot.lane.b32.xlu0 %v6508, 64
  %v6540 = vpop.permute.xlu0 %6539
  %6541 = vrot.lane.b32.xlu0 %v6509, 64
  %v6542 = vpop.permute.xlu0 %6541
  %6543 = vrot.lane.b32.xlu0 %v6536, 64
  %v6544 = vpop.permute.xlu0 %6543
  %v6546 = vsel %vm1223, 0, %v6538
  %v6548 = vunpack.c.l.b16 %v6511
  %v6549 = vpack.c.b16 %v6548, %v6548
  %v6550 = vpack.c.b16 %v6528, %v6528
  %6551 = vrot.lane.b32.xlu0 %v6549, 64
  %v6552 = vpop.permute.xlu0 %6551
  %6553 = vrot.lane.b32.xlu0 %v6530, 64
  %v6554 = vpop.permute.xlu0 %6553
  %6555 = vrot.lane.b32.xlu0 %v6531, 64
  %v6556 = vpop.permute.xlu0 %6555
  %6557 = vrot.lane.b32.xlu0 %v6550, 64
  %v6558 = vpop.permute.xlu0 %6557
  %v6560 = vsel %vm1223, 0, %v6552
  %v6561 = vld [vmem:[#allocation2 + $0xe4] sm:$0xf]
  %v6562 = vld [vmem:[#allocation2 + $0xec] sm:$0xf]
  %v6563 = vld [vmem:[#allocation2 + $0xf4] sm:$0xf]
  %v6564 = vld [vmem:[#allocation2 + $0xfc] sm:$0xf]
  %v6565 = vld [vmem:[#allocation2 + $0x104] sm:$0xf]
  %v6566 = vld [vmem:[#allocation2 + $0x10c] sm:$0xf]
  %v6567 = vld [vmem:[#allocation2 + $0x114] sm:$0xf]
  %v6574 = vunpack.c.l.b16 %v6562
  %v6575 = vunpack.c.l.b16 %v6563
  %v6576 = vunpack.c.l.b16 %v6564
  %v6577 = vunpack.c.l.b16 %v6565
  %v6578 = vunpack.c.l.b16 %v6566
  %v6579 = vunpack.c.l.b16 %v6567
  %v6580 = vpack.c.b16 %v6575, %v6574
  %v6581 = vpack.c.b16 %v6577, %v6576
  %v6582 = vpack.c.b16 %v6579, %v6578
  %v6583 = vld [vmem:[#allocation2 + $0x11c] sm:$0xf]
  %v6584 = vld [vmem:[#allocation2 + $0x124] sm:$0xf]
  %v6585 = vld [vmem:[#allocation2 + $0x12c] sm:$0xf]
  %v6586 = vld [vmem:[#allocation2 + $0x134] sm:$0xf]
  %v6587 = vld [vmem:[#allocation2 + $0x13c] sm:$0xf]
  %v6588 = vld [vmem:[#allocation2 + $0x144] sm:$0xf]
  %v6589 = vld [vmem:[#allocation2 + $0x14c] sm:$0xf]
  %v6596 = vunpack.c.l.b16 %v6584
  %v6597 = vunpack.c.l.b16 %v6585
  %v6598 = vunpack.c.l.b16 %v6586
  %v6599 = vunpack.c.l.b16 %v6587
  %v6600 = vunpack.c.l.b16 %v6588
  %v6601 = vunpack.c.l.b16 %v6589
  %v6602 = vpack.c.b16 %v6597, %v6596
  %v6603 = vpack.c.b16 %v6599, %v6598
  %v6604 = vpack.c.b16 %v6601, %v6600
  %v6606 = vunpack.c.l.b16 %v6561
  %v6607 = vpack.c.b16 %v6606, %v6606
  %v6608 = vpack.c.b16 %v6578, %v6578
  %6609 = vrot.lane.b32.xlu0 %v6607, 64
  %v6610 = vpop.permute.xlu0 %6609
  %6611 = vrot.lane.b32.xlu0 %v6580, 64
  %v6612 = vpop.permute.xlu0 %6611
  %6613 = vrot.lane.b32.xlu0 %v6581, 64
  %v6614 = vpop.permute.xlu0 %6613
  %6615 = vrot.lane.b32.xlu0 %v6608, 64
  %v6616 = vpop.permute.xlu0 %6615
  %v6618 = vsel %vm1223, 0, %v6610
  %v6620 = vunpack.c.l.b16 %v6583
  %v6621 = vpack.c.b16 %v6620, %v6620
  %v6622 = vpack.c.b16 %v6600, %v6600
  %6623 = vrot.lane.b32.xlu0 %v6621, 64
  %v6624 = vpop.permute.xlu0 %6623
  %6625 = vrot.lane.b32.xlu0 %v6602, 64
  %v6626 = vpop.permute.xlu0 %6625
  %6627 = vrot.lane.b32.xlu0 %v6603, 64
  %v6628 = vpop.permute.xlu0 %6627
  %6629 = vrot.lane.b32.xlu0 %v6622, 64
  %v6630 = vpop.permute.xlu0 %6629
  %v6632 = vsel %vm1223, 0, %v6624
  %v6633 = vpack.c.b16 %v6502, %v6534
  %v6634 = vpack.c.b16 %v6504, %v6503
  %v6635 = vpack.c.b16 %v6506, %v6505
  %v6636 = vpack.c.b16 %v6507, %v6507
  %6637 = vrot.lane.b32.xlu0 %v6510, 64
  %v6638 = vpop.permute.xlu0 %6637
  %v6639 = vpack.c.b16 %v6524, %v6548
  %v6640 = vpack.c.b16 %v6526, %v6525
  %v6641 = vpack.c.b16 %v6528, %v6527
  %v6642 = vpack.c.b16 %v6529, %v6529
  %6643 = vrot.lane.b32.xlu0 %v6532, 64
  %v6644 = vpop.permute.xlu0 %6643
  %v6647 = vsel %vm103, %v6633, %v6540
  %v6651 = vsel %vm103, %v6634, %v6542
  %v6655 = vsel %vm103, %v6635, %v6638
  %v6658 = vsel %vm103, %v6636, %v1285
  %v6662 = vsel %vm103, %v6639, %v6554
  %v6666 = vsel %vm103, %v6640, %v6556
  %v6670 = vsel %vm103, %v6641, %v6644
  %v6673 = vsel %vm103, %v6642, %v1285
  %v6675 = vld [vmem:[%s3] sm:$0xf]
  %v6676 = vld [vmem:[%s3 + $0x4] sm:$0xf]
  %v6677 = vld [vmem:[%s3 + $0x8] sm:$0xf]
  %v6678 = vld [vmem:[%s3 + $0xc] sm:$0xf]
  %v6679 = vld [vmem:[%s3 + $0x10] sm:$0xf]
  %v6680 = vld [vmem:[%s3 + $0x14] sm:$0xf]
  %v6681 = vld [vmem:[%s3 + $0x18] sm:$0xf]
  %v6682 = vld [vmem:[%s3 + $0x1c] sm:$0xf]
  %v6683 = vld [vmem:[%s3 + $0x20] sm:$0xf]
  %v6684 = vld [vmem:[%s3 + $0x24] sm:$0xf]
  %v6685 = vld [vmem:[%s3 + $0x28] sm:$0xf]
  %v6686 = vld [vmem:[%s3 + $0x2c] sm:$0xf]
  %v6687 = vld [vmem:[%s3 + $0x30] sm:$0xf]
  %v6688 = vld [vmem:[%s3 + $0x34] sm:$0xf]
  %v6689 = vld [vmem:[%s3 + $0x38] sm:$0xf]
  %v6690 = vld [vmem:[%s3 + $0x3c] sm:$0xf]
  %v6691 = vld [vmem:[%s3 + $0x40] sm:$0xf]
  %v6692 = vld [vmem:[%s3 + $0x44] sm:$0xf]
  %v6693 = vld [vmem:[%s3 + $0x48] sm:$0xf]
  %v6694 = vld [vmem:[%s3 + $0x4c] sm:$0xf]
  %v6695 = vld [vmem:[%s3 + $0x50] sm:$0xf]
  %v6696 = vld [vmem:[%s3 + $0x54] sm:$0xf]
  %v6697 = vld [vmem:[%s3 + $0x58] sm:$0xf]
  %v6698 = vld [vmem:[%s3 + $0x5c] sm:$0xf]
  %v6699 = vld [vmem:[%s3 + $0x60] sm:$0xf]
  %v6700 = vld [vmem:[%s3 + $0x64] sm:$0xf]
  %v6701 = vld [vmem:[%s3 + $0x68] sm:$0xf]
  %v6702 = vld [vmem:[%s3 + $0x6c] sm:$0xf]
  %v6703 = vld [vmem:[%s3 + $0x70] sm:$0xf]
  %v6704 = vld [vmem:[%s3 + $0x74] sm:$0xf]
  %v6705 = vld [vmem:[%s3 + $0x78] sm:$0xf]
  %v6706 = vld [vmem:[%s3 + $0x7c] sm:$0xf]
  %v6707 = vsel %vm103, %v6546, %v6633
  %v6709 = vsel %vm103, %v6540, %v6634
  %v6711 = vsel %vm103, %v6542, %v6635
  %v6714 = vsel %vm103, %v6544, %v6636
  %v6716 = vsel %vm103, %v6560, %v6639
  %v6718 = vsel %vm103, %v6554, %v6640
  %v6720 = vsel %vm103, %v6556, %v6641
  %v6723 = vsel %vm103, %v6558, %v6642
  %v6725 = vld [vmem:[%s1373] sm:$0xf]
  %v6726 = vld [vmem:[%s1373 + $0x4] sm:$0xf]
  %v6727 = vld [vmem:[%s1373 + $0x8] sm:$0xf]
  %v6728 = vld [vmem:[%s1373 + $0xc] sm:$0xf]
  %v6729 = vld [vmem:[%s1373 + $0x10] sm:$0xf]
  %v6730 = vld [vmem:[%s1373 + $0x14] sm:$0xf]
  %v6731 = vld [vmem:[%s1373 + $0x18] sm:$0xf]
  %v6732 = vld [vmem:[%s1373 + $0x1c] sm:$0xf]
  %v6733 = vld [vmem:[%s1373 + $0x20] sm:$0xf]
  %v6734 = vld [vmem:[%s1373 + $0x24] sm:$0xf]
  %v6735 = vld [vmem:[%s1373 + $0x28] sm:$0xf]
  %v6736 = vld [vmem:[%s1373 + $0x2c] sm:$0xf]
  %v6737 = vld [vmem:[%s1373 + $0x30] sm:$0xf]
  %v6738 = vld [vmem:[%s1373 + $0x34] sm:$0xf]
  %v6739 = vld [vmem:[%s1373 + $0x38] sm:$0xf]
  %v6740 = vld [vmem:[%s1373 + $0x3c] sm:$0xf]
  %v6741 = vld [vmem:[%s1373 + $0x40] sm:$0xf]
  %v6742 = vld [vmem:[%s1373 + $0x44] sm:$0xf]
  %v6743 = vld [vmem:[%s1373 + $0x48] sm:$0xf]
  %v6744 = vld [vmem:[%s1373 + $0x4c] sm:$0xf]
  %v6745 = vld [vmem:[%s1373 + $0x50] sm:$0xf]
  %v6746 = vld [vmem:[%s1373 + $0x54] sm:$0xf]
  %v6747 = vld [vmem:[%s1373 + $0x58] sm:$0xf]
  %v6748 = vld [vmem:[%s1373 + $0x5c] sm:$0xf]
  %v6749 = vld [vmem:[%s1373 + $0x60] sm:$0xf]
  %v6750 = vld [vmem:[%s1373 + $0x64] sm:$0xf]
  %v6751 = vld [vmem:[%s1373 + $0x68] sm:$0xf]
  %v6752 = vld [vmem:[%s1373 + $0x6c] sm:$0xf]
  %v6753 = vld [vmem:[%s1373 + $0x70] sm:$0xf]
  %v6754 = vld [vmem:[%s1373 + $0x74] sm:$0xf]
  %v6755 = vld [vmem:[%s1373 + $0x78] sm:$0xf]
  %v6756 = vld [vmem:[%s1373 + $0x7c] sm:$0xf]
  %v6789 = vunpack.c.l.b16 %v6725
  %v6790 = vunpack.c.l.b16 %v6726
  %v6791 = vunpack.c.l.b16 %v6727
  %v6792 = vunpack.c.l.b16 %v6728
  %v6793 = vunpack.c.l.b16 %v6729
  %v6794 = vunpack.c.l.b16 %v6730
  %v6795 = vunpack.c.l.b16 %v6731
  %v6796 = vunpack.c.l.b16 %v6732
  %v6797 = vunpack.c.l.b16 %v6733
  %v6798 = vunpack.c.l.b16 %v6734
  %v6799 = vunpack.c.l.b16 %v6735
  %v6800 = vunpack.c.l.b16 %v6736
  %v6801 = vunpack.c.l.b16 %v6737
  %v6802 = vunpack.c.l.b16 %v6738
  %v6803 = vunpack.c.l.b16 %v6739
  %v6804 = vunpack.c.l.b16 %v6740
  %v6805 = vunpack.c.l.b16 %v6741
  %v6806 = vunpack.c.l.b16 %v6742
  %v6807 = vunpack.c.l.b16 %v6743
  %v6808 = vunpack.c.l.b16 %v6744
  %v6809 = vunpack.c.l.b16 %v6745
  %v6810 = vunpack.c.l.b16 %v6746
  %v6811 = vunpack.c.l.b16 %v6747
  %v6812 = vunpack.c.l.b16 %v6748
  %v6813 = vunpack.c.l.b16 %v6749
  %v6814 = vunpack.c.l.b16 %v6750
  %v6815 = vunpack.c.l.b16 %v6751
  %v6816 = vunpack.c.l.b16 %v6752
  %v6817 = vunpack.c.l.b16 %v6753
  %v6818 = vunpack.c.l.b16 %v6754
  %v6819 = vunpack.c.l.b16 %v6755
  %v6820 = vunpack.c.l.b16 %v6756
  %v6821 = vpack.c.b16 %v6790, %v6789
  %v6822 = vpack.c.b16 %v6792, %v6791
  %v6823 = vpack.c.b16 %v6794, %v6793
  %v6824 = vpack.c.b16 %v6796, %v6795
  %v6825 = vpack.c.b16 %v6798, %v6797
  %v6826 = vpack.c.b16 %v6800, %v6799
  %v6827 = vpack.c.b16 %v6802, %v6801
  %v6828 = vpack.c.b16 %v6804, %v6803
  %v6829 = vpack.c.b16 %v6806, %v6805
  %v6830 = vpack.c.b16 %v6808, %v6807
  %v6831 = vpack.c.b16 %v6810, %v6809
  %v6832 = vpack.c.b16 %v6812, %v6811
  %v6833 = vpack.c.b16 %v6814, %v6813
  %v6834 = vpack.c.b16 %v6816, %v6815
  %v6835 = vpack.c.b16 %v6818, %v6817
  %v6836 = vpack.c.b16 %v6820, %v6819
  %6853 = vmatpush.bf16.msra.mxu0 %v6828
  %6854 = vmatpush.bf16.msra.mxu0 %v6827
  %6855 = vmatpush.bf16.msra.mxu0 %v6826
  %6856 = vmatpush.bf16.msra.mxu0 %v6825
  %6857 = vmatpush.bf16.msra.mxu0 %v6824
  %6858 = vmatpush.bf16.msra.mxu0 %v6823
  %6859 = vmatpush.bf16.msra.mxu0 %v6822
  %6860 = vmatpush.bf16.msra.mxu0 %v6821
  %6861 = vmatmul.bf16.gmra.mxu0 %v6707
  %v6862 = vpop.f32.mrf.mxu0
  %v6863 = vadd.f32 0.0, %v6862
  %v6864 = vpop.f32.mrf.mxu0
  %v6865 = vadd.f32 0.0, %v6864
  %6866 = vmatmul.bf16.gmra.mxu0 %v6709
  %v6867 = vpop.f32.mrf.mxu0
  %v6868 = vadd.f32 0.0, %v6867
  %v6869 = vpop.f32.mrf.mxu0
  %v6870 = vadd.f32 0.0, %v6869
  %6871 = vmatmul.bf16.gmra.mxu0 %v6711
  %v6872 = vpop.f32.mrf.mxu0
  %v6873 = vadd.f32 0.0, %v6872
  %v6874 = vpop.f32.mrf.mxu0
  %v6875 = vadd.f32 0.0, %v6874
  %6876 = vmatmul.bf16.gmra.mxu0 %v6714
  %v6877 = vpop.f32.mrf.mxu0
  %v6878 = vadd.f32 0.0, %v6877
  %v6879 = vpop.f32.mrf.mxu0
  %6880 = vdwg.mxu0
  %6881 = vmatpush.bf16.msra.mxu0 %v6836
  %6882 = vmatpush.bf16.msra.mxu0 %v6835
  %6883 = vmatpush.bf16.msra.mxu0 %v6834
  %6884 = vmatpush.bf16.msra.mxu0 %v6833
  %6885 = vmatpush.bf16.msra.mxu0 %v6832
  %6886 = vmatpush.bf16.msra.mxu0 %v6831
  %6887 = vmatpush.bf16.msra.mxu0 %v6830
  %6888 = vmatpush.bf16.msra.mxu0 %v6829
  %6889 = vmatmul.bf16.gmra.mxu0 %v6716
  %v6890 = vpop.f32.mrf.mxu0
  %v6891 = vadd.f32 %v6863, %v6890
  %v6892 = vpop.f32.mrf.mxu0
  %v6893 = vadd.f32 %v6865, %v6892
  %6894 = vmatmul.bf16.gmra.mxu0 %v6718
  %v6895 = vpop.f32.mrf.mxu0
  %v6896 = vadd.f32 %v6868, %v6895
  %v6897 = vpop.f32.mrf.mxu0
  %v6898 = vadd.f32 %v6870, %v6897
  %6899 = vmatmul.bf16.gmra.mxu0 %v6720
  %v6900 = vpop.f32.mrf.mxu0
  %v6901 = vadd.f32 %v6873, %v6900
  %v6902 = vpop.f32.mrf.mxu0
  %v6903 = vadd.f32 %v6875, %v6902
  %6904 = vmatmul.bf16.gmra.mxu0 %v6723
  %v6905 = vpop.f32.mrf.mxu0
  %v6906 = vadd.f32 %v6878, %v6905
  %v6907 = vpop.f32.mrf.mxu0
  %6908 = vdwg.mxu0
  %v6941 = vunpack.c.l.b16 %v6675
  %v6942 = vunpack.c.l.b16 %v6676
  %v6943 = vunpack.c.l.b16 %v6677
  %v6944 = vunpack.c.l.b16 %v6678
  %v6945 = vunpack.c.l.b16 %v6679
  %v6946 = vunpack.c.l.b16 %v6680
  %v6947 = vunpack.c.l.b16 %v6681
  %v6948 = vunpack.c.l.b16 %v6682
  %v6949 = vunpack.c.l.b16 %v6683
  %v6950 = vunpack.c.l.b16 %v6684
  %v6951 = vunpack.c.l.b16 %v6685
  %v6952 = vunpack.c.l.b16 %v6686
  %v6953 = vunpack.c.l.b16 %v6687
  %v6954 = vunpack.c.l.b16 %v6688
  %v6955 = vunpack.c.l.b16 %v6689
  %v6956 = vunpack.c.l.b16 %v6690
  %v6957 = vunpack.c.l.b16 %v6691
  %v6958 = vunpack.c.l.b16 %v6692
  %v6959 = vunpack.c.l.b16 %v6693
  %v6960 = vunpack.c.l.b16 %v6694
  %v6961 = vunpack.c.l.b16 %v6695
  %v6962 = vunpack.c.l.b16 %v6696
  %v6963 = vunpack.c.l.b16 %v6697
  %v6964 = vunpack.c.l.b16 %v6698
  %v6965 = vunpack.c.l.b16 %v6699
  %v6966 = vunpack.c.l.b16 %v6700
  %v6967 = vunpack.c.l.b16 %v6701
  %v6968 = vunpack.c.l.b16 %v6702
  %v6969 = vunpack.c.l.b16 %v6703
  %v6970 = vunpack.c.l.b16 %v6704
  %v6971 = vunpack.c.l.b16 %v6705
  %v6972 = vunpack.c.l.b16 %v6706
  %v6973 = vpack.c.b16 %v6942, %v6941
  %v6974 = vpack.c.b16 %v6944, %v6943
  %v6975 = vpack.c.b16 %v6946, %v6945
  %v6976 = vpack.c.b16 %v6948, %v6947
  %v6977 = vpack.c.b16 %v6950, %v6949
  %v6978 = vpack.c.b16 %v6952, %v6951
  %v6979 = vpack.c.b16 %v6954, %v6953
  %v6980 = vpack.c.b16 %v6956, %v6955
  %v6981 = vpack.c.b16 %v6958, %v6957
  %v6982 = vpack.c.b16 %v6960, %v6959
  %v6983 = vpack.c.b16 %v6962, %v6961
  %v6984 = vpack.c.b16 %v6964, %v6963
  %v6985 = vpack.c.b16 %v6966, %v6965
  %v6986 = vpack.c.b16 %v6968, %v6967
  %v6987 = vpack.c.b16 %v6970, %v6969
  %v6988 = vpack.c.b16 %v6972, %v6971
  %7005 = vmatpush.bf16.msra.mxu0 %v6980
  %7006 = vmatpush.bf16.msra.mxu0 %v6979
  %7007 = vmatpush.bf16.msra.mxu0 %v6978
  %7008 = vmatpush.bf16.msra.mxu0 %v6977
  %7009 = vmatpush.bf16.msra.mxu0 %v6976
  %7010 = vmatpush.bf16.msra.mxu0 %v6975
  %7011 = vmatpush.bf16.msra.mxu0 %v6974
  %7012 = vmatpush.bf16.msra.mxu0 %v6973
  %7013 = vmatmul.bf16.gmra.mxu0 %v6647
  %v7014 = vpop.f32.mrf.mxu0
  %v7015 = vadd.f32 %v6891, %v7014
  %v7016 = vpop.f32.mrf.mxu0
  %v7017 = vadd.f32 %v6893, %v7016
  %7018 = vmatmul.bf16.gmra.mxu0 %v6651
  %v7019 = vpop.f32.mrf.mxu0
  %v7020 = vadd.f32 %v6896, %v7019
  %v7021 = vpop.f32.mrf.mxu0
  %v7022 = vadd.f32 %v6898, %v7021
  %7023 = vmatmul.bf16.gmra.mxu0 %v6655
  %v7024 = vpop.f32.mrf.mxu0
  %v7025 = vadd.f32 %v6901, %v7024
  %v7026 = vpop.f32.mrf.mxu0
  %v7027 = vadd.f32 %v6903, %v7026
  %7028 = vmatmul.bf16.gmra.mxu0 %v6658
  %v7029 = vpop.f32.mrf.mxu0
  %v7030 = vadd.f32 %v6906, %v7029
  %v7031 = vpop.f32.mrf.mxu0
  %7032 = vdwg.mxu0
  %7033 = vmatpush.bf16.msra.mxu0 %v6988
  %7034 = vmatpush.bf16.msra.mxu0 %v6987
  %7035 = vmatpush.bf16.msra.mxu0 %v6986
  %7036 = vmatpush.bf16.msra.mxu0 %v6985
  %7037 = vmatpush.bf16.msra.mxu0 %v6984
  %7038 = vmatpush.bf16.msra.mxu0 %v6983
  %7039 = vmatpush.bf16.msra.mxu0 %v6982
  %7040 = vmatpush.bf16.msra.mxu0 %v6981
  %7041 = vmatmul.bf16.gmra.mxu0 %v6662
  %v7042 = vpop.f32.mrf.mxu0
  %v7043 = vadd.f32 %v7015, %v7042
  %v7044 = vpop.f32.mrf.mxu0
  %v7045 = vadd.f32 %v7017, %v7044
  %7046 = vmatmul.bf16.gmra.mxu0 %v6666
  %v7047 = vpop.f32.mrf.mxu0
  %v7048 = vadd.f32 %v7020, %v7047
  %v7049 = vpop.f32.mrf.mxu0
  %v7050 = vadd.f32 %v7022, %v7049
  %7051 = vmatmul.bf16.gmra.mxu0 %v6670
  %v7052 = vpop.f32.mrf.mxu0
  %v7053 = vadd.f32 %v7025, %v7052
  %v7054 = vpop.f32.mrf.mxu0
  %v7055 = vadd.f32 %v7027, %v7054
  %7056 = vmatmul.bf16.gmra.mxu0 %v6673
  %v7057 = vpop.f32.mrf.mxu0
  %v7058 = vadd.f32 %v7030, %v7057
  %v7059 = vpop.f32.mrf.mxu0
  %7060 = vdwg.mxu0
  %v7061 = vpack.c.b16 %v6574, %v6606
  %v7062 = vpack.c.b16 %v6576, %v6575
  %v7063 = vpack.c.b16 %v6578, %v6577
  %v7064 = vpack.c.b16 %v6579, %v6579
  %7065 = vrot.lane.b32.xlu0 %v6582, 64
  %v7066 = vpop.permute.xlu0 %7065
  %v7067 = vpack.c.b16 %v6596, %v6620
  %v7068 = vpack.c.b16 %v6598, %v6597
  %v7069 = vpack.c.b16 %v6600, %v6599
  %v7070 = vpack.c.b16 %v6601, %v6601
  %7071 = vrot.lane.b32.xlu0 %v6604, 64
  %v7072 = vpop.permute.xlu0 %7071
  %v7075 = vsel %vm103, %v7061, %v6612
  %v7079 = vsel %vm103, %v7062, %v6614
  %v7083 = vsel %vm103, %v7063, %v7066
  %v7086 = vsel %vm103, %v7064, %v1285
  %v7090 = vsel %vm103, %v7067, %v6626
  %v7094 = vsel %vm103, %v7068, %v6628
  %v7098 = vsel %vm103, %v7069, %v7072
  %v7101 = vsel %vm103, %v7070, %v1285
  %v7103 = vld [vmem:[%s1732] sm:$0xf]
  %v7104 = vld [vmem:[%s1732 + $0x4] sm:$0xf]
  %v7105 = vld [vmem:[%s1732 + $0x8] sm:$0xf]
  %v7106 = vld [vmem:[%s1732 + $0xc] sm:$0xf]
  %v7107 = vld [vmem:[%s1732 + $0x10] sm:$0xf]
  %v7108 = vld [vmem:[%s1732 + $0x14] sm:$0xf]
  %v7109 = vld [vmem:[%s1732 + $0x18] sm:$0xf]
  %v7110 = vld [vmem:[%s1732 + $0x1c] sm:$0xf]
  %v7111 = vld [vmem:[%s1732 + $0x20] sm:$0xf]
  %v7112 = vld [vmem:[%s1732 + $0x24] sm:$0xf]
  %v7113 = vld [vmem:[%s1732 + $0x28] sm:$0xf]
  %v7114 = vld [vmem:[%s1732 + $0x2c] sm:$0xf]
  %v7115 = vld [vmem:[%s1732 + $0x30] sm:$0xf]
  %v7116 = vld [vmem:[%s1732 + $0x34] sm:$0xf]
  %v7117 = vld [vmem:[%s1732 + $0x38] sm:$0xf]
  %v7118 = vld [vmem:[%s1732 + $0x3c] sm:$0xf]
  %v7119 = vld [vmem:[%s1732 + $0x40] sm:$0xf]
  %v7120 = vld [vmem:[%s1732 + $0x44] sm:$0xf]
  %v7121 = vld [vmem:[%s1732 + $0x48] sm:$0xf]
  %v7122 = vld [vmem:[%s1732 + $0x4c] sm:$0xf]
  %v7123 = vld [vmem:[%s1732 + $0x50] sm:$0xf]
  %v7124 = vld [vmem:[%s1732 + $0x54] sm:$0xf]
  %v7125 = vld [vmem:[%s1732 + $0x58] sm:$0xf]
  %v7126 = vld [vmem:[%s1732 + $0x5c] sm:$0xf]
  %v7127 = vld [vmem:[%s1732 + $0x60] sm:$0xf]
  %v7128 = vld [vmem:[%s1732 + $0x64] sm:$0xf]
  %v7129 = vld [vmem:[%s1732 + $0x68] sm:$0xf]
  %v7130 = vld [vmem:[%s1732 + $0x6c] sm:$0xf]
  %v7131 = vld [vmem:[%s1732 + $0x70] sm:$0xf]
  %v7132 = vld [vmem:[%s1732 + $0x74] sm:$0xf]
  %v7133 = vld [vmem:[%s1732 + $0x78] sm:$0xf]
  %v7134 = vld [vmem:[%s1732 + $0x7c] sm:$0xf]
  %v7167 = vunpack.c.l.b16 %v7103
  %v7168 = vunpack.c.l.b16 %v7104
  %v7169 = vunpack.c.l.b16 %v7105
  %v7170 = vunpack.c.l.b16 %v7106
  %v7171 = vunpack.c.l.b16 %v7107
  %v7172 = vunpack.c.l.b16 %v7108
  %v7173 = vunpack.c.l.b16 %v7109
  %v7174 = vunpack.c.l.b16 %v7110
  %v7175 = vunpack.c.l.b16 %v7111
  %v7176 = vunpack.c.l.b16 %v7112
  %v7177 = vunpack.c.l.b16 %v7113
  %v7178 = vunpack.c.l.b16 %v7114
  %v7179 = vunpack.c.l.b16 %v7115
  %v7180 = vunpack.c.l.b16 %v7116
  %v7181 = vunpack.c.l.b16 %v7117
  %v7182 = vunpack.c.l.b16 %v7118
  %v7183 = vunpack.c.l.b16 %v7119
  %v7184 = vunpack.c.l.b16 %v7120
  %v7185 = vunpack.c.l.b16 %v7121
  %v7186 = vunpack.c.l.b16 %v7122
  %v7187 = vunpack.c.l.b16 %v7123
  %v7188 = vunpack.c.l.b16 %v7124
  %v7189 = vunpack.c.l.b16 %v7125
  %v7190 = vunpack.c.l.b16 %v7126
  %v7191 = vunpack.c.l.b16 %v7127
  %v7192 = vunpack.c.l.b16 %v7128
  %v7193 = vunpack.c.l.b16 %v7129
  %v7194 = vunpack.c.l.b16 %v7130
  %v7195 = vunpack.c.l.b16 %v7131
  %v7196 = vunpack.c.l.b16 %v7132
  %v7197 = vunpack.c.l.b16 %v7133
  %v7198 = vunpack.c.l.b16 %v7134
  %v7199 = vpack.c.b16 %v7168, %v7167
  %v7200 = vpack.c.b16 %v7170, %v7169
  %v7201 = vpack.c.b16 %v7172, %v7171
  %v7202 = vpack.c.b16 %v7174, %v7173
  %v7203 = vpack.c.b16 %v7176, %v7175
  %v7204 = vpack.c.b16 %v7178, %v7177
  %v7205 = vpack.c.b16 %v7180, %v7179
  %v7206 = vpack.c.b16 %v7182, %v7181
  %v7207 = vpack.c.b16 %v7184, %v7183
  %v7208 = vpack.c.b16 %v7186, %v7185
  %v7209 = vpack.c.b16 %v7188, %v7187
  %v7210 = vpack.c.b16 %v7190, %v7189
  %v7211 = vpack.c.b16 %v7192, %v7191
  %v7212 = vpack.c.b16 %v7194, %v7193
  %v7213 = vpack.c.b16 %v7196, %v7195
  %v7214 = vpack.c.b16 %v7198, %v7197
  %7231 = vmatpush.bf16.msra.mxu0 %v7206
  %7232 = vmatpush.bf16.msra.mxu0 %v7205
  %7233 = vmatpush.bf16.msra.mxu0 %v7204
  %7234 = vmatpush.bf16.msra.mxu0 %v7203
  %7235 = vmatpush.bf16.msra.mxu0 %v7202
  %7236 = vmatpush.bf16.msra.mxu0 %v7201
  %7237 = vmatpush.bf16.msra.mxu0 %v7200
  %7238 = vmatpush.bf16.msra.mxu0 %v7199
  %7239 = vmatmul.bf16.gmra.mxu0 %v7075
  %v7240 = vpop.f32.mrf.mxu0
  %v7241 = vadd.f32 0.0, %v7240
  %v7242 = vpop.f32.mrf.mxu0
  %v7243 = vadd.f32 0.0, %v7242
  %7244 = vmatmul.bf16.gmra.mxu0 %v7079
  %v7245 = vpop.f32.mrf.mxu0
  %v7246 = vadd.f32 0.0, %v7245
  %v7247 = vpop.f32.mrf.mxu0
  %v7248 = vadd.f32 0.0, %v7247
  %7249 = vmatmul.bf16.gmra.mxu0 %v7083
  %v7250 = vpop.f32.mrf.mxu0
  %v7251 = vadd.f32 0.0, %v7250
  %v7252 = vpop.f32.mrf.mxu0
  %v7253 = vadd.f32 0.0, %v7252
  %7254 = vmatmul.bf16.gmra.mxu0 %v7086
  %v7255 = vpop.f32.mrf.mxu0
  %v7256 = vadd.f32 0.0, %v7255
  %v7257 = vpop.f32.mrf.mxu0
  %7258 = vdwg.mxu0
  %7259 = vmatpush.bf16.msra.mxu0 %v7214
  %7260 = vmatpush.bf16.msra.mxu0 %v7213
  %7261 = vmatpush.bf16.msra.mxu0 %v7212
  %7262 = vmatpush.bf16.msra.mxu0 %v7211
  %7263 = vmatpush.bf16.msra.mxu0 %v7210
  %7264 = vmatpush.bf16.msra.mxu0 %v7209
  %7265 = vmatpush.bf16.msra.mxu0 %v7208
  %7266 = vmatpush.bf16.msra.mxu0 %v7207
  %7267 = vmatmul.bf16.gmra.mxu0 %v7090
  %v7268 = vpop.f32.mrf.mxu0
  %v7269 = vadd.f32 %v7241, %v7268
  %v7270 = vpop.f32.mrf.mxu0
  %v7271 = vadd.f32 %v7243, %v7270
  %7272 = vmatmul.bf16.gmra.mxu0 %v7094
  %v7273 = vpop.f32.mrf.mxu0
  %v7274 = vadd.f32 %v7246, %v7273
  %v7275 = vpop.f32.mrf.mxu0
  %v7276 = vadd.f32 %v7248, %v7275
  %7277 = vmatmul.bf16.gmra.mxu0 %v7098
  %v7278 = vpop.f32.mrf.mxu0
  %v7279 = vadd.f32 %v7251, %v7278
  %v7280 = vpop.f32.mrf.mxu0
  %v7281 = vadd.f32 %v7253, %v7280
  %7282 = vmatmul.bf16.gmra.mxu0 %v7101
  %v7283 = vpop.f32.mrf.mxu0
  %v7284 = vadd.f32 %v7256, %v7283
  %v7285 = vpop.f32.mrf.mxu0
  %7286 = vdwg.mxu0
  %v7287 = vadd.f32 %v7043, %v7269
  %v7288 = vadd.f32 %v7045, %v7271
  %v7289 = vadd.f32 %v7048, %v7274
  %v7290 = vadd.f32 %v7050, %v7276
  %v7291 = vadd.f32 %v7053, %v7279
  %v7292 = vadd.f32 %v7055, %v7281
  %v7293 = vadd.f32 %v7058, %v7284
  %v7294 = vsel %vm103, %v6618, %v7061
  %v7296 = vsel %vm103, %v6612, %v7062
  %v7298 = vsel %vm103, %v6614, %v7063
  %v7301 = vsel %vm103, %v6616, %v7064
  %v7303 = vsel %vm103, %v6632, %v7067
  %v7305 = vsel %vm103, %v6626, %v7068
  %v7307 = vsel %vm103, %v6628, %v7069
  %v7310 = vsel %vm103, %v6630, %v7070
  %v7312 = vld [vmem:[%s1933] sm:$0xf]
  %v7313 = vld [vmem:[%s1933 + $0x4] sm:$0xf]
  %v7314 = vld [vmem:[%s1933 + $0x8] sm:$0xf]
  %v7315 = vld [vmem:[%s1933 + $0xc] sm:$0xf]
  %v7316 = vld [vmem:[%s1933 + $0x10] sm:$0xf]
  %v7317 = vld [vmem:[%s1933 + $0x14] sm:$0xf]
  %v7318 = vld [vmem:[%s1933 + $0x18] sm:$0xf]
  %v7319 = vld [vmem:[%s1933 + $0x1c] sm:$0xf]
  %v7320 = vld [vmem:[%s1933 + $0x20] sm:$0xf]
  %v7321 = vld [vmem:[%s1933 + $0x24] sm:$0xf]
  %v7322 = vld [vmem:[%s1933 + $0x28] sm:$0xf]
  %v7323 = vld [vmem:[%s1933 + $0x2c] sm:$0xf]
  %v7324 = vld [vmem:[%s1933 + $0x30] sm:$0xf]
  %v7325 = vld [vmem:[%s1933 + $0x34] sm:$0xf]
  %v7326 = vld [vmem:[%s1933 + $0x38] sm:$0xf]
  %v7327 = vld [vmem:[%s1933 + $0x3c] sm:$0xf]
  %v7328 = vld [vmem:[%s1933 + $0x40] sm:$0xf]
  %v7329 = vld [vmem:[%s1933 + $0x44] sm:$0xf]
  %v7330 = vld [vmem:[%s1933 + $0x48] sm:$0xf]
  %v7331 = vld [vmem:[%s1933 + $0x4c] sm:$0xf]
  %v7332 = vld [vmem:[%s1933 + $0x50] sm:$0xf]
  %v7333 = vld [vmem:[%s1933 + $0x54] sm:$0xf]
  %v7334 = vld [vmem:[%s1933 + $0x58] sm:$0xf]
  %v7335 = vld [vmem:[%s1933 + $0x5c] sm:$0xf]
  %v7336 = vld [vmem:[%s1933 + $0x60] sm:$0xf]
  %v7337 = vld [vmem:[%s1933 + $0x64] sm:$0xf]
  %v7338 = vld [vmem:[%s1933 + $0x68] sm:$0xf]
  %v7339 = vld [vmem:[%s1933 + $0x6c] sm:$0xf]
  %v7340 = vld [vmem:[%s1933 + $0x70] sm:$0xf]
  %v7341 = vld [vmem:[%s1933 + $0x74] sm:$0xf]
  %v7342 = vld [vmem:[%s1933 + $0x78] sm:$0xf]
  %v7343 = vld [vmem:[%s1933 + $0x7c] sm:$0xf]
  %v7376 = vunpack.c.l.b16 %v7312
  %v7377 = vunpack.c.l.b16 %v7313
  %v7378 = vunpack.c.l.b16 %v7314
  %v7379 = vunpack.c.l.b16 %v7315
  %v7380 = vunpack.c.l.b16 %v7316
  %v7381 = vunpack.c.l.b16 %v7317
  %v7382 = vunpack.c.l.b16 %v7318
  %v7383 = vunpack.c.l.b16 %v7319
  %v7384 = vunpack.c.l.b16 %v7320
  %v7385 = vunpack.c.l.b16 %v7321
  %v7386 = vunpack.c.l.b16 %v7322
  %v7387 = vunpack.c.l.b16 %v7323
  %v7388 = vunpack.c.l.b16 %v7324
  %v7389 = vunpack.c.l.b16 %v7325
  %v7390 = vunpack.c.l.b16 %v7326
  %v7391 = vunpack.c.l.b16 %v7327
  %v7392 = vunpack.c.l.b16 %v7328
  %v7393 = vunpack.c.l.b16 %v7329
  %v7394 = vunpack.c.l.b16 %v7330
  %v7395 = vunpack.c.l.b16 %v7331
  %v7396 = vunpack.c.l.b16 %v7332
  %v7397 = vunpack.c.l.b16 %v7333
  %v7398 = vunpack.c.l.b16 %v7334
  %v7399 = vunpack.c.l.b16 %v7335
  %v7400 = vunpack.c.l.b16 %v7336
  %v7401 = vunpack.c.l.b16 %v7337
  %v7402 = vunpack.c.l.b16 %v7338
  %v7403 = vunpack.c.l.b16 %v7339
  %v7404 = vunpack.c.l.b16 %v7340
  %v7405 = vunpack.c.l.b16 %v7341
  %v7406 = vunpack.c.l.b16 %v7342
  %v7407 = vunpack.c.l.b16 %v7343
  %v7408 = vpack.c.b16 %v7377, %v7376
  %v7409 = vpack.c.b16 %v7379, %v7378
  %v7410 = vpack.c.b16 %v7381, %v7380
  %v7411 = vpack.c.b16 %v7383, %v7382
  %v7412 = vpack.c.b16 %v7385, %v7384
  %v7413 = vpack.c.b16 %v7387, %v7386
  %v7414 = vpack.c.b16 %v7389, %v7388
  %v7415 = vpack.c.b16 %v7391, %v7390
  %v7416 = vpack.c.b16 %v7393, %v7392
  %v7417 = vpack.c.b16 %v7395, %v7394
  %v7418 = vpack.c.b16 %v7397, %v7396
  %v7419 = vpack.c.b16 %v7399, %v7398
  %v7420 = vpack.c.b16 %v7401, %v7400
  %v7421 = vpack.c.b16 %v7403, %v7402
  %v7422 = vpack.c.b16 %v7405, %v7404
  %v7423 = vpack.c.b16 %v7407, %v7406
  %7440 = vmatpush.bf16.msra.mxu0 %v7415
  %7441 = vmatpush.bf16.msra.mxu0 %v7414
  %7442 = vmatpush.bf16.msra.mxu0 %v7413
  %7443 = vmatpush.bf16.msra.mxu0 %v7412
  %7444 = vmatpush.bf16.msra.mxu0 %v7411
  %7445 = vmatpush.bf16.msra.mxu0 %v7410
  %7446 = vmatpush.bf16.msra.mxu0 %v7409
  %7447 = vmatpush.bf16.msra.mxu0 %v7408
  %7448 = vmatmul.bf16.gmra.mxu0 %v7294
  %v7449 = vpop.f32.mrf.mxu0
  %v7450 = vadd.f32 0.0, %v7449
  %v7451 = vpop.f32.mrf.mxu0
  %v7452 = vadd.f32 0.0, %v7451
  %7453 = vmatmul.bf16.gmra.mxu0 %v7296
  %v7454 = vpop.f32.mrf.mxu0
  %v7455 = vadd.f32 0.0, %v7454
  %v7456 = vpop.f32.mrf.mxu0
  %v7457 = vadd.f32 0.0, %v7456
  %7458 = vmatmul.bf16.gmra.mxu0 %v7298
  %v7459 = vpop.f32.mrf.mxu0
  %v7460 = vadd.f32 0.0, %v7459
  %v7461 = vpop.f32.mrf.mxu0
  %v7462 = vadd.f32 0.0, %v7461
  %7463 = vmatmul.bf16.gmra.mxu0 %v7301
  %v7464 = vpop.f32.mrf.mxu0
  %v7465 = vadd.f32 0.0, %v7464
  %v7466 = vpop.f32.mrf.mxu0
  %7467 = vdwg.mxu0
  %7468 = vmatpush.bf16.msra.mxu0 %v7423
  %7469 = vmatpush.bf16.msra.mxu0 %v7422
  %7470 = vmatpush.bf16.msra.mxu0 %v7421
  %7471 = vmatpush.bf16.msra.mxu0 %v7420
  %7472 = vmatpush.bf16.msra.mxu0 %v7419
  %7473 = vmatpush.bf16.msra.mxu0 %v7418
  %7474 = vmatpush.bf16.msra.mxu0 %v7417
  %7475 = vmatpush.bf16.msra.mxu0 %v7416
  %7476 = vmatmul.bf16.gmra.mxu0 %v7303
  %v7477 = vpop.f32.mrf.mxu0
  %v7478 = vadd.f32 %v7450, %v7477
  %v7479 = vpop.f32.mrf.mxu0
  %v7480 = vadd.f32 %v7452, %v7479
  %7481 = vmatmul.bf16.gmra.mxu0 %v7305
  %v7482 = vpop.f32.mrf.mxu0
  %v7483 = vadd.f32 %v7455, %v7482
  %v7484 = vpop.f32.mrf.mxu0
  %v7485 = vadd.f32 %v7457, %v7484
  %7486 = vmatmul.bf16.gmra.mxu0 %v7307
  %v7487 = vpop.f32.mrf.mxu0
  %v7488 = vadd.f32 %v7460, %v7487
  %v7489 = vpop.f32.mrf.mxu0
  %v7490 = vadd.f32 %v7462, %v7489
  %7491 = vmatmul.bf16.gmra.mxu0 %v7310
  %v7492 = vpop.f32.mrf.mxu0
  %v7493 = vadd.f32 %v7465, %v7492
  %v7494 = vpop.f32.mrf.mxu0
  %7495 = vdwg.mxu0
  %v7496 = vadd.f32 %v7287, %v7478
  %v7497 = vadd.f32 %v7288, %v7480
  %v7498 = vadd.f32 %v7289, %v7483
  %v7499 = vadd.f32 %v7290, %v7485
  %v7500 = vadd.f32 %v7291, %v7488
  %v7501 = vadd.f32 %v7292, %v7490
  %v7502 = vadd.f32 %v7293, %v7493
  %v7503 = vadd.f32 %v7496, %v2126
  %v7504 = vadd.f32 %v7497, %v2126
  %v7505 = vadd.f32 %v7498, %v2126
  %v7506 = vadd.f32 %v7499, %v2126
  %v7507 = vadd.f32 %v7500, %v2126
  %v7508 = vadd.f32 %v7501, %v2126
  %v7509 = vadd.f32 %v7502, %v2126
  %v7510 = vpack.c.bf16 %v7503, %v7503
  %v7511 = vpack.c.bf16 %v7504, %v7504
  %v7512 = vpack.c.bf16 %v7505, %v7505
  %v7513 = vpack.c.bf16 %v7506, %v7506
  %v7514 = vpack.c.bf16 %v7507, %v7507
  %v7515 = vpack.c.bf16 %v7508, %v7508
  %v7516 = vpack.c.bf16 %v7509, %v7509
  %7517 = vst [vmem:[%s5 + $0x8c] sm:$0xf] %v7510
  %7518 = vst [vmem:[%s5 + $0x90] sm:$0xf] %v7511
  %7519 = vst [vmem:[%s5 + $0x94] sm:$0xf] %v7512
  %7520 = vst [vmem:[%s5 + $0x98] sm:$0xf] %v7513
  %7521 = vst [vmem:[%s5 + $0x9c] sm:$0xf] %v7514
  %7522 = vst [vmem:[%s5 + $0xa0] sm:$0xf] %v7515
  %7523 = vst [vmem:[%s5 + $0xa4] sm:$0xf] %v7516
  %v7524 = vmul.f32 %v7503, %v1160
  %v7525 = vmul.f32 %v7504, %v1161
  %v7526 = vmul.f32 %v7505, %v1162
  %v7527 = vmul.f32 %v7506, %v1163
  %v7528 = vmul.f32 %v7507, %v1164
  %v7529 = vmul.f32 %v7508, %v1165
  %v7530 = vmul.f32 %v7509, %v1166
  %v7531 = vadd.f32 %v7524, %v7525
  %v7532 = vadd.f32 %v7531, %v7526
  %v7533 = vadd.f32 %v7532, %v7527
  %v7534 = vadd.f32 %v7533, %v7528
  %v7535 = vadd.f32 %v7534, %v7529
  %v7536 = vadd.f32 %v7535, %v7530
  %v7537 = vrot.slane %v7536, 4
  %v7538 = vadd.f32 %v7536, %v7537
  %v7539 = vrot.slane %v7538, 2
  %v7540 = vadd.f32 %v7538, %v7539
  %v7541 = vrot.slane %v7540, 1
  %v7542 = vadd.f32 %v7540, %v7541
  %v7543 = vadd.f32 %v6468, %v7542
  %v7544 = vmul.f32 %v7524, %v7503
  %v7545 = vmul.f32 %v7525, %v7504
  %v7546 = vmul.f32 %v7526, %v7505
  %v7547 = vmul.f32 %v7527, %v7506
  %v7548 = vmul.f32 %v7528, %v7507
  %v7549 = vmul.f32 %v7529, %v7508
  %v7550 = vmul.f32 %v7530, %v7509
  %v7551 = vadd.f32 %v7544, %v7545
  %v7552 = vadd.f32 %v7551, %v7546
  %v7553 = vadd.f32 %v7552, %v7547
  %v7554 = vadd.f32 %v7553, %v7548
  %v7555 = vadd.f32 %v7554, %v7549
  %v7556 = vadd.f32 %v7555, %v7550
  %v7557 = vrot.slane %v7556, 4
  %v7558 = vadd.f32 %v7556, %v7557
  %v7559 = vrot.slane %v7558, 2
  %v7560 = vadd.f32 %v7558, %v7559
  %v7561 = vrot.slane %v7560, 1
  %v7562 = vadd.f32 %v7560, %v7561
  %v7563 = vadd.f32 %v6488, %v7562
  %v7564 = vld [vmem:[#allocation2 + $0x150] sm:$0xf]
  %v7565 = vld [vmem:[#allocation2 + $0x158] sm:$0xf]
  %v7566 = vld [vmem:[#allocation2 + $0x160] sm:$0xf]
  %v7567 = vld [vmem:[#allocation2 + $0x168] sm:$0xf]
  %v7568 = vld [vmem:[#allocation2 + $0x170] sm:$0xf]
  %v7569 = vld [vmem:[#allocation2 + $0x178] sm:$0xf]
  %v7570 = vld [vmem:[#allocation2 + $0x180] sm:$0xf]
  %v7577 = vunpack.c.l.b16 %v7565
  %v7578 = vunpack.c.l.b16 %v7566
  %v7579 = vunpack.c.l.b16 %v7567
  %v7580 = vunpack.c.l.b16 %v7568
  %v7581 = vunpack.c.l.b16 %v7569
  %v7582 = vunpack.c.l.b16 %v7570
  %v7583 = vpack.c.b16 %v7578, %v7577
  %v7584 = vpack.c.b16 %v7580, %v7579
  %v7585 = vpack.c.b16 %v7582, %v7581
  %v7587 = vunpack.c.l.b16 %v7564
  %v7588 = vpack.c.b16 %v7587, %v7587
  %v7589 = vpack.c.b16 %v7581, %v7581
  %7590 = vrot.lane.b32.xlu0 %v7588, 64
  %v7591 = vpop.permute.xlu0 %7590
  %7592 = vrot.lane.b32.xlu0 %v7583, 64
  %v7593 = vpop.permute.xlu0 %7592
  %7594 = vrot.lane.b32.xlu0 %v7584, 64
  %v7595 = vpop.permute.xlu0 %7594
  %7596 = vrot.lane.b32.xlu0 %v7589, 64
  %v7597 = vpop.permute.xlu0 %7596
  %v7599 = vsel %vm1223, 0, %v7591
  %v7600 = vld [vmem:[#allocation2 + $0x11c] sm:$0xf]
  %v7601 = vld [vmem:[#allocation2 + $0x124] sm:$0xf]
  %v7602 = vld [vmem:[#allocation2 + $0x12c] sm:$0xf]
  %v7603 = vld [vmem:[#allocation2 + $0x134] sm:$0xf]
  %v7604 = vld [vmem:[#allocation2 + $0x13c] sm:$0xf]
  %v7605 = vld [vmem:[#allocation2 + $0x144] sm:$0xf]
  %v7606 = vld [vmem:[#allocation2 + $0x14c] sm:$0xf]
  %v7613 = vunpack.c.l.b16 %v7601
  %v7614 = vunpack.c.l.b16 %v7602
  %v7615 = vunpack.c.l.b16 %v7603
  %v7616 = vunpack.c.l.b16 %v7604
  %v7617 = vunpack.c.l.b16 %v7605
  %v7618 = vunpack.c.l.b16 %v7606
  %v7619 = vpack.c.b16 %v7614, %v7613
  %v7620 = vpack.c.b16 %v7616, %v7615
  %v7621 = vpack.c.b16 %v7618, %v7617
  %v7622 = vld [vmem:[#allocation2 + $0x154] sm:$0xf]
  %v7623 = vld [vmem:[#allocation2 + $0x15c] sm:$0xf]
  %v7624 = vld [vmem:[#allocation2 + $0x164] sm:$0xf]
  %v7625 = vld [vmem:[#allocation2 + $0x16c] sm:$0xf]
  %v7626 = vld [vmem:[#allocation2 + $0x174] sm:$0xf]
  %v7627 = vld [vmem:[#allocation2 + $0x17c] sm:$0xf]
  %v7628 = vld [vmem:[#allocation2 + $0x184] sm:$0xf]
  %v7635 = vunpack.c.l.b16 %v7623
  %v7636 = vunpack.c.l.b16 %v7624
  %v7637 = vunpack.c.l.b16 %v7625
  %v7638 = vunpack.c.l.b16 %v7626
  %v7639 = vunpack.c.l.b16 %v7627
  %v7640 = vunpack.c.l.b16 %v7628
  %v7641 = vpack.c.b16 %v7636, %v7635
  %v7642 = vpack.c.b16 %v7638, %v7637
  %v7643 = vpack.c.b16 %v7640, %v7639
  %v7645 = vunpack.c.l.b16 %v7600
  %v7646 = vpack.c.b16 %v7645, %v7645
  %v7647 = vpack.c.b16 %v7617, %v7617
  %7648 = vrot.lane.b32.xlu0 %v7646, 64
  %v7649 = vpop.permute.xlu0 %7648
  %7650 = vrot.lane.b32.xlu0 %v7619, 64
  %v7651 = vpop.permute.xlu0 %7650
  %7652 = vrot.lane.b32.xlu0 %v7620, 64
  %v7653 = vpop.permute.xlu0 %7652
  %7654 = vrot.lane.b32.xlu0 %v7647, 64
  %v7655 = vpop.permute.xlu0 %7654
  %v7657 = vsel %vm1223, 0, %v7649
  %v7658 = vld [vmem:[#allocation2 + $0x154] sm:$0xf]
  %v7659 = vld [vmem:[#allocation2 + $0x15c] sm:$0xf]
  %v7660 = vld [vmem:[#allocation2 + $0x164] sm:$0xf]
  %v7661 = vld [vmem:[#allocation2 + $0x16c] sm:$0xf]
  %v7662 = vld [vmem:[#allocation2 + $0x174] sm:$0xf]
  %v7663 = vld [vmem:[#allocation2 + $0x17c] sm:$0xf]
  %v7670 = vunpack.c.l.b16 %v7658
  %v7671 = vunpack.c.l.b16 %v7659
  %v7672 = vunpack.c.l.b16 %v7660
  %v7673 = vunpack.c.l.b16 %v7661
  %v7674 = vunpack.c.l.b16 %v7662
  %v7675 = vunpack.c.l.b16 %v7663
  %v7676 = vpack.c.b16 %v7670, %v7670
  %v7677 = vpack.c.b16 %v7672, %v7671
  %v7678 = vpack.c.b16 %v7674, %v7673
  %v7679 = vpack.c.b16 %v7675, %v7675
  %7680 = vrot.lane.b32.xlu0 %v7676, 64
  %v7681 = vpop.permute.xlu0 %7680
  %7682 = vrot.lane.b32.xlu0 %v7677, 64
  %v7683 = vpop.permute.xlu0 %7682
  %7684 = vrot.lane.b32.xlu0 %v7678, 64
  %v7685 = vpop.permute.xlu0 %7684
  %7686 = vrot.lane.b32.xlu0 %v7679, 64
  %v7687 = vpop.permute.xlu0 %7686
  %v7689 = vsel %vm1223, 0, %v7681
  %v7690 = vpack.c.b16 %v7577, %v7587
  %v7691 = vpack.c.b16 %v7579, %v7578
  %v7692 = vpack.c.b16 %v7581, %v7580
  %v7693 = vpack.c.b16 %v7582, %v7582
  %7694 = vrot.lane.b32.xlu0 %v7585, 64
  %v7695 = vpop.permute.xlu0 %7694
  %v7698 = vsel %vm103, %v7690, %v7593
  %v7702 = vsel %vm103, %v7691, %v7595
  %v7706 = vsel %vm103, %v7692, %v7695
  %v7709 = vsel %vm103, %v7693, %v1285
  %v7711 = vld [vmem:[%s3] sm:$0xf]
  %v7712 = vld [vmem:[%s3 + $0x4] sm:$0xf]
  %v7713 = vld [vmem:[%s3 + $0x8] sm:$0xf]
  %v7714 = vld [vmem:[%s3 + $0xc] sm:$0xf]
  %v7715 = vld [vmem:[%s3 + $0x10] sm:$0xf]
  %v7716 = vld [vmem:[%s3 + $0x14] sm:$0xf]
  %v7717 = vld [vmem:[%s3 + $0x18] sm:$0xf]
  %v7718 = vld [vmem:[%s3 + $0x1c] sm:$0xf]
  %v7719 = vld [vmem:[%s3 + $0x20] sm:$0xf]
  %v7720 = vld [vmem:[%s3 + $0x24] sm:$0xf]
  %v7721 = vld [vmem:[%s3 + $0x28] sm:$0xf]
  %v7722 = vld [vmem:[%s3 + $0x2c] sm:$0xf]
  %v7723 = vld [vmem:[%s3 + $0x30] sm:$0xf]
  %v7724 = vld [vmem:[%s3 + $0x34] sm:$0xf]
  %v7725 = vld [vmem:[%s3 + $0x38] sm:$0xf]
  %v7726 = vld [vmem:[%s3 + $0x3c] sm:$0xf]
  %v7727 = vld [vmem:[%s3 + $0x40] sm:$0xf]
  %v7728 = vld [vmem:[%s3 + $0x44] sm:$0xf]
  %v7729 = vld [vmem:[%s3 + $0x48] sm:$0xf]
  %v7730 = vld [vmem:[%s3 + $0x4c] sm:$0xf]
  %v7731 = vld [vmem:[%s3 + $0x50] sm:$0xf]
  %v7732 = vld [vmem:[%s3 + $0x54] sm:$0xf]
  %v7733 = vld [vmem:[%s3 + $0x58] sm:$0xf]
  %v7734 = vld [vmem:[%s3 + $0x5c] sm:$0xf]
  %v7735 = vld [vmem:[%s3 + $0x60] sm:$0xf]
  %v7736 = vld [vmem:[%s3 + $0x64] sm:$0xf]
  %v7737 = vld [vmem:[%s3 + $0x68] sm:$0xf]
  %v7738 = vld [vmem:[%s3 + $0x6c] sm:$0xf]
  %v7739 = vld [vmem:[%s3 + $0x70] sm:$0xf]
  %v7740 = vld [vmem:[%s3 + $0x74] sm:$0xf]
  %v7741 = vld [vmem:[%s3 + $0x78] sm:$0xf]
  %v7742 = vld [vmem:[%s3 + $0x7c] sm:$0xf]
  %v7743 = vsel %vm103, %v7599, %v7690
  %v7745 = vsel %vm103, %v7593, %v7691
  %v7747 = vsel %vm103, %v7595, %v7692
  %v7750 = vsel %vm103, %v7597, %v7693
  %v7752 = vld [vmem:[%s1373] sm:$0xf]
  %v7753 = vld [vmem:[%s1373 + $0x4] sm:$0xf]
  %v7754 = vld [vmem:[%s1373 + $0x8] sm:$0xf]
  %v7755 = vld [vmem:[%s1373 + $0xc] sm:$0xf]
  %v7756 = vld [vmem:[%s1373 + $0x10] sm:$0xf]
  %v7757 = vld [vmem:[%s1373 + $0x14] sm:$0xf]
  %v7758 = vld [vmem:[%s1373 + $0x18] sm:$0xf]
  %v7759 = vld [vmem:[%s1373 + $0x1c] sm:$0xf]
  %v7760 = vld [vmem:[%s1373 + $0x20] sm:$0xf]
  %v7761 = vld [vmem:[%s1373 + $0x24] sm:$0xf]
  %v7762 = vld [vmem:[%s1373 + $0x28] sm:$0xf]
  %v7763 = vld [vmem:[%s1373 + $0x2c] sm:$0xf]
  %v7764 = vld [vmem:[%s1373 + $0x30] sm:$0xf]
  %v7765 = vld [vmem:[%s1373 + $0x34] sm:$0xf]
  %v7766 = vld [vmem:[%s1373 + $0x38] sm:$0xf]
  %v7767 = vld [vmem:[%s1373 + $0x3c] sm:$0xf]
  %v7768 = vld [vmem:[%s1373 + $0x40] sm:$0xf]
  %v7769 = vld [vmem:[%s1373 + $0x44] sm:$0xf]
  %v7770 = vld [vmem:[%s1373 + $0x48] sm:$0xf]
  %v7771 = vld [vmem:[%s1373 + $0x4c] sm:$0xf]
  %v7772 = vld [vmem:[%s1373 + $0x50] sm:$0xf]
  %v7773 = vld [vmem:[%s1373 + $0x54] sm:$0xf]
  %v7774 = vld [vmem:[%s1373 + $0x58] sm:$0xf]
  %v7775 = vld [vmem:[%s1373 + $0x5c] sm:$0xf]
  %v7776 = vld [vmem:[%s1373 + $0x60] sm:$0xf]
  %v7777 = vld [vmem:[%s1373 + $0x64] sm:$0xf]
  %v7778 = vld [vmem:[%s1373 + $0x68] sm:$0xf]
  %v7779 = vld [vmem:[%s1373 + $0x6c] sm:$0xf]
  %v7780 = vld [vmem:[%s1373 + $0x70] sm:$0xf]
  %v7781 = vld [vmem:[%s1373 + $0x74] sm:$0xf]
  %v7782 = vld [vmem:[%s1373 + $0x78] sm:$0xf]
  %v7783 = vld [vmem:[%s1373 + $0x7c] sm:$0xf]
  %v7816 = vunpack.c.l.b16 %v7752
  %v7817 = vunpack.c.l.b16 %v7753
  %v7818 = vunpack.c.l.b16 %v7754
  %v7819 = vunpack.c.l.b16 %v7755
  %v7820 = vunpack.c.l.b16 %v7756
  %v7821 = vunpack.c.l.b16 %v7757
  %v7822 = vunpack.c.l.b16 %v7758
  %v7823 = vunpack.c.l.b16 %v7759
  %v7824 = vunpack.c.l.b16 %v7760
  %v7825 = vunpack.c.l.b16 %v7761
  %v7826 = vunpack.c.l.b16 %v7762
  %v7827 = vunpack.c.l.b16 %v7763
  %v7828 = vunpack.c.l.b16 %v7764
  %v7829 = vunpack.c.l.b16 %v7765
  %v7830 = vunpack.c.l.b16 %v7766
  %v7831 = vunpack.c.l.b16 %v7767
  %v7832 = vunpack.c.l.b16 %v7768
  %v7833 = vunpack.c.l.b16 %v7769
  %v7834 = vunpack.c.l.b16 %v7770
  %v7835 = vunpack.c.l.b16 %v7771
  %v7836 = vunpack.c.l.b16 %v7772
  %v7837 = vunpack.c.l.b16 %v7773
  %v7838 = vunpack.c.l.b16 %v7774
  %v7839 = vunpack.c.l.b16 %v7775
  %v7840 = vunpack.c.l.b16 %v7776
  %v7841 = vunpack.c.l.b16 %v7777
  %v7842 = vunpack.c.l.b16 %v7778
  %v7843 = vunpack.c.l.b16 %v7779
  %v7844 = vunpack.c.l.b16 %v7780
  %v7845 = vunpack.c.l.b16 %v7781
  %v7846 = vunpack.c.l.b16 %v7782
  %v7847 = vunpack.c.l.b16 %v7783
  %v7848 = vpack.c.b16 %v7817, %v7816
  %v7849 = vpack.c.b16 %v7819, %v7818
  %v7850 = vpack.c.b16 %v7821, %v7820
  %v7851 = vpack.c.b16 %v7823, %v7822
  %v7852 = vpack.c.b16 %v7825, %v7824
  %v7853 = vpack.c.b16 %v7827, %v7826
  %v7854 = vpack.c.b16 %v7829, %v7828
  %v7855 = vpack.c.b16 %v7831, %v7830
  %v7856 = vpack.c.b16 %v7833, %v7832
  %v7857 = vpack.c.b16 %v7835, %v7834
  %v7858 = vpack.c.b16 %v7837, %v7836
  %v7859 = vpack.c.b16 %v7839, %v7838
  %v7860 = vpack.c.b16 %v7841, %v7840
  %v7861 = vpack.c.b16 %v7843, %v7842
  %v7862 = vpack.c.b16 %v7845, %v7844
  %v7863 = vpack.c.b16 %v7847, %v7846
  %7880 = vmatpush.bf16.msra.mxu0 %v7855
  %7881 = vmatpush.bf16.msra.mxu0 %v7854
  %7882 = vmatpush.bf16.msra.mxu0 %v7853
  %7883 = vmatpush.bf16.msra.mxu0 %v7852
  %7884 = vmatpush.bf16.msra.mxu0 %v7851
  %7885 = vmatpush.bf16.msra.mxu0 %v7850
  %7886 = vmatpush.bf16.msra.mxu0 %v7849
  %7887 = vmatpush.bf16.msra.mxu0 %v7848
  %7888 = vmatmul.bf16.gmra.mxu0 %v7743
  %v7889 = vpop.f32.mrf.mxu0
  %v7890 = vadd.f32 0.0, %v7889
  %v7891 = vpop.f32.mrf.mxu0
  %v7892 = vadd.f32 0.0, %v7891
  %7893 = vmatmul.bf16.gmra.mxu0 %v7745
  %v7894 = vpop.f32.mrf.mxu0
  %v7895 = vadd.f32 0.0, %v7894
  %v7896 = vpop.f32.mrf.mxu0
  %v7897 = vadd.f32 0.0, %v7896
  %7898 = vmatmul.bf16.gmra.mxu0 %v7747
  %v7899 = vpop.f32.mrf.mxu0
  %v7900 = vadd.f32 0.0, %v7899
  %v7901 = vpop.f32.mrf.mxu0
  %v7902 = vadd.f32 0.0, %v7901
  %7903 = vmatmul.bf16.gmra.mxu0 %v7750
  %v7904 = vpop.f32.mrf.mxu0
  %v7905 = vadd.f32 0.0, %v7904
  %v7906 = vpop.f32.mrf.mxu0
  %7907 = vdwg.mxu0
  %7908 = vmatpush.bf16.msra.mxu0 %v7863
  %7909 = vmatpush.bf16.msra.mxu0 %v7862
  %7910 = vmatpush.bf16.msra.mxu0 %v7861
  %7911 = vmatpush.bf16.msra.mxu0 %v7860
  %7912 = vmatpush.bf16.msra.mxu0 %v7859
  %7913 = vmatpush.bf16.msra.mxu0 %v7858
  %7914 = vmatpush.bf16.msra.mxu0 %v7857
  %7915 = vmatpush.bf16.msra.mxu0 %v7856
  %7916 = vmatmul.bf16.gmra.mxu0 0
  %v7917 = vpop.f32.mrf.mxu0
  %v7918 = vadd.f32 %v7890, %v7917
  %v7919 = vpop.f32.mrf.mxu0
  %v7920 = vadd.f32 %v7892, %v7919
  %7921 = vmatmul.bf16.gmra.mxu0 0
  %v7922 = vpop.f32.mrf.mxu0
  %v7923 = vadd.f32 %v7895, %v7922
  %v7924 = vpop.f32.mrf.mxu0
  %v7925 = vadd.f32 %v7897, %v7924
  %7926 = vmatmul.bf16.gmra.mxu0 0
  %v7927 = vpop.f32.mrf.mxu0
  %v7928 = vadd.f32 %v7900, %v7927
  %v7929 = vpop.f32.mrf.mxu0
  %v7930 = vadd.f32 %v7902, %v7929
  %7931 = vmatmul.bf16.gmra.mxu0 0
  %v7932 = vpop.f32.mrf.mxu0
  %v7933 = vadd.f32 %v7905, %v7932
  %v7934 = vpop.f32.mrf.mxu0
  %7935 = vdwg.mxu0
  %v7968 = vunpack.c.l.b16 %v7711
  %v7969 = vunpack.c.l.b16 %v7712
  %v7970 = vunpack.c.l.b16 %v7713
  %v7971 = vunpack.c.l.b16 %v7714
  %v7972 = vunpack.c.l.b16 %v7715
  %v7973 = vunpack.c.l.b16 %v7716
  %v7974 = vunpack.c.l.b16 %v7717
  %v7975 = vunpack.c.l.b16 %v7718
  %v7976 = vunpack.c.l.b16 %v7719
  %v7977 = vunpack.c.l.b16 %v7720
  %v7978 = vunpack.c.l.b16 %v7721
  %v7979 = vunpack.c.l.b16 %v7722
  %v7980 = vunpack.c.l.b16 %v7723
  %v7981 = vunpack.c.l.b16 %v7724
  %v7982 = vunpack.c.l.b16 %v7725
  %v7983 = vunpack.c.l.b16 %v7726
  %v7984 = vunpack.c.l.b16 %v7727
  %v7985 = vunpack.c.l.b16 %v7728
  %v7986 = vunpack.c.l.b16 %v7729
  %v7987 = vunpack.c.l.b16 %v7730
  %v7988 = vunpack.c.l.b16 %v7731
  %v7989 = vunpack.c.l.b16 %v7732
  %v7990 = vunpack.c.l.b16 %v7733
  %v7991 = vunpack.c.l.b16 %v7734
  %v7992 = vunpack.c.l.b16 %v7735
  %v7993 = vunpack.c.l.b16 %v7736
  %v7994 = vunpack.c.l.b16 %v7737
  %v7995 = vunpack.c.l.b16 %v7738
  %v7996 = vunpack.c.l.b16 %v7739
  %v7997 = vunpack.c.l.b16 %v7740
  %v7998 = vunpack.c.l.b16 %v7741
  %v7999 = vunpack.c.l.b16 %v7742
  %v8000 = vpack.c.b16 %v7969, %v7968
  %v8001 = vpack.c.b16 %v7971, %v7970
  %v8002 = vpack.c.b16 %v7973, %v7972
  %v8003 = vpack.c.b16 %v7975, %v7974
  %v8004 = vpack.c.b16 %v7977, %v7976
  %v8005 = vpack.c.b16 %v7979, %v7978
  %v8006 = vpack.c.b16 %v7981, %v7980
  %v8007 = vpack.c.b16 %v7983, %v7982
  %v8008 = vpack.c.b16 %v7985, %v7984
  %v8009 = vpack.c.b16 %v7987, %v7986
  %v8010 = vpack.c.b16 %v7989, %v7988
  %v8011 = vpack.c.b16 %v7991, %v7990
  %v8012 = vpack.c.b16 %v7993, %v7992
  %v8013 = vpack.c.b16 %v7995, %v7994
  %v8014 = vpack.c.b16 %v7997, %v7996
  %v8015 = vpack.c.b16 %v7999, %v7998
  %8032 = vmatpush.bf16.msra.mxu0 %v8007
  %8033 = vmatpush.bf16.msra.mxu0 %v8006
  %8034 = vmatpush.bf16.msra.mxu0 %v8005
  %8035 = vmatpush.bf16.msra.mxu0 %v8004
  %8036 = vmatpush.bf16.msra.mxu0 %v8003
  %8037 = vmatpush.bf16.msra.mxu0 %v8002
  %8038 = vmatpush.bf16.msra.mxu0 %v8001
  %8039 = vmatpush.bf16.msra.mxu0 %v8000
  %8040 = vmatmul.bf16.gmra.mxu0 %v7698
  %v8041 = vpop.f32.mrf.mxu0
  %v8042 = vadd.f32 %v7918, %v8041
  %v8043 = vpop.f32.mrf.mxu0
  %v8044 = vadd.f32 %v7920, %v8043
  %8045 = vmatmul.bf16.gmra.mxu0 %v7702
  %v8046 = vpop.f32.mrf.mxu0
  %v8047 = vadd.f32 %v7923, %v8046
  %v8048 = vpop.f32.mrf.mxu0
  %v8049 = vadd.f32 %v7925, %v8048
  %8050 = vmatmul.bf16.gmra.mxu0 %v7706
  %v8051 = vpop.f32.mrf.mxu0
  %v8052 = vadd.f32 %v7928, %v8051
  %v8053 = vpop.f32.mrf.mxu0
  %v8054 = vadd.f32 %v7930, %v8053
  %8055 = vmatmul.bf16.gmra.mxu0 %v7709
  %v8056 = vpop.f32.mrf.mxu0
  %v8057 = vadd.f32 %v7933, %v8056
  %v8058 = vpop.f32.mrf.mxu0
  %8059 = vdwg.mxu0
  %8060 = vmatpush.bf16.msra.mxu0 %v8015
  %8061 = vmatpush.bf16.msra.mxu0 %v8014
  %8062 = vmatpush.bf16.msra.mxu0 %v8013
  %8063 = vmatpush.bf16.msra.mxu0 %v8012
  %8064 = vmatpush.bf16.msra.mxu0 %v8011
  %8065 = vmatpush.bf16.msra.mxu0 %v8010
  %8066 = vmatpush.bf16.msra.mxu0 %v8009
  %8067 = vmatpush.bf16.msra.mxu0 %v8008
  %8068 = vmatmul.bf16.gmra.mxu0 0
  %v8069 = vpop.f32.mrf.mxu0
  %v8070 = vadd.f32 %v8042, %v8069
  %v8071 = vpop.f32.mrf.mxu0
  %v8072 = vadd.f32 %v8044, %v8071
  %8073 = vmatmul.bf16.gmra.mxu0 0
  %v8074 = vpop.f32.mrf.mxu0
  %v8075 = vadd.f32 %v8047, %v8074
  %v8076 = vpop.f32.mrf.mxu0
  %v8077 = vadd.f32 %v8049, %v8076
  %8078 = vmatmul.bf16.gmra.mxu0 0
  %v8079 = vpop.f32.mrf.mxu0
  %v8080 = vadd.f32 %v8052, %v8079
  %v8081 = vpop.f32.mrf.mxu0
  %v8082 = vadd.f32 %v8054, %v8081
  %8083 = vmatmul.bf16.gmra.mxu0 0
  %v8084 = vpop.f32.mrf.mxu0
  %v8085 = vadd.f32 %v8057, %v8084
  %v8086 = vpop.f32.mrf.mxu0
  %8087 = vdwg.mxu0
  %v8088 = vpack.c.b16 %v7613, %v7645
  %v8089 = vpack.c.b16 %v7615, %v7614
  %v8090 = vpack.c.b16 %v7617, %v7616
  %v8091 = vpack.c.b16 %v7618, %v7618
  %8092 = vrot.lane.b32.xlu0 %v7621, 64
  %v8093 = vpop.permute.xlu0 %8092
  %v8095 = vunpack.c.l.b16 %v7622
  %v8096 = vpack.c.b16 %v7635, %v8095
  %v8097 = vpack.c.b16 %v7637, %v7636
  %v8098 = vpack.c.b16 %v7639, %v7638
  %v8099 = vpack.c.b16 %v7640, %v7640
  %8100 = vrot.lane.b32.xlu0 %v7641, 64
  %v8101 = vpop.permute.xlu0 %8100
  %8102 = vrot.lane.b32.xlu0 %v7642, 64
  %v8103 = vpop.permute.xlu0 %8102
  %8104 = vrot.lane.b32.xlu0 %v7643, 64
  %v8105 = vpop.permute.xlu0 %8104
  %v8108 = vsel %vm103, %v8088, %v7651
  %v8112 = vsel %vm103, %v8089, %v7653
  %v8116 = vsel %vm103, %v8090, %v8093
  %v8119 = vsel %vm103, %v8091, %v1285
  %v8123 = vsel %vm103, %v8096, %v8101
  %v8127 = vsel %vm103, %v8097, %v8103
  %v8131 = vsel %vm103, %v8098, %v8105
  %v8134 = vsel %vm103, %v8099, %v1285
  %v8136 = vld [vmem:[%s1732] sm:$0xf]
  %v8137 = vld [vmem:[%s1732 + $0x4] sm:$0xf]
  %v8138 = vld [vmem:[%s1732 + $0x8] sm:$0xf]
  %v8139 = vld [vmem:[%s1732 + $0xc] sm:$0xf]
  %v8140 = vld [vmem:[%s1732 + $0x10] sm:$0xf]
  %v8141 = vld [vmem:[%s1732 + $0x14] sm:$0xf]
  %v8142 = vld [vmem:[%s1732 + $0x18] sm:$0xf]
  %v8143 = vld [vmem:[%s1732 + $0x1c] sm:$0xf]
  %v8144 = vld [vmem:[%s1732 + $0x20] sm:$0xf]
  %v8145 = vld [vmem:[%s1732 + $0x24] sm:$0xf]
  %v8146 = vld [vmem:[%s1732 + $0x28] sm:$0xf]
  %v8147 = vld [vmem:[%s1732 + $0x2c] sm:$0xf]
  %v8148 = vld [vmem:[%s1732 + $0x30] sm:$0xf]
  %v8149 = vld [vmem:[%s1732 + $0x34] sm:$0xf]
  %v8150 = vld [vmem:[%s1732 + $0x38] sm:$0xf]
  %v8151 = vld [vmem:[%s1732 + $0x3c] sm:$0xf]
  %v8152 = vld [vmem:[%s1732 + $0x40] sm:$0xf]
  %v8153 = vld [vmem:[%s1732 + $0x44] sm:$0xf]
  %v8154 = vld [vmem:[%s1732 + $0x48] sm:$0xf]
  %v8155 = vld [vmem:[%s1732 + $0x4c] sm:$0xf]
  %v8156 = vld [vmem:[%s1732 + $0x50] sm:$0xf]
  %v8157 = vld [vmem:[%s1732 + $0x54] sm:$0xf]
  %v8158 = vld [vmem:[%s1732 + $0x58] sm:$0xf]
  %v8159 = vld [vmem:[%s1732 + $0x5c] sm:$0xf]
  %v8160 = vld [vmem:[%s1732 + $0x60] sm:$0xf]
  %v8161 = vld [vmem:[%s1732 + $0x64] sm:$0xf]
  %v8162 = vld [vmem:[%s1732 + $0x68] sm:$0xf]
  %v8163 = vld [vmem:[%s1732 + $0x6c] sm:$0xf]
  %v8164 = vld [vmem:[%s1732 + $0x70] sm:$0xf]
  %v8165 = vld [vmem:[%s1732 + $0x74] sm:$0xf]
  %v8166 = vld [vmem:[%s1732 + $0x78] sm:$0xf]
  %v8167 = vld [vmem:[%s1732 + $0x7c] sm:$0xf]
  %v8200 = vunpack.c.l.b16 %v8136
  %v8201 = vunpack.c.l.b16 %v8137
  %v8202 = vunpack.c.l.b16 %v8138
  %v8203 = vunpack.c.l.b16 %v8139
  %v8204 = vunpack.c.l.b16 %v8140
  %v8205 = vunpack.c.l.b16 %v8141
  %v8206 = vunpack.c.l.b16 %v8142
  %v8207 = vunpack.c.l.b16 %v8143
  %v8208 = vunpack.c.l.b16 %v8144
  %v8209 = vunpack.c.l.b16 %v8145
  %v8210 = vunpack.c.l.b16 %v8146
  %v8211 = vunpack.c.l.b16 %v8147
  %v8212 = vunpack.c.l.b16 %v8148
  %v8213 = vunpack.c.l.b16 %v8149
  %v8214 = vunpack.c.l.b16 %v8150
  %v8215 = vunpack.c.l.b16 %v8151
  %v8216 = vunpack.c.l.b16 %v8152
  %v8217 = vunpack.c.l.b16 %v8153
  %v8218 = vunpack.c.l.b16 %v8154
  %v8219 = vunpack.c.l.b16 %v8155
  %v8220 = vunpack.c.l.b16 %v8156
  %v8221 = vunpack.c.l.b16 %v8157
  %v8222 = vunpack.c.l.b16 %v8158
  %v8223 = vunpack.c.l.b16 %v8159
  %v8224 = vunpack.c.l.b16 %v8160
  %v8225 = vunpack.c.l.b16 %v8161
  %v8226 = vunpack.c.l.b16 %v8162
  %v8227 = vunpack.c.l.b16 %v8163
  %v8228 = vunpack.c.l.b16 %v8164
  %v8229 = vunpack.c.l.b16 %v8165
  %v8230 = vunpack.c.l.b16 %v8166
  %v8231 = vunpack.c.l.b16 %v8167
  %v8232 = vpack.c.b16 %v8201, %v8200
  %v8233 = vpack.c.b16 %v8203, %v8202
  %v8234 = vpack.c.b16 %v8205, %v8204
  %v8235 = vpack.c.b16 %v8207, %v8206
  %v8236 = vpack.c.b16 %v8209, %v8208
  %v8237 = vpack.c.b16 %v8211, %v8210
  %v8238 = vpack.c.b16 %v8213, %v8212
  %v8239 = vpack.c.b16 %v8215, %v8214
  %v8240 = vpack.c.b16 %v8217, %v8216
  %v8241 = vpack.c.b16 %v8219, %v8218
  %v8242 = vpack.c.b16 %v8221, %v8220
  %v8243 = vpack.c.b16 %v8223, %v8222
  %v8244 = vpack.c.b16 %v8225, %v8224
  %v8245 = vpack.c.b16 %v8227, %v8226
  %v8246 = vpack.c.b16 %v8229, %v8228
  %v8247 = vpack.c.b16 %v8231, %v8230
  %8264 = vmatpush.bf16.msra.mxu0 %v8239
  %8265 = vmatpush.bf16.msra.mxu0 %v8238
  %8266 = vmatpush.bf16.msra.mxu0 %v8237
  %8267 = vmatpush.bf16.msra.mxu0 %v8236
  %8268 = vmatpush.bf16.msra.mxu0 %v8235
  %8269 = vmatpush.bf16.msra.mxu0 %v8234
  %8270 = vmatpush.bf16.msra.mxu0 %v8233
  %8271 = vmatpush.bf16.msra.mxu0 %v8232
  %8272 = vmatmul.bf16.gmra.mxu0 %v8108
  %v8273 = vpop.f32.mrf.mxu0
  %v8274 = vadd.f32 0.0, %v8273
  %v8275 = vpop.f32.mrf.mxu0
  %v8276 = vadd.f32 0.0, %v8275
  %8277 = vmatmul.bf16.gmra.mxu0 %v8112
  %v8278 = vpop.f32.mrf.mxu0
  %v8279 = vadd.f32 0.0, %v8278
  %v8280 = vpop.f32.mrf.mxu0
  %v8281 = vadd.f32 0.0, %v8280
  %8282 = vmatmul.bf16.gmra.mxu0 %v8116
  %v8283 = vpop.f32.mrf.mxu0
  %v8284 = vadd.f32 0.0, %v8283
  %v8285 = vpop.f32.mrf.mxu0
  %v8286 = vadd.f32 0.0, %v8285
  %8287 = vmatmul.bf16.gmra.mxu0 %v8119
  %v8288 = vpop.f32.mrf.mxu0
  %v8289 = vadd.f32 0.0, %v8288
  %v8290 = vpop.f32.mrf.mxu0
  %8291 = vdwg.mxu0
  %8292 = vmatpush.bf16.msra.mxu0 %v8247
  %8293 = vmatpush.bf16.msra.mxu0 %v8246
  %8294 = vmatpush.bf16.msra.mxu0 %v8245
  %8295 = vmatpush.bf16.msra.mxu0 %v8244
  %8296 = vmatpush.bf16.msra.mxu0 %v8243
  %8297 = vmatpush.bf16.msra.mxu0 %v8242
  %8298 = vmatpush.bf16.msra.mxu0 %v8241
  %8299 = vmatpush.bf16.msra.mxu0 %v8240
  %8300 = vmatmul.bf16.gmra.mxu0 %v8123
  %v8301 = vpop.f32.mrf.mxu0
  %v8302 = vadd.f32 %v8274, %v8301
  %v8303 = vpop.f32.mrf.mxu0
  %v8304 = vadd.f32 %v8276, %v8303
  %8305 = vmatmul.bf16.gmra.mxu0 %v8127
  %v8306 = vpop.f32.mrf.mxu0
  %v8307 = vadd.f32 %v8279, %v8306
  %v8308 = vpop.f32.mrf.mxu0
  %v8309 = vadd.f32 %v8281, %v8308
  %8310 = vmatmul.bf16.gmra.mxu0 %v8131
  %v8311 = vpop.f32.mrf.mxu0
  %v8312 = vadd.f32 %v8284, %v8311
  %v8313 = vpop.f32.mrf.mxu0
  %v8314 = vadd.f32 %v8286, %v8313
  %8315 = vmatmul.bf16.gmra.mxu0 %v8134
  %v8316 = vpop.f32.mrf.mxu0
  %v8317 = vadd.f32 %v8289, %v8316
  %v8318 = vpop.f32.mrf.mxu0
  %8319 = vdwg.mxu0
  %v8320 = vadd.f32 %v8070, %v8302
  %v8321 = vadd.f32 %v8072, %v8304
  %v8322 = vadd.f32 %v8075, %v8307
  %v8323 = vadd.f32 %v8077, %v8309
  %v8324 = vadd.f32 %v8080, %v8312
  %v8325 = vadd.f32 %v8082, %v8314
  %v8326 = vadd.f32 %v8085, %v8317
  %v8327 = vsel %vm103, %v7657, %v8088
  %v8329 = vsel %vm103, %v7651, %v8089
  %v8331 = vsel %vm103, %v7653, %v8090
  %v8334 = vsel %vm103, %v7655, %v8091
  %v8336 = vsel %vm103, %v7689, %v8096
  %v8339 = vsel %vm103, %v7683, %v8097
  %v8342 = vsel %vm103, %v7685, %v8098
  %v8345 = vsel %vm103, %v7687, %v8099
  %v8347 = vld [vmem:[%s1933] sm:$0xf]
  %v8348 = vld [vmem:[%s1933 + $0x4] sm:$0xf]
  %v8349 = vld [vmem:[%s1933 + $0x8] sm:$0xf]
  %v8350 = vld [vmem:[%s1933 + $0xc] sm:$0xf]
  %v8351 = vld [vmem:[%s1933 + $0x10] sm:$0xf]
  %v8352 = vld [vmem:[%s1933 + $0x14] sm:$0xf]
  %v8353 = vld [vmem:[%s1933 + $0x18] sm:$0xf]
  %v8354 = vld [vmem:[%s1933 + $0x1c] sm:$0xf]
  %v8355 = vld [vmem:[%s1933 + $0x20] sm:$0xf]
  %v8356 = vld [vmem:[%s1933 + $0x24] sm:$0xf]
  %v8357 = vld [vmem:[%s1933 + $0x28] sm:$0xf]
  %v8358 = vld [vmem:[%s1933 + $0x2c] sm:$0xf]
  %v8359 = vld [vmem:[%s1933 + $0x30] sm:$0xf]
  %v8360 = vld [vmem:[%s1933 + $0x34] sm:$0xf]
  %v8361 = vld [vmem:[%s1933 + $0x38] sm:$0xf]
  %v8362 = vld [vmem:[%s1933 + $0x3c] sm:$0xf]
  %v8363 = vld [vmem:[%s1933 + $0x40] sm:$0xf]
  %v8364 = vld [vmem:[%s1933 + $0x44] sm:$0xf]
  %v8365 = vld [vmem:[%s1933 + $0x48] sm:$0xf]
  %v8366 = vld [vmem:[%s1933 + $0x4c] sm:$0xf]
  %v8367 = vld [vmem:[%s1933 + $0x50] sm:$0xf]
  %v8368 = vld [vmem:[%s1933 + $0x54] sm:$0xf]
  %v8369 = vld [vmem:[%s1933 + $0x58] sm:$0xf]
  %v8370 = vld [vmem:[%s1933 + $0x5c] sm:$0xf]
  %v8371 = vld [vmem:[%s1933 + $0x60] sm:$0xf]
  %v8372 = vld [vmem:[%s1933 + $0x64] sm:$0xf]
  %v8373 = vld [vmem:[%s1933 + $0x68] sm:$0xf]
  %v8374 = vld [vmem:[%s1933 + $0x6c] sm:$0xf]
  %v8375 = vld [vmem:[%s1933 + $0x70] sm:$0xf]
  %v8376 = vld [vmem:[%s1933 + $0x74] sm:$0xf]
  %v8377 = vld [vmem:[%s1933 + $0x78] sm:$0xf]
  %v8378 = vld [vmem:[%s1933 + $0x7c] sm:$0xf]
  %v8411 = vunpack.c.l.b16 %v8347
  %v8412 = vunpack.c.l.b16 %v8348
  %v8413 = vunpack.c.l.b16 %v8349
  %v8414 = vunpack.c.l.b16 %v8350
  %v8415 = vunpack.c.l.b16 %v8351
  %v8416 = vunpack.c.l.b16 %v8352
  %v8417 = vunpack.c.l.b16 %v8353
  %v8418 = vunpack.c.l.b16 %v8354
  %v8419 = vunpack.c.l.b16 %v8355
  %v8420 = vunpack.c.l.b16 %v8356
  %v8421 = vunpack.c.l.b16 %v8357
  %v8422 = vunpack.c.l.b16 %v8358
  %v8423 = vunpack.c.l.b16 %v8359
  %v8424 = vunpack.c.l.b16 %v8360
  %v8425 = vunpack.c.l.b16 %v8361
  %v8426 = vunpack.c.l.b16 %v8362
  %v8427 = vunpack.c.l.b16 %v8363
  %v8428 = vunpack.c.l.b16 %v8364
  %v8429 = vunpack.c.l.b16 %v8365
  %v8430 = vunpack.c.l.b16 %v8366
  %v8431 = vunpack.c.l.b16 %v8367
  %v8432 = vunpack.c.l.b16 %v8368
  %v8433 = vunpack.c.l.b16 %v8369
  %v8434 = vunpack.c.l.b16 %v8370
  %v8435 = vunpack.c.l.b16 %v8371
  %v8436 = vunpack.c.l.b16 %v8372
  %v8437 = vunpack.c.l.b16 %v8373
  %v8438 = vunpack.c.l.b16 %v8374
  %v8439 = vunpack.c.l.b16 %v8375
  %v8440 = vunpack.c.l.b16 %v8376
  %v8441 = vunpack.c.l.b16 %v8377
  %v8442 = vunpack.c.l.b16 %v8378
  %v8443 = vpack.c.b16 %v8412, %v8411
  %v8444 = vpack.c.b16 %v8414, %v8413
  %v8445 = vpack.c.b16 %v8416, %v8415
  %v8446 = vpack.c.b16 %v8418, %v8417
  %v8447 = vpack.c.b16 %v8420, %v8419
  %v8448 = vpack.c.b16 %v8422, %v8421
  %v8449 = vpack.c.b16 %v8424, %v8423
  %v8450 = vpack.c.b16 %v8426, %v8425
  %v8451 = vpack.c.b16 %v8428, %v8427
  %v8452 = vpack.c.b16 %v8430, %v8429
  %v8453 = vpack.c.b16 %v8432, %v8431
  %v8454 = vpack.c.b16 %v8434, %v8433
  %v8455 = vpack.c.b16 %v8436, %v8435
  %v8456 = vpack.c.b16 %v8438, %v8437
  %v8457 = vpack.c.b16 %v8440, %v8439
  %v8458 = vpack.c.b16 %v8442, %v8441
  %8475 = vmatpush.bf16.msra.mxu0 %v8450
  %8476 = vmatpush.bf16.msra.mxu0 %v8449
  %8477 = vmatpush.bf16.msra.mxu0 %v8448
  %8478 = vmatpush.bf16.msra.mxu0 %v8447
  %8479 = vmatpush.bf16.msra.mxu0 %v8446
  %8480 = vmatpush.bf16.msra.mxu0 %v8445
  %8481 = vmatpush.bf16.msra.mxu0 %v8444
  %8482 = vmatpush.bf16.msra.mxu0 %v8443
  %8483 = vmatmul.bf16.gmra.mxu0 %v8327
  %v8484 = vpop.f32.mrf.mxu0
  %v8485 = vadd.f32 0.0, %v8484
  %v8486 = vpop.f32.mrf.mxu0
  %v8487 = vadd.f32 0.0, %v8486
  %8488 = vmatmul.bf16.gmra.mxu0 %v8329
  %v8489 = vpop.f32.mrf.mxu0
  %v8490 = vadd.f32 0.0, %v8489
  %v8491 = vpop.f32.mrf.mxu0
  %v8492 = vadd.f32 0.0, %v8491
  %8493 = vmatmul.bf16.gmra.mxu0 %v8331
  %v8494 = vpop.f32.mrf.mxu0
  %v8495 = vadd.f32 0.0, %v8494
  %v8496 = vpop.f32.mrf.mxu0
  %v8497 = vadd.f32 0.0, %v8496
  %8498 = vmatmul.bf16.gmra.mxu0 %v8334
  %v8499 = vpop.f32.mrf.mxu0
  %v8500 = vadd.f32 0.0, %v8499
  %v8501 = vpop.f32.mrf.mxu0
  %8502 = vdwg.mxu0
  %8503 = vmatpush.bf16.msra.mxu0 %v8458
  %8504 = vmatpush.bf16.msra.mxu0 %v8457
  %8505 = vmatpush.bf16.msra.mxu0 %v8456
  %8506 = vmatpush.bf16.msra.mxu0 %v8455
  %8507 = vmatpush.bf16.msra.mxu0 %v8454
  %8508 = vmatpush.bf16.msra.mxu0 %v8453
  %8509 = vmatpush.bf16.msra.mxu0 %v8452
  %8510 = vmatpush.bf16.msra.mxu0 %v8451
  %8511 = vmatmul.bf16.gmra.mxu0 %v8336
  %v8512 = vpop.f32.mrf.mxu0
  %v8513 = vadd.f32 %v8485, %v8512
  %v8514 = vpop.f32.mrf.mxu0
  %v8515 = vadd.f32 %v8487, %v8514
  %8516 = vmatmul.bf16.gmra.mxu0 %v8339
  %v8517 = vpop.f32.mrf.mxu0
  %v8518 = vadd.f32 %v8490, %v8517
  %v8519 = vpop.f32.mrf.mxu0
  %v8520 = vadd.f32 %v8492, %v8519
  %8521 = vmatmul.bf16.gmra.mxu0 %v8342
  %v8522 = vpop.f32.mrf.mxu0
  %v8523 = vadd.f32 %v8495, %v8522
  %v8524 = vpop.f32.mrf.mxu0
  %v8525 = vadd.f32 %v8497, %v8524
  %8526 = vmatmul.bf16.gmra.mxu0 %v8345
  %v8527 = vpop.f32.mrf.mxu0
  %v8528 = vadd.f32 %v8500, %v8527
  %v8529 = vpop.f32.mrf.mxu0
  %8530 = vdwg.mxu0
  %v8531 = vadd.f32 %v8320, %v8513
  %v8532 = vadd.f32 %v8321, %v8515
  %v8533 = vadd.f32 %v8322, %v8518
  %v8534 = vadd.f32 %v8323, %v8520
  %v8535 = vadd.f32 %v8324, %v8523
  %v8536 = vadd.f32 %v8325, %v8525
  %v8537 = vadd.f32 %v8326, %v8528
  %v8538 = vadd.f32 %v8531, %v2126
  %v8539 = vadd.f32 %v8532, %v2126
  %v8540 = vadd.f32 %v8533, %v2126
  %v8541 = vadd.f32 %v8534, %v2126
  %v8542 = vadd.f32 %v8535, %v2126
  %v8543 = vadd.f32 %v8536, %v2126
  %v8544 = vadd.f32 %v8537, %v2126
  %v8545 = vpack.c.bf16 %v8538, %v8538
  %v8546 = vpack.c.bf16 %v8539, %v8539
  %v8547 = vpack.c.bf16 %v8540, %v8540
  %v8548 = vpack.c.bf16 %v8541, %v8541
  %v8549 = vpack.c.bf16 %v8542, %v8542
  %v8550 = vpack.c.bf16 %v8543, %v8543
  %v8551 = vpack.c.bf16 %v8544, %v8544
  %8552 = vst [vmem:[%s5 + $0xa8] sm:$0xf] %v8545
  %8553 = vst [vmem:[%s5 + $0xac] sm:$0xf] %v8546
  %8554 = vst [vmem:[%s5 + $0xb0] sm:$0xf] %v8547
  %8555 = vst [vmem:[%s5 + $0xb4] sm:$0xf] %v8548
  %8556 = vst [vmem:[%s5 + $0xb8] sm:$0xf] %v8549
  %8557 = vst [vmem:[%s5 + $0xbc] sm:$0xf] %v8550
  %8558 = vst [vmem:[%s5 + $0xc0] sm:$0xf] %v8551
  %v8559 = vmul.f32 %v8538, %v1160
  %v8560 = vmul.f32 %v8539, %v1161
  %v8561 = vmul.f32 %v8540, %v1162
  %v8562 = vmul.f32 %v8541, %v1163
  %v8563 = vmul.f32 %v8542, %v1164
  %v8564 = vmul.f32 %v8543, %v1165
  %v8565 = vmul.f32 %v8544, %v1166
  %v8566 = vadd.f32 %v8559, %v8560
  %v8567 = vadd.f32 %v8566, %v8561
  %v8568 = vadd.f32 %v8567, %v8562
  %v8569 = vadd.f32 %v8568, %v8563
  %v8570 = vadd.f32 %v8569, %v8564
  %v8571 = vadd.f32 %v8570, %v8565
  %v8572 = vrot.slane %v8571, 4
  %v8573 = vadd.f32 %v8571, %v8572
  %v8574 = vrot.slane %v8573, 2
  %v8575 = vadd.f32 %v8573, %v8574
  %v8576 = vrot.slane %v8575, 1
  %v8577 = vadd.f32 %v8575, %v8576
  %v8578 = vadd.f32 %v7543, %v8577
  %v8579 = vmul.f32 %v8559, %v8538
  %v8580 = vmul.f32 %v8560, %v8539
  %v8581 = vmul.f32 %v8561, %v8540
  %v8582 = vmul.f32 %v8562, %v8541
  %v8583 = vmul.f32 %v8563, %v8542
  %v8584 = vmul.f32 %v8564, %v8543
  %v8585 = vmul.f32 %v8565, %v8544
  %v8586 = vadd.f32 %v8579, %v8580
  %v8587 = vadd.f32 %v8586, %v8581
  %v8588 = vadd.f32 %v8587, %v8582
  %v8589 = vadd.f32 %v8588, %v8583
  %v8590 = vadd.f32 %v8589, %v8584
  %v8591 = vadd.f32 %v8590, %v8585
  %v8592 = vrot.slane %v8591, 4
  %v8593 = vadd.f32 %v8591, %v8592
  %v8594 = vrot.slane %v8593, 2
  %v8595 = vadd.f32 %v8593, %v8594
  %v8596 = vrot.slane %v8595, 1
  %v8597 = vadd.f32 %v8595, %v8596
  %v8598 = vadd.f32 %v7563, %v8597
  %vm8599 = vcmask 1040384
  %v8600 = vsel %vm8599, %v8578, %v8598
  %8601 = vst [vmem:[%s6] sm:$0x3] %v8600
  // Predicated region
  $region22: #{discriminator_forward.2} parent=0 // pred_check
    _
  $region23: #{discriminator_forward.2} parent=0 // pred_check_branch
    %8603 = sbr.rel (0) target = $region25
  $region24: #{discriminator_forward.2} parent=0 // pred_region
    _
  $region25: #{discriminator_forward.2} parent=0 // pred_fallthru
    _
  // Predicated region
  $region26: #{discriminator_forward.2} parent=0 // pred_check
    _
  $region27: #{discriminator_forward.2} parent=0 // pred_check_branch
    %8605 = sbr.rel (0) target = $region29
  $region28: #{discriminator_forward.2} parent=0 // pred_region
    _
  $region29: #{discriminator_forward.2} parent=0 // pred_fallthru
    _
  // Predicated region
  $region30: #{discriminator_forward.2} parent=0 // pred_check
    _
  $region31: #{discriminator_forward.2} parent=0 // pred_check_branch
    %8607 = sbr.rel (0) target = $region33
  $region32: #{discriminator_forward.2} parent=0 // pred_region
    _
  $region33: #{discriminator_forward.2} parent=0 // pred_fallthru
    _
  // Predicated region
  $region34: #{discriminator_forward.2} parent=0 // pred_check
    _
  $region35: #{discriminator_forward.2} parent=0 // pred_check_branch
    %8609 = sbr.rel (0) target = $region37
  $region36: #{discriminator_forward.2} parent=0 // pred_region
    _
  $region37: #{discriminator_forward.2} parent=0 // pred_fallthru
    _

</llo_original>
